<compile_context>
chip_gen: v5e
topology: v5e:2x2
jax: 0.10.0
libtpu: 0.0.40
codegen_flags: <defaults>
</compile_context>

<pallas_src>
import functools
import numpy as np
import jax
import jax.numpy as jnp
from jax import lax
from jax.experimental import pallas as pl
from jax.experimental.pallas import tpu as pltpu

EPS = 1e-4            # matches `epsilon` in the PyTorch module
F32 = jnp.float32
HIGH = lax.Precision.HIGHEST


# --------------------------------------------------------------------------
# dot helpers (2D only, MXU friendly)
# --------------------------------------------------------------------------
def _dot(a, b, precision=None):
    return jnp.dot(a, b, precision=precision, preferred_element_type=F32)


def _dot_tlhs(a, b, precision=None):      # a^T @ b   (contract dim 0 of both)
    return lax.dot_general(a, b, (((0,), (0,)), ((), ())),
                           precision=precision, preferred_element_type=F32)


def _dot_trhs(a, b, precision=None):      # a @ b^T   (contract dim 1 of both)
    return lax.dot_general(a, b, (((1,), (1,)), ((), ())),
                           precision=precision, preferred_element_type=F32)


# --------------------------------------------------------------------------
# Fused EncoderLayer kernel (one batch element per grid step)
# --------------------------------------------------------------------------
def _encoder_kernel(x_ref,
                    m_mean_ref, m_last_ref,
                    m_se_mu_ref, m_se_hat_ref,
                    m_st_mu_ref, m_st_hat_ref, m_si_hat_ref,
                    a_nt_ref, d_t_ref,
                    sel_s_ref, sel_h_ref, sel_xz_ref, sel_sp_ref,
                    w_taps_ref, b_cat_ref, w4_ref, b4_ref,
                    wr_ref, br_ref, ws_ref, bs_ref,
                    xz_ref, sp_ref,
                    s_all_ref, h_all_ref,
                    *, C, N, T, P, K):
    x = x_ref[...]                       # (C, N*T)
    x_sq = x * x

    def norm(mu, sq):
        var = sq - mu * mu + EPS
        return (x - mu) * lax.rsqrt(var)

    # ---------------- long term ----------------------------------------
    m_mean = m_mean_ref[...]
    mu_lt = _dot(x, m_mean, HIGH)                       # mean repeated over t
    r_lt = norm(mu_lt, _dot(x_sq, m_mean, HIGH))
    m_last = m_last_ref[...]
    hat_r_lt = _dot(r_lt, m_last, HIGH)
    hat_mu_lt = _dot(mu_lt, m_last, HIGH)

    # ---------------- seasonal (cycle mixing as one matmul) ------------
    m_se = m_se_mu_ref[...]
    mu_se = _dot(x, m_se, HIGH)
    r_se = norm(mu_se, _dot(x_sq, m_se, HIGH))
    m_se_hat = m_se_hat_ref[...]
    hat_r_se = _dot(r_se, m_se_hat, HIGH)
    hat_mu_se = _dot(mu_se, m_se_hat, HIGH)

    # ---------------- short term (causal moving average as matmul) -----
    m_st = m_st_mu_ref[...]
    mu_st = _dot(x, m_st, HIGH)
    r_st = norm(mu_st, _dot(x_sq, m_st, HIGH))
    m_st_hat = m_st_hat_ref[...]
    hat_r_st = _dot(r_st, m_st_hat, HIGH)
    hat_mu_st = _dot(mu_st, m_st_hat, HIGH)

    # ---------------- spatial attention (batched over channels) --------
    a_nt = a_nt_ref[...]                                # (NT, N) series selector
    d_t = d_t_ref[...]                                  # (NT, NT) same-time mask
    gram = _dot_tlhs(r_st, r_st, HIGH) * d_t            # (NT, NT), sum over C
    g_nm = _dot_tlhs(a_nt, _dot(gram, a_nt, HIGH), HIGH)  # (N, N), sum over t
    g_nm = g_nm * (10.0 / (T * C))
    g_nm = g_nm - jnp.max(g_nm, axis=-1, keepdims=True)
    g_exp = jnp.exp(g_nm)
    g_soft = g_exp / jnp.sum(g_exp, axis=-1, keepdims=True)   # softmax rows
    # expand g_soft block-diagonally along time: Mg[(m,t),(n,t)] = g_soft[n,m]
    g_expand = _dot_trhs(a_nt, g_soft, HIGH)            # (NT, N)
    mg = _dot_trhs(g_expand, a_nt, HIGH) * d_t          # (NT, NT)
    mu_si = _dot(r_st, mg, HIGH)
    sq_si = _dot(r_st * r_st, mg, HIGH)
    var_si = sq_si - mu_si * mu_si + EPS
    r_si = (r_st - mu_si) * lax.rsqrt(var_si)
    m_si_hat = m_si_hat_ref[...]
    hat_r_si = _dot(r_si, m_si_hat, HIGH)
    hat_mu_si = _dot(mu_si, m_si_hat, HIGH)

    # ---------------- assemble component slabs (8C, N*T) / (8C, N*P) ---
    comps_s = (r_lt, mu_lt, r_se, mu_se, r_st, mu_st, r_si, mu_si)
    comps_h = (hat_r_lt, hat_mu_lt, hat_r_se, hat_mu_se,
               hat_r_st, hat_mu_st, hat_r_si, hat_mu_si)
    for q in range(8):
        s_all_ref[q * C:(q + 1) * C, :] = comps_s[q]
        h_all_ref[q * C:(q + 1) * C, :] = comps_h[q]
    s_all = s_all_ref[...]               # (8C, N*T)
    h_all = h_all_ref[...]               # (8C, N*P)

    # ---------------- fused (1,K) convs: channel contraction FIRST ------
    # z[o, (n,tau)] = b[o] + sum_k sum_c W[o,c,k] * xcat[c, n, tau-(K-1)+k]
    # where xcat = [s | hat_s] along time.  Apply the small (3C,8C) weight
    # slice first, then the per-tap time-placement operator on 3C rows only.
    z = b_cat_ref[...]                                  # (3C, 1), broadcasts
    for k in range(K):
        w_k = w_taps_ref[k]                             # (3C, 8C)
        z = z + _dot(_dot(w_k, s_all), sel_s_ref[k]) \
              + _dot(_dot(w_k, h_all), sel_h_ref[k])    # (3C, N*(T+P))
    x1 = z[0:C]
    x2 = z[C:2 * C]
    x3 = z[2 * C:3 * C]
    z4 = _dot(w4_ref[...], x1 * x2) + b4_ref[...] + x3  # (C, N*(T+P))

    # ---------------- residual / skip 1x1 convs -------------------------
    xz = _dot(z4, sel_xz_ref[...])                      # (C, N*T)
    sp = _dot(z4, sel_sp_ref[...])                      # (C, N*P)
    xz_ref[...] = _dot(wr_ref[...], xz) + br_ref[...]
    sp_ref[...] = _dot(ws_ref[...], sp) + bs_ref[...]


# --------------------------------------------------------------------------
# Wrapper: constant operator matrices (built once, tiny) + pallas_call
# --------------------------------------------------------------------------
def _np_shift_matrix(rows, cols, off):
    m = np.zeros((rows, cols), np.float32)
    for i in range(rows):
        j = i + off
        if 0 <= j < cols:
            m[i, j] = 1.0
    return m


def _build_constants(p, C, N, T):
    P, CL, L, K = p["pred_len"], p["cycle_len"], p["short_period_len"], p["kernel_size"]
    TOUT = T + P
    eye_n = np.eye(N, dtype=np.float32)
    eye_n_j = jnp.asarray(eye_n)
    eye_cl = jnp.eye(CL, dtype=F32)

    # parameter softmaxes (match torch.softmax dims)
    i_se = jax.nn.softmax(p["I_se"], axis=1)[:, :, 0, 0]          # (NC, NC)
    e_se = jax.nn.softmax(p["E_se"], axis=1)[:, :, 0, 0]          # (PC, NC)
    i_st = jax.nn.softmax(p["I_st"], axis=-1)[0, 0, 0, :]         # (L,)
    e_st = jax.nn.softmax(p["E_st"], axis=-1)[:, 0, 0, :]         # (P, L)
    e_si = jax.nn.softmax(p["E_si"], axis=-1)[:, 0, 0, :]         # (P, L)

    def kron_n(blk):          # expand a per-series operator block-diagonally
        return jnp.kron(eye_n_j, blk.astype(F32))

    # long term: per-series running mean + "repeat last" projection
    m_mean = kron_n(jnp.full((T, T), 1.0 / T, F32))
    blk_last = np.zeros((T, P), np.float32)
    blk_last[T - 1, :] = 1.0
    m_last = jnp.asarray(np.kron(eye_n, blk_last))

    # seasonal: cycle mixing matrices
    m_se_mu = kron_n(jnp.kron(i_se.T.astype(F32), eye_cl))                 # (NT, NT)
    m_se_hat = kron_n(jnp.kron(e_se.T.astype(F32), eye_cl)[:, :P])         # (NT, NP)

    # short term: causal moving-average band matrix + tail projections
    rows = jnp.arange(T)[:, None]
    cols = jnp.arange(T)[None, :]
    jidx = rows - cols + (L - 1)
    band = jnp.where((jidx >= 0) & (jidx < L),
                     i_st[jnp.clip(jidx, 0, L - 1)], 0.0).astype(F32)      # (T, T)
    q_st = jnp.zeros((T, P), F32).at[T - L:, :].set(e_st.T.astype(F32))
    q_si = jnp.zeros((T, P), F32).at[T - L:, :].set(e_si.T.astype(F32))
    m_st_mu = kron_n(band)
    m_st_hat = kron_n(q_st)
    m_si_hat = kron_n(q_si)

    # spatial helpers
    a_nt = jnp.asarray(np.kron(eye_n, np.ones((T, 1), np.float32)))        # (NT, N)
    d_t = jnp.asarray(np.kron(np.ones((N, N), np.float32),
                              np.eye(T, dtype=np.float32)))                # (NT, NT)

    # conv-head tap/selection operators (equivalent of left pad K-1 + (1,K) conv)
    sel_s = jnp.asarray(np.stack(
        [np.kron(eye_n, _np_shift_matrix(T, TOUT, (K - 1) - k)) for k in range(K)]))
    sel_h = jnp.asarray(np.stack(
        [np.kron(eye_n, _np_shift_matrix(P, TOUT, T + (K - 1) - k)) for k in range(K)]))
    blk_xz = np.concatenate([np.eye(T, dtype=np.float32),
                             np.zeros((P, T), np.float32)], axis=0)
    blk_sp = np.concatenate([np.zeros((T, P), np.float32),
                             np.eye(P, dtype=np.float32)], axis=0)
    sel_xz = jnp.asarray(np.kron(eye_n, blk_xz))                           # (N*TOUT, NT)
    sel_sp = jnp.asarray(np.kron(eye_n, blk_sp))                           # (N*TOUT, NP)

    # conv1/conv2/conv3 weights, per tap: w_taps[k] = [W1_k; W2_k; W3_k]  (3C, 8C)
    w123 = jnp.concatenate([p["conv1_w"], p["conv2_w"], p["conv3_w"]],
                           axis=0)[:, :, 0, :]                             # (3C, 8C, K)
    w_taps = jnp.transpose(w123, (2, 0, 1))                                # (K, 3C, 8C)
    b_cat = jnp.concatenate([p["conv1_b"], p["conv2_b"], p["conv3_b"]])[:, None]

    return dict(
        m_mean=m_mean, m_last=m_last,
        m_se_mu=m_se_mu, m_se_hat=m_se_hat,
        m_st_mu=m_st_mu, m_st_hat=m_st_hat, m_si_hat=m_si_hat,
        a_nt=a_nt, d_t=d_t,
        sel_s=sel_s, sel_h=sel_h, sel_xz=sel_xz, sel_sp=sel_sp,
        w_taps=w_taps, b_cat=b_cat,
        w4=p["conv4_w"][:, :, 0, 0], b4=p["conv4_b"][:, None],
        wr=p["res_w"][:, :, 0, 0], br=p["res_b"][:, None],
        ws=p["skip_w"][:, :, 0, 0], bs=p["skip_b"][:, None],
    )


def encoder_layer_forward(x, p):
    B, C, N, T = x.shape
    P, K = p["pred_len"], p["kernel_size"]
    NT, NP = N * T, N * P

    consts = _build_constants(p, C, N, T)
    names = ["m_mean", "m_last", "m_se_mu", "m_se_hat", "m_st_mu", "m_st_hat",
             "m_si_hat", "a_nt", "d_t", "sel_s", "sel_h", "sel_xz", "sel_sp",
             "w_taps", "b_cat", "w4", "b4", "wr", "br", "ws", "bs"]
    const_arrays = [consts[n] for n in names]

    x_flat = x.reshape(B, C, NT)          # free reshape: series folded into lanes

    def const_spec(a):
        nd = a.ndim
        return pl.BlockSpec(a.shape, lambda b, _nd=nd: (0,) * _nd)

    kernel = functools.partial(_encoder_kernel, C=C, N=N, T=T, P=P, K=K)
    xz_flat, sp_flat = pl.pallas_call(
        kernel,
        grid=(B,),
        in_specs=[pl.BlockSpec((None, C, NT), lambda b: (b, 0, 0))] +
                 [const_spec(a) for a in const_arrays],
        out_specs=(
            pl.BlockSpec((None, C, NT), lambda b: (b, 0, 0)),
            pl.BlockSpec((None, C, NP), lambda b: (b, 0, 0)),
        ),
        out_shape=(
            jax.ShapeDtypeStruct((B, C, NT), F32),
            jax.ShapeDtypeStruct((B, C, NP), F32),
        ),
        scratch_shapes=[
            pltpu.VMEM((8 * C, NT), F32),          # S_all
            pltpu.VMEM((8 * C, NP), F32),          # H_all
        ],
        compiler_params=pltpu.CompilerParams(dimension_semantics=("parallel",)),
    )(x_flat, *const_arrays)

    return xz_flat.reshape(B, C, N, T), sp_flat.reshape(B, C, N, P)


# --------------------------------------------------------------------------
# Deterministic parameter init (shapes from EncoderLayer.__init__)
# --------------------------------------------------------------------------
def init_params(key, d_model, seq_len, pred_len, cycle_len, short_period_len, kernel_size):
    NC = seq_len // cycle_len
    PC = pred_len // cycle_len + 1
    C = d_model
    C8 = 4 * 2 * d_model   # (long + seasonal + short + spatial) * 2 * d_model
    ks = jax.random.split(key, 17)
    r = lambda k, shp, s=0.1: (s * jax.random.normal(k, shp)).astype(F32)
    return dict(
        pred_len=pred_len, cycle_len=cycle_len,
        short_period_len=short_period_len, kernel_size=kernel_size,
        I_st=r(ks[0], (1, 1, 1, short_period_len)),
        E_st=r(ks[1], (pred_len, 1, 1, short_period_len)),
        E_si=r(ks[2], (pred_len, 1, 1, short_period_len)),
        I_se=r(ks[3], (NC, NC, 1, 1)),
        E_se=r(ks[4], (PC, NC, 1, 1)),
        conv1_w=r(ks[5], (C, C8, 1, kernel_size)), conv1_b=r(ks[6], (C,)),
        conv2_w=r(ks[7], (C, C8, 1, kernel_size)), conv2_b=r(ks[8], (C,)),
        conv3_w=r(ks[9], (C, C8, 1, kernel_size)), conv3_b=r(ks[10], (C,)),
        conv4_w=r(ks[11], (C, C, 1, 1)), conv4_b=r(ks[12], (C,)),
        res_w=r(ks[13], (C, C, 1, 1)), res_b=r(ks[14], (C,)),
        skip_w=r(ks[15], (C, C, 1, 1)), skip_b=r(ks[16], (C,)),
    )


# --------------------------------------------------------------------------
# Pure-JAX reference (mirrors the PyTorch forward) for verification
# --------------------------------------------------------------------------
def reference_forward(x, p):
    B, C, N, T = x.shape
    P, CL, L, K = p["pred_len"], p["cycle_len"], p["short_period_len"], p["kernel_size"]
    NC = T // CL
    i_se = jax.nn.softmax(p["I_se"], axis=1)[:, :, 0, 0]
    e_se = jax.nn.softmax(p["E_se"], axis=1)[:, :, 0, 0]
    i_st = jax.nn.softmax(p["I_st"], axis=-1)[0, 0, 0, :]
    e_st = jax.nn.softmax(p["E_st"], axis=-1)[:, 0, 0, :]
    e_si = jax.nn.softmax(p["E_si"], axis=-1)[:, 0, 0, :]

    mu_lt = jnp.mean(x, -1, keepdims=True)
    var_lt = jnp.mean(x ** 2, -1, keepdims=True) - mu_lt ** 2 + EPS
    r_lt = (x - mu_lt) / jnp.sqrt(var_lt)
    mu_lt_f = jnp.broadcast_to(mu_lt, x.shape)
    hat_mu_lt = jnp.broadcast_to(mu_lt, (B, C, N, P))
    hat_r_lt = jnp.broadcast_to(r_lt[..., -1:], (B, C, N, P))

    xr = x.reshape(B, C, N, NC, CL)
    mu_se = jnp.einsum('ik,bcnkp->bcnip', i_se, xr).reshape(B, C, N, T)
    var_se = jnp.einsum('ik,bcnkp->bcnip', i_se, xr ** 2).reshape(B, C, N, T) - mu_se ** 2 + EPS
    r_se = (x - mu_se) / jnp.sqrt(var_se)
    hat_mu_se = jnp.einsum('ik,bcnkp->bcnip', e_se,
                           mu_se.reshape(B, C, N, NC, CL)).reshape(B, C, N, -1)[..., :P]
    hat_r_se = jnp.einsum('ik,bcnkp->bcnip', e_se,
                          r_se.reshape(B, C, N, NC, CL)).reshape(B, C, N, -1)[..., :P]

    xpad = jnp.pad(x, ((0, 0), (0, 0), (0, 0), (L - 1, 0)))
    mu_st = sum(i_st[j] * xpad[..., j:j + T] for j in range(L))
    var_st = sum(i_st[j] * xpad[..., j:j + T] ** 2 for j in range(L)) - mu_st ** 2 + EPS
    r_st = (x - mu_st) / jnp.sqrt(var_st)
    hat_mu_st = jnp.einsum('pj,bcnj->bcnp', e_st, mu_st[..., T - L:])
    hat_r_st = jnp.einsum('pj,bcnj->bcnp', e_st, r_st[..., T - L:])

    corr = jnp.matmul(r_st, jnp.swapaxes(r_st, -1, -2))
    G = jnp.mean(corr / T, axis=1, keepdims=True)
    Gs = jax.nn.softmax(G * 10.0, axis=-1)
    mu_si = jnp.matmul(Gs, r_st)
    var_si = jnp.matmul(Gs, r_st ** 2) - mu_si ** 2 + EPS
    r_si = (r_st - mu_si) / jnp.sqrt(var_si)
    hat_mu_si = jnp.einsum('pj,bcnj->bcnp', e_si, mu_si[..., T - L:])
    hat_r_si = jnp.einsum('pj,bcnj->bcnp', e_si, r_si[..., T - L:])

    s = jnp.concatenate([r_lt, mu_lt_f, r_se, mu_se, r_st, mu_st, r_si, mu_si], axis=1)
    hs = jnp.concatenate([hat_r_lt, hat_mu_lt, hat_r_se, hat_mu_se,
                          hat_r_st, hat_mu_st, hat_r_si, hat_mu_si], axis=1)
    xx = jnp.concatenate([s, hs], axis=-1)
    xx = jnp.pad(xx, ((0, 0), (0, 0), (0, 0), (K - 1, 0)))
    t_out = T + P

    def conv1k(w4d, b):
        w = w4d[:, :, 0, :]
        out = sum(jnp.einsum('oc,bcnt->bont', w[:, :, k], xx[..., k:k + t_out])
                  for k in range(K))
        return out + b[None, :, None, None]

    x1 = conv1k(p["conv1_w"], p["conv1_b"])
    x2 = conv1k(p["conv2_w"], p["conv2_b"])
    x3 = conv1k(p["conv3_w"], p["conv3_b"])
    z = jnp.einsum('oc,bcnt->bont', p["conv4_w"][:, :, 0, 0], x1 * x2) \
        + p["conv4_b"][None, :, None, None] + x3
    xz = z[..., :T]
    sp = z[..., T:]
    xz = jnp.einsum('oc,bcnt->bont', p["res_w"][:, :, 0, 0], xz) + p["res_b"][None, :, None, None]
    sp = jnp.einsum('oc,bcnt->bont', p["skip_w"][:, :, 0, 0], sp) + p["skip_b"][None, :, None, None]
    return xz, sp


if __name__ == "__main__":
    B, d_model, series_num, seq_len = 2, 4, 5, 16
    pred_len, cycle_len, short_period_len, kernel_size = 4, 4, 4, 3

    key = jax.random.PRNGKey(0)
    kx, kp = jax.random.split(key)
    x = jax.random.normal(kx, (B, d_model, series_num, seq_len)).astype(F32)
    params = init_params(kp, d_model, seq_len, pred_len, cycle_len,
                         short_period_len, kernel_size)

    x_z, s = encoder_layer_forward(x, params)
    jax.block_until_ready((x_z, s))

    # Golden reference at full f32 matmul precision.  The Pallas conv head runs
    # at default MXU precision (per perf guidance), so a ~1% tolerance is used.
    with jax.default_matmul_precision("highest"):
        x_z_ref, s_ref = reference_forward(x, params)
    jax.block_until_ready((x_z_ref, s_ref))

    assert x_z.shape == (B, d_model, series_num, seq_len)
    assert s.shape == (B, d_model, series_num, pred_len)
    assert np.allclose(np.asarray(x_z), np.asarray(x_z_ref), rtol=2e-2, atol=2e-2), \
        "x_z mismatch vs reference"
    assert np.allclose(np.asarray(s), np.asarray(s_ref), rtol=2e-2, atol=2e-2), \
        "s mismatch vs reference"
    print("KERNEL_OK")
</pallas_src>

<mosaic_0001>
module attributes {stable_mosaic.version = 11 : i64} {
  func.func @_encoder_kernel(%arg0: i32, %arg1: memref<1x4x80xf32, #tpu.memory_space<vmem>>, %arg2: memref<80x80xf32, #tpu.memory_space<vmem>>, %arg3: memref<80x20xf32, #tpu.memory_space<vmem>>, %arg4: memref<80x80xf32, #tpu.memory_space<vmem>>, %arg5: memref<80x20xf32, #tpu.memory_space<vmem>>, %arg6: memref<80x80xf32, #tpu.memory_space<vmem>>, %arg7: memref<80x20xf32, #tpu.memory_space<vmem>>, %arg8: memref<80x20xf32, #tpu.memory_space<vmem>>, %arg9: memref<80x5xf32, #tpu.memory_space<vmem>>, %arg10: memref<80x80xf32, #tpu.memory_space<vmem>>, %arg11: memref<3x80x100xf32, #tpu.memory_space<vmem>>, %arg12: memref<3x20x100xf32, #tpu.memory_space<vmem>>, %arg13: memref<100x80xf32, #tpu.memory_space<vmem>>, %arg14: memref<100x20xf32, #tpu.memory_space<vmem>>, %arg15: memref<3x12x32xf32, #tpu.memory_space<vmem>>, %arg16: memref<12x1xf32, #tpu.memory_space<vmem>>, %arg17: memref<4x4xf32, #tpu.memory_space<vmem>>, %arg18: memref<4x1xf32, #tpu.memory_space<vmem>>, %arg19: memref<4x4xf32, #tpu.memory_space<vmem>>, %arg20: memref<4x1xf32, #tpu.memory_space<vmem>>, %arg21: memref<4x4xf32, #tpu.memory_space<vmem>>, %arg22: memref<4x1xf32, #tpu.memory_space<vmem>>, %arg23: memref<1x4x80xf32, #tpu.memory_space<vmem>>, %arg24: memref<1x4x20xf32, #tpu.memory_space<vmem>>, %arg25: memref<32x80xf32, #tpu.memory_space<vmem>>, %arg26: memref<32x20xf32, #tpu.memory_space<vmem>>) attributes {dimension_semantics = [#tpu.dimension_semantics<parallel>], iteration_bounds = array<i64: 2>, scalar_prefetch = 0 : i64, scratch_operands = 2 : i64, tpu.core_type = #tpu.core_type<tc>, window_params = [{transform_indices = @transform_0, window_bounds = array<i64: 1, 4, 80>}, {pipeline_mode = #tpu.pipeline_mode<synchronous>, transform_indices = @transform_1, window_bounds = array<i64: 80, 80>}, {pipeline_mode = #tpu.pipeline_mode<synchronous>, transform_indices = @transform_2, window_bounds = array<i64: 80, 20>}, {pipeline_mode = #tpu.pipeline_mode<synchronous>, transform_indices = @transform_3, window_bounds = array<i64: 80, 80>}, {pipeline_mode = #tpu.pipeline_mode<synchronous>, transform_indices = @transform_4, window_bounds = array<i64: 80, 20>}, {pipeline_mode = #tpu.pipeline_mode<synchronous>, transform_indices = @transform_5, window_bounds = array<i64: 80, 80>}, {pipeline_mode = #tpu.pipeline_mode<synchronous>, transform_indices = @transform_6, window_bounds = array<i64: 80, 20>}, {pipeline_mode = #tpu.pipeline_mode<synchronous>, transform_indices = @transform_7, window_bounds = array<i64: 80, 20>}, {pipeline_mode = #tpu.pipeline_mode<synchronous>, transform_indices = @transform_8, window_bounds = array<i64: 80, 5>}, {pipeline_mode = #tpu.pipeline_mode<synchronous>, transform_indices = @transform_9, window_bounds = array<i64: 80, 80>}, {pipeline_mode = #tpu.pipeline_mode<synchronous>, transform_indices = @transform_10, window_bounds = array<i64: 3, 80, 100>}, {pipeline_mode = #tpu.pipeline_mode<synchronous>, transform_indices = @transform_11, window_bounds = array<i64: 3, 20, 100>}, {pipeline_mode = #tpu.pipeline_mode<synchronous>, transform_indices = @transform_12, window_bounds = array<i64: 100, 80>}, {pipeline_mode = #tpu.pipeline_mode<synchronous>, transform_indices = @transform_13, window_bounds = array<i64: 100, 20>}, {pipeline_mode = #tpu.pipeline_mode<synchronous>, transform_indices = @transform_14, window_bounds = array<i64: 3, 12, 32>}, {pipeline_mode = #tpu.pipeline_mode<synchronous>, transform_indices = @transform_15, window_bounds = array<i64: 12, 1>}, {pipeline_mode = #tpu.pipeline_mode<synchronous>, transform_indices = @transform_16, window_bounds = array<i64: 4, 4>}, {pipeline_mode = #tpu.pipeline_mode<synchronous>, transform_indices = @transform_17, window_bounds = array<i64: 4, 1>}, {pipeline_mode = #tpu.pipeline_mode<synchronous>, transform_indices = @transform_18, window_bounds = array<i64: 4, 4>}, {pipeline_mode = #tpu.pipeline_mode<synchronous>, transform_indices = @transform_19, window_bounds = array<i64: 4, 1>}, {pipeline_mode = #tpu.pipeline_mode<synchronous>, transform_indices = @transform_20, window_bounds = array<i64: 4, 4>}, {pipeline_mode = #tpu.pipeline_mode<synchronous>, transform_indices = @transform_21, window_bounds = array<i64: 4, 1>}, {transform_indices = @transform_22, window_bounds = array<i64: 1, 4, 80>}, {transform_indices = @transform_23, window_bounds = array<i64: 1, 4, 20>}]} {
    %c0 = arith.constant 0 : index
    %c0_0 = arith.constant 0 : index
    %c0_1 = arith.constant 0 : index
    %0 = vector.load %arg1[%c0, %c0_0, %c0_1] : memref<1x4x80xf32, #tpu.memory_space<vmem>>, vector<1x4x80xf32>
    %1 = vector.shape_cast %0 : vector<1x4x80xf32> to vector<4x80xf32>
    %2 = arith.mulf %1, %1 : vector<4x80xf32>
    %c0_2 = arith.constant 0 : index
    %c0_3 = arith.constant 0 : index
    %3 = vector.load %arg2[%c0_2, %c0_3] : memref<80x80xf32, #tpu.memory_space<vmem>>, vector<80x80xf32>
    %cst = arith.constant dense<0.000000e+00> : vector<4x80xf32>
    %4 = tpu.matmul %1, %3, %cst {dimension_numbers = #tpu.dot_dimension_numbers<[1], [0], [0], [1], [0, 0, 1, 1], [], []>, precision = #tpu.contract_precision<fp32>} : vector<4x80xf32>, vector<80x80xf32>, vector<4x80xf32> -> vector<4x80xf32>
    %cst_4 = arith.constant dense<0.000000e+00> : vector<4x80xf32>
    %5 = tpu.matmul %2, %3, %cst_4 {dimension_numbers = #tpu.dot_dimension_numbers<[1], [0], [0], [1], [0, 0, 1, 1], [], []>, precision = #tpu.contract_precision<fp32>} : vector<4x80xf32>, vector<80x80xf32>, vector<4x80xf32> -> vector<4x80xf32>
    %6 = arith.mulf %4, %4 : vector<4x80xf32>
    %7 = arith.subf %5, %6 : vector<4x80xf32>
    %cst_5 = arith.constant 9.99999974E-5 : f32
    %8 = vector.broadcast %cst_5 : f32 to vector<4x80xf32>
    %9 = arith.addf %7, %8 : vector<4x80xf32>
    %10 = arith.subf %1, %4 : vector<4x80xf32>
    %11 = math.rsqrt %9 : vector<4x80xf32>
    %12 = arith.mulf %10, %11 : vector<4x80xf32>
    %c0_6 = arith.constant 0 : index
    %c0_7 = arith.constant 0 : index
    %13 = vector.load %arg3[%c0_6, %c0_7] : memref<80x20xf32, #tpu.memory_space<vmem>>, vector<80x20xf32>
    %cst_8 = arith.constant dense<0.000000e+00> : vector<4x20xf32>
    %14 = tpu.matmul %12, %13, %cst_8 {dimension_numbers = #tpu.dot_dimension_numbers<[1], [0], [0], [1], [0, 0, 1, 1], [], []>, precision = #tpu.contract_precision<fp32>} : vector<4x80xf32>, vector<80x20xf32>, vector<4x20xf32> -> vector<4x20xf32>
    %cst_9 = arith.constant dense<0.000000e+00> : vector<4x20xf32>
    %15 = tpu.matmul %4, %13, %cst_9 {dimension_numbers = #tpu.dot_dimension_numbers<[1], [0], [0], [1], [0, 0, 1, 1], [], []>, precision = #tpu.contract_precision<fp32>} : vector<4x80xf32>, vector<80x20xf32>, vector<4x20xf32> -> vector<4x20xf32>
    %c0_10 = arith.constant 0 : index
    %c0_11 = arith.constant 0 : index
    %16 = vector.load %arg4[%c0_10, %c0_11] : memref<80x80xf32, #tpu.memory_space<vmem>>, vector<80x80xf32>
    %cst_12 = arith.constant dense<0.000000e+00> : vector<4x80xf32>
    %17 = tpu.matmul %1, %16, %cst_12 {dimension_numbers = #tpu.dot_dimension_numbers<[1], [0], [0], [1], [0, 0, 1, 1], [], []>, precision = #tpu.contract_precision<fp32>} : vector<4x80xf32>, vector<80x80xf32>, vector<4x80xf32> -> vector<4x80xf32>
    %cst_13 = arith.constant dense<0.000000e+00> : vector<4x80xf32>
    %18 = tpu.matmul %2, %16, %cst_13 {dimension_numbers = #tpu.dot_dimension_numbers<[1], [0], [0], [1], [0, 0, 1, 1], [], []>, precision = #tpu.contract_precision<fp32>} : vector<4x80xf32>, vector<80x80xf32>, vector<4x80xf32> -> vector<4x80xf32>
    %19 = arith.mulf %17, %17 : vector<4x80xf32>
    %20 = arith.subf %18, %19 : vector<4x80xf32>
    %cst_14 = arith.constant 9.99999974E-5 : f32
    %21 = vector.broadcast %cst_14 : f32 to vector<4x80xf32>
    %22 = arith.addf %20, %21 : vector<4x80xf32>
    %23 = arith.subf %1, %17 : vector<4x80xf32>
    %24 = math.rsqrt %22 : vector<4x80xf32>
    %25 = arith.mulf %23, %24 : vector<4x80xf32>
    %c0_15 = arith.constant 0 : index
    %c0_16 = arith.constant 0 : index
    %26 = vector.load %arg5[%c0_15, %c0_16] : memref<80x20xf32, #tpu.memory_space<vmem>>, vector<80x20xf32>
    %cst_17 = arith.constant dense<0.000000e+00> : vector<4x20xf32>
    %27 = tpu.matmul %25, %26, %cst_17 {dimension_numbers = #tpu.dot_dimension_numbers<[1], [0], [0], [1], [0, 0, 1, 1], [], []>, precision = #tpu.contract_precision<fp32>} : vector<4x80xf32>, vector<80x20xf32>, vector<4x20xf32> -> vector<4x20xf32>
    %cst_18 = arith.constant dense<0.000000e+00> : vector<4x20xf32>
    %28 = tpu.matmul %17, %26, %cst_18 {dimension_numbers = #tpu.dot_dimension_numbers<[1], [0], [0], [1], [0, 0, 1, 1], [], []>, precision = #tpu.contract_precision<fp32>} : vector<4x80xf32>, vector<80x20xf32>, vector<4x20xf32> -> vector<4x20xf32>
    %c0_19 = arith.constant 0 : index
    %c0_20 = arith.constant 0 : index
    %29 = vector.load %arg6[%c0_19, %c0_20] : memref<80x80xf32, #tpu.memory_space<vmem>>, vector<80x80xf32>
    %cst_21 = arith.constant dense<0.000000e+00> : vector<4x80xf32>
    %30 = tpu.matmul %1, %29, %cst_21 {dimension_numbers = #tpu.dot_dimension_numbers<[1], [0], [0], [1], [0, 0, 1, 1], [], []>, precision = #tpu.contract_precision<fp32>} : vector<4x80xf32>, vector<80x80xf32>, vector<4x80xf32> -> vector<4x80xf32>
    %cst_22 = arith.constant dense<0.000000e+00> : vector<4x80xf32>
    %31 = tpu.matmul %2, %29, %cst_22 {dimension_numbers = #tpu.dot_dimension_numbers<[1], [0], [0], [1], [0, 0, 1, 1], [], []>, precision = #tpu.contract_precision<fp32>} : vector<4x80xf32>, vector<80x80xf32>, vector<4x80xf32> -> vector<4x80xf32>
    %32 = arith.mulf %30, %30 : vector<4x80xf32>
    %33 = arith.subf %31, %32 : vector<4x80xf32>
    %cst_23 = arith.constant 9.99999974E-5 : f32
    %34 = vector.broadcast %cst_23 : f32 to vector<4x80xf32>
    %35 = arith.addf %33, %34 : vector<4x80xf32>
    %36 = arith.subf %1, %30 : vector<4x80xf32>
    %37 = math.rsqrt %35 : vector<4x80xf32>
    %38 = arith.mulf %36, %37 : vector<4x80xf32>
    %c0_24 = arith.constant 0 : index
    %c0_25 = arith.constant 0 : index
    %39 = vector.load %arg7[%c0_24, %c0_25] : memref<80x20xf32, #tpu.memory_space<vmem>>, vector<80x20xf32>
    %cst_26 = arith.constant dense<0.000000e+00> : vector<4x20xf32>
    %40 = tpu.matmul %38, %39, %cst_26 {dimension_numbers = #tpu.dot_dimension_numbers<[1], [0], [0], [1], [0, 0, 1, 1], [], []>, precision = #tpu.contract_precision<fp32>} : vector<4x80xf32>, vector<80x20xf32>, vector<4x20xf32> -> vector<4x20xf32>
    %cst_27 = arith.constant dense<0.000000e+00> : vector<4x20xf32>
    %41 = tpu.matmul %30, %39, %cst_27 {dimension_numbers = #tpu.dot_dimension_numbers<[1], [0], [0], [1], [0, 0, 1, 1], [], []>, precision = #tpu.contract_precision<fp32>} : vector<4x80xf32>, vector<80x20xf32>, vector<4x20xf32> -> vector<4x20xf32>
    %c0_28 = arith.constant 0 : index
    %c0_29 = arith.constant 0 : index
    %42 = vector.load %arg9[%c0_28, %c0_29] : memref<80x5xf32, #tpu.memory_space<vmem>>, vector<80x5xf32>
    %c0_30 = arith.constant 0 : index
    %c0_31 = arith.constant 0 : index
    %43 = vector.load %arg10[%c0_30, %c0_31] : memref<80x80xf32, #tpu.memory_space<vmem>>, vector<80x80xf32>
    %cst_32 = arith.constant dense<0.000000e+00> : vector<80x80xf32>
    %44 = tpu.matmul %38, %38, %cst_32 {dimension_numbers = #tpu.dot_dimension_numbers<[0], [0], [1], [1], [0, 1, 1, 1], [], []>, precision = #tpu.contract_precision<fp32>} : vector<4x80xf32>, vector<4x80xf32>, vector<80x80xf32> -> vector<80x80xf32>
    %45 = arith.mulf %44, %43 : vector<80x80xf32>
    %cst_33 = arith.constant dense<0.000000e+00> : vector<80x5xf32>
    %46 = tpu.matmul %45, %42, %cst_33 {dimension_numbers = #tpu.dot_dimension_numbers<[1], [0], [0], [1], [0, 0, 1, 1], [], []>, precision = #tpu.contract_precision<fp32>} : vector<80x80xf32>, vector<80x5xf32>, vector<80x5xf32> -> vector<80x5xf32>
    %cst_34 = arith.constant dense<0.000000e+00> : vector<5x5xf32>
    %47 = tpu.matmul %42, %46, %cst_34 {dimension_numbers = #tpu.dot_dimension_numbers<[0], [0], [1], [1], [0, 1, 1, 1], [], []>, precision = #tpu.contract_precision<fp32>} : vector<80x5xf32>, vector<80x5xf32>, vector<5x5xf32> -> vector<5x5xf32>
    %cst_35 = arith.constant 1.562500e-01 : f32
    %48 = vector.broadcast %cst_35 : f32 to vector<5x5xf32>
    %49 = arith.mulf %47, %48 : vector<5x5xf32>
    %cst_36 = arith.constant dense<0xFF800000> : vector<5xf32>
    %50 = vector.multi_reduction <maximumf>, %49, %cst_36 [1] : vector<5x5xf32> to vector<5xf32>
    %51 = vector.shape_cast %50 : vector<5xf32> to vector<5x1xf32>
    %52 = vector.broadcast %51 : vector<5x1xf32> to vector<5x5xf32>
    %53 = arith.subf %49, %52 : vector<5x5xf32>
    %54 = math.exp %53 : vector<5x5xf32>
    %cst_37 = arith.constant dense<0.000000e+00> : vector<5xf32>
    %55 = vector.multi_reduction <add>, %54, %cst_37 [1] : vector<5x5xf32> to vector<5xf32>
    %56 = vector.shape_cast %55 : vector<5xf32> to vector<5x1xf32>
    %57 = vector.broadcast %56 : vector<5x1xf32> to vector<5x5xf32>
    %58 = arith.divf %54, %57 : vector<5x5xf32>
    %cst_38 = arith.constant dense<0.000000e+00> : vector<80x5xf32>
    %59 = tpu.matmul %42, %58, %cst_38 {dimension_numbers = #tpu.dot_dimension_numbers<[1], [1], [0], [0], [0, 0, 1, 0], [], []>, precision = #tpu.contract_precision<fp32>} : vector<80x5xf32>, vector<5x5xf32>, vector<80x5xf32> -> vector<80x5xf32>
    %cst_39 = arith.constant dense<0.000000e+00> : vector<80x80xf32>
    %60 = tpu.matmul %59, %42, %cst_39 {dimension_numbers = #tpu.dot_dimension_numbers<[1], [1], [0], [0], [0, 0, 1, 0], [], []>, precision = #tpu.contract_precision<fp32>} : vector<80x5xf32>, vector<80x5xf32>, vector<80x80xf32> -> vector<80x80xf32>
    %61 = arith.mulf %60, %43 : vector<80x80xf32>
    %cst_40 = arith.constant dense<0.000000e+00> : vector<4x80xf32>
    %62 = tpu.matmul %38, %61, %cst_40 {dimension_numbers = #tpu.dot_dimension_numbers<[1], [0], [0], [1], [0, 0, 1, 1], [], []>, precision = #tpu.contract_precision<fp32>} : vector<4x80xf32>, vector<80x80xf32>, vector<4x80xf32> -> vector<4x80xf32>
    %63 = arith.mulf %38, %38 : vector<4x80xf32>
    %cst_41 = arith.constant dense<0.000000e+00> : vector<4x80xf32>
    %64 = tpu.matmul %63, %61, %cst_41 {dimension_numbers = #tpu.dot_dimension_numbers<[1], [0], [0], [1], [0, 0, 1, 1], [], []>, precision = #tpu.contract_precision<fp32>} : vector<4x80xf32>, vector<80x80xf32>, vector<4x80xf32> -> vector<4x80xf32>
    %65 = arith.mulf %62, %62 : vector<4x80xf32>
    %66 = arith.subf %64, %65 : vector<4x80xf32>
    %cst_42 = arith.constant 9.99999974E-5 : f32
    %67 = vector.broadcast %cst_42 : f32 to vector<4x80xf32>
    %68 = arith.addf %66, %67 : vector<4x80xf32>
    %69 = arith.subf %38, %62 : vector<4x80xf32>
    %70 = math.rsqrt %68 : vector<4x80xf32>
    %71 = arith.mulf %69, %70 : vector<4x80xf32>
    %c0_43 = arith.constant 0 : index
    %c0_44 = arith.constant 0 : index
    %72 = vector.load %arg8[%c0_43, %c0_44] : memref<80x20xf32, #tpu.memory_space<vmem>>, vector<80x20xf32>
    %cst_45 = arith.constant dense<0.000000e+00> : vector<4x20xf32>
    %73 = tpu.matmul %71, %72, %cst_45 {dimension_numbers = #tpu.dot_dimension_numbers<[1], [0], [0], [1], [0, 0, 1, 1], [], []>, precision = #tpu.contract_precision<fp32>} : vector<4x80xf32>, vector<80x20xf32>, vector<4x20xf32> -> vector<4x20xf32>
    %cst_46 = arith.constant dense<0.000000e+00> : vector<4x20xf32>
    %74 = tpu.matmul %62, %72, %cst_46 {dimension_numbers = #tpu.dot_dimension_numbers<[1], [0], [0], [1], [0, 0, 1, 1], [], []>, precision = #tpu.contract_precision<fp32>} : vector<4x80xf32>, vector<80x20xf32>, vector<4x20xf32> -> vector<4x20xf32>
    %c0_47 = arith.constant 0 : index
    %c0_48 = arith.constant 0 : index
    %75 = vector.load %arg25[%c0_47, %c0_48] : memref<32x80xf32, #tpu.memory_space<vmem>>, vector<4x80xf32>
    tpu.vector_store %arg25[%c0_47, %c0_48], %12 {strides = array<i32>} : memref<32x80xf32, #tpu.memory_space<vmem>>, vector<4x80xf32>,
    %c0_49 = arith.constant 0 : index
    %c0_50 = arith.constant 0 : index
    %76 = vector.load %arg26[%c0_49, %c0_50] : memref<32x20xf32, #tpu.memory_space<vmem>>, vector<4x20xf32>
    tpu.vector_store %arg26[%c0_49, %c0_50], %14 {strides = array<i32>} : memref<32x20xf32, #tpu.memory_space<vmem>>, vector<4x20xf32>,
    %c4 = arith.constant 4 : index
    %c0_51 = arith.constant 0 : index
    %77 = vector.load %arg25[%c4, %c0_51] : memref<32x80xf32, #tpu.memory_space<vmem>>, vector<4x80xf32>
    tpu.vector_store %arg25[%c4, %c0_51], %4 {strides = array<i32>} : memref<32x80xf32, #tpu.memory_space<vmem>>, vector<4x80xf32>,
    %c4_52 = arith.constant 4 : index
    %c0_53 = arith.constant 0 : index
    %78 = vector.load %arg26[%c4_52, %c0_53] : memref<32x20xf32, #tpu.memory_space<vmem>>, vector<4x20xf32>
    tpu.vector_store %arg26[%c4_52, %c0_53], %15 {strides = array<i32>} : memref<32x20xf32, #tpu.memory_space<vmem>>, vector<4x20xf32>,
    %c8 = arith.constant 8 : index
    %c0_54 = arith.constant 0 : index
    %79 = vector.load %arg25[%c8, %c0_54] : memref<32x80xf32, #tpu.memory_space<vmem>>, vector<4x80xf32>
    tpu.vector_store %arg25[%c8, %c0_54], %25 {strides = array<i32>} : memref<32x80xf32, #tpu.memory_space<vmem>>, vector<4x80xf32>,
    %c8_55 = arith.constant 8 : index
    %c0_56 = arith.constant 0 : index
    %80 = vector.load %arg26[%c8_55, %c0_56] : memref<32x20xf32, #tpu.memory_space<vmem>>, vector<4x20xf32>
    tpu.vector_store %arg26[%c8_55, %c0_56], %27 {strides = array<i32>} : memref<32x20xf32, #tpu.memory_space<vmem>>, vector<4x20xf32>,
    %c12 = arith.constant 12 : index
    %c0_57 = arith.constant 0 : index
    %81 = vector.load %arg25[%c12, %c0_57] : memref<32x80xf32, #tpu.memory_space<vmem>>, vector<4x80xf32>
    tpu.vector_store %arg25[%c12, %c0_57], %17 {strides = array<i32>} : memref<32x80xf32, #tpu.memory_space<vmem>>, vector<4x80xf32>,
    %c12_58 = arith.constant 12 : index
    %c0_59 = arith.constant 0 : index
    %82 = vector.load %arg26[%c12_58, %c0_59] : memref<32x20xf32, #tpu.memory_space<vmem>>, vector<4x20xf32>
    tpu.vector_store %arg26[%c12_58, %c0_59], %28 {strides = array<i32>} : memref<32x20xf32, #tpu.memory_space<vmem>>, vector<4x20xf32>,
    %c16 = arith.constant 16 : index
    %c0_60 = arith.constant 0 : index
    %83 = vector.load %arg25[%c16, %c0_60] : memref<32x80xf32, #tpu.memory_space<vmem>>, vector<4x80xf32>
    tpu.vector_store %arg25[%c16, %c0_60], %38 {strides = array<i32>} : memref<32x80xf32, #tpu.memory_space<vmem>>, vector<4x80xf32>,
    %c16_61 = arith.constant 16 : index
    %c0_62 = arith.constant 0 : index
    %84 = vector.load %arg26[%c16_61, %c0_62] : memref<32x20xf32, #tpu.memory_space<vmem>>, vector<4x20xf32>
    tpu.vector_store %arg26[%c16_61, %c0_62], %40 {strides = array<i32>} : memref<32x20xf32, #tpu.memory_space<vmem>>, vector<4x20xf32>,
    %c20 = arith.constant 20 : index
    %c0_63 = arith.constant 0 : index
    %85 = vector.load %arg25[%c20, %c0_63] : memref<32x80xf32, #tpu.memory_space<vmem>>, vector<4x80xf32>
    tpu.vector_store %arg25[%c20, %c0_63], %30 {strides = array<i32>} : memref<32x80xf32, #tpu.memory_space<vmem>>, vector<4x80xf32>,
    %c20_64 = arith.constant 20 : index
    %c0_65 = arith.constant 0 : index
    %86 = vector.load %arg26[%c20_64, %c0_65] : memref<32x20xf32, #tpu.memory_space<vmem>>, vector<4x20xf32>
    tpu.vector_store %arg26[%c20_64, %c0_65], %41 {strides = array<i32>} : memref<32x20xf32, #tpu.memory_space<vmem>>, vector<4x20xf32>,
    %c24 = arith.constant 24 : index
    %c0_66 = arith.constant 0 : index
    %87 = vector.load %arg25[%c24, %c0_66] : memref<32x80xf32, #tpu.memory_space<vmem>>, vector<4x80xf32>
    tpu.vector_store %arg25[%c24, %c0_66], %71 {strides = array<i32>} : memref<32x80xf32, #tpu.memory_space<vmem>>, vector<4x80xf32>,
    %c24_67 = arith.constant 24 : index
    %c0_68 = arith.constant 0 : index
    %88 = vector.load %arg26[%c24_67, %c0_68] : memref<32x20xf32, #tpu.memory_space<vmem>>, vector<4x20xf32>
    tpu.vector_store %arg26[%c24_67, %c0_68], %73 {strides = array<i32>} : memref<32x20xf32, #tpu.memory_space<vmem>>, vector<4x20xf32>,
    %c28 = arith.constant 28 : index
    %c0_69 = arith.constant 0 : index
    %89 = vector.load %arg25[%c28, %c0_69] : memref<32x80xf32, #tpu.memory_space<vmem>>, vector<4x80xf32>
    tpu.vector_store %arg25[%c28, %c0_69], %62 {strides = array<i32>} : memref<32x80xf32, #tpu.memory_space<vmem>>, vector<4x80xf32>,
    %c28_70 = arith.constant 28 : index
    %c0_71 = arith.constant 0 : index
    %90 = vector.load %arg26[%c28_70, %c0_71] : memref<32x20xf32, #tpu.memory_space<vmem>>, vector<4x20xf32>
    tpu.vector_store %arg26[%c28_70, %c0_71], %74 {strides = array<i32>} : memref<32x20xf32, #tpu.memory_space<vmem>>, vector<4x20xf32>,
    %c0_72 = arith.constant 0 : index
    %c0_73 = arith.constant 0 : index
    %91 = vector.load %arg25[%c0_72, %c0_73] : memref<32x80xf32, #tpu.memory_space<vmem>>, vector<32x80xf32>
    %c0_74 = arith.constant 0 : index
    %c0_75 = arith.constant 0 : index
    %92 = vector.load %arg26[%c0_74, %c0_75] : memref<32x20xf32, #tpu.memory_space<vmem>>, vector<32x20xf32>
    %c0_76 = arith.constant 0 : index
    %c0_77 = arith.constant 0 : index
    %93 = vector.load %arg16[%c0_76, %c0_77] : memref<12x1xf32, #tpu.memory_space<vmem>>, vector<12x1xf32>
    %c0_78 = arith.constant 0 : index
    %c0_79 = arith.constant 0 : index
    %c0_80 = arith.constant 0 : index
    %94 = vector.load %arg15[%c0_78, %c0_79, %c0_80] : memref<3x12x32xf32, #tpu.memory_space<vmem>>, vector<1x12x32xf32>
    %95 = vector.shape_cast %94 : vector<1x12x32xf32> to vector<12x32xf32>
    %cst_81 = arith.constant dense<0.000000e+00> : vector<12x80xf32>
    %96 = tpu.matmul %95, %91, %cst_81 {dimension_numbers = #tpu.dot_dimension_numbers<[1], [0], [0], [1], [0, 0, 1, 1], [], []>} : vector<12x32xf32>, vector<32x80xf32>, vector<12x80xf32> -> vector<12x80xf32>
    %c0_82 = arith.constant 0 : index
    %c0_83 = arith.constant 0 : index
    %c0_84 = arith.constant 0 : index
    %97 = vector.load %arg11[%c0_82, %c0_83, %c0_84] : memref<3x80x100xf32, #tpu.memory_space<vmem>>, vector<1x80x100xf32>
    %98 = vector.shape_cast %97 : vector<1x80x100xf32> to vector<80x100xf32>
    %cst_85 = arith.constant dense<0.000000e+00> : vector<12x100xf32>
    %99 = tpu.matmul %96, %98, %cst_85 {dimension_numbers = #tpu.dot_dimension_numbers<[1], [0], [0], [1], [0, 0, 1, 1], [], []>} : vector<12x80xf32>, vector<80x100xf32>, vector<12x100xf32> -> vector<12x100xf32>
    %100 = vector.broadcast %93 : vector<12x1xf32> to vector<12x100xf32>
    %101 = arith.addf %100, %99 : vector<12x100xf32>
    %cst_86 = arith.constant dense<0.000000e+00> : vector<12x20xf32>
    %102 = tpu.matmul %95, %92, %cst_86 {dimension_numbers = #tpu.dot_dimension_numbers<[1], [0], [0], [1], [0, 0, 1, 1], [], []>} : vector<12x32xf32>, vector<32x20xf32>, vector<12x20xf32> -> vector<12x20xf32>
    %c0_87 = arith.constant 0 : index
    %c0_88 = arith.constant 0 : index
    %c0_89 = arith.constant 0 : index
    %103 = vector.load %arg12[%c0_87, %c0_88, %c0_89] : memref<3x20x100xf32, #tpu.memory_space<vmem>>, vector<1x20x100xf32>
    %104 = vector.shape_cast %103 : vector<1x20x100xf32> to vector<20x100xf32>
    %cst_90 = arith.constant dense<0.000000e+00> : vector<12x100xf32>
    %105 = tpu.matmul %102, %104, %cst_90 {dimension_numbers = #tpu.dot_dimension_numbers<[1], [0], [0], [1], [0, 0, 1, 1], [], []>} : vector<12x20xf32>, vector<20x100xf32>, vector<12x100xf32> -> vector<12x100xf32>
    %106 = arith.addf %101, %105 : vector<12x100xf32>
    %c1 = arith.constant 1 : index
    %c0_91 = arith.constant 0 : index
    %c0_92 = arith.constant 0 : index
    %107 = vector.load %arg15[%c1, %c0_91, %c0_92] : memref<3x12x32xf32, #tpu.memory_space<vmem>>, vector<1x12x32xf32>
    %108 = vector.shape_cast %107 : vector<1x12x32xf32> to vector<12x32xf32>
    %cst_93 = arith.constant dense<0.000000e+00> : vector<12x80xf32>
    %109 = tpu.matmul %108, %91, %cst_93 {dimension_numbers = #tpu.dot_dimension_numbers<[1], [0], [0], [1], [0, 0, 1, 1], [], []>} : vector<12x32xf32>, vector<32x80xf32>, vector<12x80xf32> -> vector<12x80xf32>
    %c1_94 = arith.constant 1 : index
    %c0_95 = arith.constant 0 : index
    %c0_96 = arith.constant 0 : index
    %110 = vector.load %arg11[%c1_94, %c0_95, %c0_96] : memref<3x80x100xf32, #tpu.memory_space<vmem>>, vector<1x80x100xf32>
    %111 = vector.shape_cast %110 : vector<1x80x100xf32> to vector<80x100xf32>
    %cst_97 = arith.constant dense<0.000000e+00> : vector<12x100xf32>
    %112 = tpu.matmul %109, %111, %cst_97 {dimension_numbers = #tpu.dot_dimension_numbers<[1], [0], [0], [1], [0, 0, 1, 1], [], []>} : vector<12x80xf32>, vector<80x100xf32>, vector<12x100xf32> -> vector<12x100xf32>
    %113 = arith.addf %106, %112 : vector<12x100xf32>
    %cst_98 = arith.constant dense<0.000000e+00> : vector<12x20xf32>
    %114 = tpu.matmul %108, %92, %cst_98 {dimension_numbers = #tpu.dot_dimension_numbers<[1], [0], [0], [1], [0, 0, 1, 1], [], []>} : vector<12x32xf32>, vector<32x20xf32>, vector<12x20xf32> -> vector<12x20xf32>
    %c1_99 = arith.constant 1 : index
    %c0_100 = arith.constant 0 : index
    %c0_101 = arith.constant 0 : index
    %115 = vector.load %arg12[%c1_99, %c0_100, %c0_101] : memref<3x20x100xf32, #tpu.memory_space<vmem>>, vector<1x20x100xf32>
    %116 = vector.shape_cast %115 : vector<1x20x100xf32> to vector<20x100xf32>
    %cst_102 = arith.constant dense<0.000000e+00> : vector<12x100xf32>
    %117 = tpu.matmul %114, %116, %cst_102 {dimension_numbers = #tpu.dot_dimension_numbers<[1], [0], [0], [1], [0, 0, 1, 1], [], []>} : vector<12x20xf32>, vector<20x100xf32>, vector<12x100xf32> -> vector<12x100xf32>
    %118 = arith.addf %113, %117 : vector<12x100xf32>
    %c2 = arith.constant 2 : index
    %c0_103 = arith.constant 0 : index
    %c0_104 = arith.constant 0 : index
    %119 = vector.load %arg15[%c2, %c0_103, %c0_104] : memref<3x12x32xf32, #tpu.memory_space<vmem>>, vector<1x12x32xf32>
    %120 = vector.shape_cast %119 : vector<1x12x32xf32> to vector<12x32xf32>
    %cst_105 = arith.constant dense<0.000000e+00> : vector<12x80xf32>
    %121 = tpu.matmul %120, %91, %cst_105 {dimension_numbers = #tpu.dot_dimension_numbers<[1], [0], [0], [1], [0, 0, 1, 1], [], []>} : vector<12x32xf32>, vector<32x80xf32>, vector<12x80xf32> -> vector<12x80xf32>
    %c2_106 = arith.constant 2 : index
    %c0_107 = arith.constant 0 : index
    %c0_108 = arith.constant 0 : index
    %122 = vector.load %arg11[%c2_106, %c0_107, %c0_108] : memref<3x80x100xf32, #tpu.memory_space<vmem>>, vector<1x80x100xf32>
    %123 = vector.shape_cast %122 : vector<1x80x100xf32> to vector<80x100xf32>
    %cst_109 = arith.constant dense<0.000000e+00> : vector<12x100xf32>
    %124 = tpu.matmul %121, %123, %cst_109 {dimension_numbers = #tpu.dot_dimension_numbers<[1], [0], [0], [1], [0, 0, 1, 1], [], []>} : vector<12x80xf32>, vector<80x100xf32>, vector<12x100xf32> -> vector<12x100xf32>
    %125 = arith.addf %118, %124 : vector<12x100xf32>
    %cst_110 = arith.constant dense<0.000000e+00> : vector<12x20xf32>
    %126 = tpu.matmul %120, %92, %cst_110 {dimension_numbers = #tpu.dot_dimension_numbers<[1], [0], [0], [1], [0, 0, 1, 1], [], []>} : vector<12x32xf32>, vector<32x20xf32>, vector<12x20xf32> -> vector<12x20xf32>
    %c2_111 = arith.constant 2 : index
    %c0_112 = arith.constant 0 : index
    %c0_113 = arith.constant 0 : index
    %127 = vector.load %arg12[%c2_111, %c0_112, %c0_113] : memref<3x20x100xf32, #tpu.memory_space<vmem>>, vector<1x20x100xf32>
    %128 = vector.shape_cast %127 : vector<1x20x100xf32> to vector<20x100xf32>
    %cst_114 = arith.constant dense<0.000000e+00> : vector<12x100xf32>
    %129 = tpu.matmul %126, %128, %cst_114 {dimension_numbers = #tpu.dot_dimension_numbers<[1], [0], [0], [1], [0, 0, 1, 1], [], []>} : vector<12x20xf32>, vector<20x100xf32>, vector<12x100xf32> -> vector<12x100xf32>
    %130 = arith.addf %125, %129 : vector<12x100xf32>
    %131 = vector.extract_strided_slice %130 {offsets = [0, 0], sizes = [4, 100], strides = [1, 1]} : vector<12x100xf32> to vector<4x100xf32>
    %132 = vector.extract_strided_slice %130 {offsets = [4, 0], sizes = [4, 100], strides = [1, 1]} : vector<12x100xf32> to vector<4x100xf32>
    %133 = vector.extract_strided_slice %130 {offsets = [8, 0], sizes = [4, 100], strides = [1, 1]} : vector<12x100xf32> to vector<4x100xf32>
    %c0_115 = arith.constant 0 : index
    %c0_116 = arith.constant 0 : index
    %134 = vector.load %arg17[%c0_115, %c0_116] : memref<4x4xf32, #tpu.memory_space<vmem>>, vector<4x4xf32>
    %135 = arith.mulf %131, %132 : vector<4x100xf32>
    %cst_117 = arith.constant dense<0.000000e+00> : vector<4x100xf32>
    %136 = tpu.matmul %134, %135, %cst_117 {dimension_numbers = #tpu.dot_dimension_numbers<[1], [0], [0], [1], [0, 0, 1, 1], [], []>} : vector<4x4xf32>, vector<4x100xf32>, vector<4x100xf32> -> vector<4x100xf32>
    %c0_118 = arith.constant 0 : index
    %c0_119 = arith.constant 0 : index
    %137 = vector.load %arg18[%c0_118, %c0_119] : memref<4x1xf32, #tpu.memory_space<vmem>>, vector<4x1xf32>
    %138 = vector.broadcast %137 : vector<4x1xf32> to vector<4x100xf32>
    %139 = arith.addf %136, %138 : vector<4x100xf32>
    %140 = arith.addf %139, %133 : vector<4x100xf32>
    %c0_120 = arith.constant 0 : index
    %c0_121 = arith.constant 0 : index
    %141 = vector.load %arg13[%c0_120, %c0_121] : memref<100x80xf32, #tpu.memory_space<vmem>>, vector<100x80xf32>
    %cst_122 = arith.constant dense<0.000000e+00> : vector<4x80xf32>
    %142 = tpu.matmul %140, %141, %cst_122 {dimension_numbers = #tpu.dot_dimension_numbers<[1], [0], [0], [1], [0, 0, 1, 1], [], []>} : vector<4x100xf32>, vector<100x80xf32>, vector<4x80xf32> -> vector<4x80xf32>
    %c0_123 = arith.constant 0 : index
    %c0_124 = arith.constant 0 : index
    %143 = vector.load %arg14[%c0_123, %c0_124] : memref<100x20xf32, #tpu.memory_space<vmem>>, vector<100x20xf32>
    %cst_125 = arith.constant dense<0.000000e+00> : vector<4x20xf32>
    %144 = tpu.matmul %140, %143, %cst_125 {dimension_numbers = #tpu.dot_dimension_numbers<[1], [0], [0], [1], [0, 0, 1, 1], [], []>} : vector<4x100xf32>, vector<100x20xf32>, vector<4x20xf32> -> vector<4x20xf32>
    %c0_126 = arith.constant 0 : index
    %c0_127 = arith.constant 0 : index
    %145 = vector.load %arg19[%c0_126, %c0_127] : memref<4x4xf32, #tpu.memory_space<vmem>>, vector<4x4xf32>
    %cst_128 = arith.constant dense<0.000000e+00> : vector<4x80xf32>
    %146 = tpu.matmul %145, %142, %cst_128 {dimension_numbers = #tpu.dot_dimension_numbers<[1], [0], [0], [1], [0, 0, 1, 1], [], []>} : vector<4x4xf32>, vector<4x80xf32>, vector<4x80xf32> -> vector<4x80xf32>
    %c0_129 = arith.constant 0 : index
    %c0_130 = arith.constant 0 : index
    %147 = vector.load %arg20[%c0_129, %c0_130] : memref<4x1xf32, #tpu.memory_space<vmem>>, vector<4x1xf32>
    %148 = vector.broadcast %147 : vector<4x1xf32> to vector<4x80xf32>
    %149 = arith.addf %146, %148 : vector<4x80xf32>
    %c0_131 = arith.constant 0 : index
    %c0_132 = arith.constant 0 : index
    %c0_133 = arith.constant 0 : index
    %150 = vector.load %arg23[%c0_131, %c0_132, %c0_133] : memref<1x4x80xf32, #tpu.memory_space<vmem>>, vector<1x4x80xf32>
    %151 = vector.shape_cast %150 : vector<1x4x80xf32> to vector<4x80xf32>
    %152 = vector.shape_cast %149 : vector<4x80xf32> to vector<1x4x80xf32>
    tpu.vector_store %arg23[%c0_131, %c0_132, %c0_133], %152 {strides = array<i32>} : memref<1x4x80xf32, #tpu.memory_space<vmem>>, vector<1x4x80xf32>,
    %c0_134 = arith.constant 0 : index
    %c0_135 = arith.constant 0 : index
    %153 = vector.load %arg21[%c0_134, %c0_135] : memref<4x4xf32, #tpu.memory_space<vmem>>, vector<4x4xf32>
    %cst_136 = arith.constant dense<0.000000e+00> : vector<4x20xf32>
    %154 = tpu.matmul %153, %144, %cst_136 {dimension_numbers = #tpu.dot_dimension_numbers<[1], [0], [0], [1], [0, 0, 1, 1], [], []>} : vector<4x4xf32>, vector<4x20xf32>, vector<4x20xf32> -> vector<4x20xf32>
    %c0_137 = arith.constant 0 : index
    %c0_138 = arith.constant 0 : index
    %155 = vector.load %arg22[%c0_137, %c0_138] : memref<4x1xf32, #tpu.memory_space<vmem>>, vector<4x1xf32>
    %156 = vector.broadcast %155 : vector<4x1xf32> to vector<4x20xf32>
    %157 = arith.addf %154, %156 : vector<4x20xf32>
    %c0_139 = arith.constant 0 : index
    %c0_140 = arith.constant 0 : index
    %c0_141 = arith.constant 0 : index
    %158 = vector.load %arg24[%c0_139, %c0_140, %c0_141] : memref<1x4x20xf32, #tpu.memory_space<vmem>>, vector<1x4x20xf32>
    %159 = vector.shape_cast %158 : vector<1x4x20xf32> to vector<4x20xf32>
    %160 = vector.shape_cast %157 : vector<4x20xf32> to vector<1x4x20xf32>
    tpu.vector_store %arg24[%c0_139, %c0_140, %c0_141], %160 {strides = array<i32>} : memref<1x4x20xf32, #tpu.memory_space<vmem>>, vector<1x4x20xf32>,
    return
  }
  func.func @transform_0(%arg0: i32) -> (i32, i32, i32) {
    %c0_i32 = arith.constant 0 : i32
    %c0_i32_0 = arith.constant 0 : i32
    %c0_i32_1 = arith.constant 0 : i32
    return %arg0, %c0_i32, %c0_i32_0 : i32, i32, i32
  }
  func.func @transform_1(%arg0: i32) -> (i32, i32) {
    %c0_i32 = arith.constant 0 : i32
    %c0_i32_0 = arith.constant 0 : i32
    %c0_i32_1 = arith.constant 0 : i32
    return %c0_i32, %c0_i32_0 : i32, i32
  }
  func.func @transform_2(%arg0: i32) -> (i32, i32) {
    %c0_i32 = arith.constant 0 : i32
    %c0_i32_0 = arith.constant 0 : i32
    %c0_i32_1 = arith.constant 0 : i32
    return %c0_i32, %c0_i32_0 : i32, i32
  }
  func.func @transform_3(%arg0: i32) -> (i32, i32) {
    %c0_i32 = arith.constant 0 : i32
    %c0_i32_0 = arith.constant 0 : i32
    %c0_i32_1 = arith.constant 0 : i32
    return %c0_i32, %c0_i32_0 : i32, i32
  }
  func.func @transform_4(%arg0: i32) -> (i32, i32) {
    %c0_i32 = arith.constant 0 : i32
    %c0_i32_0 = arith.constant 0 : i32
    %c0_i32_1 = arith.constant 0 : i32
    return %c0_i32, %c0_i32_0 : i32, i32
  }
  func.func @transform_5(%arg0: i32) -> (i32, i32) {
    %c0_i32 = arith.constant 0 : i32
    %c0_i32_0 = arith.constant 0 : i32
    %c0_i32_1 = arith.constant 0 : i32
    return %c0_i32, %c0_i32_0 : i32, i32
  }
  func.func @transform_6(%arg0: i32) -> (i32, i32) {
    %c0_i32 = arith.constant 0 : i32
    %c0_i32_0 = arith.constant 0 : i32
    %c0_i32_1 = arith.constant 0 : i32
    return %c0_i32, %c0_i32_0 : i32, i32
  }
  func.func @transform_7(%arg0: i32) -> (i32, i32) {
    %c0_i32 = arith.constant 0 : i32
    %c0_i32_0 = arith.constant 0 : i32
    %c0_i32_1 = arith.constant 0 : i32
    return %c0_i32, %c0_i32_0 : i32, i32
  }
  func.func @transform_8(%arg0: i32) -> (i32, i32) {
    %c0_i32 = arith.constant 0 : i32
    %c0_i32_0 = arith.constant 0 : i32
    %c0_i32_1 = arith.constant 0 : i32
    return %c0_i32, %c0_i32_0 : i32, i32
  }
  func.func @transform_9(%arg0: i32) -> (i32, i32) {
    %c0_i32 = arith.constant 0 : i32
    %c0_i32_0 = arith.constant 0 : i32
    %c0_i32_1 = arith.constant 0 : i32
    return %c0_i32, %c0_i32_0 : i32, i32
  }
  func.func @transform_10(%arg0: i32) -> (i32, i32, i32) {
    %c0_i32 = arith.constant 0 : i32
    %c0_i32_0 = arith.constant 0 : i32
    %c0_i32_1 = arith.constant 0 : i32
    %c0_i32_2 = arith.constant 0 : i32
    return %c0_i32, %c0_i32_0, %c0_i32_1 : i32, i32, i32
  }
  func.func @transform_11(%arg0: i32) -> (i32, i32, i32) {
    %c0_i32 = arith.constant 0 : i32
    %c0_i32_0 = arith.constant 0 : i32
    %c0_i32_1 = arith.constant 0 : i32
    %c0_i32_2 = arith.constant 0 : i32
    return %c0_i32, %c0_i32_0, %c0_i32_1 : i32, i32, i32
  }
  func.func @transform_12(%arg0: i32) -> (i32, i32) {
    %c0_i32 = arith.constant 0 : i32
    %c0_i32_0 = arith.constant 0 : i32
    %c0_i32_1 = arith.constant 0 : i32
    return %c0_i32, %c0_i32_0 : i32, i32
  }
  func.func @transform_13(%arg0: i32) -> (i32, i32) {
    %c0_i32 = arith.constant 0 : i32
    %c0_i32_0 = arith.constant 0 : i32
    %c0_i32_1 = arith.constant 0 : i32
    return %c0_i32, %c0_i32_0 : i32, i32
  }
  func.func @transform_14(%arg0: i32) -> (i32, i32, i32) {
    %c0_i32 = arith.constant 0 : i32
    %c0_i32_0 = arith.constant 0 : i32
    %c0_i32_1 = arith.constant 0 : i32
    %c0_i32_2 = arith.constant 0 : i32
    return %c0_i32, %c0_i32_0, %c0_i32_1 : i32, i32, i32
  }
  func.func @transform_15(%arg0: i32) -> (i32, i32) {
    %c0_i32 = arith.constant 0 : i32
    %c0_i32_0 = arith.constant 0 : i32
    %c0_i32_1 = arith.constant 0 : i32
    return %c0_i32, %c0_i32_0 : i32, i32
  }
  func.func @transform_16(%arg0: i32) -> (i32, i32) {
    %c0_i32 = arith.constant 0 : i32
    %c0_i32_0 = arith.constant 0 : i32
    %c0_i32_1 = arith.constant 0 : i32
    return %c0_i32, %c0_i32_0 : i32, i32
  }
  func.func @transform_17(%arg0: i32) -> (i32, i32) {
    %c0_i32 = arith.constant 0 : i32
    %c0_i32_0 = arith.constant 0 : i32
    %c0_i32_1 = arith.constant 0 : i32
    return %c0_i32, %c0_i32_0 : i32, i32
  }
  func.func @transform_18(%arg0: i32) -> (i32, i32) {
    %c0_i32 = arith.constant 0 : i32
    %c0_i32_0 = arith.constant 0 : i32
    %c0_i32_1 = arith.constant 0 : i32
    return %c0_i32, %c0_i32_0 : i32, i32
  }
  func.func @transform_19(%arg0: i32) -> (i32, i32) {
    %c0_i32 = arith.constant 0 : i32
    %c0_i32_0 = arith.constant 0 : i32
    %c0_i32_1 = arith.constant 0 : i32
    return %c0_i32, %c0_i32_0 : i32, i32
  }
  func.func @transform_20(%arg0: i32) -> (i32, i32) {
    %c0_i32 = arith.constant 0 : i32
    %c0_i32_0 = arith.constant 0 : i32
    %c0_i32_1 = arith.constant 0 : i32
    return %c0_i32, %c0_i32_0 : i32, i32
  }
  func.func @transform_21(%arg0: i32) -> (i32, i32) {
    %c0_i32 = arith.constant 0 : i32
    %c0_i32_0 = arith.constant 0 : i32
    %c0_i32_1 = arith.constant 0 : i32
    return %c0_i32, %c0_i32_0 : i32, i32
  }
  func.func @transform_22(%arg0: i32) -> (i32, i32, i32) {
    %c0_i32 = arith.constant 0 : i32
    %c0_i32_0 = arith.constant 0 : i32
    %c0_i32_1 = arith.constant 0 : i32
    return %arg0, %c0_i32, %c0_i32_0 : i32, i32, i32
  }
  func.func @transform_23(%arg0: i32) -> (i32, i32, i32) {
    %c0_i32 = arith.constant 0 : i32
    %c0_i32_0 = arith.constant 0 : i32
    %c0_i32_1 = arith.constant 0 : i32
    return %arg0, %c0_i32, %c0_i32_0 : i32, i32, i32
  }
}

</mosaic_0001>

<llo_original>
// kernel: tpu_custom_call.1
$region0: #{tpu_custom_call.1}
  #allocation0 [shape = 'u32[]', space=smem, size = 0x4, offset = 0x4, fixed_abs, tag = 'smem constant byte address 0x4 - core index']
  #allocation1 [shape = 'u32[72,128]{1,0:T(1,128)}', space=vmem, size = 0x9000, scoped, tag = 'internal scratch']
  #allocation2 [shape = 'f32[32,80]{1,0:T(8,128)}', space=vmem, size = 0x4000, scoped, tag = 'scratch operand']
  #allocation3 [shape = 'f32[32,20]{1,0:T(8,128)}', space=vmem, size = 0x4000, scoped, tag = 'scratch operand']
  %s0 = inlined_call_operand.hbm [shape: f32[2,4,80], index: 0, kind: input, shape index: {}]
  %s1 = inlined_call_operand.vmem [shape: f32[80,80], index: 1, kind: input, shape index: {}]
  %s2 = inlined_call_operand.vmem [shape: f32[80,20], index: 2, kind: input, shape index: {}]
  %s3 = inlined_call_operand.vmem [shape: f32[80,80], index: 3, kind: input, shape index: {}]
  %s4 = inlined_call_operand.vmem [shape: f32[80,20], index: 4, kind: input, shape index: {}]
  %s5 = inlined_call_operand.vmem [shape: f32[80,80], index: 5, kind: input, shape index: {}]
  %s6 = inlined_call_operand.vmem [shape: f32[80,20], index: 6, kind: input, shape index: {}]
  %s7 = inlined_call_operand.vmem [shape: f32[80,20], index: 7, kind: input, shape index: {}]
  %s8 = inlined_call_operand.vmem [shape: f32[80,5], index: 8, kind: input, shape index: {}]
  %s9 = inlined_call_operand.vmem [shape: f32[80,80], index: 9, kind: input, shape index: {}]
  %s10 = inlined_call_operand.vmem [shape: f32[3,80,100], index: 10, kind: input, shape index: {}]
  %s11 = inlined_call_operand.vmem [shape: f32[3,20,100], index: 11, kind: input, shape index: {}]
  %s12 = inlined_call_operand.vmem [shape: f32[100,80], index: 12, kind: input, shape index: {}]
  %s13 = inlined_call_operand.vmem [shape: f32[100,20], index: 13, kind: input, shape index: {}]
  %s14 = inlined_call_operand.hbm [shape: f32[3,12,32], index: 14, kind: input, shape index: {}]
  %s15 = inlined_call_operand.vmem [shape: f32[12,1], index: 15, kind: input, shape index: {}]
  %s16 = inlined_call_operand.vmem [shape: f32[4,4], index: 16, kind: input, shape index: {}]
  %s17 = inlined_call_operand.vmem [shape: f32[4,1], index: 17, kind: input, shape index: {}]
  %s18 = inlined_call_operand.vmem [shape: f32[4,4], index: 18, kind: input, shape index: {}]
  %s19 = inlined_call_operand.vmem [shape: f32[4,1], index: 19, kind: input, shape index: {}]
  %s20 = inlined_call_operand.vmem [shape: f32[4,4], index: 20, kind: input, shape index: {}]
  %s21 = inlined_call_operand.vmem [shape: f32[4,1], index: 21, kind: input, shape index: {}]
  %s22 = inlined_call_operand.hbm [shape: f32[2,4,80], index: 22, kind: output, shape index: {0}]
  %s23 = inlined_call_operand.hbm [shape: f32[2,4,20], index: 23, kind: output, shape index: {1}]
  %24 = xla_tuple %s22, %s23
  %s25 = sld [smem:[#allocation0]]
  $region137: #{tpu_custom_call.1} parent=0
    _
  %s27 = ssub.s32 1, %s25
  %s28 = scalar_select 0, %s27, %s25
  $region1: #{tpu_custom_call.1} parent=0
    #allocation4 [shape = 'u8[4096]{0}', space=vmem, size = 0x1000, scoped, tag = 'input window, operand 0']
    #allocation5 [shape = 's32[2]{0}', space=sflag, size = 0x8, scoped, tag = 'scoped memory for tpu_custom_call.1']
    #allocation6 [shape = 's32[2]{0}', space=sflag, size = 0x8, scoped, tag = 'scoped memory for tpu_custom_call.1']
    #allocation7 [shape = 'u8[24576]{0}', space=vmem, size = 0x6000, scoped, tag = 'input window, operand 14, single buffered']
    #allocation8 [shape = 's32[1]{0}', space=sflag, size = 0x4, scoped, tag = 'scoped memory for tpu_custom_call.1']
    #allocation9 [shape = 'u8[4096]{0}', space=vmem, size = 0x1000, scoped, tag = 'output window, operand 0']
    #allocation10 [shape = 'u8[4096]{0}', space=vmem, size = 0x1000, scoped, tag = 'output window, operand 1']
    #allocation11 [shape = 's32[2]{0}', space=sflag, size = 0x8, scoped, tag = 'scoped memory for tpu_custom_call.1']
    %29 = vsyncpa [#allocation5], 0
    %s30 = scalar_lea.sflag [#allocation5], 1
    %31 = vsyncpa %s30, 0
    %32 = vsyncpa [#allocation8], 0
    %33 = vsyncpa [#allocation6], 0
    %s34 = scalar_lea.sflag [#allocation6], 1
    %35 = vsyncpa %s34, 0
    %36 = vsyncpa [#allocation11], 0
    %s37 = scalar_lea.sflag [#allocation11], 1
    %38 = vsyncpa %s37, 0
    loop: start=0, step=1, limit=4
    $region2: #{tpu_custom_call.1} parent=1 // loop_pre_header
      _
    $region3: #{tpu_custom_call.1} parent=1 // loop_header
      %s40 = sphi 0, %s44
      %p41 = scmp.ge.s32.totalorder %s40, 4
      %s50 = sphi 0, %s52
      %s53 = sphi 0, %s50
      %s54 = sphi 0, %s53
      %s70 = sphi 0, %s54
      %s74 = sphi 0, %s74
      %s76 = sphi 0, %s74
      %s77 = sphi 0, %s76
      %s91 = sphi 0, %s77
      %s95 = sphi 0, %s95
      %s97 = sphi 0, %s95
      %s98 = sphi 0, %s97
      %s112 = sphi 0, %s98
      %s116 = sphi 0, %s116
      %s118 = sphi 0, %s116
      %s119 = sphi 0, %s118
      %s133 = sphi 0, %s119
      %s137 = sphi 0, %s137
      %s139 = sphi 0, %s137
      %s140 = sphi 0, %s139
      %s154 = sphi 0, %s140
      %s158 = sphi 0, %s158
      %s160 = sphi 0, %s158
      %s161 = sphi 0, %s160
      %s175 = sphi 0, %s161
      %s179 = sphi 0, %s179
      %s181 = sphi 0, %s179
      %s182 = sphi 0, %s181
      %s196 = sphi 0, %s182
      %s200 = sphi 0, %s200
      %s202 = sphi 0, %s200
      %s203 = sphi 0, %s202
      %s217 = sphi 0, %s203
      %s221 = sphi 0, %s221
      %s223 = sphi 0, %s221
      %s224 = sphi 0, %s223
      %s238 = sphi 0, %s224
      %s242 = sphi 0, %s242
      %s244 = sphi 0, %s242
      %s245 = sphi 0, %s244
      %s259 = sphi 0, %s245
      %s263 = sphi 0, %s263
      %s265 = sphi 0, %s263
      %s266 = sphi 0, %s265
      %s280 = sphi 0, %s266
      %s284 = sphi 0, %s284
      %s286 = sphi 0, %s284
      %s287 = sphi 0, %s286
      %s301 = sphi 0, %s287
      %s305 = sphi 0, %s305
      %s307 = sphi 0, %s305
      %s308 = sphi 0, %s307
      %s322 = sphi 0, %s308
      %s326 = sphi 0, %s326
      %s328 = sphi 0, %s326
      %s329 = sphi 0, %s328
      %s343 = sphi 0, %s329
      %s347 = sphi 0, %s347
      %s349 = sphi 0, %s347
      %s350 = sphi 0, %s349
      %s364 = sphi 0, %s350
      %s368 = sphi 0, %s368
      %s370 = sphi 0, %s368
      %s371 = sphi 0, %s370
      %s385 = sphi 0, %s371
      %s389 = sphi 0, %s389
      %s391 = sphi 0, %s389
      %s392 = sphi 0, %s391
      %s406 = sphi 0, %s392
      %s410 = sphi 0, %s410
      %s412 = sphi 0, %s410
      %s413 = sphi 0, %s412
      %s427 = sphi 0, %s413
      %s431 = sphi 0, %s431
      %s433 = sphi 0, %s431
      %s434 = sphi 0, %s433
      %s448 = sphi 0, %s434
      %s452 = sphi 0, %s452
      %s454 = sphi 0, %s452
      %s455 = sphi 0, %s454
      %s469 = sphi 0, %s455
      %s473 = sphi 0, %s473
      %s475 = sphi 0, %s473
      %s476 = sphi 0, %s475
      %s490 = sphi 0, %s476
      %s494 = sphi 0, %s494
      %s496 = sphi 0, %s494
      %s497 = sphi 0, %s496
      %s511 = sphi 0, %s497
      %s517 = sphi 0, %s519
      %s520 = sphi 0, %s517
      %s521 = sphi 0, %s520
      %s537 = sphi 0, %s521
      %s543 = sphi 0, %s545
      %s546 = sphi 0, %s543
      %s547 = sphi 0, %s546
      %s563 = sphi 0, %s547
    $region4: #{tpu_custom_call.1} parent=1 // loop_header_branch
      %43 = sbr.rel (%p41) target = $region8
    $region5: #{tpu_custom_call.1} parent=1 // loop_body
      %s45 = ssub.s32 %s40, 1
      %s46 = ssub.s32 %s40, 2
      %s47 = sadd.s32 %s40, 1
      %s48 = ssub.s32 %s40, %s47
      %p49 = scmp.eq.s32.totalorder %s48, 0
      %s51 = sadd.s32 %s50, 1
      %s52 = scalar_select %p49, %s50, %s51
      %p55 = pneg %p49
      %p56 = scmp.eq.s32.totalorder %s40, 1
      %p57 = por %p55, %p56
      %p58 = scmp.ne.s32.totalorder %s50, %s53
      %p59 = scmp.eq.s32.totalorder %s40, 0
      %p60 = por %p58, %p59
      %p61 = scmp.ne.s32.totalorder %s50, %s53
      %p62 = scmp.eq.s32.totalorder %s45, 1
      %p63 = por %p61, %p62
      %p64 = scmp.ne.s32.totalorder %s53, %s54
      %p65 = scmp.eq.s32.totalorder %s45, 0
      %p66 = por %p64, %p65
      %p67 = scmp.ne.s32.totalorder %s53, %s54
      %p68 = scmp.eq.s32.totalorder %s46, 1
      %p69 = por %p67, %p68
      %p71 = scmp.ne.s32.totalorder %s54, %s70
      %p72 = scmp.eq.s32.totalorder %s46, 0
      %p73 = por %p71, %p72
      %s75 = sadd.s32 %s74, 1
      %p78 = scmp.eq.s32.totalorder %s40, 1
      %p79 = scmp.ne.s32.totalorder %s74, %s76
      %p80 = scmp.eq.s32.totalorder %s40, 0
      %p81 = por %p79, %p80
      %p82 = scmp.ne.s32.totalorder %s74, %s76
      %p83 = scmp.eq.s32.totalorder %s45, 1
      %p84 = por %p82, %p83
      %p85 = scmp.ne.s32.totalorder %s76, %s77
      %p86 = scmp.eq.s32.totalorder %s45, 0
      %p87 = por %p85, %p86
      %p88 = scmp.ne.s32.totalorder %s76, %s77
      %p89 = scmp.eq.s32.totalorder %s46, 1
      %p90 = por %p88, %p89
      %p92 = scmp.ne.s32.totalorder %s77, %s91
      %p93 = scmp.eq.s32.totalorder %s46, 0
      %p94 = por %p92, %p93
      %s96 = sadd.s32 %s95, 1
      %p99 = scmp.eq.s32.totalorder %s40, 1
      %p100 = scmp.ne.s32.totalorder %s95, %s97
      %p101 = scmp.eq.s32.totalorder %s40, 0
      %p102 = por %p100, %p101
      %p103 = scmp.ne.s32.totalorder %s95, %s97
      %p104 = scmp.eq.s32.totalorder %s45, 1
      %p105 = por %p103, %p104
      %p106 = scmp.ne.s32.totalorder %s97, %s98
      %p107 = scmp.eq.s32.totalorder %s45, 0
      %p108 = por %p106, %p107
      %p109 = scmp.ne.s32.totalorder %s97, %s98
      %p110 = scmp.eq.s32.totalorder %s46, 1
      %p111 = por %p109, %p110
      %p113 = scmp.ne.s32.totalorder %s98, %s112
      %p114 = scmp.eq.s32.totalorder %s46, 0
      %p115 = por %p113, %p114
      %s117 = sadd.s32 %s116, 1
      %p120 = scmp.eq.s32.totalorder %s40, 1
      %p121 = scmp.ne.s32.totalorder %s116, %s118
      %p122 = scmp.eq.s32.totalorder %s40, 0
      %p123 = por %p121, %p122
      %p124 = scmp.ne.s32.totalorder %s116, %s118
      %p125 = scmp.eq.s32.totalorder %s45, 1
      %p126 = por %p124, %p125
      %p127 = scmp.ne.s32.totalorder %s118, %s119
      %p128 = scmp.eq.s32.totalorder %s45, 0
      %p129 = por %p127, %p128
      %p130 = scmp.ne.s32.totalorder %s118, %s119
      %p131 = scmp.eq.s32.totalorder %s46, 1
      %p132 = por %p130, %p131
      %p134 = scmp.ne.s32.totalorder %s119, %s133
      %p135 = scmp.eq.s32.totalorder %s46, 0
      %p136 = por %p134, %p135
      %s138 = sadd.s32 %s137, 1
      %p141 = scmp.eq.s32.totalorder %s40, 1
      %p142 = scmp.ne.s32.totalorder %s137, %s139
      %p143 = scmp.eq.s32.totalorder %s40, 0
      %p144 = por %p142, %p143
      %p145 = scmp.ne.s32.totalorder %s137, %s139
      %p146 = scmp.eq.s32.totalorder %s45, 1
      %p147 = por %p145, %p146
      %p148 = scmp.ne.s32.totalorder %s139, %s140
      %p149 = scmp.eq.s32.totalorder %s45, 0
      %p150 = por %p148, %p149
      %p151 = scmp.ne.s32.totalorder %s139, %s140
      %p152 = scmp.eq.s32.totalorder %s46, 1
      %p153 = por %p151, %p152
      %p155 = scmp.ne.s32.totalorder %s140, %s154
      %p156 = scmp.eq.s32.totalorder %s46, 0
      %p157 = por %p155, %p156
      %s159 = sadd.s32 %s158, 1
      %p162 = scmp.eq.s32.totalorder %s40, 1
      %p163 = scmp.ne.s32.totalorder %s158, %s160
      %p164 = scmp.eq.s32.totalorder %s40, 0
      %p165 = por %p163, %p164
      %p166 = scmp.ne.s32.totalorder %s158, %s160
      %p167 = scmp.eq.s32.totalorder %s45, 1
      %p168 = por %p166, %p167
      %p169 = scmp.ne.s32.totalorder %s160, %s161
      %p170 = scmp.eq.s32.totalorder %s45, 0
      %p171 = por %p169, %p170
      %p172 = scmp.ne.s32.totalorder %s160, %s161
      %p173 = scmp.eq.s32.totalorder %s46, 1
      %p174 = por %p172, %p173
      %p176 = scmp.ne.s32.totalorder %s161, %s175
      %p177 = scmp.eq.s32.totalorder %s46, 0
      %p178 = por %p176, %p177
      %s180 = sadd.s32 %s179, 1
      %p183 = scmp.eq.s32.totalorder %s40, 1
      %p184 = scmp.ne.s32.totalorder %s179, %s181
      %p185 = scmp.eq.s32.totalorder %s40, 0
      %p186 = por %p184, %p185
      %p187 = scmp.ne.s32.totalorder %s179, %s181
      %p188 = scmp.eq.s32.totalorder %s45, 1
      %p189 = por %p187, %p188
      %p190 = scmp.ne.s32.totalorder %s181, %s182
      %p191 = scmp.eq.s32.totalorder %s45, 0
      %p192 = por %p190, %p191
      %p193 = scmp.ne.s32.totalorder %s181, %s182
      %p194 = scmp.eq.s32.totalorder %s46, 1
      %p195 = por %p193, %p194
      %p197 = scmp.ne.s32.totalorder %s182, %s196
      %p198 = scmp.eq.s32.totalorder %s46, 0
      %p199 = por %p197, %p198
      %s201 = sadd.s32 %s200, 1
      %p204 = scmp.eq.s32.totalorder %s40, 1
      %p205 = scmp.ne.s32.totalorder %s200, %s202
      %p206 = scmp.eq.s32.totalorder %s40, 0
      %p207 = por %p205, %p206
      %p208 = scmp.ne.s32.totalorder %s200, %s202
      %p209 = scmp.eq.s32.totalorder %s45, 1
      %p210 = por %p208, %p209
      %p211 = scmp.ne.s32.totalorder %s202, %s203
      %p212 = scmp.eq.s32.totalorder %s45, 0
      %p213 = por %p211, %p212
      %p214 = scmp.ne.s32.totalorder %s202, %s203
      %p215 = scmp.eq.s32.totalorder %s46, 1
      %p216 = por %p214, %p215
      %p218 = scmp.ne.s32.totalorder %s203, %s217
      %p219 = scmp.eq.s32.totalorder %s46, 0
      %p220 = por %p218, %p219
      %s222 = sadd.s32 %s221, 1
      %p225 = scmp.eq.s32.totalorder %s40, 1
      %p226 = scmp.ne.s32.totalorder %s221, %s223
      %p227 = scmp.eq.s32.totalorder %s40, 0
      %p228 = por %p226, %p227
      %p229 = scmp.ne.s32.totalorder %s221, %s223
      %p230 = scmp.eq.s32.totalorder %s45, 1
      %p231 = por %p229, %p230
      %p232 = scmp.ne.s32.totalorder %s223, %s224
      %p233 = scmp.eq.s32.totalorder %s45, 0
      %p234 = por %p232, %p233
      %p235 = scmp.ne.s32.totalorder %s223, %s224
      %p236 = scmp.eq.s32.totalorder %s46, 1
      %p237 = por %p235, %p236
      %p239 = scmp.ne.s32.totalorder %s224, %s238
      %p240 = scmp.eq.s32.totalorder %s46, 0
      %p241 = por %p239, %p240
      %s243 = sadd.s32 %s242, 1
      %p246 = scmp.eq.s32.totalorder %s40, 1
      %p247 = scmp.ne.s32.totalorder %s242, %s244
      %p248 = scmp.eq.s32.totalorder %s40, 0
      %p249 = por %p247, %p248
      %p250 = scmp.ne.s32.totalorder %s242, %s244
      %p251 = scmp.eq.s32.totalorder %s45, 1
      %p252 = por %p250, %p251
      %p253 = scmp.ne.s32.totalorder %s244, %s245
      %p254 = scmp.eq.s32.totalorder %s45, 0
      %p255 = por %p253, %p254
      %p256 = scmp.ne.s32.totalorder %s244, %s245
      %p257 = scmp.eq.s32.totalorder %s46, 1
      %p258 = por %p256, %p257
      %p260 = scmp.ne.s32.totalorder %s245, %s259
      %p261 = scmp.eq.s32.totalorder %s46, 0
      %p262 = por %p260, %p261
      %s264 = sadd.s32 %s263, 1
      %p267 = scmp.eq.s32.totalorder %s40, 1
      %p268 = scmp.ne.s32.totalorder %s263, %s265
      %p269 = scmp.eq.s32.totalorder %s40, 0
      %p270 = por %p268, %p269
      %p271 = scmp.ne.s32.totalorder %s263, %s265
      %p272 = scmp.eq.s32.totalorder %s45, 1
      %p273 = por %p271, %p272
      %p274 = scmp.ne.s32.totalorder %s265, %s266
      %p275 = scmp.eq.s32.totalorder %s45, 0
      %p276 = por %p274, %p275
      %p277 = scmp.ne.s32.totalorder %s265, %s266
      %p278 = scmp.eq.s32.totalorder %s46, 1
      %p279 = por %p277, %p278
      %p281 = scmp.ne.s32.totalorder %s266, %s280
      %p282 = scmp.eq.s32.totalorder %s46, 0
      %p283 = por %p281, %p282
      %s285 = sadd.s32 %s284, 1
      %p288 = scmp.eq.s32.totalorder %s40, 1
      %p289 = scmp.ne.s32.totalorder %s284, %s286
      %p290 = scmp.eq.s32.totalorder %s40, 0
      %p291 = por %p289, %p290
      %p292 = scmp.ne.s32.totalorder %s284, %s286
      %p293 = scmp.eq.s32.totalorder %s45, 1
      %p294 = por %p292, %p293
      %p295 = scmp.ne.s32.totalorder %s286, %s287
      %p296 = scmp.eq.s32.totalorder %s45, 0
      %p297 = por %p295, %p296
      %p298 = scmp.ne.s32.totalorder %s286, %s287
      %p299 = scmp.eq.s32.totalorder %s46, 1
      %p300 = por %p298, %p299
      %p302 = scmp.ne.s32.totalorder %s287, %s301
      %p303 = scmp.eq.s32.totalorder %s46, 0
      %p304 = por %p302, %p303
      %s306 = sadd.s32 %s305, 1
      %p309 = scmp.eq.s32.totalorder %s40, 1
      %p310 = scmp.ne.s32.totalorder %s305, %s307
      %p311 = scmp.eq.s32.totalorder %s40, 0
      %p312 = por %p310, %p311
      %p313 = scmp.ne.s32.totalorder %s305, %s307
      %p314 = scmp.eq.s32.totalorder %s45, 1
      %p315 = por %p313, %p314
      %p316 = scmp.ne.s32.totalorder %s307, %s308
      %p317 = scmp.eq.s32.totalorder %s45, 0
      %p318 = por %p316, %p317
      %p319 = scmp.ne.s32.totalorder %s307, %s308
      %p320 = scmp.eq.s32.totalorder %s46, 1
      %p321 = por %p319, %p320
      %p323 = scmp.ne.s32.totalorder %s308, %s322
      %p324 = scmp.eq.s32.totalorder %s46, 0
      %p325 = por %p323, %p324
      %s327 = sadd.s32 %s326, 1
      %p330 = scmp.eq.s32.totalorder %s40, 1
      %p331 = scmp.ne.s32.totalorder %s326, %s328
      %p332 = scmp.eq.s32.totalorder %s40, 0
      %p333 = por %p331, %p332
      %p334 = scmp.ne.s32.totalorder %s326, %s328
      %p335 = scmp.eq.s32.totalorder %s45, 1
      %p336 = por %p334, %p335
      %p337 = scmp.ne.s32.totalorder %s328, %s329
      %p338 = scmp.eq.s32.totalorder %s45, 0
      %p339 = por %p337, %p338
      %p340 = scmp.ne.s32.totalorder %s328, %s329
      %p341 = scmp.eq.s32.totalorder %s46, 1
      %p342 = por %p340, %p341
      %p344 = scmp.ne.s32.totalorder %s329, %s343
      %p345 = scmp.eq.s32.totalorder %s46, 0
      %p346 = por %p344, %p345
      %s348 = sadd.s32 %s347, 1
      %p351 = scmp.eq.s32.totalorder %s40, 1
      %p352 = scmp.ne.s32.totalorder %s347, %s349
      %p353 = scmp.eq.s32.totalorder %s40, 0
      %p354 = por %p352, %p353
      %p355 = scmp.ne.s32.totalorder %s347, %s349
      %p356 = scmp.eq.s32.totalorder %s45, 1
      %p357 = por %p355, %p356
      %p358 = scmp.ne.s32.totalorder %s349, %s350
      %p359 = scmp.eq.s32.totalorder %s45, 0
      %p360 = por %p358, %p359
      %p361 = scmp.ne.s32.totalorder %s349, %s350
      %p362 = scmp.eq.s32.totalorder %s46, 1
      %p363 = por %p361, %p362
      %p365 = scmp.ne.s32.totalorder %s350, %s364
      %p366 = scmp.eq.s32.totalorder %s46, 0
      %p367 = por %p365, %p366
      %s369 = sadd.s32 %s368, 1
      %p372 = scmp.eq.s32.totalorder %s40, 1
      %p373 = scmp.ne.s32.totalorder %s368, %s370
      %p374 = scmp.eq.s32.totalorder %s40, 0
      %p375 = por %p373, %p374
      %p376 = scmp.ne.s32.totalorder %s368, %s370
      %p377 = scmp.eq.s32.totalorder %s45, 1
      %p378 = por %p376, %p377
      %p379 = scmp.ne.s32.totalorder %s370, %s371
      %p380 = scmp.eq.s32.totalorder %s45, 0
      %p381 = por %p379, %p380
      %p382 = scmp.ne.s32.totalorder %s370, %s371
      %p383 = scmp.eq.s32.totalorder %s46, 1
      %p384 = por %p382, %p383
      %p386 = scmp.ne.s32.totalorder %s371, %s385
      %p387 = scmp.eq.s32.totalorder %s46, 0
      %p388 = por %p386, %p387
      %s390 = sadd.s32 %s389, 1
      %p393 = scmp.eq.s32.totalorder %s40, 1
      %p394 = scmp.ne.s32.totalorder %s389, %s391
      %p395 = scmp.eq.s32.totalorder %s40, 0
      %p396 = por %p394, %p395
      %p397 = scmp.ne.s32.totalorder %s389, %s391
      %p398 = scmp.eq.s32.totalorder %s45, 1
      %p399 = por %p397, %p398
      %p400 = scmp.ne.s32.totalorder %s391, %s392
      %p401 = scmp.eq.s32.totalorder %s45, 0
      %p402 = por %p400, %p401
      %p403 = scmp.ne.s32.totalorder %s391, %s392
      %p404 = scmp.eq.s32.totalorder %s46, 1
      %p405 = por %p403, %p404
      %p407 = scmp.ne.s32.totalorder %s392, %s406
      %p408 = scmp.eq.s32.totalorder %s46, 0
      %p409 = por %p407, %p408
      %s411 = sadd.s32 %s410, 1
      %p414 = scmp.eq.s32.totalorder %s40, 1
      %p415 = scmp.ne.s32.totalorder %s410, %s412
      %p416 = scmp.eq.s32.totalorder %s40, 0
      %p417 = por %p415, %p416
      %p418 = scmp.ne.s32.totalorder %s410, %s412
      %p419 = scmp.eq.s32.totalorder %s45, 1
      %p420 = por %p418, %p419
      %p421 = scmp.ne.s32.totalorder %s412, %s413
      %p422 = scmp.eq.s32.totalorder %s45, 0
      %p423 = por %p421, %p422
      %p424 = scmp.ne.s32.totalorder %s412, %s413
      %p425 = scmp.eq.s32.totalorder %s46, 1
      %p426 = por %p424, %p425
      %p428 = scmp.ne.s32.totalorder %s413, %s427
      %p429 = scmp.eq.s32.totalorder %s46, 0
      %p430 = por %p428, %p429
      %s432 = sadd.s32 %s431, 1
      %p435 = scmp.eq.s32.totalorder %s40, 1
      %p436 = scmp.ne.s32.totalorder %s431, %s433
      %p437 = scmp.eq.s32.totalorder %s40, 0
      %p438 = por %p436, %p437
      %p439 = scmp.ne.s32.totalorder %s431, %s433
      %p440 = scmp.eq.s32.totalorder %s45, 1
      %p441 = por %p439, %p440
      %p442 = scmp.ne.s32.totalorder %s433, %s434
      %p443 = scmp.eq.s32.totalorder %s45, 0
      %p444 = por %p442, %p443
      %p445 = scmp.ne.s32.totalorder %s433, %s434
      %p446 = scmp.eq.s32.totalorder %s46, 1
      %p447 = por %p445, %p446
      %p449 = scmp.ne.s32.totalorder %s434, %s448
      %p450 = scmp.eq.s32.totalorder %s46, 0
      %p451 = por %p449, %p450
      %s453 = sadd.s32 %s452, 1
      %p456 = scmp.eq.s32.totalorder %s40, 1
      %p457 = scmp.ne.s32.totalorder %s452, %s454
      %p458 = scmp.eq.s32.totalorder %s40, 0
      %p459 = por %p457, %p458
      %p460 = scmp.ne.s32.totalorder %s452, %s454
      %p461 = scmp.eq.s32.totalorder %s45, 1
      %p462 = por %p460, %p461
      %p463 = scmp.ne.s32.totalorder %s454, %s455
      %p464 = scmp.eq.s32.totalorder %s45, 0
      %p465 = por %p463, %p464
      %p466 = scmp.ne.s32.totalorder %s454, %s455
      %p467 = scmp.eq.s32.totalorder %s46, 1
      %p468 = por %p466, %p467
      %p470 = scmp.ne.s32.totalorder %s455, %s469
      %p471 = scmp.eq.s32.totalorder %s46, 0
      %p472 = por %p470, %p471
      %s474 = sadd.s32 %s473, 1
      %p477 = scmp.eq.s32.totalorder %s40, 1
      %p478 = scmp.ne.s32.totalorder %s473, %s475
      %p479 = scmp.eq.s32.totalorder %s40, 0
      %p480 = por %p478, %p479
      %p481 = scmp.ne.s32.totalorder %s473, %s475
      %p482 = scmp.eq.s32.totalorder %s45, 1
      %p483 = por %p481, %p482
      %p484 = scmp.ne.s32.totalorder %s475, %s476
      %p485 = scmp.eq.s32.totalorder %s45, 0
      %p486 = por %p484, %p485
      %p487 = scmp.ne.s32.totalorder %s475, %s476
      %p488 = scmp.eq.s32.totalorder %s46, 1
      %p489 = por %p487, %p488
      %p491 = scmp.ne.s32.totalorder %s476, %s490
      %p492 = scmp.eq.s32.totalorder %s46, 0
      %p493 = por %p491, %p492
      %s495 = sadd.s32 %s494, 1
      %p498 = scmp.eq.s32.totalorder %s40, 1
      %p499 = scmp.ne.s32.totalorder %s494, %s496
      %p500 = scmp.eq.s32.totalorder %s40, 0
      %p501 = por %p499, %p500
      %p502 = scmp.ne.s32.totalorder %s494, %s496
      %p503 = scmp.eq.s32.totalorder %s45, 1
      %p504 = por %p502, %p503
      %p505 = scmp.ne.s32.totalorder %s496, %s497
      %p506 = scmp.eq.s32.totalorder %s45, 0
      %p507 = por %p505, %p506
      %p508 = scmp.ne.s32.totalorder %s496, %s497
      %p509 = scmp.eq.s32.totalorder %s46, 1
      %p510 = por %p508, %p509
      %p512 = scmp.ne.s32.totalorder %s497, %s511
      %p513 = scmp.eq.s32.totalorder %s46, 0
      %p514 = por %p512, %p513
      %s515 = ssub.s32 %s40, %s47
      %p516 = scmp.eq.s32.totalorder %s515, 0
      %s518 = sadd.s32 %s517, 1
      %s519 = scalar_select %p516, %s517, %s518
      %p522 = pneg %p516
      %p523 = scmp.eq.s32.totalorder %s40, 1
      %p524 = por %p522, %p523
      %p525 = scmp.ne.s32.totalorder %s517, %s520
      %p526 = scmp.eq.s32.totalorder %s40, 0
      %p527 = por %p525, %p526
      %p528 = scmp.ne.s32.totalorder %s517, %s520
      %p529 = scmp.eq.s32.totalorder %s45, 1
      %p530 = por %p528, %p529
      %p531 = scmp.ne.s32.totalorder %s520, %s521
      %p532 = scmp.eq.s32.totalorder %s45, 0
      %p533 = por %p531, %p532
      %p534 = scmp.ne.s32.totalorder %s520, %s521
      %p535 = scmp.eq.s32.totalorder %s46, 1
      %p536 = por %p534, %p535
      %p538 = scmp.ne.s32.totalorder %s521, %s537
      %p539 = scmp.eq.s32.totalorder %s46, 0
      %p540 = por %p538, %p539
      %s541 = ssub.s32 %s40, %s47
      %p542 = scmp.eq.s32.totalorder %s541, 0
      %s544 = sadd.s32 %s543, 1
      %s545 = scalar_select %p542, %s543, %s544
      %p548 = pneg %p542
      %p549 = scmp.eq.s32.totalorder %s40, 1
      %p550 = por %p548, %p549
      %p551 = scmp.ne.s32.totalorder %s543, %s546
      %p552 = scmp.eq.s32.totalorder %s40, 0
      %p553 = por %p551, %p552
      %p554 = scmp.ne.s32.totalorder %s543, %s546
      %p555 = scmp.eq.s32.totalorder %s45, 1
      %p556 = por %p554, %p555
      %p557 = scmp.ne.s32.totalorder %s546, %s547
      %p558 = scmp.eq.s32.totalorder %s45, 0
      %p559 = por %p557, %p558
      %p560 = scmp.ne.s32.totalorder %s546, %s547
      %p561 = scmp.eq.s32.totalorder %s46, 1
      %p562 = por %p560, %p561
      %p564 = scmp.ne.s32.totalorder %s547, %s563
      %p565 = scmp.eq.s32.totalorder %s46, 0
      %p566 = por %p564, %p565
      %p567 = scmp.le.s32.totalorder 1, %s40
      %p568 = scmp.lt.s32.totalorder %s40, 3
      %p569 = pnand %p567, %p568
      %p570 = pneg %p569
      // Predicated region
      $region9: #{tpu_custom_call.1} parent=5 // pred_check
        _
      $region10: #{tpu_custom_call.1} parent=5 // pred_check_branch
        %572 = sbr.rel (%p569) target = $region12
      $region11: #{tpu_custom_call.1} parent=5 // pred_region
        %s573 = ssub.s32 %s40, 1
        // Predicated region
        $region13: #{tpu_custom_call.1} parent=11 // pred_check
          %p574 = pneg %p87
        $region14: #{tpu_custom_call.1} parent=11 // pred_check_branch
          %576 = sbr.rel (%p574) target = $region16
        $region15: #{tpu_custom_call.1} parent=11 // pred_region
          _
        $region16: #{tpu_custom_call.1} parent=11 // pred_fallthru
          _
        // Predicated region
        $region17: #{tpu_custom_call.1} parent=11 // pred_check
          %p577 = pneg %p108
        $region18: #{tpu_custom_call.1} parent=11 // pred_check_branch
          %579 = sbr.rel (%p577) target = $region20
        $region19: #{tpu_custom_call.1} parent=11 // pred_region
          _
        $region20: #{tpu_custom_call.1} parent=11 // pred_fallthru
          _
        // Predicated region
        $region21: #{tpu_custom_call.1} parent=11 // pred_check
          %p580 = pneg %p129
        $region22: #{tpu_custom_call.1} parent=11 // pred_check_branch
          %582 = sbr.rel (%p580) target = $region24
        $region23: #{tpu_custom_call.1} parent=11 // pred_region
          _
        $region24: #{tpu_custom_call.1} parent=11 // pred_fallthru
          _
        // Predicated region
        $region25: #{tpu_custom_call.1} parent=11 // pred_check
          %p583 = pneg %p150
        $region26: #{tpu_custom_call.1} parent=11 // pred_check_branch
          %585 = sbr.rel (%p583) target = $region28
        $region27: #{tpu_custom_call.1} parent=11 // pred_region
          _
        $region28: #{tpu_custom_call.1} parent=11 // pred_fallthru
          _
        // Predicated region
        $region29: #{tpu_custom_call.1} parent=11 // pred_check
          %p586 = pneg %p171
        $region30: #{tpu_custom_call.1} parent=11 // pred_check_branch
          %588 = sbr.rel (%p586) target = $region32
        $region31: #{tpu_custom_call.1} parent=11 // pred_region
          _
        $region32: #{tpu_custom_call.1} parent=11 // pred_fallthru
          _
        // Predicated region
        $region33: #{tpu_custom_call.1} parent=11 // pred_check
          %p589 = pneg %p192
        $region34: #{tpu_custom_call.1} parent=11 // pred_check_branch
          %591 = sbr.rel (%p589) target = $region36
        $region35: #{tpu_custom_call.1} parent=11 // pred_region
          _
        $region36: #{tpu_custom_call.1} parent=11 // pred_fallthru
          _
        // Predicated region
        $region37: #{tpu_custom_call.1} parent=11 // pred_check
          %p592 = pneg %p213
        $region38: #{tpu_custom_call.1} parent=11 // pred_check_branch
          %594 = sbr.rel (%p592) target = $region40
        $region39: #{tpu_custom_call.1} parent=11 // pred_region
          _
        $region40: #{tpu_custom_call.1} parent=11 // pred_fallthru
          _
        // Predicated region
        $region41: #{tpu_custom_call.1} parent=11 // pred_check
          %p595 = pneg %p234
        $region42: #{tpu_custom_call.1} parent=11 // pred_check_branch
          %597 = sbr.rel (%p595) target = $region44
        $region43: #{tpu_custom_call.1} parent=11 // pred_region
          _
        $region44: #{tpu_custom_call.1} parent=11 // pred_fallthru
          _
        // Predicated region
        $region45: #{tpu_custom_call.1} parent=11 // pred_check
          %p598 = pneg %p255
        $region46: #{tpu_custom_call.1} parent=11 // pred_check_branch
          %600 = sbr.rel (%p598) target = $region48
        $region47: #{tpu_custom_call.1} parent=11 // pred_region
          _
        $region48: #{tpu_custom_call.1} parent=11 // pred_fallthru
          _
        // Predicated region
        $region49: #{tpu_custom_call.1} parent=11 // pred_check
          %p601 = pneg %p276
        $region50: #{tpu_custom_call.1} parent=11 // pred_check_branch
          %603 = sbr.rel (%p601) target = $region52
        $region51: #{tpu_custom_call.1} parent=11 // pred_region
          _
        $region52: #{tpu_custom_call.1} parent=11 // pred_fallthru
          _
        // Predicated region
        $region53: #{tpu_custom_call.1} parent=11 // pred_check
          %p604 = pneg %p297
        $region54: #{tpu_custom_call.1} parent=11 // pred_check_branch
          %606 = sbr.rel (%p604) target = $region56
        $region55: #{tpu_custom_call.1} parent=11 // pred_region
          _
        $region56: #{tpu_custom_call.1} parent=11 // pred_fallthru
          _
        // Predicated region
        $region57: #{tpu_custom_call.1} parent=11 // pred_check
          %p607 = pneg %p318
        $region58: #{tpu_custom_call.1} parent=11 // pred_check_branch
          %609 = sbr.rel (%p607) target = $region60
        $region59: #{tpu_custom_call.1} parent=11 // pred_region
          _
        $region60: #{tpu_custom_call.1} parent=11 // pred_fallthru
          _
        // Predicated region
        $region61: #{tpu_custom_call.1} parent=11 // pred_check
          %p610 = pneg %p339
        $region62: #{tpu_custom_call.1} parent=11 // pred_check_branch
          %612 = sbr.rel (%p610) target = $region64
        $region63: #{tpu_custom_call.1} parent=11 // pred_region
          _
        $region64: #{tpu_custom_call.1} parent=11 // pred_fallthru
          _
        // Predicated region
        $region65: #{tpu_custom_call.1} parent=11 // pred_check
          %p613 = pneg %p360
        $region66: #{tpu_custom_call.1} parent=11 // pred_check_branch
          %615 = sbr.rel (%p613) target = $region68
        $region67: #{tpu_custom_call.1} parent=11 // pred_region
          %617 = vsyncadd [#allocation8], 0
          %s618 = sshll.u32 %s14, 4
          %s619 = int_to_ptr.hbm [resolvable:$true] %s618
          %s620 = sshll.u32 [#allocation7], 4
          %s621 = int_to_ptr.vmem [resolvable:$true] %s620
          %626 = dma.hbm_to_vmem [thread:$0]  %s619, 768, %s621, [#allocation8], 128, 128, 8
        $region68: #{tpu_custom_call.1} parent=11 // pred_fallthru
          _
        // Predicated region
        $region69: #{tpu_custom_call.1} parent=11 // pred_check
          %p627 = pneg %p381
        $region70: #{tpu_custom_call.1} parent=11 // pred_check_branch
          %629 = sbr.rel (%p627) target = $region72
        $region71: #{tpu_custom_call.1} parent=11 // pred_region
          _
        $region72: #{tpu_custom_call.1} parent=11 // pred_fallthru
          _
        // Predicated region
        $region73: #{tpu_custom_call.1} parent=11 // pred_check
          %p630 = pneg %p402
        $region74: #{tpu_custom_call.1} parent=11 // pred_check_branch
          %632 = sbr.rel (%p630) target = $region76
        $region75: #{tpu_custom_call.1} parent=11 // pred_region
          _
        $region76: #{tpu_custom_call.1} parent=11 // pred_fallthru
          _
        // Predicated region
        $region77: #{tpu_custom_call.1} parent=11 // pred_check
          %p633 = pneg %p423
        $region78: #{tpu_custom_call.1} parent=11 // pred_check_branch
          %635 = sbr.rel (%p633) target = $region80
        $region79: #{tpu_custom_call.1} parent=11 // pred_region
          _
        $region80: #{tpu_custom_call.1} parent=11 // pred_fallthru
          _
        // Predicated region
        $region81: #{tpu_custom_call.1} parent=11 // pred_check
          %p636 = pneg %p444
        $region82: #{tpu_custom_call.1} parent=11 // pred_check_branch
          %638 = sbr.rel (%p636) target = $region84
        $region83: #{tpu_custom_call.1} parent=11 // pred_region
          _
        $region84: #{tpu_custom_call.1} parent=11 // pred_fallthru
          _
        // Predicated region
        $region85: #{tpu_custom_call.1} parent=11 // pred_check
          %p639 = pneg %p465
        $region86: #{tpu_custom_call.1} parent=11 // pred_check_branch
          %641 = sbr.rel (%p639) target = $region88
        $region87: #{tpu_custom_call.1} parent=11 // pred_region
          _
        $region88: #{tpu_custom_call.1} parent=11 // pred_fallthru
          _
        // Predicated region
        $region89: #{tpu_custom_call.1} parent=11 // pred_check
          %p642 = pneg %p486
        $region90: #{tpu_custom_call.1} parent=11 // pred_check_branch
          %644 = sbr.rel (%p642) target = $region92
        $region91: #{tpu_custom_call.1} parent=11 // pred_region
          _
        $region92: #{tpu_custom_call.1} parent=11 // pred_fallthru
          _
        // Predicated region
        $region93: #{tpu_custom_call.1} parent=11 // pred_check
          %p645 = pneg %p507
        $region94: #{tpu_custom_call.1} parent=11 // pred_check_branch
          %647 = sbr.rel (%p645) target = $region96
        $region95: #{tpu_custom_call.1} parent=11 // pred_region
          _
        $region96: #{tpu_custom_call.1} parent=11 // pred_fallthru
          _
      $region12: #{tpu_custom_call.1} parent=5 // pred_fallthru
        _
      %p648 = scmp.lt.s32.totalorder %s40, 2
      // Predicated region
      $region97: #{tpu_custom_call.1} parent=5 // pred_check
        %p649 = pneg %p648
      $region98: #{tpu_custom_call.1} parent=5 // pred_check_branch
        %651 = sbr.rel (%p649) target = $region100
      $region99: #{tpu_custom_call.1} parent=5 // pred_region
        // Predicated region
        $region101: #{tpu_custom_call.1} parent=99 // pred_check
          %p652 = pneg %p60
        $region102: #{tpu_custom_call.1} parent=99 // pred_check_branch
          %654 = sbr.rel (%p652) target = $region104
        $region103: #{tpu_custom_call.1} parent=99 // pred_region
          %s655 = sand.u32 %s50, 1
          %s656 = scalar_lea.sflag [#allocation5], %s655
          %s657 = sand.u32 %s50, 1
          %s658 = smul.addr %s657, 4
          %s659 = scalar_lea.vmem [#allocation4], %s658
          %661 = vsyncadd %s656, 0
          %s662 = smul.addr %s40, 4
          %s663 = scalar_lea.hbm %s0, %s662
          %s665 = sshll.u32 %s663, 4
          %s666 = int_to_ptr.hbm [resolvable:$true] %s665
          %s667 = sshll.u32 %s659, 4
          %s668 = int_to_ptr.vmem [resolvable:$true] %s667
          %670 = dma.hbm_to_vmem [thread:$0]  %s666, 64, %s668, %s656
        $region104: #{tpu_custom_call.1} parent=99 // pred_fallthru
          _
      $region100: #{tpu_custom_call.1} parent=5 // pred_fallthru
        _
      %p671 = scmp.le.s32.totalorder 1, %s40
      %p672 = scmp.lt.s32.totalorder %s40, 3
      %p673 = pnand %p671, %p672
      %p674 = pneg %p673
      // Predicated region
      $region105: #{tpu_custom_call.1} parent=5 // pred_check
        _
      $region106: #{tpu_custom_call.1} parent=5 // pred_check_branch
        %676 = sbr.rel (%p673) target = $region108
      $region107: #{tpu_custom_call.1} parent=5 // pred_region
        %s677 = ssub.s32 %s40, 1
        %s678 = sand.u32 %s53, 1
        %s679 = scalar_lea.sflag [#allocation5], %s678
        %s680 = sand.u32 %s53, 1
        %s681 = smul.addr %s680, 4
        %s682 = scalar_lea.vmem [#allocation4], %s681
        // Predicated region
        $region109: #{tpu_custom_call.1} parent=107 // pred_check
          %p683 = pneg %p66
        $region110: #{tpu_custom_call.1} parent=107 // pred_check_branch
          %685 = sbr.rel (%p683) target = $region112
        $region111: #{tpu_custom_call.1} parent=107 // pred_region
          %687 = dma.done %s679, 64
        $region112: #{tpu_custom_call.1} parent=107 // pred_fallthru
          _
        // Predicated region
        $region113: #{tpu_custom_call.1} parent=107 // pred_check
          %p688 = pneg %p360
        $region114: #{tpu_custom_call.1} parent=107 // pred_check_branch
          %690 = sbr.rel (%p688) target = $region116
        $region115: #{tpu_custom_call.1} parent=107 // pred_region
          %692 = dma.done [#allocation8], 768
        $region116: #{tpu_custom_call.1} parent=107 // pred_fallthru
          _
        %s693 = sand.u32 %s53, 1
        %s694 = scalar_lea.sflag [#allocation5], %s693
        %s695 = sand.u32 %s53, 1
        %s696 = smul.addr %s695, 4
        %s697 = scalar_lea.vmem [#allocation4], %s696
        %p698 = pneg %p66
        %p699 = pneg %p63
        %p700 = pneg %p87
        %p701 = pneg %p84
        %p702 = pneg %p108
        %p703 = pneg %p105
        %p704 = pneg %p129
        %p705 = pneg %p126
        %p706 = pneg %p150
        %p707 = pneg %p147
        %p708 = pneg %p171
        %p709 = pneg %p168
        %p710 = pneg %p192
        %p711 = pneg %p189
        %p712 = pneg %p213
        %p713 = pneg %p210
        %p714 = pneg %p234
        %p715 = pneg %p231
        %p716 = pneg %p255
        %p717 = pneg %p252
        %p718 = pneg %p276
        %p719 = pneg %p273
        %p720 = pneg %p297
        %p721 = pneg %p294
        %p722 = pneg %p318
        %p723 = pneg %p315
        %p724 = pneg %p339
        %p725 = pneg %p336
        %p726 = pneg %p360
        %p727 = pneg %p357
        %p728 = pneg %p381
        %p729 = pneg %p378
        %p730 = pneg %p402
        %p731 = pneg %p399
        %p732 = pneg %p423
        %p733 = pneg %p420
        %p734 = pneg %p444
        %p735 = pneg %p441
        %p736 = pneg %p465
        %p737 = pneg %p462
        %p738 = pneg %p486
        %p739 = pneg %p483
        %p740 = pneg %p507
        %p741 = pneg %p504
        %p742 = pneg %p533
        %p743 = pneg %p530
        %s744 = sand.u32 %s520, 1
        %s745 = scalar_lea.sflag [#allocation6], %s744
        %s746 = sand.u32 %s520, 1
        %s747 = smul.addr %s746, 4
        %s748 = scalar_lea.vmem [#allocation9], %s747
        %p749 = pneg %p559
        %p750 = pneg %p556
        %s751 = sand.u32 %s546, 1
        %s752 = scalar_lea.sflag [#allocation11], %s751
        %s753 = sand.u32 %s546, 1
        %s754 = smul.addr %s753, 4
        %s755 = scalar_lea.vmem [#allocation10], %s754
        %v756 = vld [vmem:[%s682] sm:$0xf]
        %v757 = vmul.f32 %v756, %v756
        %v758 = vld [vmem:[%s1] sm:$0xff]
        %v759 = vld [vmem:[%s1 + $0x8] sm:$0xff]
        %v760 = vld [vmem:[%s1 + $0x10] sm:$0xff]
        %v761 = vld [vmem:[%s1 + $0x18] sm:$0xff]
        %v762 = vld [vmem:[%s1 + $0x20] sm:$0xff]
        %v763 = vld [vmem:[%s1 + $0x28] sm:$0xff]
        %v764 = vld [vmem:[%s1 + $0x30] sm:$0xff]
        %v765 = vld [vmem:[%s1 + $0x38] sm:$0xff]
        %v766 = vld [vmem:[%s1 + $0x40] sm:$0xff]
        %v767 = vld [vmem:[%s1 + $0x48] sm:$0xff]
        %vm768 = vcmask 654336
        %v770 = vsel %vm768, %v756, 0
        %772 = vmatpush.msra.mxu0 0.0
        %773 = vmatpush.msra.mxu0 0.0
        %774 = vmatpush.msra.mxu0 0.0
        %775 = vmatpush.msra.mxu0 0.0
        %776 = vmatpush.msra.mxu0 0.0
        %777 = vmatpush.msra.mxu0 0.0
        %v778 = vand.u32 %v767, 4294901760
        %779 = vmatpush.msra.mxu0 %v778
        %v780 = vand.u32 %v766, 4294901760
        %781 = vmatpush.msra.mxu0 %v780
        %v782 = vand.u32 %v765, 4294901760
        %783 = vmatpush.msra.mxu0 %v782
        %v784 = vand.u32 %v764, 4294901760
        %785 = vmatpush.msra.mxu0 %v784
        %v786 = vand.u32 %v763, 4294901760
        %787 = vmatpush.msra.mxu0 %v786
        %v788 = vand.u32 %v762, 4294901760
        %789 = vmatpush.msra.mxu0 %v788
        %v790 = vand.u32 %v761, 4294901760
        %791 = vmatpush.msra.mxu0 %v790
        %v792 = vand.u32 %v760, 4294901760
        %793 = vmatpush.msra.mxu0 %v792
        %v794 = vand.u32 %v759, 4294901760
        %795 = vmatpush.msra.mxu0 %v794
        %v796 = vand.u32 %v758, 4294901760
        %797 = vmatpush.msra.mxu0 %v796
        %v798 = vand.u32 %v770, 4294901760
        %v799 = vsub.f32 %v770, %v798
        %v800 = vand.u32 %v799, 4294901760
        %v801 = vsub.f32 %v799, %v800
        %v802 = vand.u32 %v801, 4294901760
        %803 = vmatmul.f32.gmra.mxu0 %v802
        %v804 = vpop.f32.mrf.mxu0
        %v805 = vadd.f32 0.0, %v804
        %806 = vdwg.mxu0
        %807 = vmatpush.msra.mxu0 0.0
        %808 = vmatpush.msra.mxu0 0.0
        %809 = vmatpush.msra.mxu0 0.0
        %810 = vmatpush.msra.mxu0 0.0
        %811 = vmatpush.msra.mxu0 0.0
        %812 = vmatpush.msra.mxu0 0.0
        %v813 = vand.u32 %v767, 4294901760
        %v814 = vsub.f32 %v767, %v813
        %v815 = vand.u32 %v814, 4294901760
        %v816 = vsub.f32 %v814, %v815
        %v817 = vand.u32 %v816, 4294901760
        %818 = vmatpush.msra.mxu0 %v817
        %v819 = vand.u32 %v766, 4294901760
        %v820 = vsub.f32 %v766, %v819
        %v821 = vand.u32 %v820, 4294901760
        %v822 = vsub.f32 %v820, %v821
        %v823 = vand.u32 %v822, 4294901760
        %824 = vmatpush.msra.mxu0 %v823
        %v825 = vand.u32 %v765, 4294901760
        %v826 = vsub.f32 %v765, %v825
        %v827 = vand.u32 %v826, 4294901760
        %v828 = vsub.f32 %v826, %v827
        %v829 = vand.u32 %v828, 4294901760
        %830 = vmatpush.msra.mxu0 %v829
        %v831 = vand.u32 %v764, 4294901760
        %v832 = vsub.f32 %v764, %v831
        %v833 = vand.u32 %v832, 4294901760
        %v834 = vsub.f32 %v832, %v833
        %v835 = vand.u32 %v834, 4294901760
        %836 = vmatpush.msra.mxu0 %v835
        %v837 = vand.u32 %v763, 4294901760
        %v838 = vsub.f32 %v763, %v837
        %v839 = vand.u32 %v838, 4294901760
        %v840 = vsub.f32 %v838, %v839
        %v841 = vand.u32 %v840, 4294901760
        %842 = vmatpush.msra.mxu0 %v841
        %v843 = vand.u32 %v762, 4294901760
        %v844 = vsub.f32 %v762, %v843
        %v845 = vand.u32 %v844, 4294901760
        %v846 = vsub.f32 %v844, %v845
        %v847 = vand.u32 %v846, 4294901760
        %848 = vmatpush.msra.mxu0 %v847
        %v849 = vand.u32 %v761, 4294901760
        %v850 = vsub.f32 %v761, %v849
        %v851 = vand.u32 %v850, 4294901760
        %v852 = vsub.f32 %v850, %v851
        %v853 = vand.u32 %v852, 4294901760
        %854 = vmatpush.msra.mxu0 %v853
        %v855 = vand.u32 %v760, 4294901760
        %v856 = vsub.f32 %v760, %v855
        %v857 = vand.u32 %v856, 4294901760
        %v858 = vsub.f32 %v856, %v857
        %v859 = vand.u32 %v858, 4294901760
        %860 = vmatpush.msra.mxu0 %v859
        %v861 = vand.u32 %v759, 4294901760
        %v862 = vsub.f32 %v759, %v861
        %v863 = vand.u32 %v862, 4294901760
        %v864 = vsub.f32 %v862, %v863
        %v865 = vand.u32 %v864, 4294901760
        %866 = vmatpush.msra.mxu0 %v865
        %v867 = vand.u32 %v758, 4294901760
        %v868 = vsub.f32 %v758, %v867
        %v869 = vand.u32 %v868, 4294901760
        %v870 = vsub.f32 %v868, %v869
        %v871 = vand.u32 %v870, 4294901760
        %872 = vmatpush.msra.mxu0 %v871
        %v873 = vand.u32 %v770, 4294901760
        %874 = vmatmul.f32.gmra.mxu0 %v873
        %v875 = vpop.f32.mrf.mxu0
        %v876 = vadd.f32 %v805, %v875
        %877 = vdwg.mxu0
        %878 = vmatpush.msra.mxu0 0.0
        %879 = vmatpush.msra.mxu0 0.0
        %880 = vmatpush.msra.mxu0 0.0
        %881 = vmatpush.msra.mxu0 0.0
        %882 = vmatpush.msra.mxu0 0.0
        %883 = vmatpush.msra.mxu0 0.0
        %v884 = vand.u32 %v767, 4294901760
        %v885 = vsub.f32 %v767, %v884
        %886 = vmatpush.msra.mxu0 %v885
        %v887 = vand.u32 %v766, 4294901760
        %v888 = vsub.f32 %v766, %v887
        %889 = vmatpush.msra.mxu0 %v888
        %v890 = vand.u32 %v765, 4294901760
        %v891 = vsub.f32 %v765, %v890
        %892 = vmatpush.msra.mxu0 %v891
        %v893 = vand.u32 %v764, 4294901760
        %v894 = vsub.f32 %v764, %v893
        %895 = vmatpush.msra.mxu0 %v894
        %v896 = vand.u32 %v763, 4294901760
        %v897 = vsub.f32 %v763, %v896
        %898 = vmatpush.msra.mxu0 %v897
        %v899 = vand.u32 %v762, 4294901760
        %v900 = vsub.f32 %v762, %v899
        %901 = vmatpush.msra.mxu0 %v900
        %v902 = vand.u32 %v761, 4294901760
        %v903 = vsub.f32 %v761, %v902
        %904 = vmatpush.msra.mxu0 %v903
        %v905 = vand.u32 %v760, 4294901760
        %v906 = vsub.f32 %v760, %v905
        %907 = vmatpush.msra.mxu0 %v906
        %v908 = vand.u32 %v759, 4294901760
        %v909 = vsub.f32 %v759, %v908
        %910 = vmatpush.msra.mxu0 %v909
        %v911 = vand.u32 %v758, 4294901760
        %v912 = vsub.f32 %v758, %v911
        %913 = vmatpush.msra.mxu0 %v912
        %v914 = vand.u32 %v770, 4294901760
        %v915 = vsub.f32 %v770, %v914
        %916 = vmatmul.f32.gmra.mxu0 %v915
        %v917 = vpop.f32.mrf.mxu0
        %v918 = vadd.f32 %v876, %v917
        %919 = vdwg.mxu0
        %920 = vmatpush.msra.mxu0 0.0
        %921 = vmatpush.msra.mxu0 0.0
        %922 = vmatpush.msra.mxu0 0.0
        %923 = vmatpush.msra.mxu0 0.0
        %924 = vmatpush.msra.mxu0 0.0
        %925 = vmatpush.msra.mxu0 0.0
        %v926 = vand.u32 %v767, 4294901760
        %927 = vmatpush.msra.mxu0 %v926
        %v928 = vand.u32 %v766, 4294901760
        %929 = vmatpush.msra.mxu0 %v928
        %v930 = vand.u32 %v765, 4294901760
        %931 = vmatpush.msra.mxu0 %v930
        %v932 = vand.u32 %v764, 4294901760
        %933 = vmatpush.msra.mxu0 %v932
        %v934 = vand.u32 %v763, 4294901760
        %935 = vmatpush.msra.mxu0 %v934
        %v936 = vand.u32 %v762, 4294901760
        %937 = vmatpush.msra.mxu0 %v936
        %v938 = vand.u32 %v761, 4294901760
        %939 = vmatpush.msra.mxu0 %v938
        %v940 = vand.u32 %v760, 4294901760
        %941 = vmatpush.msra.mxu0 %v940
        %v942 = vand.u32 %v759, 4294901760
        %943 = vmatpush.msra.mxu0 %v942
        %v944 = vand.u32 %v758, 4294901760
        %945 = vmatpush.msra.mxu0 %v944
        %v946 = vand.u32 %v770, 4294901760
        %v947 = vsub.f32 %v770, %v946
        %v948 = vand.u32 %v947, 4294901760
        %949 = vmatmul.f32.gmra.mxu0 %v948
        %v950 = vpop.f32.mrf.mxu0
        %v951 = vadd.f32 %v918, %v950
        %952 = vdwg.mxu0
        %953 = vmatpush.msra.mxu0 0.0
        %954 = vmatpush.msra.mxu0 0.0
        %955 = vmatpush.msra.mxu0 0.0
        %956 = vmatpush.msra.mxu0 0.0
        %957 = vmatpush.msra.mxu0 0.0
        %958 = vmatpush.msra.mxu0 0.0
        %v959 = vand.u32 %v767, 4294901760
        %v960 = vsub.f32 %v767, %v959
        %v961 = vand.u32 %v960, 4294901760
        %962 = vmatpush.msra.mxu0 %v961
        %v963 = vand.u32 %v766, 4294901760
        %v964 = vsub.f32 %v766, %v963
        %v965 = vand.u32 %v964, 4294901760
        %966 = vmatpush.msra.mxu0 %v965
        %v967 = vand.u32 %v765, 4294901760
        %v968 = vsub.f32 %v765, %v967
        %v969 = vand.u32 %v968, 4294901760
        %970 = vmatpush.msra.mxu0 %v969
        %v971 = vand.u32 %v764, 4294901760
        %v972 = vsub.f32 %v764, %v971
        %v973 = vand.u32 %v972, 4294901760
        %974 = vmatpush.msra.mxu0 %v973
        %v975 = vand.u32 %v763, 4294901760
        %v976 = vsub.f32 %v763, %v975
        %v977 = vand.u32 %v976, 4294901760
        %978 = vmatpush.msra.mxu0 %v977
        %v979 = vand.u32 %v762, 4294901760
        %v980 = vsub.f32 %v762, %v979
        %v981 = vand.u32 %v980, 4294901760
        %982 = vmatpush.msra.mxu0 %v981
        %v983 = vand.u32 %v761, 4294901760
        %v984 = vsub.f32 %v761, %v983
        %v985 = vand.u32 %v984, 4294901760
        %986 = vmatpush.msra.mxu0 %v985
        %v987 = vand.u32 %v760, 4294901760
        %v988 = vsub.f32 %v760, %v987
        %v989 = vand.u32 %v988, 4294901760
        %990 = vmatpush.msra.mxu0 %v989
        %v991 = vand.u32 %v759, 4294901760
        %v992 = vsub.f32 %v759, %v991
        %v993 = vand.u32 %v992, 4294901760
        %994 = vmatpush.msra.mxu0 %v993
        %v995 = vand.u32 %v758, 4294901760
        %v996 = vsub.f32 %v758, %v995
        %v997 = vand.u32 %v996, 4294901760
        %998 = vmatpush.msra.mxu0 %v997
        %v999 = vand.u32 %v770, 4294901760
        %1000 = vmatmul.f32.gmra.mxu0 %v999
        %v1001 = vpop.f32.mrf.mxu0
        %v1002 = vadd.f32 %v951, %v1001
        %1003 = vdwg.mxu0
        %1004 = vmatpush.msra.mxu0 0.0
        %1005 = vmatpush.msra.mxu0 0.0
        %1006 = vmatpush.msra.mxu0 0.0
        %1007 = vmatpush.msra.mxu0 0.0
        %1008 = vmatpush.msra.mxu0 0.0
        %1009 = vmatpush.msra.mxu0 0.0
        %v1010 = vand.u32 %v767, 4294901760
        %1011 = vmatpush.msra.mxu0 %v1010
        %v1012 = vand.u32 %v766, 4294901760
        %1013 = vmatpush.msra.mxu0 %v1012
        %v1014 = vand.u32 %v765, 4294901760
        %1015 = vmatpush.msra.mxu0 %v1014
        %v1016 = vand.u32 %v764, 4294901760
        %1017 = vmatpush.msra.mxu0 %v1016
        %v1018 = vand.u32 %v763, 4294901760
        %1019 = vmatpush.msra.mxu0 %v1018
        %v1020 = vand.u32 %v762, 4294901760
        %1021 = vmatpush.msra.mxu0 %v1020
        %v1022 = vand.u32 %v761, 4294901760
        %1023 = vmatpush.msra.mxu0 %v1022
        %v1024 = vand.u32 %v760, 4294901760
        %1025 = vmatpush.msra.mxu0 %v1024
        %v1026 = vand.u32 %v759, 4294901760
        %1027 = vmatpush.msra.mxu0 %v1026
        %v1028 = vand.u32 %v758, 4294901760
        %1029 = vmatpush.msra.mxu0 %v1028
        %v1030 = vand.u32 %v770, 4294901760
        %1031 = vmatmul.f32.gmra.mxu0 %v1030
        %v1032 = vpop.f32.mrf.mxu0
        %v1033 = vadd.f32 %v1002, %v1032
        %1034 = vdwg.mxu0
        %v1036 = vsel %vm768, %v757, 0
        %1038 = vmatpush.msra.mxu0 0.0
        %1039 = vmatpush.msra.mxu0 0.0
        %1040 = vmatpush.msra.mxu0 0.0
        %1041 = vmatpush.msra.mxu0 0.0
        %1042 = vmatpush.msra.mxu0 0.0
        %1043 = vmatpush.msra.mxu0 0.0
        %v1044 = vand.u32 %v767, 4294901760
        %1045 = vmatpush.msra.mxu0 %v1044
        %v1046 = vand.u32 %v766, 4294901760
        %1047 = vmatpush.msra.mxu0 %v1046
        %v1048 = vand.u32 %v765, 4294901760
        %1049 = vmatpush.msra.mxu0 %v1048
        %v1050 = vand.u32 %v764, 4294901760
        %1051 = vmatpush.msra.mxu0 %v1050
        %v1052 = vand.u32 %v763, 4294901760
        %1053 = vmatpush.msra.mxu0 %v1052
        %v1054 = vand.u32 %v762, 4294901760
        %1055 = vmatpush.msra.mxu0 %v1054
        %v1056 = vand.u32 %v761, 4294901760
        %1057 = vmatpush.msra.mxu0 %v1056
        %v1058 = vand.u32 %v760, 4294901760
        %1059 = vmatpush.msra.mxu0 %v1058
        %v1060 = vand.u32 %v759, 4294901760
        %1061 = vmatpush.msra.mxu0 %v1060
        %v1062 = vand.u32 %v758, 4294901760
        %1063 = vmatpush.msra.mxu0 %v1062
        %v1064 = vand.u32 %v1036, 4294901760
        %v1065 = vsub.f32 %v1036, %v1064
        %v1066 = vand.u32 %v1065, 4294901760
        %v1067 = vsub.f32 %v1065, %v1066
        %v1068 = vand.u32 %v1067, 4294901760
        %1069 = vmatmul.f32.gmra.mxu0 %v1068
        %v1070 = vpop.f32.mrf.mxu0
        %v1071 = vadd.f32 0.0, %v1070
        %1072 = vdwg.mxu0
        %1073 = vmatpush.msra.mxu0 0.0
        %1074 = vmatpush.msra.mxu0 0.0
        %1075 = vmatpush.msra.mxu0 0.0
        %1076 = vmatpush.msra.mxu0 0.0
        %1077 = vmatpush.msra.mxu0 0.0
        %1078 = vmatpush.msra.mxu0 0.0
        %v1079 = vand.u32 %v767, 4294901760
        %v1080 = vsub.f32 %v767, %v1079
        %v1081 = vand.u32 %v1080, 4294901760
        %v1082 = vsub.f32 %v1080, %v1081
        %v1083 = vand.u32 %v1082, 4294901760
        %1084 = vmatpush.msra.mxu0 %v1083
        %v1085 = vand.u32 %v766, 4294901760
        %v1086 = vsub.f32 %v766, %v1085
        %v1087 = vand.u32 %v1086, 4294901760
        %v1088 = vsub.f32 %v1086, %v1087
        %v1089 = vand.u32 %v1088, 4294901760
        %1090 = vmatpush.msra.mxu0 %v1089
        %v1091 = vand.u32 %v765, 4294901760
        %v1092 = vsub.f32 %v765, %v1091
        %v1093 = vand.u32 %v1092, 4294901760
        %v1094 = vsub.f32 %v1092, %v1093
        %v1095 = vand.u32 %v1094, 4294901760
        %1096 = vmatpush.msra.mxu0 %v1095
        %v1097 = vand.u32 %v764, 4294901760
        %v1098 = vsub.f32 %v764, %v1097
        %v1099 = vand.u32 %v1098, 4294901760
        %v1100 = vsub.f32 %v1098, %v1099
        %v1101 = vand.u32 %v1100, 4294901760
        %1102 = vmatpush.msra.mxu0 %v1101
        %v1103 = vand.u32 %v763, 4294901760
        %v1104 = vsub.f32 %v763, %v1103
        %v1105 = vand.u32 %v1104, 4294901760
        %v1106 = vsub.f32 %v1104, %v1105
        %v1107 = vand.u32 %v1106, 4294901760
        %1108 = vmatpush.msra.mxu0 %v1107
        %v1109 = vand.u32 %v762, 4294901760
        %v1110 = vsub.f32 %v762, %v1109
        %v1111 = vand.u32 %v1110, 4294901760
        %v1112 = vsub.f32 %v1110, %v1111
        %v1113 = vand.u32 %v1112, 4294901760
        %1114 = vmatpush.msra.mxu0 %v1113
        %v1115 = vand.u32 %v761, 4294901760
        %v1116 = vsub.f32 %v761, %v1115
        %v1117 = vand.u32 %v1116, 4294901760
        %v1118 = vsub.f32 %v1116, %v1117
        %v1119 = vand.u32 %v1118, 4294901760
        %1120 = vmatpush.msra.mxu0 %v1119
        %v1121 = vand.u32 %v760, 4294901760
        %v1122 = vsub.f32 %v760, %v1121
        %v1123 = vand.u32 %v1122, 4294901760
        %v1124 = vsub.f32 %v1122, %v1123
        %v1125 = vand.u32 %v1124, 4294901760
        %1126 = vmatpush.msra.mxu0 %v1125
        %v1127 = vand.u32 %v759, 4294901760
        %v1128 = vsub.f32 %v759, %v1127
        %v1129 = vand.u32 %v1128, 4294901760
        %v1130 = vsub.f32 %v1128, %v1129
        %v1131 = vand.u32 %v1130, 4294901760
        %1132 = vmatpush.msra.mxu0 %v1131
        %v1133 = vand.u32 %v758, 4294901760
        %v1134 = vsub.f32 %v758, %v1133
        %v1135 = vand.u32 %v1134, 4294901760
        %v1136 = vsub.f32 %v1134, %v1135
        %v1137 = vand.u32 %v1136, 4294901760
        %1138 = vmatpush.msra.mxu0 %v1137
        %v1139 = vand.u32 %v1036, 4294901760
        %1140 = vmatmul.f32.gmra.mxu0 %v1139
        %v1141 = vpop.f32.mrf.mxu0
        %v1142 = vadd.f32 %v1071, %v1141
        %1143 = vdwg.mxu0
        %1144 = vmatpush.msra.mxu0 0.0
        %1145 = vmatpush.msra.mxu0 0.0
        %1146 = vmatpush.msra.mxu0 0.0
        %1147 = vmatpush.msra.mxu0 0.0
        %1148 = vmatpush.msra.mxu0 0.0
        %1149 = vmatpush.msra.mxu0 0.0
        %v1150 = vand.u32 %v767, 4294901760
        %v1151 = vsub.f32 %v767, %v1150
        %1152 = vmatpush.msra.mxu0 %v1151
        %v1153 = vand.u32 %v766, 4294901760
        %v1154 = vsub.f32 %v766, %v1153
        %1155 = vmatpush.msra.mxu0 %v1154
        %v1156 = vand.u32 %v765, 4294901760
        %v1157 = vsub.f32 %v765, %v1156
        %1158 = vmatpush.msra.mxu0 %v1157
        %v1159 = vand.u32 %v764, 4294901760
        %v1160 = vsub.f32 %v764, %v1159
        %1161 = vmatpush.msra.mxu0 %v1160
        %v1162 = vand.u32 %v763, 4294901760
        %v1163 = vsub.f32 %v763, %v1162
        %1164 = vmatpush.msra.mxu0 %v1163
        %v1165 = vand.u32 %v762, 4294901760
        %v1166 = vsub.f32 %v762, %v1165
        %1167 = vmatpush.msra.mxu0 %v1166
        %v1168 = vand.u32 %v761, 4294901760
        %v1169 = vsub.f32 %v761, %v1168
        %1170 = vmatpush.msra.mxu0 %v1169
        %v1171 = vand.u32 %v760, 4294901760
        %v1172 = vsub.f32 %v760, %v1171
        %1173 = vmatpush.msra.mxu0 %v1172
        %v1174 = vand.u32 %v759, 4294901760
        %v1175 = vsub.f32 %v759, %v1174
        %1176 = vmatpush.msra.mxu0 %v1175
        %v1177 = vand.u32 %v758, 4294901760
        %v1178 = vsub.f32 %v758, %v1177
        %1179 = vmatpush.msra.mxu0 %v1178
        %v1180 = vand.u32 %v1036, 4294901760
        %v1181 = vsub.f32 %v1036, %v1180
        %1182 = vmatmul.f32.gmra.mxu0 %v1181
        %v1183 = vpop.f32.mrf.mxu0
        %v1184 = vadd.f32 %v1142, %v1183
        %1185 = vdwg.mxu0
        %1186 = vmatpush.msra.mxu0 0.0
        %1187 = vmatpush.msra.mxu0 0.0
        %1188 = vmatpush.msra.mxu0 0.0
        %1189 = vmatpush.msra.mxu0 0.0
        %1190 = vmatpush.msra.mxu0 0.0
        %1191 = vmatpush.msra.mxu0 0.0
        %v1192 = vand.u32 %v767, 4294901760
        %1193 = vmatpush.msra.mxu0 %v1192
        %v1194 = vand.u32 %v766, 4294901760
        %1195 = vmatpush.msra.mxu0 %v1194
        %v1196 = vand.u32 %v765, 4294901760
        %1197 = vmatpush.msra.mxu0 %v1196
        %v1198 = vand.u32 %v764, 4294901760
        %1199 = vmatpush.msra.mxu0 %v1198
        %v1200 = vand.u32 %v763, 4294901760
        %1201 = vmatpush.msra.mxu0 %v1200
        %v1202 = vand.u32 %v762, 4294901760
        %1203 = vmatpush.msra.mxu0 %v1202
        %v1204 = vand.u32 %v761, 4294901760
        %1205 = vmatpush.msra.mxu0 %v1204
        %v1206 = vand.u32 %v760, 4294901760
        %1207 = vmatpush.msra.mxu0 %v1206
        %v1208 = vand.u32 %v759, 4294901760
        %1209 = vmatpush.msra.mxu0 %v1208
        %v1210 = vand.u32 %v758, 4294901760
        %1211 = vmatpush.msra.mxu0 %v1210
        %v1212 = vand.u32 %v1036, 4294901760
        %v1213 = vsub.f32 %v1036, %v1212
        %v1214 = vand.u32 %v1213, 4294901760
        %1215 = vmatmul.f32.gmra.mxu0 %v1214
        %v1216 = vpop.f32.mrf.mxu0
        %v1217 = vadd.f32 %v1184, %v1216
        %1218 = vdwg.mxu0
        %1219 = vmatpush.msra.mxu0 0.0
        %1220 = vmatpush.msra.mxu0 0.0
        %1221 = vmatpush.msra.mxu0 0.0
        %1222 = vmatpush.msra.mxu0 0.0
        %1223 = vmatpush.msra.mxu0 0.0
        %1224 = vmatpush.msra.mxu0 0.0
        %v1225 = vand.u32 %v767, 4294901760
        %v1226 = vsub.f32 %v767, %v1225
        %v1227 = vand.u32 %v1226, 4294901760
        %1228 = vmatpush.msra.mxu0 %v1227
        %v1229 = vand.u32 %v766, 4294901760
        %v1230 = vsub.f32 %v766, %v1229
        %v1231 = vand.u32 %v1230, 4294901760
        %1232 = vmatpush.msra.mxu0 %v1231
        %v1233 = vand.u32 %v765, 4294901760
        %v1234 = vsub.f32 %v765, %v1233
        %v1235 = vand.u32 %v1234, 4294901760
        %1236 = vmatpush.msra.mxu0 %v1235
        %v1237 = vand.u32 %v764, 4294901760
        %v1238 = vsub.f32 %v764, %v1237
        %v1239 = vand.u32 %v1238, 4294901760
        %1240 = vmatpush.msra.mxu0 %v1239
        %v1241 = vand.u32 %v763, 4294901760
        %v1242 = vsub.f32 %v763, %v1241
        %v1243 = vand.u32 %v1242, 4294901760
        %1244 = vmatpush.msra.mxu0 %v1243
        %v1245 = vand.u32 %v762, 4294901760
        %v1246 = vsub.f32 %v762, %v1245
        %v1247 = vand.u32 %v1246, 4294901760
        %1248 = vmatpush.msra.mxu0 %v1247
        %v1249 = vand.u32 %v761, 4294901760
        %v1250 = vsub.f32 %v761, %v1249
        %v1251 = vand.u32 %v1250, 4294901760
        %1252 = vmatpush.msra.mxu0 %v1251
        %v1253 = vand.u32 %v760, 4294901760
        %v1254 = vsub.f32 %v760, %v1253
        %v1255 = vand.u32 %v1254, 4294901760
        %1256 = vmatpush.msra.mxu0 %v1255
        %v1257 = vand.u32 %v759, 4294901760
        %v1258 = vsub.f32 %v759, %v1257
        %v1259 = vand.u32 %v1258, 4294901760
        %1260 = vmatpush.msra.mxu0 %v1259
        %v1261 = vand.u32 %v758, 4294901760
        %v1262 = vsub.f32 %v758, %v1261
        %v1263 = vand.u32 %v1262, 4294901760
        %1264 = vmatpush.msra.mxu0 %v1263
        %v1265 = vand.u32 %v1036, 4294901760
        %1266 = vmatmul.f32.gmra.mxu0 %v1265
        %v1267 = vpop.f32.mrf.mxu0
        %v1268 = vadd.f32 %v1217, %v1267
        %1269 = vdwg.mxu0
        %1270 = vmatpush.msra.mxu0 0.0
        %1271 = vmatpush.msra.mxu0 0.0
        %1272 = vmatpush.msra.mxu0 0.0
        %1273 = vmatpush.msra.mxu0 0.0
        %1274 = vmatpush.msra.mxu0 0.0
        %1275 = vmatpush.msra.mxu0 0.0
        %v1276 = vand.u32 %v767, 4294901760
        %1277 = vmatpush.msra.mxu0 %v1276
        %v1278 = vand.u32 %v766, 4294901760
        %1279 = vmatpush.msra.mxu0 %v1278
        %v1280 = vand.u32 %v765, 4294901760
        %1281 = vmatpush.msra.mxu0 %v1280
        %v1282 = vand.u32 %v764, 4294901760
        %1283 = vmatpush.msra.mxu0 %v1282
        %v1284 = vand.u32 %v763, 4294901760
        %1285 = vmatpush.msra.mxu0 %v1284
        %v1286 = vand.u32 %v762, 4294901760
        %1287 = vmatpush.msra.mxu0 %v1286
        %v1288 = vand.u32 %v761, 4294901760
        %1289 = vmatpush.msra.mxu0 %v1288
        %v1290 = vand.u32 %v760, 4294901760
        %1291 = vmatpush.msra.mxu0 %v1290
        %v1292 = vand.u32 %v759, 4294901760
        %1293 = vmatpush.msra.mxu0 %v1292
        %v1294 = vand.u32 %v758, 4294901760
        %1295 = vmatpush.msra.mxu0 %v1294
        %v1296 = vand.u32 %v1036, 4294901760
        %1297 = vmatmul.f32.gmra.mxu0 %v1296
        %v1298 = vpop.f32.mrf.mxu0
        %v1299 = vadd.f32 %v1268, %v1298
        %1300 = vdwg.mxu0
        %v1301 = vmul.f32 %v1033, %v1033
        %v1302 = vsub.f32 %v1299, %v1301
        %v1303 = vadd.f32 %v1302, 0.0001
        %v1304 = vsub.f32 %v756, %v1033
        %v1305 = vrsqrt.pop %v1303
        %v1306 = vmul.f32 %v1305, %v1303
        %v1307 = vmul.f32 %v1306, %v1305
        %v1308 = vmul.f32 0.5, %v1307
        %v1309 = vsub.f32 1.5, %v1308
        %v1310 = vmul.f32 %v1305, %v1309
        %vm1311 = vweird.f32 %v1303
        %vm1312 = vweird.f32 %v1305
        %vm1313 = vmor %vm1311, %vm1312
        %v1314 = vsel %vm1313, %v1305, %v1310
        %v1315 = vmul.f32 %v1304, %v1314
        %v1316 = vld [vmem:[%s2] sm:$0xff]
        %v1317 = vld [vmem:[%s2 + $0x8] sm:$0xff]
        %v1318 = vld [vmem:[%s2 + $0x10] sm:$0xff]
        %v1319 = vld [vmem:[%s2 + $0x18] sm:$0xff]
        %v1320 = vld [vmem:[%s2 + $0x20] sm:$0xff]
        %v1321 = vld [vmem:[%s2 + $0x28] sm:$0xff]
        %v1322 = vld [vmem:[%s2 + $0x30] sm:$0xff]
        %v1323 = vld [vmem:[%s2 + $0x38] sm:$0xff]
        %v1324 = vld [vmem:[%s2 + $0x40] sm:$0xff]
        %v1325 = vld [vmem:[%s2 + $0x48] sm:$0xff]
        %v1327 = vsel %vm768, %v1315, 0
        %1329 = vmatpush.msra.mxu0 0.0
        %1330 = vmatpush.msra.mxu0 0.0
        %1331 = vmatpush.msra.mxu0 0.0
        %1332 = vmatpush.msra.mxu0 0.0
        %1333 = vmatpush.msra.mxu0 0.0
        %1334 = vmatpush.msra.mxu0 0.0
        %v1335 = vand.u32 %v1325, 4294901760
        %1336 = vmatpush.msra.mxu0 %v1335
        %v1337 = vand.u32 %v1324, 4294901760
        %1338 = vmatpush.msra.mxu0 %v1337
        %v1339 = vand.u32 %v1323, 4294901760
        %1340 = vmatpush.msra.mxu0 %v1339
        %v1341 = vand.u32 %v1322, 4294901760
        %1342 = vmatpush.msra.mxu0 %v1341
        %v1343 = vand.u32 %v1321, 4294901760
        %1344 = vmatpush.msra.mxu0 %v1343
        %v1345 = vand.u32 %v1320, 4294901760
        %1346 = vmatpush.msra.mxu0 %v1345
        %v1347 = vand.u32 %v1319, 4294901760
        %1348 = vmatpush.msra.mxu0 %v1347
        %v1349 = vand.u32 %v1318, 4294901760
        %1350 = vmatpush.msra.mxu0 %v1349
        %v1351 = vand.u32 %v1317, 4294901760
        %1352 = vmatpush.msra.mxu0 %v1351
        %v1353 = vand.u32 %v1316, 4294901760
        %1354 = vmatpush.msra.mxu0 %v1353
        %v1355 = vand.u32 %v1327, 4294901760
        %v1356 = vsub.f32 %v1327, %v1355
        %v1357 = vand.u32 %v1356, 4294901760
        %v1358 = vsub.f32 %v1356, %v1357
        %v1359 = vand.u32 %v1358, 4294901760
        %1360 = vmatmul.f32.gmra.mxu0 %v1359
        %v1361 = vpop.f32.mrf.mxu0
        %v1362 = vadd.f32 0.0, %v1361
        %1363 = vdwg.mxu0
        %1364 = vmatpush.msra.mxu0 0.0
        %1365 = vmatpush.msra.mxu0 0.0
        %1366 = vmatpush.msra.mxu0 0.0
        %1367 = vmatpush.msra.mxu0 0.0
        %1368 = vmatpush.msra.mxu0 0.0
        %1369 = vmatpush.msra.mxu0 0.0
        %v1370 = vand.u32 %v1325, 4294901760
        %v1371 = vsub.f32 %v1325, %v1370
        %v1372 = vand.u32 %v1371, 4294901760
        %v1373 = vsub.f32 %v1371, %v1372
        %v1374 = vand.u32 %v1373, 4294901760
        %1375 = vmatpush.msra.mxu0 %v1374
        %v1376 = vand.u32 %v1324, 4294901760
        %v1377 = vsub.f32 %v1324, %v1376
        %v1378 = vand.u32 %v1377, 4294901760
        %v1379 = vsub.f32 %v1377, %v1378
        %v1380 = vand.u32 %v1379, 4294901760
        %1381 = vmatpush.msra.mxu0 %v1380
        %v1382 = vand.u32 %v1323, 4294901760
        %v1383 = vsub.f32 %v1323, %v1382
        %v1384 = vand.u32 %v1383, 4294901760
        %v1385 = vsub.f32 %v1383, %v1384
        %v1386 = vand.u32 %v1385, 4294901760
        %1387 = vmatpush.msra.mxu0 %v1386
        %v1388 = vand.u32 %v1322, 4294901760
        %v1389 = vsub.f32 %v1322, %v1388
        %v1390 = vand.u32 %v1389, 4294901760
        %v1391 = vsub.f32 %v1389, %v1390
        %v1392 = vand.u32 %v1391, 4294901760
        %1393 = vmatpush.msra.mxu0 %v1392
        %v1394 = vand.u32 %v1321, 4294901760
        %v1395 = vsub.f32 %v1321, %v1394
        %v1396 = vand.u32 %v1395, 4294901760
        %v1397 = vsub.f32 %v1395, %v1396
        %v1398 = vand.u32 %v1397, 4294901760
        %1399 = vmatpush.msra.mxu0 %v1398
        %v1400 = vand.u32 %v1320, 4294901760
        %v1401 = vsub.f32 %v1320, %v1400
        %v1402 = vand.u32 %v1401, 4294901760
        %v1403 = vsub.f32 %v1401, %v1402
        %v1404 = vand.u32 %v1403, 4294901760
        %1405 = vmatpush.msra.mxu0 %v1404
        %v1406 = vand.u32 %v1319, 4294901760
        %v1407 = vsub.f32 %v1319, %v1406
        %v1408 = vand.u32 %v1407, 4294901760
        %v1409 = vsub.f32 %v1407, %v1408
        %v1410 = vand.u32 %v1409, 4294901760
        %1411 = vmatpush.msra.mxu0 %v1410
        %v1412 = vand.u32 %v1318, 4294901760
        %v1413 = vsub.f32 %v1318, %v1412
        %v1414 = vand.u32 %v1413, 4294901760
        %v1415 = vsub.f32 %v1413, %v1414
        %v1416 = vand.u32 %v1415, 4294901760
        %1417 = vmatpush.msra.mxu0 %v1416
        %v1418 = vand.u32 %v1317, 4294901760
        %v1419 = vsub.f32 %v1317, %v1418
        %v1420 = vand.u32 %v1419, 4294901760
        %v1421 = vsub.f32 %v1419, %v1420
        %v1422 = vand.u32 %v1421, 4294901760
        %1423 = vmatpush.msra.mxu0 %v1422
        %v1424 = vand.u32 %v1316, 4294901760
        %v1425 = vsub.f32 %v1316, %v1424
        %v1426 = vand.u32 %v1425, 4294901760
        %v1427 = vsub.f32 %v1425, %v1426
        %v1428 = vand.u32 %v1427, 4294901760
        %1429 = vmatpush.msra.mxu0 %v1428
        %v1430 = vand.u32 %v1327, 4294901760
        %1431 = vmatmul.f32.gmra.mxu0 %v1430
        %v1432 = vpop.f32.mrf.mxu0
        %v1433 = vadd.f32 %v1362, %v1432
        %1434 = vdwg.mxu0
        %1435 = vmatpush.msra.mxu0 0.0
        %1436 = vmatpush.msra.mxu0 0.0
        %1437 = vmatpush.msra.mxu0 0.0
        %1438 = vmatpush.msra.mxu0 0.0
        %1439 = vmatpush.msra.mxu0 0.0
        %1440 = vmatpush.msra.mxu0 0.0
        %v1441 = vand.u32 %v1325, 4294901760
        %v1442 = vsub.f32 %v1325, %v1441
        %1443 = vmatpush.msra.mxu0 %v1442
        %v1444 = vand.u32 %v1324, 4294901760
        %v1445 = vsub.f32 %v1324, %v1444
        %1446 = vmatpush.msra.mxu0 %v1445
        %v1447 = vand.u32 %v1323, 4294901760
        %v1448 = vsub.f32 %v1323, %v1447
        %1449 = vmatpush.msra.mxu0 %v1448
        %v1450 = vand.u32 %v1322, 4294901760
        %v1451 = vsub.f32 %v1322, %v1450
        %1452 = vmatpush.msra.mxu0 %v1451
        %v1453 = vand.u32 %v1321, 4294901760
        %v1454 = vsub.f32 %v1321, %v1453
        %1455 = vmatpush.msra.mxu0 %v1454
        %v1456 = vand.u32 %v1320, 4294901760
        %v1457 = vsub.f32 %v1320, %v1456
        %1458 = vmatpush.msra.mxu0 %v1457
        %v1459 = vand.u32 %v1319, 4294901760
        %v1460 = vsub.f32 %v1319, %v1459
        %1461 = vmatpush.msra.mxu0 %v1460
        %v1462 = vand.u32 %v1318, 4294901760
        %v1463 = vsub.f32 %v1318, %v1462
        %1464 = vmatpush.msra.mxu0 %v1463
        %v1465 = vand.u32 %v1317, 4294901760
        %v1466 = vsub.f32 %v1317, %v1465
        %1467 = vmatpush.msra.mxu0 %v1466
        %v1468 = vand.u32 %v1316, 4294901760
        %v1469 = vsub.f32 %v1316, %v1468
        %1470 = vmatpush.msra.mxu0 %v1469
        %v1471 = vand.u32 %v1327, 4294901760
        %v1472 = vsub.f32 %v1327, %v1471
        %1473 = vmatmul.f32.gmra.mxu0 %v1472
        %v1474 = vpop.f32.mrf.mxu0
        %v1475 = vadd.f32 %v1433, %v1474
        %1476 = vdwg.mxu0
        %1477 = vmatpush.msra.mxu0 0.0
        %1478 = vmatpush.msra.mxu0 0.0
        %1479 = vmatpush.msra.mxu0 0.0
        %1480 = vmatpush.msra.mxu0 0.0
        %1481 = vmatpush.msra.mxu0 0.0
        %1482 = vmatpush.msra.mxu0 0.0
        %v1483 = vand.u32 %v1325, 4294901760
        %1484 = vmatpush.msra.mxu0 %v1483
        %v1485 = vand.u32 %v1324, 4294901760
        %1486 = vmatpush.msra.mxu0 %v1485
        %v1487 = vand.u32 %v1323, 4294901760
        %1488 = vmatpush.msra.mxu0 %v1487
        %v1489 = vand.u32 %v1322, 4294901760
        %1490 = vmatpush.msra.mxu0 %v1489
        %v1491 = vand.u32 %v1321, 4294901760
        %1492 = vmatpush.msra.mxu0 %v1491
        %v1493 = vand.u32 %v1320, 4294901760
        %1494 = vmatpush.msra.mxu0 %v1493
        %v1495 = vand.u32 %v1319, 4294901760
        %1496 = vmatpush.msra.mxu0 %v1495
        %v1497 = vand.u32 %v1318, 4294901760
        %1498 = vmatpush.msra.mxu0 %v1497
        %v1499 = vand.u32 %v1317, 4294901760
        %1500 = vmatpush.msra.mxu0 %v1499
        %v1501 = vand.u32 %v1316, 4294901760
        %1502 = vmatpush.msra.mxu0 %v1501
        %v1503 = vand.u32 %v1327, 4294901760
        %v1504 = vsub.f32 %v1327, %v1503
        %v1505 = vand.u32 %v1504, 4294901760
        %1506 = vmatmul.f32.gmra.mxu0 %v1505
        %v1507 = vpop.f32.mrf.mxu0
        %v1508 = vadd.f32 %v1475, %v1507
        %1509 = vdwg.mxu0
        %1510 = vmatpush.msra.mxu0 0.0
        %1511 = vmatpush.msra.mxu0 0.0
        %1512 = vmatpush.msra.mxu0 0.0
        %1513 = vmatpush.msra.mxu0 0.0
        %1514 = vmatpush.msra.mxu0 0.0
        %1515 = vmatpush.msra.mxu0 0.0
        %v1516 = vand.u32 %v1325, 4294901760
        %v1517 = vsub.f32 %v1325, %v1516
        %v1518 = vand.u32 %v1517, 4294901760
        %1519 = vmatpush.msra.mxu0 %v1518
        %v1520 = vand.u32 %v1324, 4294901760
        %v1521 = vsub.f32 %v1324, %v1520
        %v1522 = vand.u32 %v1521, 4294901760
        %1523 = vmatpush.msra.mxu0 %v1522
        %v1524 = vand.u32 %v1323, 4294901760
        %v1525 = vsub.f32 %v1323, %v1524
        %v1526 = vand.u32 %v1525, 4294901760
        %1527 = vmatpush.msra.mxu0 %v1526
        %v1528 = vand.u32 %v1322, 4294901760
        %v1529 = vsub.f32 %v1322, %v1528
        %v1530 = vand.u32 %v1529, 4294901760
        %1531 = vmatpush.msra.mxu0 %v1530
        %v1532 = vand.u32 %v1321, 4294901760
        %v1533 = vsub.f32 %v1321, %v1532
        %v1534 = vand.u32 %v1533, 4294901760
        %1535 = vmatpush.msra.mxu0 %v1534
        %v1536 = vand.u32 %v1320, 4294901760
        %v1537 = vsub.f32 %v1320, %v1536
        %v1538 = vand.u32 %v1537, 4294901760
        %1539 = vmatpush.msra.mxu0 %v1538
        %v1540 = vand.u32 %v1319, 4294901760
        %v1541 = vsub.f32 %v1319, %v1540
        %v1542 = vand.u32 %v1541, 4294901760
        %1543 = vmatpush.msra.mxu0 %v1542
        %v1544 = vand.u32 %v1318, 4294901760
        %v1545 = vsub.f32 %v1318, %v1544
        %v1546 = vand.u32 %v1545, 4294901760
        %1547 = vmatpush.msra.mxu0 %v1546
        %v1548 = vand.u32 %v1317, 4294901760
        %v1549 = vsub.f32 %v1317, %v1548
        %v1550 = vand.u32 %v1549, 4294901760
        %1551 = vmatpush.msra.mxu0 %v1550
        %v1552 = vand.u32 %v1316, 4294901760
        %v1553 = vsub.f32 %v1316, %v1552
        %v1554 = vand.u32 %v1553, 4294901760
        %1555 = vmatpush.msra.mxu0 %v1554
        %v1556 = vand.u32 %v1327, 4294901760
        %1557 = vmatmul.f32.gmra.mxu0 %v1556
        %v1558 = vpop.f32.mrf.mxu0
        %v1559 = vadd.f32 %v1508, %v1558
        %1560 = vdwg.mxu0
        %1561 = vmatpush.msra.mxu0 0.0
        %1562 = vmatpush.msra.mxu0 0.0
        %1563 = vmatpush.msra.mxu0 0.0
        %1564 = vmatpush.msra.mxu0 0.0
        %1565 = vmatpush.msra.mxu0 0.0
        %1566 = vmatpush.msra.mxu0 0.0
        %v1567 = vand.u32 %v1325, 4294901760
        %1568 = vmatpush.msra.mxu0 %v1567
        %v1569 = vand.u32 %v1324, 4294901760
        %1570 = vmatpush.msra.mxu0 %v1569
        %v1571 = vand.u32 %v1323, 4294901760
        %1572 = vmatpush.msra.mxu0 %v1571
        %v1573 = vand.u32 %v1322, 4294901760
        %1574 = vmatpush.msra.mxu0 %v1573
        %v1575 = vand.u32 %v1321, 4294901760
        %1576 = vmatpush.msra.mxu0 %v1575
        %v1577 = vand.u32 %v1320, 4294901760
        %1578 = vmatpush.msra.mxu0 %v1577
        %v1579 = vand.u32 %v1319, 4294901760
        %1580 = vmatpush.msra.mxu0 %v1579
        %v1581 = vand.u32 %v1318, 4294901760
        %1582 = vmatpush.msra.mxu0 %v1581
        %v1583 = vand.u32 %v1317, 4294901760
        %1584 = vmatpush.msra.mxu0 %v1583
        %v1585 = vand.u32 %v1316, 4294901760
        %1586 = vmatpush.msra.mxu0 %v1585
        %v1587 = vand.u32 %v1327, 4294901760
        %1588 = vmatmul.f32.gmra.mxu0 %v1587
        %v1589 = vpop.f32.mrf.mxu0
        %v1590 = vadd.f32 %v1559, %v1589
        %1591 = vdwg.mxu0
        %v1593 = vsel %vm768, %v1033, 0
        %1595 = vmatpush.msra.mxu0 0.0
        %1596 = vmatpush.msra.mxu0 0.0
        %1597 = vmatpush.msra.mxu0 0.0
        %1598 = vmatpush.msra.mxu0 0.0
        %1599 = vmatpush.msra.mxu0 0.0
        %1600 = vmatpush.msra.mxu0 0.0
        %v1601 = vand.u32 %v1325, 4294901760
        %1602 = vmatpush.msra.mxu0 %v1601
        %v1603 = vand.u32 %v1324, 4294901760
        %1604 = vmatpush.msra.mxu0 %v1603
        %v1605 = vand.u32 %v1323, 4294901760
        %1606 = vmatpush.msra.mxu0 %v1605
        %v1607 = vand.u32 %v1322, 4294901760
        %1608 = vmatpush.msra.mxu0 %v1607
        %v1609 = vand.u32 %v1321, 4294901760
        %1610 = vmatpush.msra.mxu0 %v1609
        %v1611 = vand.u32 %v1320, 4294901760
        %1612 = vmatpush.msra.mxu0 %v1611
        %v1613 = vand.u32 %v1319, 4294901760
        %1614 = vmatpush.msra.mxu0 %v1613
        %v1615 = vand.u32 %v1318, 4294901760
        %1616 = vmatpush.msra.mxu0 %v1615
        %v1617 = vand.u32 %v1317, 4294901760
        %1618 = vmatpush.msra.mxu0 %v1617
        %v1619 = vand.u32 %v1316, 4294901760
        %1620 = vmatpush.msra.mxu0 %v1619
        %v1621 = vand.u32 %v1593, 4294901760
        %v1622 = vsub.f32 %v1593, %v1621
        %v1623 = vand.u32 %v1622, 4294901760
        %v1624 = vsub.f32 %v1622, %v1623
        %v1625 = vand.u32 %v1624, 4294901760
        %1626 = vmatmul.f32.gmra.mxu0 %v1625
        %v1627 = vpop.f32.mrf.mxu0
        %v1628 = vadd.f32 0.0, %v1627
        %1629 = vdwg.mxu0
        %1630 = vmatpush.msra.mxu0 0.0
        %1631 = vmatpush.msra.mxu0 0.0
        %1632 = vmatpush.msra.mxu0 0.0
        %1633 = vmatpush.msra.mxu0 0.0
        %1634 = vmatpush.msra.mxu0 0.0
        %1635 = vmatpush.msra.mxu0 0.0
        %v1636 = vand.u32 %v1325, 4294901760
        %v1637 = vsub.f32 %v1325, %v1636
        %v1638 = vand.u32 %v1637, 4294901760
        %v1639 = vsub.f32 %v1637, %v1638
        %v1640 = vand.u32 %v1639, 4294901760
        %1641 = vmatpush.msra.mxu0 %v1640
        %v1642 = vand.u32 %v1324, 4294901760
        %v1643 = vsub.f32 %v1324, %v1642
        %v1644 = vand.u32 %v1643, 4294901760
        %v1645 = vsub.f32 %v1643, %v1644
        %v1646 = vand.u32 %v1645, 4294901760
        %1647 = vmatpush.msra.mxu0 %v1646
        %v1648 = vand.u32 %v1323, 4294901760
        %v1649 = vsub.f32 %v1323, %v1648
        %v1650 = vand.u32 %v1649, 4294901760
        %v1651 = vsub.f32 %v1649, %v1650
        %v1652 = vand.u32 %v1651, 4294901760
        %1653 = vmatpush.msra.mxu0 %v1652
        %v1654 = vand.u32 %v1322, 4294901760
        %v1655 = vsub.f32 %v1322, %v1654
        %v1656 = vand.u32 %v1655, 4294901760
        %v1657 = vsub.f32 %v1655, %v1656
        %v1658 = vand.u32 %v1657, 4294901760
        %1659 = vmatpush.msra.mxu0 %v1658
        %v1660 = vand.u32 %v1321, 4294901760
        %v1661 = vsub.f32 %v1321, %v1660
        %v1662 = vand.u32 %v1661, 4294901760
        %v1663 = vsub.f32 %v1661, %v1662
        %v1664 = vand.u32 %v1663, 4294901760
        %1665 = vmatpush.msra.mxu0 %v1664
        %v1666 = vand.u32 %v1320, 4294901760
        %v1667 = vsub.f32 %v1320, %v1666
        %v1668 = vand.u32 %v1667, 4294901760
        %v1669 = vsub.f32 %v1667, %v1668
        %v1670 = vand.u32 %v1669, 4294901760
        %1671 = vmatpush.msra.mxu0 %v1670
        %v1672 = vand.u32 %v1319, 4294901760
        %v1673 = vsub.f32 %v1319, %v1672
        %v1674 = vand.u32 %v1673, 4294901760
        %v1675 = vsub.f32 %v1673, %v1674
        %v1676 = vand.u32 %v1675, 4294901760
        %1677 = vmatpush.msra.mxu0 %v1676
        %v1678 = vand.u32 %v1318, 4294901760
        %v1679 = vsub.f32 %v1318, %v1678
        %v1680 = vand.u32 %v1679, 4294901760
        %v1681 = vsub.f32 %v1679, %v1680
        %v1682 = vand.u32 %v1681, 4294901760
        %1683 = vmatpush.msra.mxu0 %v1682
        %v1684 = vand.u32 %v1317, 4294901760
        %v1685 = vsub.f32 %v1317, %v1684
        %v1686 = vand.u32 %v1685, 4294901760
        %v1687 = vsub.f32 %v1685, %v1686
        %v1688 = vand.u32 %v1687, 4294901760
        %1689 = vmatpush.msra.mxu0 %v1688
        %v1690 = vand.u32 %v1316, 4294901760
        %v1691 = vsub.f32 %v1316, %v1690
        %v1692 = vand.u32 %v1691, 4294901760
        %v1693 = vsub.f32 %v1691, %v1692
        %v1694 = vand.u32 %v1693, 4294901760
        %1695 = vmatpush.msra.mxu0 %v1694
        %v1696 = vand.u32 %v1593, 4294901760
        %1697 = vmatmul.f32.gmra.mxu0 %v1696
        %v1698 = vpop.f32.mrf.mxu0
        %v1699 = vadd.f32 %v1628, %v1698
        %1700 = vdwg.mxu0
        %1701 = vmatpush.msra.mxu0 0.0
        %1702 = vmatpush.msra.mxu0 0.0
        %1703 = vmatpush.msra.mxu0 0.0
        %1704 = vmatpush.msra.mxu0 0.0
        %1705 = vmatpush.msra.mxu0 0.0
        %1706 = vmatpush.msra.mxu0 0.0
        %v1707 = vand.u32 %v1325, 4294901760
        %v1708 = vsub.f32 %v1325, %v1707
        %1709 = vmatpush.msra.mxu0 %v1708
        %v1710 = vand.u32 %v1324, 4294901760
        %v1711 = vsub.f32 %v1324, %v1710
        %1712 = vmatpush.msra.mxu0 %v1711
        %v1713 = vand.u32 %v1323, 4294901760
        %v1714 = vsub.f32 %v1323, %v1713
        %1715 = vmatpush.msra.mxu0 %v1714
        %v1716 = vand.u32 %v1322, 4294901760
        %v1717 = vsub.f32 %v1322, %v1716
        %1718 = vmatpush.msra.mxu0 %v1717
        %v1719 = vand.u32 %v1321, 4294901760
        %v1720 = vsub.f32 %v1321, %v1719
        %1721 = vmatpush.msra.mxu0 %v1720
        %v1722 = vand.u32 %v1320, 4294901760
        %v1723 = vsub.f32 %v1320, %v1722
        %1724 = vmatpush.msra.mxu0 %v1723
        %v1725 = vand.u32 %v1319, 4294901760
        %v1726 = vsub.f32 %v1319, %v1725
        %1727 = vmatpush.msra.mxu0 %v1726
        %v1728 = vand.u32 %v1318, 4294901760
        %v1729 = vsub.f32 %v1318, %v1728
        %1730 = vmatpush.msra.mxu0 %v1729
        %v1731 = vand.u32 %v1317, 4294901760
        %v1732 = vsub.f32 %v1317, %v1731
        %1733 = vmatpush.msra.mxu0 %v1732
        %v1734 = vand.u32 %v1316, 4294901760
        %v1735 = vsub.f32 %v1316, %v1734
        %1736 = vmatpush.msra.mxu0 %v1735
        %v1737 = vand.u32 %v1593, 4294901760
        %v1738 = vsub.f32 %v1593, %v1737
        %1739 = vmatmul.f32.gmra.mxu0 %v1738
        %v1740 = vpop.f32.mrf.mxu0
        %v1741 = vadd.f32 %v1699, %v1740
        %1742 = vdwg.mxu0
        %1743 = vmatpush.msra.mxu0 0.0
        %1744 = vmatpush.msra.mxu0 0.0
        %1745 = vmatpush.msra.mxu0 0.0
        %1746 = vmatpush.msra.mxu0 0.0
        %1747 = vmatpush.msra.mxu0 0.0
        %1748 = vmatpush.msra.mxu0 0.0
        %v1749 = vand.u32 %v1325, 4294901760
        %1750 = vmatpush.msra.mxu0 %v1749
        %v1751 = vand.u32 %v1324, 4294901760
        %1752 = vmatpush.msra.mxu0 %v1751
        %v1753 = vand.u32 %v1323, 4294901760
        %1754 = vmatpush.msra.mxu0 %v1753
        %v1755 = vand.u32 %v1322, 4294901760
        %1756 = vmatpush.msra.mxu0 %v1755
        %v1757 = vand.u32 %v1321, 4294901760
        %1758 = vmatpush.msra.mxu0 %v1757
        %v1759 = vand.u32 %v1320, 4294901760
        %1760 = vmatpush.msra.mxu0 %v1759
        %v1761 = vand.u32 %v1319, 4294901760
        %1762 = vmatpush.msra.mxu0 %v1761
        %v1763 = vand.u32 %v1318, 4294901760
        %1764 = vmatpush.msra.mxu0 %v1763
        %v1765 = vand.u32 %v1317, 4294901760
        %1766 = vmatpush.msra.mxu0 %v1765
        %v1767 = vand.u32 %v1316, 4294901760
        %1768 = vmatpush.msra.mxu0 %v1767
        %v1769 = vand.u32 %v1593, 4294901760
        %v1770 = vsub.f32 %v1593, %v1769
        %v1771 = vand.u32 %v1770, 4294901760
        %1772 = vmatmul.f32.gmra.mxu0 %v1771
        %v1773 = vpop.f32.mrf.mxu0
        %v1774 = vadd.f32 %v1741, %v1773
        %1775 = vdwg.mxu0
        %1776 = vmatpush.msra.mxu0 0.0
        %1777 = vmatpush.msra.mxu0 0.0
        %1778 = vmatpush.msra.mxu0 0.0
        %1779 = vmatpush.msra.mxu0 0.0
        %1780 = vmatpush.msra.mxu0 0.0
        %1781 = vmatpush.msra.mxu0 0.0
        %v1782 = vand.u32 %v1325, 4294901760
        %v1783 = vsub.f32 %v1325, %v1782
        %v1784 = vand.u32 %v1783, 4294901760
        %1785 = vmatpush.msra.mxu0 %v1784
        %v1786 = vand.u32 %v1324, 4294901760
        %v1787 = vsub.f32 %v1324, %v1786
        %v1788 = vand.u32 %v1787, 4294901760
        %1789 = vmatpush.msra.mxu0 %v1788
        %v1790 = vand.u32 %v1323, 4294901760
        %v1791 = vsub.f32 %v1323, %v1790
        %v1792 = vand.u32 %v1791, 4294901760
        %1793 = vmatpush.msra.mxu0 %v1792
        %v1794 = vand.u32 %v1322, 4294901760
        %v1795 = vsub.f32 %v1322, %v1794
        %v1796 = vand.u32 %v1795, 4294901760
        %1797 = vmatpush.msra.mxu0 %v1796
        %v1798 = vand.u32 %v1321, 4294901760
        %v1799 = vsub.f32 %v1321, %v1798
        %v1800 = vand.u32 %v1799, 4294901760
        %1801 = vmatpush.msra.mxu0 %v1800
        %v1802 = vand.u32 %v1320, 4294901760
        %v1803 = vsub.f32 %v1320, %v1802
        %v1804 = vand.u32 %v1803, 4294901760
        %1805 = vmatpush.msra.mxu0 %v1804
        %v1806 = vand.u32 %v1319, 4294901760
        %v1807 = vsub.f32 %v1319, %v1806
        %v1808 = vand.u32 %v1807, 4294901760
        %1809 = vmatpush.msra.mxu0 %v1808
        %v1810 = vand.u32 %v1318, 4294901760
        %v1811 = vsub.f32 %v1318, %v1810
        %v1812 = vand.u32 %v1811, 4294901760
        %1813 = vmatpush.msra.mxu0 %v1812
        %v1814 = vand.u32 %v1317, 4294901760
        %v1815 = vsub.f32 %v1317, %v1814
        %v1816 = vand.u32 %v1815, 4294901760
        %1817 = vmatpush.msra.mxu0 %v1816
        %v1818 = vand.u32 %v1316, 4294901760
        %v1819 = vsub.f32 %v1316, %v1818
        %v1820 = vand.u32 %v1819, 4294901760
        %1821 = vmatpush.msra.mxu0 %v1820
        %v1822 = vand.u32 %v1593, 4294901760
        %1823 = vmatmul.f32.gmra.mxu0 %v1822
        %v1824 = vpop.f32.mrf.mxu0
        %v1825 = vadd.f32 %v1774, %v1824
        %1826 = vdwg.mxu0
        %1827 = vmatpush.msra.mxu0 0.0
        %1828 = vmatpush.msra.mxu0 0.0
        %1829 = vmatpush.msra.mxu0 0.0
        %1830 = vmatpush.msra.mxu0 0.0
        %1831 = vmatpush.msra.mxu0 0.0
        %1832 = vmatpush.msra.mxu0 0.0
        %v1833 = vand.u32 %v1325, 4294901760
        %1834 = vmatpush.msra.mxu0 %v1833
        %v1835 = vand.u32 %v1324, 4294901760
        %1836 = vmatpush.msra.mxu0 %v1835
        %v1837 = vand.u32 %v1323, 4294901760
        %1838 = vmatpush.msra.mxu0 %v1837
        %v1839 = vand.u32 %v1322, 4294901760
        %1840 = vmatpush.msra.mxu0 %v1839
        %v1841 = vand.u32 %v1321, 4294901760
        %1842 = vmatpush.msra.mxu0 %v1841
        %v1843 = vand.u32 %v1320, 4294901760
        %1844 = vmatpush.msra.mxu0 %v1843
        %v1845 = vand.u32 %v1319, 4294901760
        %1846 = vmatpush.msra.mxu0 %v1845
        %v1847 = vand.u32 %v1318, 4294901760
        %1848 = vmatpush.msra.mxu0 %v1847
        %v1849 = vand.u32 %v1317, 4294901760
        %1850 = vmatpush.msra.mxu0 %v1849
        %v1851 = vand.u32 %v1316, 4294901760
        %1852 = vmatpush.msra.mxu0 %v1851
        %v1853 = vand.u32 %v1593, 4294901760
        %1854 = vmatmul.f32.gmra.mxu0 %v1853
        %v1855 = vpop.f32.mrf.mxu0
        %v1856 = vadd.f32 %v1825, %v1855
        %1857 = vdwg.mxu0
        %v1858 = vld [vmem:[%s3] sm:$0xff]
        %v1859 = vld [vmem:[%s3 + $0x8] sm:$0xff]
        %v1860 = vld [vmem:[%s3 + $0x10] sm:$0xff]
        %v1861 = vld [vmem:[%s3 + $0x18] sm:$0xff]
        %v1862 = vld [vmem:[%s3 + $0x20] sm:$0xff]
        %v1863 = vld [vmem:[%s3 + $0x28] sm:$0xff]
        %v1864 = vld [vmem:[%s3 + $0x30] sm:$0xff]
        %v1865 = vld [vmem:[%s3 + $0x38] sm:$0xff]
        %v1866 = vld [vmem:[%s3 + $0x40] sm:$0xff]
        %v1867 = vld [vmem:[%s3 + $0x48] sm:$0xff]
        %1868 = vmatpush.msra.mxu0 0.0
        %1869 = vmatpush.msra.mxu0 0.0
        %1870 = vmatpush.msra.mxu0 0.0
        %1871 = vmatpush.msra.mxu0 0.0
        %1872 = vmatpush.msra.mxu0 0.0
        %1873 = vmatpush.msra.mxu0 0.0
        %v1874 = vand.u32 %v1867, 4294901760
        %1875 = vmatpush.msra.mxu0 %v1874
        %v1876 = vand.u32 %v1866, 4294901760
        %1877 = vmatpush.msra.mxu0 %v1876
        %v1878 = vand.u32 %v1865, 4294901760
        %1879 = vmatpush.msra.mxu0 %v1878
        %v1880 = vand.u32 %v1864, 4294901760
        %1881 = vmatpush.msra.mxu0 %v1880
        %v1882 = vand.u32 %v1863, 4294901760
        %1883 = vmatpush.msra.mxu0 %v1882
        %v1884 = vand.u32 %v1862, 4294901760
        %1885 = vmatpush.msra.mxu0 %v1884
        %v1886 = vand.u32 %v1861, 4294901760
        %1887 = vmatpush.msra.mxu0 %v1886
        %v1888 = vand.u32 %v1860, 4294901760
        %1889 = vmatpush.msra.mxu0 %v1888
        %v1890 = vand.u32 %v1859, 4294901760
        %1891 = vmatpush.msra.mxu0 %v1890
        %v1892 = vand.u32 %v1858, 4294901760
        %1893 = vmatpush.msra.mxu0 %v1892
        %v1894 = vand.u32 %v770, 4294901760
        %v1895 = vsub.f32 %v770, %v1894
        %v1896 = vand.u32 %v1895, 4294901760
        %v1897 = vsub.f32 %v1895, %v1896
        %v1898 = vand.u32 %v1897, 4294901760
        %1899 = vmatmul.f32.gmra.mxu0 %v1898
        %v1900 = vpop.f32.mrf.mxu0
        %v1901 = vadd.f32 0.0, %v1900
        %1902 = vdwg.mxu0
        %1903 = vmatpush.msra.mxu0 0.0
        %1904 = vmatpush.msra.mxu0 0.0
        %1905 = vmatpush.msra.mxu0 0.0
        %1906 = vmatpush.msra.mxu0 0.0
        %1907 = vmatpush.msra.mxu0 0.0
        %1908 = vmatpush.msra.mxu0 0.0
        %v1909 = vand.u32 %v1867, 4294901760
        %v1910 = vsub.f32 %v1867, %v1909
        %v1911 = vand.u32 %v1910, 4294901760
        %v1912 = vsub.f32 %v1910, %v1911
        %v1913 = vand.u32 %v1912, 4294901760
        %1914 = vmatpush.msra.mxu0 %v1913
        %v1915 = vand.u32 %v1866, 4294901760
        %v1916 = vsub.f32 %v1866, %v1915
        %v1917 = vand.u32 %v1916, 4294901760
        %v1918 = vsub.f32 %v1916, %v1917
        %v1919 = vand.u32 %v1918, 4294901760
        %1920 = vmatpush.msra.mxu0 %v1919
        %v1921 = vand.u32 %v1865, 4294901760
        %v1922 = vsub.f32 %v1865, %v1921
        %v1923 = vand.u32 %v1922, 4294901760
        %v1924 = vsub.f32 %v1922, %v1923
        %v1925 = vand.u32 %v1924, 4294901760
        %1926 = vmatpush.msra.mxu0 %v1925
        %v1927 = vand.u32 %v1864, 4294901760
        %v1928 = vsub.f32 %v1864, %v1927
        %v1929 = vand.u32 %v1928, 4294901760
        %v1930 = vsub.f32 %v1928, %v1929
        %v1931 = vand.u32 %v1930, 4294901760
        %1932 = vmatpush.msra.mxu0 %v1931
        %v1933 = vand.u32 %v1863, 4294901760
        %v1934 = vsub.f32 %v1863, %v1933
        %v1935 = vand.u32 %v1934, 4294901760
        %v1936 = vsub.f32 %v1934, %v1935
        %v1937 = vand.u32 %v1936, 4294901760
        %1938 = vmatpush.msra.mxu0 %v1937
        %v1939 = vand.u32 %v1862, 4294901760
        %v1940 = vsub.f32 %v1862, %v1939
        %v1941 = vand.u32 %v1940, 4294901760
        %v1942 = vsub.f32 %v1940, %v1941
        %v1943 = vand.u32 %v1942, 4294901760
        %1944 = vmatpush.msra.mxu0 %v1943
        %v1945 = vand.u32 %v1861, 4294901760
        %v1946 = vsub.f32 %v1861, %v1945
        %v1947 = vand.u32 %v1946, 4294901760
        %v1948 = vsub.f32 %v1946, %v1947
        %v1949 = vand.u32 %v1948, 4294901760
        %1950 = vmatpush.msra.mxu0 %v1949
        %v1951 = vand.u32 %v1860, 4294901760
        %v1952 = vsub.f32 %v1860, %v1951
        %v1953 = vand.u32 %v1952, 4294901760
        %v1954 = vsub.f32 %v1952, %v1953
        %v1955 = vand.u32 %v1954, 4294901760
        %1956 = vmatpush.msra.mxu0 %v1955
        %v1957 = vand.u32 %v1859, 4294901760
        %v1958 = vsub.f32 %v1859, %v1957
        %v1959 = vand.u32 %v1958, 4294901760
        %v1960 = vsub.f32 %v1958, %v1959
        %v1961 = vand.u32 %v1960, 4294901760
        %1962 = vmatpush.msra.mxu0 %v1961
        %v1963 = vand.u32 %v1858, 4294901760
        %v1964 = vsub.f32 %v1858, %v1963
        %v1965 = vand.u32 %v1964, 4294901760
        %v1966 = vsub.f32 %v1964, %v1965
        %v1967 = vand.u32 %v1966, 4294901760
        %1968 = vmatpush.msra.mxu0 %v1967
        %v1969 = vand.u32 %v770, 4294901760
        %1970 = vmatmul.f32.gmra.mxu0 %v1969
        %v1971 = vpop.f32.mrf.mxu0
        %v1972 = vadd.f32 %v1901, %v1971
        %1973 = vdwg.mxu0
        %1974 = vmatpush.msra.mxu0 0.0
        %1975 = vmatpush.msra.mxu0 0.0
        %1976 = vmatpush.msra.mxu0 0.0
        %1977 = vmatpush.msra.mxu0 0.0
        %1978 = vmatpush.msra.mxu0 0.0
        %1979 = vmatpush.msra.mxu0 0.0
        %v1980 = vand.u32 %v1867, 4294901760
        %v1981 = vsub.f32 %v1867, %v1980
        %1982 = vmatpush.msra.mxu0 %v1981
        %v1983 = vand.u32 %v1866, 4294901760
        %v1984 = vsub.f32 %v1866, %v1983
        %1985 = vmatpush.msra.mxu0 %v1984
        %v1986 = vand.u32 %v1865, 4294901760
        %v1987 = vsub.f32 %v1865, %v1986
        %1988 = vmatpush.msra.mxu0 %v1987
        %v1989 = vand.u32 %v1864, 4294901760
        %v1990 = vsub.f32 %v1864, %v1989
        %1991 = vmatpush.msra.mxu0 %v1990
        %v1992 = vand.u32 %v1863, 4294901760
        %v1993 = vsub.f32 %v1863, %v1992
        %1994 = vmatpush.msra.mxu0 %v1993
        %v1995 = vand.u32 %v1862, 4294901760
        %v1996 = vsub.f32 %v1862, %v1995
        %1997 = vmatpush.msra.mxu0 %v1996
        %v1998 = vand.u32 %v1861, 4294901760
        %v1999 = vsub.f32 %v1861, %v1998
        %2000 = vmatpush.msra.mxu0 %v1999
        %v2001 = vand.u32 %v1860, 4294901760
        %v2002 = vsub.f32 %v1860, %v2001
        %2003 = vmatpush.msra.mxu0 %v2002
        %v2004 = vand.u32 %v1859, 4294901760
        %v2005 = vsub.f32 %v1859, %v2004
        %2006 = vmatpush.msra.mxu0 %v2005
        %v2007 = vand.u32 %v1858, 4294901760
        %v2008 = vsub.f32 %v1858, %v2007
        %2009 = vmatpush.msra.mxu0 %v2008
        %v2010 = vand.u32 %v770, 4294901760
        %v2011 = vsub.f32 %v770, %v2010
        %2012 = vmatmul.f32.gmra.mxu0 %v2011
        %v2013 = vpop.f32.mrf.mxu0
        %v2014 = vadd.f32 %v1972, %v2013
        %2015 = vdwg.mxu0
        %2016 = vmatpush.msra.mxu0 0.0
        %2017 = vmatpush.msra.mxu0 0.0
        %2018 = vmatpush.msra.mxu0 0.0
        %2019 = vmatpush.msra.mxu0 0.0
        %2020 = vmatpush.msra.mxu0 0.0
        %2021 = vmatpush.msra.mxu0 0.0
        %v2022 = vand.u32 %v1867, 4294901760
        %2023 = vmatpush.msra.mxu0 %v2022
        %v2024 = vand.u32 %v1866, 4294901760
        %2025 = vmatpush.msra.mxu0 %v2024
        %v2026 = vand.u32 %v1865, 4294901760
        %2027 = vmatpush.msra.mxu0 %v2026
        %v2028 = vand.u32 %v1864, 4294901760
        %2029 = vmatpush.msra.mxu0 %v2028
        %v2030 = vand.u32 %v1863, 4294901760
        %2031 = vmatpush.msra.mxu0 %v2030
        %v2032 = vand.u32 %v1862, 4294901760
        %2033 = vmatpush.msra.mxu0 %v2032
        %v2034 = vand.u32 %v1861, 4294901760
        %2035 = vmatpush.msra.mxu0 %v2034
        %v2036 = vand.u32 %v1860, 4294901760
        %2037 = vmatpush.msra.mxu0 %v2036
        %v2038 = vand.u32 %v1859, 4294901760
        %2039 = vmatpush.msra.mxu0 %v2038
        %v2040 = vand.u32 %v1858, 4294901760
        %2041 = vmatpush.msra.mxu0 %v2040
        %v2042 = vand.u32 %v770, 4294901760
        %v2043 = vsub.f32 %v770, %v2042
        %v2044 = vand.u32 %v2043, 4294901760
        %2045 = vmatmul.f32.gmra.mxu0 %v2044
        %v2046 = vpop.f32.mrf.mxu0
        %v2047 = vadd.f32 %v2014, %v2046
        %2048 = vdwg.mxu0
        %2049 = vmatpush.msra.mxu0 0.0
        %2050 = vmatpush.msra.mxu0 0.0
        %2051 = vmatpush.msra.mxu0 0.0
        %2052 = vmatpush.msra.mxu0 0.0
        %2053 = vmatpush.msra.mxu0 0.0
        %2054 = vmatpush.msra.mxu0 0.0
        %v2055 = vand.u32 %v1867, 4294901760
        %v2056 = vsub.f32 %v1867, %v2055
        %v2057 = vand.u32 %v2056, 4294901760
        %2058 = vmatpush.msra.mxu0 %v2057
        %v2059 = vand.u32 %v1866, 4294901760
        %v2060 = vsub.f32 %v1866, %v2059
        %v2061 = vand.u32 %v2060, 4294901760
        %2062 = vmatpush.msra.mxu0 %v2061
        %v2063 = vand.u32 %v1865, 4294901760
        %v2064 = vsub.f32 %v1865, %v2063
        %v2065 = vand.u32 %v2064, 4294901760
        %2066 = vmatpush.msra.mxu0 %v2065
        %v2067 = vand.u32 %v1864, 4294901760
        %v2068 = vsub.f32 %v1864, %v2067
        %v2069 = vand.u32 %v2068, 4294901760
        %2070 = vmatpush.msra.mxu0 %v2069
        %v2071 = vand.u32 %v1863, 4294901760
        %v2072 = vsub.f32 %v1863, %v2071
        %v2073 = vand.u32 %v2072, 4294901760
        %2074 = vmatpush.msra.mxu0 %v2073
        %v2075 = vand.u32 %v1862, 4294901760
        %v2076 = vsub.f32 %v1862, %v2075
        %v2077 = vand.u32 %v2076, 4294901760
        %2078 = vmatpush.msra.mxu0 %v2077
        %v2079 = vand.u32 %v1861, 4294901760
        %v2080 = vsub.f32 %v1861, %v2079
        %v2081 = vand.u32 %v2080, 4294901760
        %2082 = vmatpush.msra.mxu0 %v2081
        %v2083 = vand.u32 %v1860, 4294901760
        %v2084 = vsub.f32 %v1860, %v2083
        %v2085 = vand.u32 %v2084, 4294901760
        %2086 = vmatpush.msra.mxu0 %v2085
        %v2087 = vand.u32 %v1859, 4294901760
        %v2088 = vsub.f32 %v1859, %v2087
        %v2089 = vand.u32 %v2088, 4294901760
        %2090 = vmatpush.msra.mxu0 %v2089
        %v2091 = vand.u32 %v1858, 4294901760
        %v2092 = vsub.f32 %v1858, %v2091
        %v2093 = vand.u32 %v2092, 4294901760
        %2094 = vmatpush.msra.mxu0 %v2093
        %v2095 = vand.u32 %v770, 4294901760
        %2096 = vmatmul.f32.gmra.mxu0 %v2095
        %v2097 = vpop.f32.mrf.mxu0
        %v2098 = vadd.f32 %v2047, %v2097
        %2099 = vdwg.mxu0
        %2100 = vmatpush.msra.mxu0 0.0
        %2101 = vmatpush.msra.mxu0 0.0
        %2102 = vmatpush.msra.mxu0 0.0
        %2103 = vmatpush.msra.mxu0 0.0
        %2104 = vmatpush.msra.mxu0 0.0
        %2105 = vmatpush.msra.mxu0 0.0
        %v2106 = vand.u32 %v1867, 4294901760
        %2107 = vmatpush.msra.mxu0 %v2106
        %v2108 = vand.u32 %v1866, 4294901760
        %2109 = vmatpush.msra.mxu0 %v2108
        %v2110 = vand.u32 %v1865, 4294901760
        %2111 = vmatpush.msra.mxu0 %v2110
        %v2112 = vand.u32 %v1864, 4294901760
        %2113 = vmatpush.msra.mxu0 %v2112
        %v2114 = vand.u32 %v1863, 4294901760
        %2115 = vmatpush.msra.mxu0 %v2114
        %v2116 = vand.u32 %v1862, 4294901760
        %2117 = vmatpush.msra.mxu0 %v2116
        %v2118 = vand.u32 %v1861, 4294901760
        %2119 = vmatpush.msra.mxu0 %v2118
        %v2120 = vand.u32 %v1860, 4294901760
        %2121 = vmatpush.msra.mxu0 %v2120
        %v2122 = vand.u32 %v1859, 4294901760
        %2123 = vmatpush.msra.mxu0 %v2122
        %v2124 = vand.u32 %v1858, 4294901760
        %2125 = vmatpush.msra.mxu0 %v2124
        %v2126 = vand.u32 %v770, 4294901760
        %2127 = vmatmul.f32.gmra.mxu0 %v2126
        %v2128 = vpop.f32.mrf.mxu0
        %v2129 = vadd.f32 %v2098, %v2128
        %2130 = vdwg.mxu0
        %2131 = vmatpush.msra.mxu0 0.0
        %2132 = vmatpush.msra.mxu0 0.0
        %2133 = vmatpush.msra.mxu0 0.0
        %2134 = vmatpush.msra.mxu0 0.0
        %2135 = vmatpush.msra.mxu0 0.0
        %2136 = vmatpush.msra.mxu0 0.0
        %v2137 = vand.u32 %v1867, 4294901760
        %2138 = vmatpush.msra.mxu0 %v2137
        %v2139 = vand.u32 %v1866, 4294901760
        %2140 = vmatpush.msra.mxu0 %v2139
        %v2141 = vand.u32 %v1865, 4294901760
        %2142 = vmatpush.msra.mxu0 %v2141
        %v2143 = vand.u32 %v1864, 4294901760
        %2144 = vmatpush.msra.mxu0 %v2143
        %v2145 = vand.u32 %v1863, 4294901760
        %2146 = vmatpush.msra.mxu0 %v2145
        %v2147 = vand.u32 %v1862, 4294901760
        %2148 = vmatpush.msra.mxu0 %v2147
        %v2149 = vand.u32 %v1861, 4294901760
        %2150 = vmatpush.msra.mxu0 %v2149
        %v2151 = vand.u32 %v1860, 4294901760
        %2152 = vmatpush.msra.mxu0 %v2151
        %v2153 = vand.u32 %v1859, 4294901760
        %2154 = vmatpush.msra.mxu0 %v2153
        %v2155 = vand.u32 %v1858, 4294901760
        %2156 = vmatpush.msra.mxu0 %v2155
        %v2157 = vand.u32 %v1036, 4294901760
        %v2158 = vsub.f32 %v1036, %v2157
        %v2159 = vand.u32 %v2158, 4294901760
        %v2160 = vsub.f32 %v2158, %v2159
        %v2161 = vand.u32 %v2160, 4294901760
        %2162 = vmatmul.f32.gmra.mxu0 %v2161
        %v2163 = vpop.f32.mrf.mxu0
        %v2164 = vadd.f32 0.0, %v2163
        %2165 = vdwg.mxu0
        %2166 = vmatpush.msra.mxu0 0.0
        %2167 = vmatpush.msra.mxu0 0.0
        %2168 = vmatpush.msra.mxu0 0.0
        %2169 = vmatpush.msra.mxu0 0.0
        %2170 = vmatpush.msra.mxu0 0.0
        %2171 = vmatpush.msra.mxu0 0.0
        %v2172 = vand.u32 %v1867, 4294901760
        %v2173 = vsub.f32 %v1867, %v2172
        %v2174 = vand.u32 %v2173, 4294901760
        %v2175 = vsub.f32 %v2173, %v2174
        %v2176 = vand.u32 %v2175, 4294901760
        %2177 = vmatpush.msra.mxu0 %v2176
        %v2178 = vand.u32 %v1866, 4294901760
        %v2179 = vsub.f32 %v1866, %v2178
        %v2180 = vand.u32 %v2179, 4294901760
        %v2181 = vsub.f32 %v2179, %v2180
        %v2182 = vand.u32 %v2181, 4294901760
        %2183 = vmatpush.msra.mxu0 %v2182
        %v2184 = vand.u32 %v1865, 4294901760
        %v2185 = vsub.f32 %v1865, %v2184
        %v2186 = vand.u32 %v2185, 4294901760
        %v2187 = vsub.f32 %v2185, %v2186
        %v2188 = vand.u32 %v2187, 4294901760
        %2189 = vmatpush.msra.mxu0 %v2188
        %v2190 = vand.u32 %v1864, 4294901760
        %v2191 = vsub.f32 %v1864, %v2190
        %v2192 = vand.u32 %v2191, 4294901760
        %v2193 = vsub.f32 %v2191, %v2192
        %v2194 = vand.u32 %v2193, 4294901760
        %2195 = vmatpush.msra.mxu0 %v2194
        %v2196 = vand.u32 %v1863, 4294901760
        %v2197 = vsub.f32 %v1863, %v2196
        %v2198 = vand.u32 %v2197, 4294901760
        %v2199 = vsub.f32 %v2197, %v2198
        %v2200 = vand.u32 %v2199, 4294901760
        %2201 = vmatpush.msra.mxu0 %v2200
        %v2202 = vand.u32 %v1862, 4294901760
        %v2203 = vsub.f32 %v1862, %v2202
        %v2204 = vand.u32 %v2203, 4294901760
        %v2205 = vsub.f32 %v2203, %v2204
        %v2206 = vand.u32 %v2205, 4294901760
        %2207 = vmatpush.msra.mxu0 %v2206
        %v2208 = vand.u32 %v1861, 4294901760
        %v2209 = vsub.f32 %v1861, %v2208
        %v2210 = vand.u32 %v2209, 4294901760
        %v2211 = vsub.f32 %v2209, %v2210
        %v2212 = vand.u32 %v2211, 4294901760
        %2213 = vmatpush.msra.mxu0 %v2212
        %v2214 = vand.u32 %v1860, 4294901760
        %v2215 = vsub.f32 %v1860, %v2214
        %v2216 = vand.u32 %v2215, 4294901760
        %v2217 = vsub.f32 %v2215, %v2216
        %v2218 = vand.u32 %v2217, 4294901760
        %2219 = vmatpush.msra.mxu0 %v2218
        %v2220 = vand.u32 %v1859, 4294901760
        %v2221 = vsub.f32 %v1859, %v2220
        %v2222 = vand.u32 %v2221, 4294901760
        %v2223 = vsub.f32 %v2221, %v2222
        %v2224 = vand.u32 %v2223, 4294901760
        %2225 = vmatpush.msra.mxu0 %v2224
        %v2226 = vand.u32 %v1858, 4294901760
        %v2227 = vsub.f32 %v1858, %v2226
        %v2228 = vand.u32 %v2227, 4294901760
        %v2229 = vsub.f32 %v2227, %v2228
        %v2230 = vand.u32 %v2229, 4294901760
        %2231 = vmatpush.msra.mxu0 %v2230
        %v2232 = vand.u32 %v1036, 4294901760
        %2233 = vmatmul.f32.gmra.mxu0 %v2232
        %v2234 = vpop.f32.mrf.mxu0
        %v2235 = vadd.f32 %v2164, %v2234
        %2236 = vdwg.mxu0
        %2237 = vmatpush.msra.mxu0 0.0
        %2238 = vmatpush.msra.mxu0 0.0
        %2239 = vmatpush.msra.mxu0 0.0
        %2240 = vmatpush.msra.mxu0 0.0
        %2241 = vmatpush.msra.mxu0 0.0
        %2242 = vmatpush.msra.mxu0 0.0
        %v2243 = vand.u32 %v1867, 4294901760
        %v2244 = vsub.f32 %v1867, %v2243
        %2245 = vmatpush.msra.mxu0 %v2244
        %v2246 = vand.u32 %v1866, 4294901760
        %v2247 = vsub.f32 %v1866, %v2246
        %2248 = vmatpush.msra.mxu0 %v2247
        %v2249 = vand.u32 %v1865, 4294901760
        %v2250 = vsub.f32 %v1865, %v2249
        %2251 = vmatpush.msra.mxu0 %v2250
        %v2252 = vand.u32 %v1864, 4294901760
        %v2253 = vsub.f32 %v1864, %v2252
        %2254 = vmatpush.msra.mxu0 %v2253
        %v2255 = vand.u32 %v1863, 4294901760
        %v2256 = vsub.f32 %v1863, %v2255
        %2257 = vmatpush.msra.mxu0 %v2256
        %v2258 = vand.u32 %v1862, 4294901760
        %v2259 = vsub.f32 %v1862, %v2258
        %2260 = vmatpush.msra.mxu0 %v2259
        %v2261 = vand.u32 %v1861, 4294901760
        %v2262 = vsub.f32 %v1861, %v2261
        %2263 = vmatpush.msra.mxu0 %v2262
        %v2264 = vand.u32 %v1860, 4294901760
        %v2265 = vsub.f32 %v1860, %v2264
        %2266 = vmatpush.msra.mxu0 %v2265
        %v2267 = vand.u32 %v1859, 4294901760
        %v2268 = vsub.f32 %v1859, %v2267
        %2269 = vmatpush.msra.mxu0 %v2268
        %v2270 = vand.u32 %v1858, 4294901760
        %v2271 = vsub.f32 %v1858, %v2270
        %2272 = vmatpush.msra.mxu0 %v2271
        %v2273 = vand.u32 %v1036, 4294901760
        %v2274 = vsub.f32 %v1036, %v2273
        %2275 = vmatmul.f32.gmra.mxu0 %v2274
        %v2276 = vpop.f32.mrf.mxu0
        %v2277 = vadd.f32 %v2235, %v2276
        %2278 = vdwg.mxu0
        %2279 = vmatpush.msra.mxu0 0.0
        %2280 = vmatpush.msra.mxu0 0.0
        %2281 = vmatpush.msra.mxu0 0.0
        %2282 = vmatpush.msra.mxu0 0.0
        %2283 = vmatpush.msra.mxu0 0.0
        %2284 = vmatpush.msra.mxu0 0.0
        %v2285 = vand.u32 %v1867, 4294901760
        %2286 = vmatpush.msra.mxu0 %v2285
        %v2287 = vand.u32 %v1866, 4294901760
        %2288 = vmatpush.msra.mxu0 %v2287
        %v2289 = vand.u32 %v1865, 4294901760
        %2290 = vmatpush.msra.mxu0 %v2289
        %v2291 = vand.u32 %v1864, 4294901760
        %2292 = vmatpush.msra.mxu0 %v2291
        %v2293 = vand.u32 %v1863, 4294901760
        %2294 = vmatpush.msra.mxu0 %v2293
        %v2295 = vand.u32 %v1862, 4294901760
        %2296 = vmatpush.msra.mxu0 %v2295
        %v2297 = vand.u32 %v1861, 4294901760
        %2298 = vmatpush.msra.mxu0 %v2297
        %v2299 = vand.u32 %v1860, 4294901760
        %2300 = vmatpush.msra.mxu0 %v2299
        %v2301 = vand.u32 %v1859, 4294901760
        %2302 = vmatpush.msra.mxu0 %v2301
        %v2303 = vand.u32 %v1858, 4294901760
        %2304 = vmatpush.msra.mxu0 %v2303
        %v2305 = vand.u32 %v1036, 4294901760
        %v2306 = vsub.f32 %v1036, %v2305
        %v2307 = vand.u32 %v2306, 4294901760
        %2308 = vmatmul.f32.gmra.mxu0 %v2307
        %v2309 = vpop.f32.mrf.mxu0
        %v2310 = vadd.f32 %v2277, %v2309
        %2311 = vdwg.mxu0
        %2312 = vmatpush.msra.mxu0 0.0
        %2313 = vmatpush.msra.mxu0 0.0
        %2314 = vmatpush.msra.mxu0 0.0
        %2315 = vmatpush.msra.mxu0 0.0
        %2316 = vmatpush.msra.mxu0 0.0
        %2317 = vmatpush.msra.mxu0 0.0
        %v2318 = vand.u32 %v1867, 4294901760
        %v2319 = vsub.f32 %v1867, %v2318
        %v2320 = vand.u32 %v2319, 4294901760
        %2321 = vmatpush.msra.mxu0 %v2320
        %v2322 = vand.u32 %v1866, 4294901760
        %v2323 = vsub.f32 %v1866, %v2322
        %v2324 = vand.u32 %v2323, 4294901760
        %2325 = vmatpush.msra.mxu0 %v2324
        %v2326 = vand.u32 %v1865, 4294901760
        %v2327 = vsub.f32 %v1865, %v2326
        %v2328 = vand.u32 %v2327, 4294901760
        %2329 = vmatpush.msra.mxu0 %v2328
        %v2330 = vand.u32 %v1864, 4294901760
        %v2331 = vsub.f32 %v1864, %v2330
        %v2332 = vand.u32 %v2331, 4294901760
        %2333 = vmatpush.msra.mxu0 %v2332
        %v2334 = vand.u32 %v1863, 4294901760
        %v2335 = vsub.f32 %v1863, %v2334
        %v2336 = vand.u32 %v2335, 4294901760
        %2337 = vmatpush.msra.mxu0 %v2336
        %v2338 = vand.u32 %v1862, 4294901760
        %v2339 = vsub.f32 %v1862, %v2338
        %v2340 = vand.u32 %v2339, 4294901760
        %2341 = vmatpush.msra.mxu0 %v2340
        %v2342 = vand.u32 %v1861, 4294901760
        %v2343 = vsub.f32 %v1861, %v2342
        %v2344 = vand.u32 %v2343, 4294901760
        %2345 = vmatpush.msra.mxu0 %v2344
        %v2346 = vand.u32 %v1860, 4294901760
        %v2347 = vsub.f32 %v1860, %v2346
        %v2348 = vand.u32 %v2347, 4294901760
        %2349 = vmatpush.msra.mxu0 %v2348
        %v2350 = vand.u32 %v1859, 4294901760
        %v2351 = vsub.f32 %v1859, %v2350
        %v2352 = vand.u32 %v2351, 4294901760
        %2353 = vmatpush.msra.mxu0 %v2352
        %v2354 = vand.u32 %v1858, 4294901760
        %v2355 = vsub.f32 %v1858, %v2354
        %v2356 = vand.u32 %v2355, 4294901760
        %2357 = vmatpush.msra.mxu0 %v2356
        %v2358 = vand.u32 %v1036, 4294901760
        %2359 = vmatmul.f32.gmra.mxu0 %v2358
        %v2360 = vpop.f32.mrf.mxu0
        %v2361 = vadd.f32 %v2310, %v2360
        %2362 = vdwg.mxu0
        %2363 = vmatpush.msra.mxu0 0.0
        %2364 = vmatpush.msra.mxu0 0.0
        %2365 = vmatpush.msra.mxu0 0.0
        %2366 = vmatpush.msra.mxu0 0.0
        %2367 = vmatpush.msra.mxu0 0.0
        %2368 = vmatpush.msra.mxu0 0.0
        %v2369 = vand.u32 %v1867, 4294901760
        %2370 = vmatpush.msra.mxu0 %v2369
        %v2371 = vand.u32 %v1866, 4294901760
        %2372 = vmatpush.msra.mxu0 %v2371
        %v2373 = vand.u32 %v1865, 4294901760
        %2374 = vmatpush.msra.mxu0 %v2373
        %v2375 = vand.u32 %v1864, 4294901760
        %2376 = vmatpush.msra.mxu0 %v2375
        %v2377 = vand.u32 %v1863, 4294901760
        %2378 = vmatpush.msra.mxu0 %v2377
        %v2379 = vand.u32 %v1862, 4294901760
        %2380 = vmatpush.msra.mxu0 %v2379
        %v2381 = vand.u32 %v1861, 4294901760
        %2382 = vmatpush.msra.mxu0 %v2381
        %v2383 = vand.u32 %v1860, 4294901760
        %2384 = vmatpush.msra.mxu0 %v2383
        %v2385 = vand.u32 %v1859, 4294901760
        %2386 = vmatpush.msra.mxu0 %v2385
        %v2387 = vand.u32 %v1858, 4294901760
        %2388 = vmatpush.msra.mxu0 %v2387
        %v2389 = vand.u32 %v1036, 4294901760
        %2390 = vmatmul.f32.gmra.mxu0 %v2389
        %v2391 = vpop.f32.mrf.mxu0
        %v2392 = vadd.f32 %v2361, %v2391
        %2393 = vdwg.mxu0
        %v2394 = vmul.f32 %v2129, %v2129
        %v2395 = vsub.f32 %v2392, %v2394
        %v2396 = vadd.f32 %v2395, 0.0001
        %v2397 = vsub.f32 %v756, %v2129
        %v2398 = vrsqrt.pop %v2396
        %v2399 = vmul.f32 %v2398, %v2396
        %v2400 = vmul.f32 %v2399, %v2398
        %v2401 = vmul.f32 0.5, %v2400
        %v2402 = vsub.f32 1.5, %v2401
        %v2403 = vmul.f32 %v2398, %v2402
        %vm2404 = vweird.f32 %v2396
        %vm2405 = vweird.f32 %v2398
        %vm2406 = vmor %vm2404, %vm2405
        %v2407 = vsel %vm2406, %v2398, %v2403
        %v2408 = vmul.f32 %v2397, %v2407
        %v2409 = vld [vmem:[%s4] sm:$0xff]
        %v2410 = vld [vmem:[%s4 + $0x8] sm:$0xff]
        %v2411 = vld [vmem:[%s4 + $0x10] sm:$0xff]
        %v2412 = vld [vmem:[%s4 + $0x18] sm:$0xff]
        %v2413 = vld [vmem:[%s4 + $0x20] sm:$0xff]
        %v2414 = vld [vmem:[%s4 + $0x28] sm:$0xff]
        %v2415 = vld [vmem:[%s4 + $0x30] sm:$0xff]
        %v2416 = vld [vmem:[%s4 + $0x38] sm:$0xff]
        %v2417 = vld [vmem:[%s4 + $0x40] sm:$0xff]
        %v2418 = vld [vmem:[%s4 + $0x48] sm:$0xff]
        %v2420 = vsel %vm768, %v2408, 0
        %2422 = vmatpush.msra.mxu0 0.0
        %2423 = vmatpush.msra.mxu0 0.0
        %2424 = vmatpush.msra.mxu0 0.0
        %2425 = vmatpush.msra.mxu0 0.0
        %2426 = vmatpush.msra.mxu0 0.0
        %2427 = vmatpush.msra.mxu0 0.0
        %v2428 = vand.u32 %v2418, 4294901760
        %2429 = vmatpush.msra.mxu0 %v2428
        %v2430 = vand.u32 %v2417, 4294901760
        %2431 = vmatpush.msra.mxu0 %v2430
        %v2432 = vand.u32 %v2416, 4294901760
        %2433 = vmatpush.msra.mxu0 %v2432
        %v2434 = vand.u32 %v2415, 4294901760
        %2435 = vmatpush.msra.mxu0 %v2434
        %v2436 = vand.u32 %v2414, 4294901760
        %2437 = vmatpush.msra.mxu0 %v2436
        %v2438 = vand.u32 %v2413, 4294901760
        %2439 = vmatpush.msra.mxu0 %v2438
        %v2440 = vand.u32 %v2412, 4294901760
        %2441 = vmatpush.msra.mxu0 %v2440
        %v2442 = vand.u32 %v2411, 4294901760
        %2443 = vmatpush.msra.mxu0 %v2442
        %v2444 = vand.u32 %v2410, 4294901760
        %2445 = vmatpush.msra.mxu0 %v2444
        %v2446 = vand.u32 %v2409, 4294901760
        %2447 = vmatpush.msra.mxu0 %v2446
        %v2448 = vand.u32 %v2420, 4294901760
        %v2449 = vsub.f32 %v2420, %v2448
        %v2450 = vand.u32 %v2449, 4294901760
        %v2451 = vsub.f32 %v2449, %v2450
        %v2452 = vand.u32 %v2451, 4294901760
        %2453 = vmatmul.f32.gmra.mxu0 %v2452
        %v2454 = vpop.f32.mrf.mxu0
        %v2455 = vadd.f32 0.0, %v2454
        %2456 = vdwg.mxu0
        %2457 = vmatpush.msra.mxu0 0.0
        %2458 = vmatpush.msra.mxu0 0.0
        %2459 = vmatpush.msra.mxu0 0.0
        %2460 = vmatpush.msra.mxu0 0.0
        %2461 = vmatpush.msra.mxu0 0.0
        %2462 = vmatpush.msra.mxu0 0.0
        %v2463 = vand.u32 %v2418, 4294901760
        %v2464 = vsub.f32 %v2418, %v2463
        %v2465 = vand.u32 %v2464, 4294901760
        %v2466 = vsub.f32 %v2464, %v2465
        %v2467 = vand.u32 %v2466, 4294901760
        %2468 = vmatpush.msra.mxu0 %v2467
        %v2469 = vand.u32 %v2417, 4294901760
        %v2470 = vsub.f32 %v2417, %v2469
        %v2471 = vand.u32 %v2470, 4294901760
        %v2472 = vsub.f32 %v2470, %v2471
        %v2473 = vand.u32 %v2472, 4294901760
        %2474 = vmatpush.msra.mxu0 %v2473
        %v2475 = vand.u32 %v2416, 4294901760
        %v2476 = vsub.f32 %v2416, %v2475
        %v2477 = vand.u32 %v2476, 4294901760
        %v2478 = vsub.f32 %v2476, %v2477
        %v2479 = vand.u32 %v2478, 4294901760
        %2480 = vmatpush.msra.mxu0 %v2479
        %v2481 = vand.u32 %v2415, 4294901760
        %v2482 = vsub.f32 %v2415, %v2481
        %v2483 = vand.u32 %v2482, 4294901760
        %v2484 = vsub.f32 %v2482, %v2483
        %v2485 = vand.u32 %v2484, 4294901760
        %2486 = vmatpush.msra.mxu0 %v2485
        %v2487 = vand.u32 %v2414, 4294901760
        %v2488 = vsub.f32 %v2414, %v2487
        %v2489 = vand.u32 %v2488, 4294901760
        %v2490 = vsub.f32 %v2488, %v2489
        %v2491 = vand.u32 %v2490, 4294901760
        %2492 = vmatpush.msra.mxu0 %v2491
        %v2493 = vand.u32 %v2413, 4294901760
        %v2494 = vsub.f32 %v2413, %v2493
        %v2495 = vand.u32 %v2494, 4294901760
        %v2496 = vsub.f32 %v2494, %v2495
        %v2497 = vand.u32 %v2496, 4294901760
        %2498 = vmatpush.msra.mxu0 %v2497
        %v2499 = vand.u32 %v2412, 4294901760
        %v2500 = vsub.f32 %v2412, %v2499
        %v2501 = vand.u32 %v2500, 4294901760
        %v2502 = vsub.f32 %v2500, %v2501
        %v2503 = vand.u32 %v2502, 4294901760
        %2504 = vmatpush.msra.mxu0 %v2503
        %v2505 = vand.u32 %v2411, 4294901760
        %v2506 = vsub.f32 %v2411, %v2505
        %v2507 = vand.u32 %v2506, 4294901760
        %v2508 = vsub.f32 %v2506, %v2507
        %v2509 = vand.u32 %v2508, 4294901760
        %2510 = vmatpush.msra.mxu0 %v2509
        %v2511 = vand.u32 %v2410, 4294901760
        %v2512 = vsub.f32 %v2410, %v2511
        %v2513 = vand.u32 %v2512, 4294901760
        %v2514 = vsub.f32 %v2512, %v2513
        %v2515 = vand.u32 %v2514, 4294901760
        %2516 = vmatpush.msra.mxu0 %v2515
        %v2517 = vand.u32 %v2409, 4294901760
        %v2518 = vsub.f32 %v2409, %v2517
        %v2519 = vand.u32 %v2518, 4294901760
        %v2520 = vsub.f32 %v2518, %v2519
        %v2521 = vand.u32 %v2520, 4294901760
        %2522 = vmatpush.msra.mxu0 %v2521
        %v2523 = vand.u32 %v2420, 4294901760
        %2524 = vmatmul.f32.gmra.mxu0 %v2523
        %v2525 = vpop.f32.mrf.mxu0
        %v2526 = vadd.f32 %v2455, %v2525
        %2527 = vdwg.mxu0
        %2528 = vmatpush.msra.mxu0 0.0
        %2529 = vmatpush.msra.mxu0 0.0
        %2530 = vmatpush.msra.mxu0 0.0
        %2531 = vmatpush.msra.mxu0 0.0
        %2532 = vmatpush.msra.mxu0 0.0
        %2533 = vmatpush.msra.mxu0 0.0
        %v2534 = vand.u32 %v2418, 4294901760
        %v2535 = vsub.f32 %v2418, %v2534
        %2536 = vmatpush.msra.mxu0 %v2535
        %v2537 = vand.u32 %v2417, 4294901760
        %v2538 = vsub.f32 %v2417, %v2537
        %2539 = vmatpush.msra.mxu0 %v2538
        %v2540 = vand.u32 %v2416, 4294901760
        %v2541 = vsub.f32 %v2416, %v2540
        %2542 = vmatpush.msra.mxu0 %v2541
        %v2543 = vand.u32 %v2415, 4294901760
        %v2544 = vsub.f32 %v2415, %v2543
        %2545 = vmatpush.msra.mxu0 %v2544
        %v2546 = vand.u32 %v2414, 4294901760
        %v2547 = vsub.f32 %v2414, %v2546
        %2548 = vmatpush.msra.mxu0 %v2547
        %v2549 = vand.u32 %v2413, 4294901760
        %v2550 = vsub.f32 %v2413, %v2549
        %2551 = vmatpush.msra.mxu0 %v2550
        %v2552 = vand.u32 %v2412, 4294901760
        %v2553 = vsub.f32 %v2412, %v2552
        %2554 = vmatpush.msra.mxu0 %v2553
        %v2555 = vand.u32 %v2411, 4294901760
        %v2556 = vsub.f32 %v2411, %v2555
        %2557 = vmatpush.msra.mxu0 %v2556
        %v2558 = vand.u32 %v2410, 4294901760
        %v2559 = vsub.f32 %v2410, %v2558
        %2560 = vmatpush.msra.mxu0 %v2559
        %v2561 = vand.u32 %v2409, 4294901760
        %v2562 = vsub.f32 %v2409, %v2561
        %2563 = vmatpush.msra.mxu0 %v2562
        %v2564 = vand.u32 %v2420, 4294901760
        %v2565 = vsub.f32 %v2420, %v2564
        %2566 = vmatmul.f32.gmra.mxu0 %v2565
        %v2567 = vpop.f32.mrf.mxu0
        %v2568 = vadd.f32 %v2526, %v2567
        %2569 = vdwg.mxu0
        %2570 = vmatpush.msra.mxu0 0.0
        %2571 = vmatpush.msra.mxu0 0.0
        %2572 = vmatpush.msra.mxu0 0.0
        %2573 = vmatpush.msra.mxu0 0.0
        %2574 = vmatpush.msra.mxu0 0.0
        %2575 = vmatpush.msra.mxu0 0.0
        %v2576 = vand.u32 %v2418, 4294901760
        %2577 = vmatpush.msra.mxu0 %v2576
        %v2578 = vand.u32 %v2417, 4294901760
        %2579 = vmatpush.msra.mxu0 %v2578
        %v2580 = vand.u32 %v2416, 4294901760
        %2581 = vmatpush.msra.mxu0 %v2580
        %v2582 = vand.u32 %v2415, 4294901760
        %2583 = vmatpush.msra.mxu0 %v2582
        %v2584 = vand.u32 %v2414, 4294901760
        %2585 = vmatpush.msra.mxu0 %v2584
        %v2586 = vand.u32 %v2413, 4294901760
        %2587 = vmatpush.msra.mxu0 %v2586
        %v2588 = vand.u32 %v2412, 4294901760
        %2589 = vmatpush.msra.mxu0 %v2588
        %v2590 = vand.u32 %v2411, 4294901760
        %2591 = vmatpush.msra.mxu0 %v2590
        %v2592 = vand.u32 %v2410, 4294901760
        %2593 = vmatpush.msra.mxu0 %v2592
        %v2594 = vand.u32 %v2409, 4294901760
        %2595 = vmatpush.msra.mxu0 %v2594
        %v2596 = vand.u32 %v2420, 4294901760
        %v2597 = vsub.f32 %v2420, %v2596
        %v2598 = vand.u32 %v2597, 4294901760
        %2599 = vmatmul.f32.gmra.mxu0 %v2598
        %v2600 = vpop.f32.mrf.mxu0
        %v2601 = vadd.f32 %v2568, %v2600
        %2602 = vdwg.mxu0
        %2603 = vmatpush.msra.mxu0 0.0
        %2604 = vmatpush.msra.mxu0 0.0
        %2605 = vmatpush.msra.mxu0 0.0
        %2606 = vmatpush.msra.mxu0 0.0
        %2607 = vmatpush.msra.mxu0 0.0
        %2608 = vmatpush.msra.mxu0 0.0
        %v2609 = vand.u32 %v2418, 4294901760
        %v2610 = vsub.f32 %v2418, %v2609
        %v2611 = vand.u32 %v2610, 4294901760
        %2612 = vmatpush.msra.mxu0 %v2611
        %v2613 = vand.u32 %v2417, 4294901760
        %v2614 = vsub.f32 %v2417, %v2613
        %v2615 = vand.u32 %v2614, 4294901760
        %2616 = vmatpush.msra.mxu0 %v2615
        %v2617 = vand.u32 %v2416, 4294901760
        %v2618 = vsub.f32 %v2416, %v2617
        %v2619 = vand.u32 %v2618, 4294901760
        %2620 = vmatpush.msra.mxu0 %v2619
        %v2621 = vand.u32 %v2415, 4294901760
        %v2622 = vsub.f32 %v2415, %v2621
        %v2623 = vand.u32 %v2622, 4294901760
        %2624 = vmatpush.msra.mxu0 %v2623
        %v2625 = vand.u32 %v2414, 4294901760
        %v2626 = vsub.f32 %v2414, %v2625
        %v2627 = vand.u32 %v2626, 4294901760
        %2628 = vmatpush.msra.mxu0 %v2627
        %v2629 = vand.u32 %v2413, 4294901760
        %v2630 = vsub.f32 %v2413, %v2629
        %v2631 = vand.u32 %v2630, 4294901760
        %2632 = vmatpush.msra.mxu0 %v2631
        %v2633 = vand.u32 %v2412, 4294901760
        %v2634 = vsub.f32 %v2412, %v2633
        %v2635 = vand.u32 %v2634, 4294901760
        %2636 = vmatpush.msra.mxu0 %v2635
        %v2637 = vand.u32 %v2411, 4294901760
        %v2638 = vsub.f32 %v2411, %v2637
        %v2639 = vand.u32 %v2638, 4294901760
        %2640 = vmatpush.msra.mxu0 %v2639
        %v2641 = vand.u32 %v2410, 4294901760
        %v2642 = vsub.f32 %v2410, %v2641
        %v2643 = vand.u32 %v2642, 4294901760
        %2644 = vmatpush.msra.mxu0 %v2643
        %v2645 = vand.u32 %v2409, 4294901760
        %v2646 = vsub.f32 %v2409, %v2645
        %v2647 = vand.u32 %v2646, 4294901760
        %2648 = vmatpush.msra.mxu0 %v2647
        %v2649 = vand.u32 %v2420, 4294901760
        %2650 = vmatmul.f32.gmra.mxu0 %v2649
        %v2651 = vpop.f32.mrf.mxu0
        %v2652 = vadd.f32 %v2601, %v2651
        %2653 = vdwg.mxu0
        %2654 = vmatpush.msra.mxu0 0.0
        %2655 = vmatpush.msra.mxu0 0.0
        %2656 = vmatpush.msra.mxu0 0.0
        %2657 = vmatpush.msra.mxu0 0.0
        %2658 = vmatpush.msra.mxu0 0.0
        %2659 = vmatpush.msra.mxu0 0.0
        %v2660 = vand.u32 %v2418, 4294901760
        %2661 = vmatpush.msra.mxu0 %v2660
        %v2662 = vand.u32 %v2417, 4294901760
        %2663 = vmatpush.msra.mxu0 %v2662
        %v2664 = vand.u32 %v2416, 4294901760
        %2665 = vmatpush.msra.mxu0 %v2664
        %v2666 = vand.u32 %v2415, 4294901760
        %2667 = vmatpush.msra.mxu0 %v2666
        %v2668 = vand.u32 %v2414, 4294901760
        %2669 = vmatpush.msra.mxu0 %v2668
        %v2670 = vand.u32 %v2413, 4294901760
        %2671 = vmatpush.msra.mxu0 %v2670
        %v2672 = vand.u32 %v2412, 4294901760
        %2673 = vmatpush.msra.mxu0 %v2672
        %v2674 = vand.u32 %v2411, 4294901760
        %2675 = vmatpush.msra.mxu0 %v2674
        %v2676 = vand.u32 %v2410, 4294901760
        %2677 = vmatpush.msra.mxu0 %v2676
        %v2678 = vand.u32 %v2409, 4294901760
        %2679 = vmatpush.msra.mxu0 %v2678
        %v2680 = vand.u32 %v2420, 4294901760
        %2681 = vmatmul.f32.gmra.mxu0 %v2680
        %v2682 = vpop.f32.mrf.mxu0
        %v2683 = vadd.f32 %v2652, %v2682
        %2684 = vdwg.mxu0
        %v2686 = vsel %vm768, %v2129, 0
        %2688 = vmatpush.msra.mxu0 0.0
        %2689 = vmatpush.msra.mxu0 0.0
        %2690 = vmatpush.msra.mxu0 0.0
        %2691 = vmatpush.msra.mxu0 0.0
        %2692 = vmatpush.msra.mxu0 0.0
        %2693 = vmatpush.msra.mxu0 0.0
        %v2694 = vand.u32 %v2418, 4294901760
        %2695 = vmatpush.msra.mxu0 %v2694
        %v2696 = vand.u32 %v2417, 4294901760
        %2697 = vmatpush.msra.mxu0 %v2696
        %v2698 = vand.u32 %v2416, 4294901760
        %2699 = vmatpush.msra.mxu0 %v2698
        %v2700 = vand.u32 %v2415, 4294901760
        %2701 = vmatpush.msra.mxu0 %v2700
        %v2702 = vand.u32 %v2414, 4294901760
        %2703 = vmatpush.msra.mxu0 %v2702
        %v2704 = vand.u32 %v2413, 4294901760
        %2705 = vmatpush.msra.mxu0 %v2704
        %v2706 = vand.u32 %v2412, 4294901760
        %2707 = vmatpush.msra.mxu0 %v2706
        %v2708 = vand.u32 %v2411, 4294901760
        %2709 = vmatpush.msra.mxu0 %v2708
        %v2710 = vand.u32 %v2410, 4294901760
        %2711 = vmatpush.msra.mxu0 %v2710
        %v2712 = vand.u32 %v2409, 4294901760
        %2713 = vmatpush.msra.mxu0 %v2712
        %v2714 = vand.u32 %v2686, 4294901760
        %v2715 = vsub.f32 %v2686, %v2714
        %v2716 = vand.u32 %v2715, 4294901760
        %v2717 = vsub.f32 %v2715, %v2716
        %v2718 = vand.u32 %v2717, 4294901760
        %2719 = vmatmul.f32.gmra.mxu0 %v2718
        %v2720 = vpop.f32.mrf.mxu0
        %v2721 = vadd.f32 0.0, %v2720
        %2722 = vdwg.mxu0
        %2723 = vmatpush.msra.mxu0 0.0
        %2724 = vmatpush.msra.mxu0 0.0
        %2725 = vmatpush.msra.mxu0 0.0
        %2726 = vmatpush.msra.mxu0 0.0
        %2727 = vmatpush.msra.mxu0 0.0
        %2728 = vmatpush.msra.mxu0 0.0
        %v2729 = vand.u32 %v2418, 4294901760
        %v2730 = vsub.f32 %v2418, %v2729
        %v2731 = vand.u32 %v2730, 4294901760
        %v2732 = vsub.f32 %v2730, %v2731
        %v2733 = vand.u32 %v2732, 4294901760
        %2734 = vmatpush.msra.mxu0 %v2733
        %v2735 = vand.u32 %v2417, 4294901760
        %v2736 = vsub.f32 %v2417, %v2735
        %v2737 = vand.u32 %v2736, 4294901760
        %v2738 = vsub.f32 %v2736, %v2737
        %v2739 = vand.u32 %v2738, 4294901760
        %2740 = vmatpush.msra.mxu0 %v2739
        %v2741 = vand.u32 %v2416, 4294901760
        %v2742 = vsub.f32 %v2416, %v2741
        %v2743 = vand.u32 %v2742, 4294901760
        %v2744 = vsub.f32 %v2742, %v2743
        %v2745 = vand.u32 %v2744, 4294901760
        %2746 = vmatpush.msra.mxu0 %v2745
        %v2747 = vand.u32 %v2415, 4294901760
        %v2748 = vsub.f32 %v2415, %v2747
        %v2749 = vand.u32 %v2748, 4294901760
        %v2750 = vsub.f32 %v2748, %v2749
        %v2751 = vand.u32 %v2750, 4294901760
        %2752 = vmatpush.msra.mxu0 %v2751
        %v2753 = vand.u32 %v2414, 4294901760
        %v2754 = vsub.f32 %v2414, %v2753
        %v2755 = vand.u32 %v2754, 4294901760
        %v2756 = vsub.f32 %v2754, %v2755
        %v2757 = vand.u32 %v2756, 4294901760
        %2758 = vmatpush.msra.mxu0 %v2757
        %v2759 = vand.u32 %v2413, 4294901760
        %v2760 = vsub.f32 %v2413, %v2759
        %v2761 = vand.u32 %v2760, 4294901760
        %v2762 = vsub.f32 %v2760, %v2761
        %v2763 = vand.u32 %v2762, 4294901760
        %2764 = vmatpush.msra.mxu0 %v2763
        %v2765 = vand.u32 %v2412, 4294901760
        %v2766 = vsub.f32 %v2412, %v2765
        %v2767 = vand.u32 %v2766, 4294901760
        %v2768 = vsub.f32 %v2766, %v2767
        %v2769 = vand.u32 %v2768, 4294901760
        %2770 = vmatpush.msra.mxu0 %v2769
        %v2771 = vand.u32 %v2411, 4294901760
        %v2772 = vsub.f32 %v2411, %v2771
        %v2773 = vand.u32 %v2772, 4294901760
        %v2774 = vsub.f32 %v2772, %v2773
        %v2775 = vand.u32 %v2774, 4294901760
        %2776 = vmatpush.msra.mxu0 %v2775
        %v2777 = vand.u32 %v2410, 4294901760
        %v2778 = vsub.f32 %v2410, %v2777
        %v2779 = vand.u32 %v2778, 4294901760
        %v2780 = vsub.f32 %v2778, %v2779
        %v2781 = vand.u32 %v2780, 4294901760
        %2782 = vmatpush.msra.mxu0 %v2781
        %v2783 = vand.u32 %v2409, 4294901760
        %v2784 = vsub.f32 %v2409, %v2783
        %v2785 = vand.u32 %v2784, 4294901760
        %v2786 = vsub.f32 %v2784, %v2785
        %v2787 = vand.u32 %v2786, 4294901760
        %2788 = vmatpush.msra.mxu0 %v2787
        %v2789 = vand.u32 %v2686, 4294901760
        %2790 = vmatmul.f32.gmra.mxu0 %v2789
        %v2791 = vpop.f32.mrf.mxu0
        %v2792 = vadd.f32 %v2721, %v2791
        %2793 = vdwg.mxu0
        %2794 = vmatpush.msra.mxu0 0.0
        %2795 = vmatpush.msra.mxu0 0.0
        %2796 = vmatpush.msra.mxu0 0.0
        %2797 = vmatpush.msra.mxu0 0.0
        %2798 = vmatpush.msra.mxu0 0.0
        %2799 = vmatpush.msra.mxu0 0.0
        %v2800 = vand.u32 %v2418, 4294901760
        %v2801 = vsub.f32 %v2418, %v2800
        %2802 = vmatpush.msra.mxu0 %v2801
        %v2803 = vand.u32 %v2417, 4294901760
        %v2804 = vsub.f32 %v2417, %v2803
        %2805 = vmatpush.msra.mxu0 %v2804
        %v2806 = vand.u32 %v2416, 4294901760
        %v2807 = vsub.f32 %v2416, %v2806
        %2808 = vmatpush.msra.mxu0 %v2807
        %v2809 = vand.u32 %v2415, 4294901760
        %v2810 = vsub.f32 %v2415, %v2809
        %2811 = vmatpush.msra.mxu0 %v2810
        %v2812 = vand.u32 %v2414, 4294901760
        %v2813 = vsub.f32 %v2414, %v2812
        %2814 = vmatpush.msra.mxu0 %v2813
        %v2815 = vand.u32 %v2413, 4294901760
        %v2816 = vsub.f32 %v2413, %v2815
        %2817 = vmatpush.msra.mxu0 %v2816
        %v2818 = vand.u32 %v2412, 4294901760
        %v2819 = vsub.f32 %v2412, %v2818
        %2820 = vmatpush.msra.mxu0 %v2819
        %v2821 = vand.u32 %v2411, 4294901760
        %v2822 = vsub.f32 %v2411, %v2821
        %2823 = vmatpush.msra.mxu0 %v2822
        %v2824 = vand.u32 %v2410, 4294901760
        %v2825 = vsub.f32 %v2410, %v2824
        %2826 = vmatpush.msra.mxu0 %v2825
        %v2827 = vand.u32 %v2409, 4294901760
        %v2828 = vsub.f32 %v2409, %v2827
        %2829 = vmatpush.msra.mxu0 %v2828
        %v2830 = vand.u32 %v2686, 4294901760
        %v2831 = vsub.f32 %v2686, %v2830
        %2832 = vmatmul.f32.gmra.mxu0 %v2831
        %v2833 = vpop.f32.mrf.mxu0
        %v2834 = vadd.f32 %v2792, %v2833
        %2835 = vdwg.mxu0
        %2836 = vmatpush.msra.mxu0 0.0
        %2837 = vmatpush.msra.mxu0 0.0
        %2838 = vmatpush.msra.mxu0 0.0
        %2839 = vmatpush.msra.mxu0 0.0
        %2840 = vmatpush.msra.mxu0 0.0
        %2841 = vmatpush.msra.mxu0 0.0
        %v2842 = vand.u32 %v2418, 4294901760
        %2843 = vmatpush.msra.mxu0 %v2842
        %v2844 = vand.u32 %v2417, 4294901760
        %2845 = vmatpush.msra.mxu0 %v2844
        %v2846 = vand.u32 %v2416, 4294901760
        %2847 = vmatpush.msra.mxu0 %v2846
        %v2848 = vand.u32 %v2415, 4294901760
        %2849 = vmatpush.msra.mxu0 %v2848
        %v2850 = vand.u32 %v2414, 4294901760
        %2851 = vmatpush.msra.mxu0 %v2850
        %v2852 = vand.u32 %v2413, 4294901760
        %2853 = vmatpush.msra.mxu0 %v2852
        %v2854 = vand.u32 %v2412, 4294901760
        %2855 = vmatpush.msra.mxu0 %v2854
        %v2856 = vand.u32 %v2411, 4294901760
        %2857 = vmatpush.msra.mxu0 %v2856
        %v2858 = vand.u32 %v2410, 4294901760
        %2859 = vmatpush.msra.mxu0 %v2858
        %v2860 = vand.u32 %v2409, 4294901760
        %2861 = vmatpush.msra.mxu0 %v2860
        %v2862 = vand.u32 %v2686, 4294901760
        %v2863 = vsub.f32 %v2686, %v2862
        %v2864 = vand.u32 %v2863, 4294901760
        %2865 = vmatmul.f32.gmra.mxu0 %v2864
        %v2866 = vpop.f32.mrf.mxu0
        %v2867 = vadd.f32 %v2834, %v2866
        %2868 = vdwg.mxu0
        %2869 = vmatpush.msra.mxu0 0.0
        %2870 = vmatpush.msra.mxu0 0.0
        %2871 = vmatpush.msra.mxu0 0.0
        %2872 = vmatpush.msra.mxu0 0.0
        %2873 = vmatpush.msra.mxu0 0.0
        %2874 = vmatpush.msra.mxu0 0.0
        %v2875 = vand.u32 %v2418, 4294901760
        %v2876 = vsub.f32 %v2418, %v2875
        %v2877 = vand.u32 %v2876, 4294901760
        %2878 = vmatpush.msra.mxu0 %v2877
        %v2879 = vand.u32 %v2417, 4294901760
        %v2880 = vsub.f32 %v2417, %v2879
        %v2881 = vand.u32 %v2880, 4294901760
        %2882 = vmatpush.msra.mxu0 %v2881
        %v2883 = vand.u32 %v2416, 4294901760
        %v2884 = vsub.f32 %v2416, %v2883
        %v2885 = vand.u32 %v2884, 4294901760
        %2886 = vmatpush.msra.mxu0 %v2885
        %v2887 = vand.u32 %v2415, 4294901760
        %v2888 = vsub.f32 %v2415, %v2887
        %v2889 = vand.u32 %v2888, 4294901760
        %2890 = vmatpush.msra.mxu0 %v2889
        %v2891 = vand.u32 %v2414, 4294901760
        %v2892 = vsub.f32 %v2414, %v2891
        %v2893 = vand.u32 %v2892, 4294901760
        %2894 = vmatpush.msra.mxu0 %v2893
        %v2895 = vand.u32 %v2413, 4294901760
        %v2896 = vsub.f32 %v2413, %v2895
        %v2897 = vand.u32 %v2896, 4294901760
        %2898 = vmatpush.msra.mxu0 %v2897
        %v2899 = vand.u32 %v2412, 4294901760
        %v2900 = vsub.f32 %v2412, %v2899
        %v2901 = vand.u32 %v2900, 4294901760
        %2902 = vmatpush.msra.mxu0 %v2901
        %v2903 = vand.u32 %v2411, 4294901760
        %v2904 = vsub.f32 %v2411, %v2903
        %v2905 = vand.u32 %v2904, 4294901760
        %2906 = vmatpush.msra.mxu0 %v2905
        %v2907 = vand.u32 %v2410, 4294901760
        %v2908 = vsub.f32 %v2410, %v2907
        %v2909 = vand.u32 %v2908, 4294901760
        %2910 = vmatpush.msra.mxu0 %v2909
        %v2911 = vand.u32 %v2409, 4294901760
        %v2912 = vsub.f32 %v2409, %v2911
        %v2913 = vand.u32 %v2912, 4294901760
        %2914 = vmatpush.msra.mxu0 %v2913
        %v2915 = vand.u32 %v2686, 4294901760
        %2916 = vmatmul.f32.gmra.mxu0 %v2915
        %v2917 = vpop.f32.mrf.mxu0
        %v2918 = vadd.f32 %v2867, %v2917
        %2919 = vdwg.mxu0
        %2920 = vmatpush.msra.mxu0 0.0
        %2921 = vmatpush.msra.mxu0 0.0
        %2922 = vmatpush.msra.mxu0 0.0
        %2923 = vmatpush.msra.mxu0 0.0
        %2924 = vmatpush.msra.mxu0 0.0
        %2925 = vmatpush.msra.mxu0 0.0
        %v2926 = vand.u32 %v2418, 4294901760
        %2927 = vmatpush.msra.mxu0 %v2926
        %v2928 = vand.u32 %v2417, 4294901760
        %2929 = vmatpush.msra.mxu0 %v2928
        %v2930 = vand.u32 %v2416, 4294901760
        %2931 = vmatpush.msra.mxu0 %v2930
        %v2932 = vand.u32 %v2415, 4294901760
        %2933 = vmatpush.msra.mxu0 %v2932
        %v2934 = vand.u32 %v2414, 4294901760
        %2935 = vmatpush.msra.mxu0 %v2934
        %v2936 = vand.u32 %v2413, 4294901760
        %2937 = vmatpush.msra.mxu0 %v2936
        %v2938 = vand.u32 %v2412, 4294901760
        %2939 = vmatpush.msra.mxu0 %v2938
        %v2940 = vand.u32 %v2411, 4294901760
        %2941 = vmatpush.msra.mxu0 %v2940
        %v2942 = vand.u32 %v2410, 4294901760
        %2943 = vmatpush.msra.mxu0 %v2942
        %v2944 = vand.u32 %v2409, 4294901760
        %2945 = vmatpush.msra.mxu0 %v2944
        %v2946 = vand.u32 %v2686, 4294901760
        %2947 = vmatmul.f32.gmra.mxu0 %v2946
        %v2948 = vpop.f32.mrf.mxu0
        %v2949 = vadd.f32 %v2918, %v2948
        %2950 = vdwg.mxu0
        %v2951 = vld [vmem:[%s5] sm:$0xff]
        %v2952 = vld [vmem:[%s5 + $0x8] sm:$0xff]
        %v2953 = vld [vmem:[%s5 + $0x10] sm:$0xff]
        %v2954 = vld [vmem:[%s5 + $0x18] sm:$0xff]
        %v2955 = vld [vmem:[%s5 + $0x20] sm:$0xff]
        %v2956 = vld [vmem:[%s5 + $0x28] sm:$0xff]
        %v2957 = vld [vmem:[%s5 + $0x30] sm:$0xff]
        %v2958 = vld [vmem:[%s5 + $0x38] sm:$0xff]
        %v2959 = vld [vmem:[%s5 + $0x40] sm:$0xff]
        %v2960 = vld [vmem:[%s5 + $0x48] sm:$0xff]
        %2961 = vmatpush.msra.mxu0 0.0
        %2962 = vmatpush.msra.mxu0 0.0
        %2963 = vmatpush.msra.mxu0 0.0
        %2964 = vmatpush.msra.mxu0 0.0
        %2965 = vmatpush.msra.mxu0 0.0
        %2966 = vmatpush.msra.mxu0 0.0
        %v2967 = vand.u32 %v2960, 4294901760
        %2968 = vmatpush.msra.mxu0 %v2967
        %v2969 = vand.u32 %v2959, 4294901760
        %2970 = vmatpush.msra.mxu0 %v2969
        %v2971 = vand.u32 %v2958, 4294901760
        %2972 = vmatpush.msra.mxu0 %v2971
        %v2973 = vand.u32 %v2957, 4294901760
        %2974 = vmatpush.msra.mxu0 %v2973
        %v2975 = vand.u32 %v2956, 4294901760
        %2976 = vmatpush.msra.mxu0 %v2975
        %v2977 = vand.u32 %v2955, 4294901760
        %2978 = vmatpush.msra.mxu0 %v2977
        %v2979 = vand.u32 %v2954, 4294901760
        %2980 = vmatpush.msra.mxu0 %v2979
        %v2981 = vand.u32 %v2953, 4294901760
        %2982 = vmatpush.msra.mxu0 %v2981
        %v2983 = vand.u32 %v2952, 4294901760
        %2984 = vmatpush.msra.mxu0 %v2983
        %v2985 = vand.u32 %v2951, 4294901760
        %2986 = vmatpush.msra.mxu0 %v2985
        %v2987 = vand.u32 %v770, 4294901760
        %v2988 = vsub.f32 %v770, %v2987
        %v2989 = vand.u32 %v2988, 4294901760
        %v2990 = vsub.f32 %v2988, %v2989
        %v2991 = vand.u32 %v2990, 4294901760
        %2992 = vmatmul.f32.gmra.mxu0 %v2991
        %v2993 = vpop.f32.mrf.mxu0
        %v2994 = vadd.f32 0.0, %v2993
        %2995 = vdwg.mxu0
        %2996 = vmatpush.msra.mxu0 0.0
        %2997 = vmatpush.msra.mxu0 0.0
        %2998 = vmatpush.msra.mxu0 0.0
        %2999 = vmatpush.msra.mxu0 0.0
        %3000 = vmatpush.msra.mxu0 0.0
        %3001 = vmatpush.msra.mxu0 0.0
        %v3002 = vand.u32 %v2960, 4294901760
        %v3003 = vsub.f32 %v2960, %v3002
        %v3004 = vand.u32 %v3003, 4294901760
        %v3005 = vsub.f32 %v3003, %v3004
        %v3006 = vand.u32 %v3005, 4294901760
        %3007 = vmatpush.msra.mxu0 %v3006
        %v3008 = vand.u32 %v2959, 4294901760
        %v3009 = vsub.f32 %v2959, %v3008
        %v3010 = vand.u32 %v3009, 4294901760
        %v3011 = vsub.f32 %v3009, %v3010
        %v3012 = vand.u32 %v3011, 4294901760
        %3013 = vmatpush.msra.mxu0 %v3012
        %v3014 = vand.u32 %v2958, 4294901760
        %v3015 = vsub.f32 %v2958, %v3014
        %v3016 = vand.u32 %v3015, 4294901760
        %v3017 = vsub.f32 %v3015, %v3016
        %v3018 = vand.u32 %v3017, 4294901760
        %3019 = vmatpush.msra.mxu0 %v3018
        %v3020 = vand.u32 %v2957, 4294901760
        %v3021 = vsub.f32 %v2957, %v3020
        %v3022 = vand.u32 %v3021, 4294901760
        %v3023 = vsub.f32 %v3021, %v3022
        %v3024 = vand.u32 %v3023, 4294901760
        %3025 = vmatpush.msra.mxu0 %v3024
        %v3026 = vand.u32 %v2956, 4294901760
        %v3027 = vsub.f32 %v2956, %v3026
        %v3028 = vand.u32 %v3027, 4294901760
        %v3029 = vsub.f32 %v3027, %v3028
        %v3030 = vand.u32 %v3029, 4294901760
        %3031 = vmatpush.msra.mxu0 %v3030
        %v3032 = vand.u32 %v2955, 4294901760
        %v3033 = vsub.f32 %v2955, %v3032
        %v3034 = vand.u32 %v3033, 4294901760
        %v3035 = vsub.f32 %v3033, %v3034
        %v3036 = vand.u32 %v3035, 4294901760
        %3037 = vmatpush.msra.mxu0 %v3036
        %v3038 = vand.u32 %v2954, 4294901760
        %v3039 = vsub.f32 %v2954, %v3038
        %v3040 = vand.u32 %v3039, 4294901760
        %v3041 = vsub.f32 %v3039, %v3040
        %v3042 = vand.u32 %v3041, 4294901760
        %3043 = vmatpush.msra.mxu0 %v3042
        %v3044 = vand.u32 %v2953, 4294901760
        %v3045 = vsub.f32 %v2953, %v3044
        %v3046 = vand.u32 %v3045, 4294901760
        %v3047 = vsub.f32 %v3045, %v3046
        %v3048 = vand.u32 %v3047, 4294901760
        %3049 = vmatpush.msra.mxu0 %v3048
        %v3050 = vand.u32 %v2952, 4294901760
        %v3051 = vsub.f32 %v2952, %v3050
        %v3052 = vand.u32 %v3051, 4294901760
        %v3053 = vsub.f32 %v3051, %v3052
        %v3054 = vand.u32 %v3053, 4294901760
        %3055 = vmatpush.msra.mxu0 %v3054
        %v3056 = vand.u32 %v2951, 4294901760
        %v3057 = vsub.f32 %v2951, %v3056
        %v3058 = vand.u32 %v3057, 4294901760
        %v3059 = vsub.f32 %v3057, %v3058
        %v3060 = vand.u32 %v3059, 4294901760
        %3061 = vmatpush.msra.mxu0 %v3060
        %v3062 = vand.u32 %v770, 4294901760
        %3063 = vmatmul.f32.gmra.mxu0 %v3062
        %v3064 = vpop.f32.mrf.mxu0
        %v3065 = vadd.f32 %v2994, %v3064
        %3066 = vdwg.mxu0
        %3067 = vmatpush.msra.mxu0 0.0
        %3068 = vmatpush.msra.mxu0 0.0
        %3069 = vmatpush.msra.mxu0 0.0
        %3070 = vmatpush.msra.mxu0 0.0
        %3071 = vmatpush.msra.mxu0 0.0
        %3072 = vmatpush.msra.mxu0 0.0
        %v3073 = vand.u32 %v2960, 4294901760
        %v3074 = vsub.f32 %v2960, %v3073
        %3075 = vmatpush.msra.mxu0 %v3074
        %v3076 = vand.u32 %v2959, 4294901760
        %v3077 = vsub.f32 %v2959, %v3076
        %3078 = vmatpush.msra.mxu0 %v3077
        %v3079 = vand.u32 %v2958, 4294901760
        %v3080 = vsub.f32 %v2958, %v3079
        %3081 = vmatpush.msra.mxu0 %v3080
        %v3082 = vand.u32 %v2957, 4294901760
        %v3083 = vsub.f32 %v2957, %v3082
        %3084 = vmatpush.msra.mxu0 %v3083
        %v3085 = vand.u32 %v2956, 4294901760
        %v3086 = vsub.f32 %v2956, %v3085
        %3087 = vmatpush.msra.mxu0 %v3086
        %v3088 = vand.u32 %v2955, 4294901760
        %v3089 = vsub.f32 %v2955, %v3088
        %3090 = vmatpush.msra.mxu0 %v3089
        %v3091 = vand.u32 %v2954, 4294901760
        %v3092 = vsub.f32 %v2954, %v3091
        %3093 = vmatpush.msra.mxu0 %v3092
        %v3094 = vand.u32 %v2953, 4294901760
        %v3095 = vsub.f32 %v2953, %v3094
        %3096 = vmatpush.msra.mxu0 %v3095
        %v3097 = vand.u32 %v2952, 4294901760
        %v3098 = vsub.f32 %v2952, %v3097
        %3099 = vmatpush.msra.mxu0 %v3098
        %v3100 = vand.u32 %v2951, 4294901760
        %v3101 = vsub.f32 %v2951, %v3100
        %3102 = vmatpush.msra.mxu0 %v3101
        %v3103 = vand.u32 %v770, 4294901760
        %v3104 = vsub.f32 %v770, %v3103
        %3105 = vmatmul.f32.gmra.mxu0 %v3104
        %v3106 = vpop.f32.mrf.mxu0
        %v3107 = vadd.f32 %v3065, %v3106
        %3108 = vdwg.mxu0
        %3109 = vmatpush.msra.mxu0 0.0
        %3110 = vmatpush.msra.mxu0 0.0
        %3111 = vmatpush.msra.mxu0 0.0
        %3112 = vmatpush.msra.mxu0 0.0
        %3113 = vmatpush.msra.mxu0 0.0
        %3114 = vmatpush.msra.mxu0 0.0
        %v3115 = vand.u32 %v2960, 4294901760
        %3116 = vmatpush.msra.mxu0 %v3115
        %v3117 = vand.u32 %v2959, 4294901760
        %3118 = vmatpush.msra.mxu0 %v3117
        %v3119 = vand.u32 %v2958, 4294901760
        %3120 = vmatpush.msra.mxu0 %v3119
        %v3121 = vand.u32 %v2957, 4294901760
        %3122 = vmatpush.msra.mxu0 %v3121
        %v3123 = vand.u32 %v2956, 4294901760
        %3124 = vmatpush.msra.mxu0 %v3123
        %v3125 = vand.u32 %v2955, 4294901760
        %3126 = vmatpush.msra.mxu0 %v3125
        %v3127 = vand.u32 %v2954, 4294901760
        %3128 = vmatpush.msra.mxu0 %v3127
        %v3129 = vand.u32 %v2953, 4294901760
        %3130 = vmatpush.msra.mxu0 %v3129
        %v3131 = vand.u32 %v2952, 4294901760
        %3132 = vmatpush.msra.mxu0 %v3131
        %v3133 = vand.u32 %v2951, 4294901760
        %3134 = vmatpush.msra.mxu0 %v3133
        %v3135 = vand.u32 %v770, 4294901760
        %v3136 = vsub.f32 %v770, %v3135
        %v3137 = vand.u32 %v3136, 4294901760
        %3138 = vmatmul.f32.gmra.mxu0 %v3137
        %v3139 = vpop.f32.mrf.mxu0
        %v3140 = vadd.f32 %v3107, %v3139
        %3141 = vdwg.mxu0
        %3142 = vmatpush.msra.mxu0 0.0
        %3143 = vmatpush.msra.mxu0 0.0
        %3144 = vmatpush.msra.mxu0 0.0
        %3145 = vmatpush.msra.mxu0 0.0
        %3146 = vmatpush.msra.mxu0 0.0
        %3147 = vmatpush.msra.mxu0 0.0
        %v3148 = vand.u32 %v2960, 4294901760
        %v3149 = vsub.f32 %v2960, %v3148
        %v3150 = vand.u32 %v3149, 4294901760
        %3151 = vmatpush.msra.mxu0 %v3150
        %v3152 = vand.u32 %v2959, 4294901760
        %v3153 = vsub.f32 %v2959, %v3152
        %v3154 = vand.u32 %v3153, 4294901760
        %3155 = vmatpush.msra.mxu0 %v3154
        %v3156 = vand.u32 %v2958, 4294901760
        %v3157 = vsub.f32 %v2958, %v3156
        %v3158 = vand.u32 %v3157, 4294901760
        %3159 = vmatpush.msra.mxu0 %v3158
        %v3160 = vand.u32 %v2957, 4294901760
        %v3161 = vsub.f32 %v2957, %v3160
        %v3162 = vand.u32 %v3161, 4294901760
        %3163 = vmatpush.msra.mxu0 %v3162
        %v3164 = vand.u32 %v2956, 4294901760
        %v3165 = vsub.f32 %v2956, %v3164
        %v3166 = vand.u32 %v3165, 4294901760
        %3167 = vmatpush.msra.mxu0 %v3166
        %v3168 = vand.u32 %v2955, 4294901760
        %v3169 = vsub.f32 %v2955, %v3168
        %v3170 = vand.u32 %v3169, 4294901760
        %3171 = vmatpush.msra.mxu0 %v3170
        %v3172 = vand.u32 %v2954, 4294901760
        %v3173 = vsub.f32 %v2954, %v3172
        %v3174 = vand.u32 %v3173, 4294901760
        %3175 = vmatpush.msra.mxu0 %v3174
        %v3176 = vand.u32 %v2953, 4294901760
        %v3177 = vsub.f32 %v2953, %v3176
        %v3178 = vand.u32 %v3177, 4294901760
        %3179 = vmatpush.msra.mxu0 %v3178
        %v3180 = vand.u32 %v2952, 4294901760
        %v3181 = vsub.f32 %v2952, %v3180
        %v3182 = vand.u32 %v3181, 4294901760
        %3183 = vmatpush.msra.mxu0 %v3182
        %v3184 = vand.u32 %v2951, 4294901760
        %v3185 = vsub.f32 %v2951, %v3184
        %v3186 = vand.u32 %v3185, 4294901760
        %3187 = vmatpush.msra.mxu0 %v3186
        %v3188 = vand.u32 %v770, 4294901760
        %3189 = vmatmul.f32.gmra.mxu0 %v3188
        %v3190 = vpop.f32.mrf.mxu0
        %v3191 = vadd.f32 %v3140, %v3190
        %3192 = vdwg.mxu0
        %3193 = vmatpush.msra.mxu0 0.0
        %3194 = vmatpush.msra.mxu0 0.0
        %3195 = vmatpush.msra.mxu0 0.0
        %3196 = vmatpush.msra.mxu0 0.0
        %3197 = vmatpush.msra.mxu0 0.0
        %3198 = vmatpush.msra.mxu0 0.0
        %v3199 = vand.u32 %v2960, 4294901760
        %3200 = vmatpush.msra.mxu0 %v3199
        %v3201 = vand.u32 %v2959, 4294901760
        %3202 = vmatpush.msra.mxu0 %v3201
        %v3203 = vand.u32 %v2958, 4294901760
        %3204 = vmatpush.msra.mxu0 %v3203
        %v3205 = vand.u32 %v2957, 4294901760
        %3206 = vmatpush.msra.mxu0 %v3205
        %v3207 = vand.u32 %v2956, 4294901760
        %3208 = vmatpush.msra.mxu0 %v3207
        %v3209 = vand.u32 %v2955, 4294901760
        %3210 = vmatpush.msra.mxu0 %v3209
        %v3211 = vand.u32 %v2954, 4294901760
        %3212 = vmatpush.msra.mxu0 %v3211
        %v3213 = vand.u32 %v2953, 4294901760
        %3214 = vmatpush.msra.mxu0 %v3213
        %v3215 = vand.u32 %v2952, 4294901760
        %3216 = vmatpush.msra.mxu0 %v3215
        %v3217 = vand.u32 %v2951, 4294901760
        %3218 = vmatpush.msra.mxu0 %v3217
        %v3219 = vand.u32 %v770, 4294901760
        %3220 = vmatmul.f32.gmra.mxu0 %v3219
        %v3221 = vpop.f32.mrf.mxu0
        %v3222 = vadd.f32 %v3191, %v3221
        %3223 = vdwg.mxu0
        %3224 = vmatpush.msra.mxu0 0.0
        %3225 = vmatpush.msra.mxu0 0.0
        %3226 = vmatpush.msra.mxu0 0.0
        %3227 = vmatpush.msra.mxu0 0.0
        %3228 = vmatpush.msra.mxu0 0.0
        %3229 = vmatpush.msra.mxu0 0.0
        %v3230 = vand.u32 %v2960, 4294901760
        %3231 = vmatpush.msra.mxu0 %v3230
        %v3232 = vand.u32 %v2959, 4294901760
        %3233 = vmatpush.msra.mxu0 %v3232
        %v3234 = vand.u32 %v2958, 4294901760
        %3235 = vmatpush.msra.mxu0 %v3234
        %v3236 = vand.u32 %v2957, 4294901760
        %3237 = vmatpush.msra.mxu0 %v3236
        %v3238 = vand.u32 %v2956, 4294901760
        %3239 = vmatpush.msra.mxu0 %v3238
        %v3240 = vand.u32 %v2955, 4294901760
        %3241 = vmatpush.msra.mxu0 %v3240
        %v3242 = vand.u32 %v2954, 4294901760
        %3243 = vmatpush.msra.mxu0 %v3242
        %v3244 = vand.u32 %v2953, 4294901760
        %3245 = vmatpush.msra.mxu0 %v3244
        %v3246 = vand.u32 %v2952, 4294901760
        %3247 = vmatpush.msra.mxu0 %v3246
        %v3248 = vand.u32 %v2951, 4294901760
        %3249 = vmatpush.msra.mxu0 %v3248
        %v3250 = vand.u32 %v1036, 4294901760
        %v3251 = vsub.f32 %v1036, %v3250
        %v3252 = vand.u32 %v3251, 4294901760
        %v3253 = vsub.f32 %v3251, %v3252
        %v3254 = vand.u32 %v3253, 4294901760
        %3255 = vmatmul.f32.gmra.mxu0 %v3254
        %v3256 = vpop.f32.mrf.mxu0
        %v3257 = vadd.f32 0.0, %v3256
        %3258 = vdwg.mxu0
        %3259 = vmatpush.msra.mxu0 0.0
        %3260 = vmatpush.msra.mxu0 0.0
        %3261 = vmatpush.msra.mxu0 0.0
        %3262 = vmatpush.msra.mxu0 0.0
        %3263 = vmatpush.msra.mxu0 0.0
        %3264 = vmatpush.msra.mxu0 0.0
        %v3265 = vand.u32 %v2960, 4294901760
        %v3266 = vsub.f32 %v2960, %v3265
        %v3267 = vand.u32 %v3266, 4294901760
        %v3268 = vsub.f32 %v3266, %v3267
        %v3269 = vand.u32 %v3268, 4294901760
        %3270 = vmatpush.msra.mxu0 %v3269
        %v3271 = vand.u32 %v2959, 4294901760
        %v3272 = vsub.f32 %v2959, %v3271
        %v3273 = vand.u32 %v3272, 4294901760
        %v3274 = vsub.f32 %v3272, %v3273
        %v3275 = vand.u32 %v3274, 4294901760
        %3276 = vmatpush.msra.mxu0 %v3275
        %v3277 = vand.u32 %v2958, 4294901760
        %v3278 = vsub.f32 %v2958, %v3277
        %v3279 = vand.u32 %v3278, 4294901760
        %v3280 = vsub.f32 %v3278, %v3279
        %v3281 = vand.u32 %v3280, 4294901760
        %3282 = vmatpush.msra.mxu0 %v3281
        %v3283 = vand.u32 %v2957, 4294901760
        %v3284 = vsub.f32 %v2957, %v3283
        %v3285 = vand.u32 %v3284, 4294901760
        %v3286 = vsub.f32 %v3284, %v3285
        %v3287 = vand.u32 %v3286, 4294901760
        %3288 = vmatpush.msra.mxu0 %v3287
        %v3289 = vand.u32 %v2956, 4294901760
        %v3290 = vsub.f32 %v2956, %v3289
        %v3291 = vand.u32 %v3290, 4294901760
        %v3292 = vsub.f32 %v3290, %v3291
        %v3293 = vand.u32 %v3292, 4294901760
        %3294 = vmatpush.msra.mxu0 %v3293
        %v3295 = vand.u32 %v2955, 4294901760
        %v3296 = vsub.f32 %v2955, %v3295
        %v3297 = vand.u32 %v3296, 4294901760
        %v3298 = vsub.f32 %v3296, %v3297
        %v3299 = vand.u32 %v3298, 4294901760
        %3300 = vmatpush.msra.mxu0 %v3299
        %v3301 = vand.u32 %v2954, 4294901760
        %v3302 = vsub.f32 %v2954, %v3301
        %v3303 = vand.u32 %v3302, 4294901760
        %v3304 = vsub.f32 %v3302, %v3303
        %v3305 = vand.u32 %v3304, 4294901760
        %3306 = vmatpush.msra.mxu0 %v3305
        %v3307 = vand.u32 %v2953, 4294901760
        %v3308 = vsub.f32 %v2953, %v3307
        %v3309 = vand.u32 %v3308, 4294901760
        %v3310 = vsub.f32 %v3308, %v3309
        %v3311 = vand.u32 %v3310, 4294901760
        %3312 = vmatpush.msra.mxu0 %v3311
        %v3313 = vand.u32 %v2952, 4294901760
        %v3314 = vsub.f32 %v2952, %v3313
        %v3315 = vand.u32 %v3314, 4294901760
        %v3316 = vsub.f32 %v3314, %v3315
        %v3317 = vand.u32 %v3316, 4294901760
        %3318 = vmatpush.msra.mxu0 %v3317
        %v3319 = vand.u32 %v2951, 4294901760
        %v3320 = vsub.f32 %v2951, %v3319
        %v3321 = vand.u32 %v3320, 4294901760
        %v3322 = vsub.f32 %v3320, %v3321
        %v3323 = vand.u32 %v3322, 4294901760
        %3324 = vmatpush.msra.mxu0 %v3323
        %v3325 = vand.u32 %v1036, 4294901760
        %3326 = vmatmul.f32.gmra.mxu0 %v3325
        %v3327 = vpop.f32.mrf.mxu0
        %v3328 = vadd.f32 %v3257, %v3327
        %3329 = vdwg.mxu0
        %3330 = vmatpush.msra.mxu0 0.0
        %3331 = vmatpush.msra.mxu0 0.0
        %3332 = vmatpush.msra.mxu0 0.0
        %3333 = vmatpush.msra.mxu0 0.0
        %3334 = vmatpush.msra.mxu0 0.0
        %3335 = vmatpush.msra.mxu0 0.0
        %v3336 = vand.u32 %v2960, 4294901760
        %v3337 = vsub.f32 %v2960, %v3336
        %3338 = vmatpush.msra.mxu0 %v3337
        %v3339 = vand.u32 %v2959, 4294901760
        %v3340 = vsub.f32 %v2959, %v3339
        %3341 = vmatpush.msra.mxu0 %v3340
        %v3342 = vand.u32 %v2958, 4294901760
        %v3343 = vsub.f32 %v2958, %v3342
        %3344 = vmatpush.msra.mxu0 %v3343
        %v3345 = vand.u32 %v2957, 4294901760
        %v3346 = vsub.f32 %v2957, %v3345
        %3347 = vmatpush.msra.mxu0 %v3346
        %v3348 = vand.u32 %v2956, 4294901760
        %v3349 = vsub.f32 %v2956, %v3348
        %3350 = vmatpush.msra.mxu0 %v3349
        %v3351 = vand.u32 %v2955, 4294901760
        %v3352 = vsub.f32 %v2955, %v3351
        %3353 = vmatpush.msra.mxu0 %v3352
        %v3354 = vand.u32 %v2954, 4294901760
        %v3355 = vsub.f32 %v2954, %v3354
        %3356 = vmatpush.msra.mxu0 %v3355
        %v3357 = vand.u32 %v2953, 4294901760
        %v3358 = vsub.f32 %v2953, %v3357
        %3359 = vmatpush.msra.mxu0 %v3358
        %v3360 = vand.u32 %v2952, 4294901760
        %v3361 = vsub.f32 %v2952, %v3360
        %3362 = vmatpush.msra.mxu0 %v3361
        %v3363 = vand.u32 %v2951, 4294901760
        %v3364 = vsub.f32 %v2951, %v3363
        %3365 = vmatpush.msra.mxu0 %v3364
        %v3366 = vand.u32 %v1036, 4294901760
        %v3367 = vsub.f32 %v1036, %v3366
        %3368 = vmatmul.f32.gmra.mxu0 %v3367
        %v3369 = vpop.f32.mrf.mxu0
        %v3370 = vadd.f32 %v3328, %v3369
        %3371 = vdwg.mxu0
        %3372 = vmatpush.msra.mxu0 0.0
        %3373 = vmatpush.msra.mxu0 0.0
        %3374 = vmatpush.msra.mxu0 0.0
        %3375 = vmatpush.msra.mxu0 0.0
        %3376 = vmatpush.msra.mxu0 0.0
        %3377 = vmatpush.msra.mxu0 0.0
        %v3378 = vand.u32 %v2960, 4294901760
        %3379 = vmatpush.msra.mxu0 %v3378
        %v3380 = vand.u32 %v2959, 4294901760
        %3381 = vmatpush.msra.mxu0 %v3380
        %v3382 = vand.u32 %v2958, 4294901760
        %3383 = vmatpush.msra.mxu0 %v3382
        %v3384 = vand.u32 %v2957, 4294901760
        %3385 = vmatpush.msra.mxu0 %v3384
        %v3386 = vand.u32 %v2956, 4294901760
        %3387 = vmatpush.msra.mxu0 %v3386
        %v3388 = vand.u32 %v2955, 4294901760
        %3389 = vmatpush.msra.mxu0 %v3388
        %v3390 = vand.u32 %v2954, 4294901760
        %3391 = vmatpush.msra.mxu0 %v3390
        %v3392 = vand.u32 %v2953, 4294901760
        %3393 = vmatpush.msra.mxu0 %v3392
        %v3394 = vand.u32 %v2952, 4294901760
        %3395 = vmatpush.msra.mxu0 %v3394
        %v3396 = vand.u32 %v2951, 4294901760
        %3397 = vmatpush.msra.mxu0 %v3396
        %v3398 = vand.u32 %v1036, 4294901760
        %v3399 = vsub.f32 %v1036, %v3398
        %v3400 = vand.u32 %v3399, 4294901760
        %3401 = vmatmul.f32.gmra.mxu0 %v3400
        %v3402 = vpop.f32.mrf.mxu0
        %v3403 = vadd.f32 %v3370, %v3402
        %3404 = vdwg.mxu0
        %3405 = vmatpush.msra.mxu0 0.0
        %3406 = vmatpush.msra.mxu0 0.0
        %3407 = vmatpush.msra.mxu0 0.0
        %3408 = vmatpush.msra.mxu0 0.0
        %3409 = vmatpush.msra.mxu0 0.0
        %3410 = vmatpush.msra.mxu0 0.0
        %v3411 = vand.u32 %v2960, 4294901760
        %v3412 = vsub.f32 %v2960, %v3411
        %v3413 = vand.u32 %v3412, 4294901760
        %3414 = vmatpush.msra.mxu0 %v3413
        %v3415 = vand.u32 %v2959, 4294901760
        %v3416 = vsub.f32 %v2959, %v3415
        %v3417 = vand.u32 %v3416, 4294901760
        %3418 = vmatpush.msra.mxu0 %v3417
        %v3419 = vand.u32 %v2958, 4294901760
        %v3420 = vsub.f32 %v2958, %v3419
        %v3421 = vand.u32 %v3420, 4294901760
        %3422 = vmatpush.msra.mxu0 %v3421
        %v3423 = vand.u32 %v2957, 4294901760
        %v3424 = vsub.f32 %v2957, %v3423
        %v3425 = vand.u32 %v3424, 4294901760
        %3426 = vmatpush.msra.mxu0 %v3425
        %v3427 = vand.u32 %v2956, 4294901760
        %v3428 = vsub.f32 %v2956, %v3427
        %v3429 = vand.u32 %v3428, 4294901760
        %3430 = vmatpush.msra.mxu0 %v3429
        %v3431 = vand.u32 %v2955, 4294901760
        %v3432 = vsub.f32 %v2955, %v3431
        %v3433 = vand.u32 %v3432, 4294901760
        %3434 = vmatpush.msra.mxu0 %v3433
        %v3435 = vand.u32 %v2954, 4294901760
        %v3436 = vsub.f32 %v2954, %v3435
        %v3437 = vand.u32 %v3436, 4294901760
        %3438 = vmatpush.msra.mxu0 %v3437
        %v3439 = vand.u32 %v2953, 4294901760
        %v3440 = vsub.f32 %v2953, %v3439
        %v3441 = vand.u32 %v3440, 4294901760
        %3442 = vmatpush.msra.mxu0 %v3441
        %v3443 = vand.u32 %v2952, 4294901760
        %v3444 = vsub.f32 %v2952, %v3443
        %v3445 = vand.u32 %v3444, 4294901760
        %3446 = vmatpush.msra.mxu0 %v3445
        %v3447 = vand.u32 %v2951, 4294901760
        %v3448 = vsub.f32 %v2951, %v3447
        %v3449 = vand.u32 %v3448, 4294901760
        %3450 = vmatpush.msra.mxu0 %v3449
        %v3451 = vand.u32 %v1036, 4294901760
        %3452 = vmatmul.f32.gmra.mxu0 %v3451
        %v3453 = vpop.f32.mrf.mxu0
        %v3454 = vadd.f32 %v3403, %v3453
        %3455 = vdwg.mxu0
        %3456 = vmatpush.msra.mxu0 0.0
        %3457 = vmatpush.msra.mxu0 0.0
        %3458 = vmatpush.msra.mxu0 0.0
        %3459 = vmatpush.msra.mxu0 0.0
        %3460 = vmatpush.msra.mxu0 0.0
        %3461 = vmatpush.msra.mxu0 0.0
        %v3462 = vand.u32 %v2960, 4294901760
        %3463 = vmatpush.msra.mxu0 %v3462
        %v3464 = vand.u32 %v2959, 4294901760
        %3465 = vmatpush.msra.mxu0 %v3464
        %v3466 = vand.u32 %v2958, 4294901760
        %3467 = vmatpush.msra.mxu0 %v3466
        %v3468 = vand.u32 %v2957, 4294901760
        %3469 = vmatpush.msra.mxu0 %v3468
        %v3470 = vand.u32 %v2956, 4294901760
        %3471 = vmatpush.msra.mxu0 %v3470
        %v3472 = vand.u32 %v2955, 4294901760
        %3473 = vmatpush.msra.mxu0 %v3472
        %v3474 = vand.u32 %v2954, 4294901760
        %3475 = vmatpush.msra.mxu0 %v3474
        %v3476 = vand.u32 %v2953, 4294901760
        %3477 = vmatpush.msra.mxu0 %v3476
        %v3478 = vand.u32 %v2952, 4294901760
        %3479 = vmatpush.msra.mxu0 %v3478
        %v3480 = vand.u32 %v2951, 4294901760
        %3481 = vmatpush.msra.mxu0 %v3480
        %v3482 = vand.u32 %v1036, 4294901760
        %3483 = vmatmul.f32.gmra.mxu0 %v3482
        %v3484 = vpop.f32.mrf.mxu0
        %v3485 = vadd.f32 %v3454, %v3484
        %3486 = vdwg.mxu0
        %v3487 = vmul.f32 %v3222, %v3222
        %v3488 = vsub.f32 %v3485, %v3487
        %v3489 = vadd.f32 %v3488, 0.0001
        %v3490 = vsub.f32 %v756, %v3222
        %v3491 = vrsqrt.pop %v3489
        %v3492 = vmul.f32 %v3491, %v3489
        %v3493 = vmul.f32 %v3492, %v3491
        %v3494 = vmul.f32 0.5, %v3493
        %v3495 = vsub.f32 1.5, %v3494
        %v3496 = vmul.f32 %v3491, %v3495
        %vm3497 = vweird.f32 %v3489
        %vm3498 = vweird.f32 %v3491
        %vm3499 = vmor %vm3497, %vm3498
        %v3500 = vsel %vm3499, %v3491, %v3496
        %v3501 = vmul.f32 %v3490, %v3500
        %v3502 = vld [vmem:[%s6] sm:$0xff]
        %v3503 = vld [vmem:[%s6 + $0x8] sm:$0xff]
        %v3504 = vld [vmem:[%s6 + $0x10] sm:$0xff]
        %v3505 = vld [vmem:[%s6 + $0x18] sm:$0xff]
        %v3506 = vld [vmem:[%s6 + $0x20] sm:$0xff]
        %v3507 = vld [vmem:[%s6 + $0x28] sm:$0xff]
        %v3508 = vld [vmem:[%s6 + $0x30] sm:$0xff]
        %v3509 = vld [vmem:[%s6 + $0x38] sm:$0xff]
        %v3510 = vld [vmem:[%s6 + $0x40] sm:$0xff]
        %v3511 = vld [vmem:[%s6 + $0x48] sm:$0xff]
        %v3513 = vsel %vm768, %v3501, 0
        %3515 = vmatpush.msra.mxu0 0.0
        %3516 = vmatpush.msra.mxu0 0.0
        %3517 = vmatpush.msra.mxu0 0.0
        %3518 = vmatpush.msra.mxu0 0.0
        %3519 = vmatpush.msra.mxu0 0.0
        %3520 = vmatpush.msra.mxu0 0.0
        %v3521 = vand.u32 %v3511, 4294901760
        %3522 = vmatpush.msra.mxu0 %v3521
        %v3523 = vand.u32 %v3510, 4294901760
        %3524 = vmatpush.msra.mxu0 %v3523
        %v3525 = vand.u32 %v3509, 4294901760
        %3526 = vmatpush.msra.mxu0 %v3525
        %v3527 = vand.u32 %v3508, 4294901760
        %3528 = vmatpush.msra.mxu0 %v3527
        %v3529 = vand.u32 %v3507, 4294901760
        %3530 = vmatpush.msra.mxu0 %v3529
        %v3531 = vand.u32 %v3506, 4294901760
        %3532 = vmatpush.msra.mxu0 %v3531
        %v3533 = vand.u32 %v3505, 4294901760
        %3534 = vmatpush.msra.mxu0 %v3533
        %v3535 = vand.u32 %v3504, 4294901760
        %3536 = vmatpush.msra.mxu0 %v3535
        %v3537 = vand.u32 %v3503, 4294901760
        %3538 = vmatpush.msra.mxu0 %v3537
        %v3539 = vand.u32 %v3502, 4294901760
        %3540 = vmatpush.msra.mxu0 %v3539
        %v3541 = vand.u32 %v3513, 4294901760
        %v3542 = vsub.f32 %v3513, %v3541
        %v3543 = vand.u32 %v3542, 4294901760
        %v3544 = vsub.f32 %v3542, %v3543
        %v3545 = vand.u32 %v3544, 4294901760
        %3546 = vmatmul.f32.gmra.mxu0 %v3545
        %v3547 = vpop.f32.mrf.mxu0
        %v3548 = vadd.f32 0.0, %v3547
        %3549 = vdwg.mxu0
        %3550 = vmatpush.msra.mxu0 0.0
        %3551 = vmatpush.msra.mxu0 0.0
        %3552 = vmatpush.msra.mxu0 0.0
        %3553 = vmatpush.msra.mxu0 0.0
        %3554 = vmatpush.msra.mxu0 0.0
        %3555 = vmatpush.msra.mxu0 0.0
        %v3556 = vand.u32 %v3511, 4294901760
        %v3557 = vsub.f32 %v3511, %v3556
        %v3558 = vand.u32 %v3557, 4294901760
        %v3559 = vsub.f32 %v3557, %v3558
        %v3560 = vand.u32 %v3559, 4294901760
        %3561 = vmatpush.msra.mxu0 %v3560
        %v3562 = vand.u32 %v3510, 4294901760
        %v3563 = vsub.f32 %v3510, %v3562
        %v3564 = vand.u32 %v3563, 4294901760
        %v3565 = vsub.f32 %v3563, %v3564
        %v3566 = vand.u32 %v3565, 4294901760
        %3567 = vmatpush.msra.mxu0 %v3566
        %v3568 = vand.u32 %v3509, 4294901760
        %v3569 = vsub.f32 %v3509, %v3568
        %v3570 = vand.u32 %v3569, 4294901760
        %v3571 = vsub.f32 %v3569, %v3570
        %v3572 = vand.u32 %v3571, 4294901760
        %3573 = vmatpush.msra.mxu0 %v3572
        %v3574 = vand.u32 %v3508, 4294901760
        %v3575 = vsub.f32 %v3508, %v3574
        %v3576 = vand.u32 %v3575, 4294901760
        %v3577 = vsub.f32 %v3575, %v3576
        %v3578 = vand.u32 %v3577, 4294901760
        %3579 = vmatpush.msra.mxu0 %v3578
        %v3580 = vand.u32 %v3507, 4294901760
        %v3581 = vsub.f32 %v3507, %v3580
        %v3582 = vand.u32 %v3581, 4294901760
        %v3583 = vsub.f32 %v3581, %v3582
        %v3584 = vand.u32 %v3583, 4294901760
        %3585 = vmatpush.msra.mxu0 %v3584
        %v3586 = vand.u32 %v3506, 4294901760
        %v3587 = vsub.f32 %v3506, %v3586
        %v3588 = vand.u32 %v3587, 4294901760
        %v3589 = vsub.f32 %v3587, %v3588
        %v3590 = vand.u32 %v3589, 4294901760
        %3591 = vmatpush.msra.mxu0 %v3590
        %v3592 = vand.u32 %v3505, 4294901760
        %v3593 = vsub.f32 %v3505, %v3592
        %v3594 = vand.u32 %v3593, 4294901760
        %v3595 = vsub.f32 %v3593, %v3594
        %v3596 = vand.u32 %v3595, 4294901760
        %3597 = vmatpush.msra.mxu0 %v3596
        %v3598 = vand.u32 %v3504, 4294901760
        %v3599 = vsub.f32 %v3504, %v3598
        %v3600 = vand.u32 %v3599, 4294901760
        %v3601 = vsub.f32 %v3599, %v3600
        %v3602 = vand.u32 %v3601, 4294901760
        %3603 = vmatpush.msra.mxu0 %v3602
        %v3604 = vand.u32 %v3503, 4294901760
        %v3605 = vsub.f32 %v3503, %v3604
        %v3606 = vand.u32 %v3605, 4294901760
        %v3607 = vsub.f32 %v3605, %v3606
        %v3608 = vand.u32 %v3607, 4294901760
        %3609 = vmatpush.msra.mxu0 %v3608
        %v3610 = vand.u32 %v3502, 4294901760
        %v3611 = vsub.f32 %v3502, %v3610
        %v3612 = vand.u32 %v3611, 4294901760
        %v3613 = vsub.f32 %v3611, %v3612
        %v3614 = vand.u32 %v3613, 4294901760
        %3615 = vmatpush.msra.mxu0 %v3614
        %v3616 = vand.u32 %v3513, 4294901760
        %3617 = vmatmul.f32.gmra.mxu0 %v3616
        %v3618 = vpop.f32.mrf.mxu0
        %v3619 = vadd.f32 %v3548, %v3618
        %3620 = vdwg.mxu0
        %3621 = vmatpush.msra.mxu0 0.0
        %3622 = vmatpush.msra.mxu0 0.0
        %3623 = vmatpush.msra.mxu0 0.0
        %3624 = vmatpush.msra.mxu0 0.0
        %3625 = vmatpush.msra.mxu0 0.0
        %3626 = vmatpush.msra.mxu0 0.0
        %v3627 = vand.u32 %v3511, 4294901760
        %v3628 = vsub.f32 %v3511, %v3627
        %3629 = vmatpush.msra.mxu0 %v3628
        %v3630 = vand.u32 %v3510, 4294901760
        %v3631 = vsub.f32 %v3510, %v3630
        %3632 = vmatpush.msra.mxu0 %v3631
        %v3633 = vand.u32 %v3509, 4294901760
        %v3634 = vsub.f32 %v3509, %v3633
        %3635 = vmatpush.msra.mxu0 %v3634
        %v3636 = vand.u32 %v3508, 4294901760
        %v3637 = vsub.f32 %v3508, %v3636
        %3638 = vmatpush.msra.mxu0 %v3637
        %v3639 = vand.u32 %v3507, 4294901760
        %v3640 = vsub.f32 %v3507, %v3639
        %3641 = vmatpush.msra.mxu0 %v3640
        %v3642 = vand.u32 %v3506, 4294901760
        %v3643 = vsub.f32 %v3506, %v3642
        %3644 = vmatpush.msra.mxu0 %v3643
        %v3645 = vand.u32 %v3505, 4294901760
        %v3646 = vsub.f32 %v3505, %v3645
        %3647 = vmatpush.msra.mxu0 %v3646
        %v3648 = vand.u32 %v3504, 4294901760
        %v3649 = vsub.f32 %v3504, %v3648
        %3650 = vmatpush.msra.mxu0 %v3649
        %v3651 = vand.u32 %v3503, 4294901760
        %v3652 = vsub.f32 %v3503, %v3651
        %3653 = vmatpush.msra.mxu0 %v3652
        %v3654 = vand.u32 %v3502, 4294901760
        %v3655 = vsub.f32 %v3502, %v3654
        %3656 = vmatpush.msra.mxu0 %v3655
        %v3657 = vand.u32 %v3513, 4294901760
        %v3658 = vsub.f32 %v3513, %v3657
        %3659 = vmatmul.f32.gmra.mxu0 %v3658
        %v3660 = vpop.f32.mrf.mxu0
        %v3661 = vadd.f32 %v3619, %v3660
        %3662 = vdwg.mxu0
        %3663 = vmatpush.msra.mxu0 0.0
        %3664 = vmatpush.msra.mxu0 0.0
        %3665 = vmatpush.msra.mxu0 0.0
        %3666 = vmatpush.msra.mxu0 0.0
        %3667 = vmatpush.msra.mxu0 0.0
        %3668 = vmatpush.msra.mxu0 0.0
        %v3669 = vand.u32 %v3511, 4294901760
        %3670 = vmatpush.msra.mxu0 %v3669
        %v3671 = vand.u32 %v3510, 4294901760
        %3672 = vmatpush.msra.mxu0 %v3671
        %v3673 = vand.u32 %v3509, 4294901760
        %3674 = vmatpush.msra.mxu0 %v3673
        %v3675 = vand.u32 %v3508, 4294901760
        %3676 = vmatpush.msra.mxu0 %v3675
        %v3677 = vand.u32 %v3507, 4294901760
        %3678 = vmatpush.msra.mxu0 %v3677
        %v3679 = vand.u32 %v3506, 4294901760
        %3680 = vmatpush.msra.mxu0 %v3679
        %v3681 = vand.u32 %v3505, 4294901760
        %3682 = vmatpush.msra.mxu0 %v3681
        %v3683 = vand.u32 %v3504, 4294901760
        %3684 = vmatpush.msra.mxu0 %v3683
        %v3685 = vand.u32 %v3503, 4294901760
        %3686 = vmatpush.msra.mxu0 %v3685
        %v3687 = vand.u32 %v3502, 4294901760
        %3688 = vmatpush.msra.mxu0 %v3687
        %v3689 = vand.u32 %v3513, 4294901760
        %v3690 = vsub.f32 %v3513, %v3689
        %v3691 = vand.u32 %v3690, 4294901760
        %3692 = vmatmul.f32.gmra.mxu0 %v3691
        %v3693 = vpop.f32.mrf.mxu0
        %v3694 = vadd.f32 %v3661, %v3693
        %3695 = vdwg.mxu0
        %3696 = vmatpush.msra.mxu0 0.0
        %3697 = vmatpush.msra.mxu0 0.0
        %3698 = vmatpush.msra.mxu0 0.0
        %3699 = vmatpush.msra.mxu0 0.0
        %3700 = vmatpush.msra.mxu0 0.0
        %3701 = vmatpush.msra.mxu0 0.0
        %v3702 = vand.u32 %v3511, 4294901760
        %v3703 = vsub.f32 %v3511, %v3702
        %v3704 = vand.u32 %v3703, 4294901760
        %3705 = vmatpush.msra.mxu0 %v3704
        %v3706 = vand.u32 %v3510, 4294901760
        %v3707 = vsub.f32 %v3510, %v3706
        %v3708 = vand.u32 %v3707, 4294901760
        %3709 = vmatpush.msra.mxu0 %v3708
        %v3710 = vand.u32 %v3509, 4294901760
        %v3711 = vsub.f32 %v3509, %v3710
        %v3712 = vand.u32 %v3711, 4294901760
        %3713 = vmatpush.msra.mxu0 %v3712
        %v3714 = vand.u32 %v3508, 4294901760
        %v3715 = vsub.f32 %v3508, %v3714
        %v3716 = vand.u32 %v3715, 4294901760
        %3717 = vmatpush.msra.mxu0 %v3716
        %v3718 = vand.u32 %v3507, 4294901760
        %v3719 = vsub.f32 %v3507, %v3718
        %v3720 = vand.u32 %v3719, 4294901760
        %3721 = vmatpush.msra.mxu0 %v3720
        %v3722 = vand.u32 %v3506, 4294901760
        %v3723 = vsub.f32 %v3506, %v3722
        %v3724 = vand.u32 %v3723, 4294901760
        %3725 = vmatpush.msra.mxu0 %v3724
        %v3726 = vand.u32 %v3505, 4294901760
        %v3727 = vsub.f32 %v3505, %v3726
        %v3728 = vand.u32 %v3727, 4294901760
        %3729 = vmatpush.msra.mxu0 %v3728
        %v3730 = vand.u32 %v3504, 4294901760
        %v3731 = vsub.f32 %v3504, %v3730
        %v3732 = vand.u32 %v3731, 4294901760
        %3733 = vmatpush.msra.mxu0 %v3732
        %v3734 = vand.u32 %v3503, 4294901760
        %v3735 = vsub.f32 %v3503, %v3734
        %v3736 = vand.u32 %v3735, 4294901760
        %3737 = vmatpush.msra.mxu0 %v3736
        %v3738 = vand.u32 %v3502, 4294901760
        %v3739 = vsub.f32 %v3502, %v3738
        %v3740 = vand.u32 %v3739, 4294901760
        %3741 = vmatpush.msra.mxu0 %v3740
        %v3742 = vand.u32 %v3513, 4294901760
        %3743 = vmatmul.f32.gmra.mxu0 %v3742
        %v3744 = vpop.f32.mrf.mxu0
        %v3745 = vadd.f32 %v3694, %v3744
        %3746 = vdwg.mxu0
        %3747 = vmatpush.msra.mxu0 0.0
        %3748 = vmatpush.msra.mxu0 0.0
        %3749 = vmatpush.msra.mxu0 0.0
        %3750 = vmatpush.msra.mxu0 0.0
        %3751 = vmatpush.msra.mxu0 0.0
        %3752 = vmatpush.msra.mxu0 0.0
        %v3753 = vand.u32 %v3511, 4294901760
        %3754 = vmatpush.msra.mxu0 %v3753
        %v3755 = vand.u32 %v3510, 4294901760
        %3756 = vmatpush.msra.mxu0 %v3755
        %v3757 = vand.u32 %v3509, 4294901760
        %3758 = vmatpush.msra.mxu0 %v3757
        %v3759 = vand.u32 %v3508, 4294901760
        %3760 = vmatpush.msra.mxu0 %v3759
        %v3761 = vand.u32 %v3507, 4294901760
        %3762 = vmatpush.msra.mxu0 %v3761
        %v3763 = vand.u32 %v3506, 4294901760
        %3764 = vmatpush.msra.mxu0 %v3763
        %v3765 = vand.u32 %v3505, 4294901760
        %3766 = vmatpush.msra.mxu0 %v3765
        %v3767 = vand.u32 %v3504, 4294901760
        %3768 = vmatpush.msra.mxu0 %v3767
        %v3769 = vand.u32 %v3503, 4294901760
        %3770 = vmatpush.msra.mxu0 %v3769
        %v3771 = vand.u32 %v3502, 4294901760
        %3772 = vmatpush.msra.mxu0 %v3771
        %v3773 = vand.u32 %v3513, 4294901760
        %3774 = vmatmul.f32.gmra.mxu0 %v3773
        %v3775 = vpop.f32.mrf.mxu0
        %v3776 = vadd.f32 %v3745, %v3775
        %3777 = vdwg.mxu0
        %v3779 = vsel %vm768, %v3222, 0
        %3781 = vmatpush.msra.mxu0 0.0
        %3782 = vmatpush.msra.mxu0 0.0
        %3783 = vmatpush.msra.mxu0 0.0
        %3784 = vmatpush.msra.mxu0 0.0
        %3785 = vmatpush.msra.mxu0 0.0
        %3786 = vmatpush.msra.mxu0 0.0
        %v3787 = vand.u32 %v3511, 4294901760
        %3788 = vmatpush.msra.mxu0 %v3787
        %v3789 = vand.u32 %v3510, 4294901760
        %3790 = vmatpush.msra.mxu0 %v3789
        %v3791 = vand.u32 %v3509, 4294901760
        %3792 = vmatpush.msra.mxu0 %v3791
        %v3793 = vand.u32 %v3508, 4294901760
        %3794 = vmatpush.msra.mxu0 %v3793
        %v3795 = vand.u32 %v3507, 4294901760
        %3796 = vmatpush.msra.mxu0 %v3795
        %v3797 = vand.u32 %v3506, 4294901760
        %3798 = vmatpush.msra.mxu0 %v3797
        %v3799 = vand.u32 %v3505, 4294901760
        %3800 = vmatpush.msra.mxu0 %v3799
        %v3801 = vand.u32 %v3504, 4294901760
        %3802 = vmatpush.msra.mxu0 %v3801
        %v3803 = vand.u32 %v3503, 4294901760
        %3804 = vmatpush.msra.mxu0 %v3803
        %v3805 = vand.u32 %v3502, 4294901760
        %3806 = vmatpush.msra.mxu0 %v3805
        %v3807 = vand.u32 %v3779, 4294901760
        %v3808 = vsub.f32 %v3779, %v3807
        %v3809 = vand.u32 %v3808, 4294901760
        %v3810 = vsub.f32 %v3808, %v3809
        %v3811 = vand.u32 %v3810, 4294901760
        %3812 = vmatmul.f32.gmra.mxu0 %v3811
        %v3813 = vpop.f32.mrf.mxu0
        %v3814 = vadd.f32 0.0, %v3813
        %3815 = vdwg.mxu0
        %3816 = vmatpush.msra.mxu0 0.0
        %3817 = vmatpush.msra.mxu0 0.0
        %3818 = vmatpush.msra.mxu0 0.0
        %3819 = vmatpush.msra.mxu0 0.0
        %3820 = vmatpush.msra.mxu0 0.0
        %3821 = vmatpush.msra.mxu0 0.0
        %v3822 = vand.u32 %v3511, 4294901760
        %v3823 = vsub.f32 %v3511, %v3822
        %v3824 = vand.u32 %v3823, 4294901760
        %v3825 = vsub.f32 %v3823, %v3824
        %v3826 = vand.u32 %v3825, 4294901760
        %3827 = vmatpush.msra.mxu0 %v3826
        %v3828 = vand.u32 %v3510, 4294901760
        %v3829 = vsub.f32 %v3510, %v3828
        %v3830 = vand.u32 %v3829, 4294901760
        %v3831 = vsub.f32 %v3829, %v3830
        %v3832 = vand.u32 %v3831, 4294901760
        %3833 = vmatpush.msra.mxu0 %v3832
        %v3834 = vand.u32 %v3509, 4294901760
        %v3835 = vsub.f32 %v3509, %v3834
        %v3836 = vand.u32 %v3835, 4294901760
        %v3837 = vsub.f32 %v3835, %v3836
        %v3838 = vand.u32 %v3837, 4294901760
        %3839 = vmatpush.msra.mxu0 %v3838
        %v3840 = vand.u32 %v3508, 4294901760
        %v3841 = vsub.f32 %v3508, %v3840
        %v3842 = vand.u32 %v3841, 4294901760
        %v3843 = vsub.f32 %v3841, %v3842
        %v3844 = vand.u32 %v3843, 4294901760
        %3845 = vmatpush.msra.mxu0 %v3844
        %v3846 = vand.u32 %v3507, 4294901760
        %v3847 = vsub.f32 %v3507, %v3846
        %v3848 = vand.u32 %v3847, 4294901760
        %v3849 = vsub.f32 %v3847, %v3848
        %v3850 = vand.u32 %v3849, 4294901760
        %3851 = vmatpush.msra.mxu0 %v3850
        %v3852 = vand.u32 %v3506, 4294901760
        %v3853 = vsub.f32 %v3506, %v3852
        %v3854 = vand.u32 %v3853, 4294901760
        %v3855 = vsub.f32 %v3853, %v3854
        %v3856 = vand.u32 %v3855, 4294901760
        %3857 = vmatpush.msra.mxu0 %v3856
        %v3858 = vand.u32 %v3505, 4294901760
        %v3859 = vsub.f32 %v3505, %v3858
        %v3860 = vand.u32 %v3859, 4294901760
        %v3861 = vsub.f32 %v3859, %v3860
        %v3862 = vand.u32 %v3861, 4294901760
        %3863 = vmatpush.msra.mxu0 %v3862
        %v3864 = vand.u32 %v3504, 4294901760
        %v3865 = vsub.f32 %v3504, %v3864
        %v3866 = vand.u32 %v3865, 4294901760
        %v3867 = vsub.f32 %v3865, %v3866
        %v3868 = vand.u32 %v3867, 4294901760
        %3869 = vmatpush.msra.mxu0 %v3868
        %v3870 = vand.u32 %v3503, 4294901760
        %v3871 = vsub.f32 %v3503, %v3870
        %v3872 = vand.u32 %v3871, 4294901760
        %v3873 = vsub.f32 %v3871, %v3872
        %v3874 = vand.u32 %v3873, 4294901760
        %3875 = vmatpush.msra.mxu0 %v3874
        %v3876 = vand.u32 %v3502, 4294901760
        %v3877 = vsub.f32 %v3502, %v3876
        %v3878 = vand.u32 %v3877, 4294901760
        %v3879 = vsub.f32 %v3877, %v3878
        %v3880 = vand.u32 %v3879, 4294901760
        %3881 = vmatpush.msra.mxu0 %v3880
        %v3882 = vand.u32 %v3779, 4294901760
        %3883 = vmatmul.f32.gmra.mxu0 %v3882
        %v3884 = vpop.f32.mrf.mxu0
        %v3885 = vadd.f32 %v3814, %v3884
        %3886 = vdwg.mxu0
        %3887 = vmatpush.msra.mxu0 0.0
        %3888 = vmatpush.msra.mxu0 0.0
        %3889 = vmatpush.msra.mxu0 0.0
        %3890 = vmatpush.msra.mxu0 0.0
        %3891 = vmatpush.msra.mxu0 0.0
        %3892 = vmatpush.msra.mxu0 0.0
        %v3893 = vand.u32 %v3511, 4294901760
        %v3894 = vsub.f32 %v3511, %v3893
        %3895 = vmatpush.msra.mxu0 %v3894
        %v3896 = vand.u32 %v3510, 4294901760
        %v3897 = vsub.f32 %v3510, %v3896
        %3898 = vmatpush.msra.mxu0 %v3897
        %v3899 = vand.u32 %v3509, 4294901760
        %v3900 = vsub.f32 %v3509, %v3899
        %3901 = vmatpush.msra.mxu0 %v3900
        %v3902 = vand.u32 %v3508, 4294901760
        %v3903 = vsub.f32 %v3508, %v3902
        %3904 = vmatpush.msra.mxu0 %v3903
        %v3905 = vand.u32 %v3507, 4294901760
        %v3906 = vsub.f32 %v3507, %v3905
        %3907 = vmatpush.msra.mxu0 %v3906
        %v3908 = vand.u32 %v3506, 4294901760
        %v3909 = vsub.f32 %v3506, %v3908
        %3910 = vmatpush.msra.mxu0 %v3909
        %v3911 = vand.u32 %v3505, 4294901760
        %v3912 = vsub.f32 %v3505, %v3911
        %3913 = vmatpush.msra.mxu0 %v3912
        %v3914 = vand.u32 %v3504, 4294901760
        %v3915 = vsub.f32 %v3504, %v3914
        %3916 = vmatpush.msra.mxu0 %v3915
        %v3917 = vand.u32 %v3503, 4294901760
        %v3918 = vsub.f32 %v3503, %v3917
        %3919 = vmatpush.msra.mxu0 %v3918
        %v3920 = vand.u32 %v3502, 4294901760
        %v3921 = vsub.f32 %v3502, %v3920
        %3922 = vmatpush.msra.mxu0 %v3921
        %v3923 = vand.u32 %v3779, 4294901760
        %v3924 = vsub.f32 %v3779, %v3923
        %3925 = vmatmul.f32.gmra.mxu0 %v3924
        %v3926 = vpop.f32.mrf.mxu0
        %v3927 = vadd.f32 %v3885, %v3926
        %3928 = vdwg.mxu0
        %3929 = vmatpush.msra.mxu0 0.0
        %3930 = vmatpush.msra.mxu0 0.0
        %3931 = vmatpush.msra.mxu0 0.0
        %3932 = vmatpush.msra.mxu0 0.0
        %3933 = vmatpush.msra.mxu0 0.0
        %3934 = vmatpush.msra.mxu0 0.0
        %v3935 = vand.u32 %v3511, 4294901760
        %3936 = vmatpush.msra.mxu0 %v3935
        %v3937 = vand.u32 %v3510, 4294901760
        %3938 = vmatpush.msra.mxu0 %v3937
        %v3939 = vand.u32 %v3509, 4294901760
        %3940 = vmatpush.msra.mxu0 %v3939
        %v3941 = vand.u32 %v3508, 4294901760
        %3942 = vmatpush.msra.mxu0 %v3941
        %v3943 = vand.u32 %v3507, 4294901760
        %3944 = vmatpush.msra.mxu0 %v3943
        %v3945 = vand.u32 %v3506, 4294901760
        %3946 = vmatpush.msra.mxu0 %v3945
        %v3947 = vand.u32 %v3505, 4294901760
        %3948 = vmatpush.msra.mxu0 %v3947
        %v3949 = vand.u32 %v3504, 4294901760
        %3950 = vmatpush.msra.mxu0 %v3949
        %v3951 = vand.u32 %v3503, 4294901760
        %3952 = vmatpush.msra.mxu0 %v3951
        %v3953 = vand.u32 %v3502, 4294901760
        %3954 = vmatpush.msra.mxu0 %v3953
        %v3955 = vand.u32 %v3779, 4294901760
        %v3956 = vsub.f32 %v3779, %v3955
        %v3957 = vand.u32 %v3956, 4294901760
        %3958 = vmatmul.f32.gmra.mxu0 %v3957
        %v3959 = vpop.f32.mrf.mxu0
        %v3960 = vadd.f32 %v3927, %v3959
        %3961 = vdwg.mxu0
        %3962 = vmatpush.msra.mxu0 0.0
        %3963 = vmatpush.msra.mxu0 0.0
        %3964 = vmatpush.msra.mxu0 0.0
        %3965 = vmatpush.msra.mxu0 0.0
        %3966 = vmatpush.msra.mxu0 0.0
        %3967 = vmatpush.msra.mxu0 0.0
        %v3968 = vand.u32 %v3511, 4294901760
        %v3969 = vsub.f32 %v3511, %v3968
        %v3970 = vand.u32 %v3969, 4294901760
        %3971 = vmatpush.msra.mxu0 %v3970
        %v3972 = vand.u32 %v3510, 4294901760
        %v3973 = vsub.f32 %v3510, %v3972
        %v3974 = vand.u32 %v3973, 4294901760
        %3975 = vmatpush.msra.mxu0 %v3974
        %v3976 = vand.u32 %v3509, 4294901760
        %v3977 = vsub.f32 %v3509, %v3976
        %v3978 = vand.u32 %v3977, 4294901760
        %3979 = vmatpush.msra.mxu0 %v3978
        %v3980 = vand.u32 %v3508, 4294901760
        %v3981 = vsub.f32 %v3508, %v3980
        %v3982 = vand.u32 %v3981, 4294901760
        %3983 = vmatpush.msra.mxu0 %v3982
        %v3984 = vand.u32 %v3507, 4294901760
        %v3985 = vsub.f32 %v3507, %v3984
        %v3986 = vand.u32 %v3985, 4294901760
        %3987 = vmatpush.msra.mxu0 %v3986
        %v3988 = vand.u32 %v3506, 4294901760
        %v3989 = vsub.f32 %v3506, %v3988
        %v3990 = vand.u32 %v3989, 4294901760
        %3991 = vmatpush.msra.mxu0 %v3990
        %v3992 = vand.u32 %v3505, 4294901760
        %v3993 = vsub.f32 %v3505, %v3992
        %v3994 = vand.u32 %v3993, 4294901760
        %3995 = vmatpush.msra.mxu0 %v3994
        %v3996 = vand.u32 %v3504, 4294901760
        %v3997 = vsub.f32 %v3504, %v3996
        %v3998 = vand.u32 %v3997, 4294901760
        %3999 = vmatpush.msra.mxu0 %v3998
        %v4000 = vand.u32 %v3503, 4294901760
        %v4001 = vsub.f32 %v3503, %v4000
        %v4002 = vand.u32 %v4001, 4294901760
        %4003 = vmatpush.msra.mxu0 %v4002
        %v4004 = vand.u32 %v3502, 4294901760
        %v4005 = vsub.f32 %v3502, %v4004
        %v4006 = vand.u32 %v4005, 4294901760
        %4007 = vmatpush.msra.mxu0 %v4006
        %v4008 = vand.u32 %v3779, 4294901760
        %4009 = vmatmul.f32.gmra.mxu0 %v4008
        %v4010 = vpop.f32.mrf.mxu0
        %v4011 = vadd.f32 %v3960, %v4010
        %4012 = vdwg.mxu0
        %4013 = vmatpush.msra.mxu0 0.0
        %4014 = vmatpush.msra.mxu0 0.0
        %4015 = vmatpush.msra.mxu0 0.0
        %4016 = vmatpush.msra.mxu0 0.0
        %4017 = vmatpush.msra.mxu0 0.0
        %4018 = vmatpush.msra.mxu0 0.0
        %v4019 = vand.u32 %v3511, 4294901760
        %4020 = vmatpush.msra.mxu0 %v4019
        %v4021 = vand.u32 %v3510, 4294901760
        %4022 = vmatpush.msra.mxu0 %v4021
        %v4023 = vand.u32 %v3509, 4294901760
        %4024 = vmatpush.msra.mxu0 %v4023
        %v4025 = vand.u32 %v3508, 4294901760
        %4026 = vmatpush.msra.mxu0 %v4025
        %v4027 = vand.u32 %v3507, 4294901760
        %4028 = vmatpush.msra.mxu0 %v4027
        %v4029 = vand.u32 %v3506, 4294901760
        %4030 = vmatpush.msra.mxu0 %v4029
        %v4031 = vand.u32 %v3505, 4294901760
        %4032 = vmatpush.msra.mxu0 %v4031
        %v4033 = vand.u32 %v3504, 4294901760
        %4034 = vmatpush.msra.mxu0 %v4033
        %v4035 = vand.u32 %v3503, 4294901760
        %4036 = vmatpush.msra.mxu0 %v4035
        %v4037 = vand.u32 %v3502, 4294901760
        %4038 = vmatpush.msra.mxu0 %v4037
        %v4039 = vand.u32 %v3779, 4294901760
        %4040 = vmatmul.f32.gmra.mxu0 %v4039
        %v4041 = vpop.f32.mrf.mxu0
        %v4042 = vadd.f32 %v4011, %v4041
        %4043 = vdwg.mxu0
        %v4044 = vld [vmem:[%s8] sm:$0xff]
        %v4045 = vld [vmem:[%s8 + $0x8] sm:$0xff]
        %v4046 = vld [vmem:[%s8 + $0x10] sm:$0xff]
        %v4047 = vld [vmem:[%s8 + $0x18] sm:$0xff]
        %v4048 = vld [vmem:[%s8 + $0x20] sm:$0xff]
        %v4049 = vld [vmem:[%s8 + $0x28] sm:$0xff]
        %v4050 = vld [vmem:[%s8 + $0x30] sm:$0xff]
        %v4051 = vld [vmem:[%s8 + $0x38] sm:$0xff]
        %v4052 = vld [vmem:[%s8 + $0x40] sm:$0xff]
        %v4053 = vld [vmem:[%s8 + $0x48] sm:$0xff]
        %v4054 = vld [vmem:[%s9] sm:$0xff]
        %v4055 = vld [vmem:[%s9 + $0x8] sm:$0xff]
        %v4056 = vld [vmem:[%s9 + $0x10] sm:$0xff]
        %v4057 = vld [vmem:[%s9 + $0x18] sm:$0xff]
        %v4058 = vld [vmem:[%s9 + $0x20] sm:$0xff]
        %v4059 = vld [vmem:[%s9 + $0x28] sm:$0xff]
        %v4060 = vld [vmem:[%s9 + $0x30] sm:$0xff]
        %v4061 = vld [vmem:[%s9 + $0x38] sm:$0xff]
        %v4062 = vld [vmem:[%s9 + $0x40] sm:$0xff]
        %v4063 = vld [vmem:[%s9 + $0x48] sm:$0xff]
        %4064 = vxpose.xlu0.b32.start [1/16] %v3501, 128
        %4065 = vxpose.xlu0.b32.cont [2/16] 0.0, 128
        %4066 = vxpose.xlu0.b32.cont [3/16] 0.0, 128
        %4067 = vxpose.xlu0.b32.cont [4/16] 0.0, 128
        %4068 = vxpose.xlu0.b32.cont [5/16] 0.0, 128
        %4069 = vxpose.xlu0.b32.cont [6/16] 0.0, 128
        %4070 = vxpose.xlu0.b32.cont [7/16] 0.0, 128
        %4071 = vxpose.xlu0.b32.cont [8/16] 0.0, 128
        %4072 = vxpose.xlu0.b32.cont [9/16] 0.0, 128
        %4073 = vxpose.xlu0.b32.cont [10/16] 0.0, 128
        %4074 = vxpose.xlu0.b32.cont [11/16] 0.0, 128
        %4075 = vxpose.xlu0.b32.cont [12/16] 0.0, 128
        %4076 = vxpose.xlu0.b32.cont [13/16] 0.0, 128
        %4077 = vxpose.xlu0.b32.cont [14/16] 0.0, 128
        %4078 = vxpose.xlu0.b32.cont [15/16] 0.0, 128
        %4079 = vxpose.xlu0.b32.end [16/16] 0.0, 128
        %v4080 = vpop.trf.xlu0
        %v4081 = vpop.trf.xlu0
        %v4082 = vpop.trf.xlu0
        %v4083 = vpop.trf.xlu0
        %v4084 = vpop.trf.xlu0
        %v4085 = vpop.trf.xlu0
        %v4086 = vpop.trf.xlu0
        %v4087 = vpop.trf.xlu0
        %v4088 = vpop.trf.xlu0
        %v4089 = vpop.trf.xlu0
        %v4090 = vpop.trf.xlu0
        %v4091 = vpop.trf.xlu0
        %v4092 = vpop.trf.xlu0
        %v4093 = vpop.trf.xlu0
        %v4094 = vpop.trf.xlu0
        %v4095 = vpop.trf.xlu0
        %vm4096 = vcmask 31744
        %v4098 = vsel %vm4096, %v4080, 0
        %v4101 = vsel %vm4096, %v4081, 0
        %v4104 = vsel %vm4096, %v4082, 0
        %v4107 = vsel %vm4096, %v4083, 0
        %v4110 = vsel %vm4096, %v4084, 0
        %v4113 = vsel %vm4096, %v4085, 0
        %v4116 = vsel %vm4096, %v4086, 0
        %v4119 = vsel %vm4096, %v4087, 0
        %v4122 = vsel %vm4096, %v4088, 0
        %v4125 = vsel %vm4096, %v4089, 0
        %vm4127 = vcmask 1043456
        %v4128 = vsel %vm4127, %v3501, 0
        %4130 = vmatpush.msra.mxu0 0.0
        %4131 = vmatpush.msra.mxu0 0.0
        %4132 = vmatpush.msra.mxu0 0.0
        %4133 = vmatpush.msra.mxu0 0.0
        %4134 = vmatpush.msra.mxu0 0.0
        %4135 = vmatpush.msra.mxu0 0.0
        %4136 = vmatpush.msra.mxu0 0.0
        %4137 = vmatpush.msra.mxu0 0.0
        %4138 = vmatpush.msra.mxu0 0.0
        %4139 = vmatpush.msra.mxu0 0.0
        %4140 = vmatpush.msra.mxu0 0.0
        %4141 = vmatpush.msra.mxu0 0.0
        %4142 = vmatpush.msra.mxu0 0.0
        %4143 = vmatpush.msra.mxu0 0.0
        %4144 = vmatpush.msra.mxu0 0.0
        %v4145 = vand.u32 %v4128, 4294901760
        %4146 = vmatpush.msra.mxu0 %v4145
        %v4147 = vand.u32 %v4098, 4294901760
        %v4148 = vsub.f32 %v4098, %v4147
        %v4149 = vand.u32 %v4148, 4294901760
        %v4150 = vsub.f32 %v4148, %v4149
        %v4151 = vand.u32 %v4150, 4294901760
        %4152 = vmatmul.f32.gmra.mxu0 %v4151
        %v4153 = vpop.f32.mrf.mxu0
        %v4154 = vadd.f32 0.0, %v4153
        %v4155 = vand.u32 %v4101, 4294901760
        %v4156 = vsub.f32 %v4101, %v4155
        %v4157 = vand.u32 %v4156, 4294901760
        %v4158 = vsub.f32 %v4156, %v4157
        %v4159 = vand.u32 %v4158, 4294901760
        %4160 = vmatmul.f32.gmra.mxu0 %v4159
        %v4161 = vpop.f32.mrf.mxu0
        %v4162 = vadd.f32 0.0, %v4161
        %v4163 = vand.u32 %v4104, 4294901760
        %v4164 = vsub.f32 %v4104, %v4163
        %v4165 = vand.u32 %v4164, 4294901760
        %v4166 = vsub.f32 %v4164, %v4165
        %v4167 = vand.u32 %v4166, 4294901760
        %4168 = vmatmul.f32.gmra.mxu0 %v4167
        %v4169 = vpop.f32.mrf.mxu0
        %v4170 = vadd.f32 0.0, %v4169
        %v4171 = vand.u32 %v4107, 4294901760
        %v4172 = vsub.f32 %v4107, %v4171
        %v4173 = vand.u32 %v4172, 4294901760
        %v4174 = vsub.f32 %v4172, %v4173
        %v4175 = vand.u32 %v4174, 4294901760
        %4176 = vmatmul.f32.gmra.mxu0 %v4175
        %v4177 = vpop.f32.mrf.mxu0
        %v4178 = vadd.f32 0.0, %v4177
        %v4179 = vand.u32 %v4110, 4294901760
        %v4180 = vsub.f32 %v4110, %v4179
        %v4181 = vand.u32 %v4180, 4294901760
        %v4182 = vsub.f32 %v4180, %v4181
        %v4183 = vand.u32 %v4182, 4294901760
        %4184 = vmatmul.f32.gmra.mxu0 %v4183
        %v4185 = vpop.f32.mrf.mxu0
        %v4186 = vadd.f32 0.0, %v4185
        %v4187 = vand.u32 %v4113, 4294901760
        %v4188 = vsub.f32 %v4113, %v4187
        %v4189 = vand.u32 %v4188, 4294901760
        %v4190 = vsub.f32 %v4188, %v4189
        %v4191 = vand.u32 %v4190, 4294901760
        %4192 = vmatmul.f32.gmra.mxu0 %v4191
        %v4193 = vpop.f32.mrf.mxu0
        %v4194 = vadd.f32 0.0, %v4193
        %v4195 = vand.u32 %v4116, 4294901760
        %v4196 = vsub.f32 %v4116, %v4195
        %v4197 = vand.u32 %v4196, 4294901760
        %v4198 = vsub.f32 %v4196, %v4197
        %v4199 = vand.u32 %v4198, 4294901760
        %4200 = vmatmul.f32.gmra.mxu0 %v4199
        %v4201 = vpop.f32.mrf.mxu0
        %v4202 = vadd.f32 0.0, %v4201
        %v4203 = vand.u32 %v4119, 4294901760
        %v4204 = vsub.f32 %v4119, %v4203
        %v4205 = vand.u32 %v4204, 4294901760
        %v4206 = vsub.f32 %v4204, %v4205
        %v4207 = vand.u32 %v4206, 4294901760
        %4208 = vmatmul.f32.gmra.mxu0 %v4207
        %v4209 = vpop.f32.mrf.mxu0
        %v4210 = vadd.f32 0.0, %v4209
        %v4211 = vand.u32 %v4122, 4294901760
        %v4212 = vsub.f32 %v4122, %v4211
        %v4213 = vand.u32 %v4212, 4294901760
        %v4214 = vsub.f32 %v4212, %v4213
        %v4215 = vand.u32 %v4214, 4294901760
        %4216 = vmatmul.f32.gmra.mxu0 %v4215
        %v4217 = vpop.f32.mrf.mxu0
        %v4218 = vadd.f32 0.0, %v4217
        %v4219 = vand.u32 %v4125, 4294901760
        %v4220 = vsub.f32 %v4125, %v4219
        %v4221 = vand.u32 %v4220, 4294901760
        %v4222 = vsub.f32 %v4220, %v4221
        %v4223 = vand.u32 %v4222, 4294901760
        %4224 = vmatmul.f32.gmra.mxu0 %v4223
        %v4225 = vpop.f32.mrf.mxu0
        %v4226 = vadd.f32 0.0, %v4225
        %4227 = vdwg.mxu0
        %4228 = vmatpush.msra.mxu0 0.0
        %4229 = vmatpush.msra.mxu0 0.0
        %4230 = vmatpush.msra.mxu0 0.0
        %4231 = vmatpush.msra.mxu0 0.0
        %4232 = vmatpush.msra.mxu0 0.0
        %4233 = vmatpush.msra.mxu0 0.0
        %4234 = vmatpush.msra.mxu0 0.0
        %4235 = vmatpush.msra.mxu0 0.0
        %4236 = vmatpush.msra.mxu0 0.0
        %4237 = vmatpush.msra.mxu0 0.0
        %4238 = vmatpush.msra.mxu0 0.0
        %4239 = vmatpush.msra.mxu0 0.0
        %4240 = vmatpush.msra.mxu0 0.0
        %4241 = vmatpush.msra.mxu0 0.0
        %4242 = vmatpush.msra.mxu0 0.0
        %v4243 = vand.u32 %v4128, 4294901760
        %v4244 = vsub.f32 %v4128, %v4243
        %v4245 = vand.u32 %v4244, 4294901760
        %v4246 = vsub.f32 %v4244, %v4245
        %v4247 = vand.u32 %v4246, 4294901760
        %4248 = vmatpush.msra.mxu0 %v4247
        %v4249 = vand.u32 %v4098, 4294901760
        %4250 = vmatmul.f32.gmra.mxu0 %v4249
        %v4251 = vpop.f32.mrf.mxu0
        %v4252 = vadd.f32 %v4154, %v4251
        %v4253 = vand.u32 %v4101, 4294901760
        %4254 = vmatmul.f32.gmra.mxu0 %v4253
        %v4255 = vpop.f32.mrf.mxu0
        %v4256 = vadd.f32 %v4162, %v4255
        %v4257 = vand.u32 %v4104, 4294901760
        %4258 = vmatmul.f32.gmra.mxu0 %v4257
        %v4259 = vpop.f32.mrf.mxu0
        %v4260 = vadd.f32 %v4170, %v4259
        %v4261 = vand.u32 %v4107, 4294901760
        %4262 = vmatmul.f32.gmra.mxu0 %v4261
        %v4263 = vpop.f32.mrf.mxu0
        %v4264 = vadd.f32 %v4178, %v4263
        %v4265 = vand.u32 %v4110, 4294901760
        %4266 = vmatmul.f32.gmra.mxu0 %v4265
        %v4267 = vpop.f32.mrf.mxu0
        %v4268 = vadd.f32 %v4186, %v4267
        %v4269 = vand.u32 %v4113, 4294901760
        %4270 = vmatmul.f32.gmra.mxu0 %v4269
        %v4271 = vpop.f32.mrf.mxu0
        %v4272 = vadd.f32 %v4194, %v4271
        %v4273 = vand.u32 %v4116, 4294901760
        %4274 = vmatmul.f32.gmra.mxu0 %v4273
        %v4275 = vpop.f32.mrf.mxu0
        %v4276 = vadd.f32 %v4202, %v4275
        %v4277 = vand.u32 %v4119, 4294901760
        %4278 = vmatmul.f32.gmra.mxu0 %v4277
        %v4279 = vpop.f32.mrf.mxu0
        %v4280 = vadd.f32 %v4210, %v4279
        %v4281 = vand.u32 %v4122, 4294901760
        %4282 = vmatmul.f32.gmra.mxu0 %v4281
        %v4283 = vpop.f32.mrf.mxu0
        %v4284 = vadd.f32 %v4218, %v4283
        %v4285 = vand.u32 %v4125, 4294901760
        %4286 = vmatmul.f32.gmra.mxu0 %v4285
        %v4287 = vpop.f32.mrf.mxu0
        %v4288 = vadd.f32 %v4226, %v4287
        %4289 = vdwg.mxu0
        %4290 = vmatpush.msra.mxu0 0.0
        %4291 = vmatpush.msra.mxu0 0.0
        %4292 = vmatpush.msra.mxu0 0.0
        %4293 = vmatpush.msra.mxu0 0.0
        %4294 = vmatpush.msra.mxu0 0.0
        %4295 = vmatpush.msra.mxu0 0.0
        %4296 = vmatpush.msra.mxu0 0.0
        %4297 = vmatpush.msra.mxu0 0.0
        %4298 = vmatpush.msra.mxu0 0.0
        %4299 = vmatpush.msra.mxu0 0.0
        %4300 = vmatpush.msra.mxu0 0.0
        %4301 = vmatpush.msra.mxu0 0.0
        %4302 = vmatpush.msra.mxu0 0.0
        %4303 = vmatpush.msra.mxu0 0.0
        %4304 = vmatpush.msra.mxu0 0.0
        %v4305 = vand.u32 %v4128, 4294901760
        %v4306 = vsub.f32 %v4128, %v4305
        %4307 = vmatpush.msra.mxu0 %v4306
        %v4308 = vand.u32 %v4098, 4294901760
        %v4309 = vsub.f32 %v4098, %v4308
        %4310 = vmatmul.f32.gmra.mxu0 %v4309
        %v4311 = vpop.f32.mrf.mxu0
        %v4312 = vadd.f32 %v4252, %v4311
        %v4313 = vand.u32 %v4101, 4294901760
        %v4314 = vsub.f32 %v4101, %v4313
        %4315 = vmatmul.f32.gmra.mxu0 %v4314
        %v4316 = vpop.f32.mrf.mxu0
        %v4317 = vadd.f32 %v4256, %v4316
        %v4318 = vand.u32 %v4104, 4294901760
        %v4319 = vsub.f32 %v4104, %v4318
        %4320 = vmatmul.f32.gmra.mxu0 %v4319
        %v4321 = vpop.f32.mrf.mxu0
        %v4322 = vadd.f32 %v4260, %v4321
        %v4323 = vand.u32 %v4107, 4294901760
        %v4324 = vsub.f32 %v4107, %v4323
        %4325 = vmatmul.f32.gmra.mxu0 %v4324
        %v4326 = vpop.f32.mrf.mxu0
        %v4327 = vadd.f32 %v4264, %v4326
        %v4328 = vand.u32 %v4110, 4294901760
        %v4329 = vsub.f32 %v4110, %v4328
        %4330 = vmatmul.f32.gmra.mxu0 %v4329
        %v4331 = vpop.f32.mrf.mxu0
        %v4332 = vadd.f32 %v4268, %v4331
        %v4333 = vand.u32 %v4113, 4294901760
        %v4334 = vsub.f32 %v4113, %v4333
        %4335 = vmatmul.f32.gmra.mxu0 %v4334
        %v4336 = vpop.f32.mrf.mxu0
        %v4337 = vadd.f32 %v4272, %v4336
        %v4338 = vand.u32 %v4116, 4294901760
        %v4339 = vsub.f32 %v4116, %v4338
        %4340 = vmatmul.f32.gmra.mxu0 %v4339
        %v4341 = vpop.f32.mrf.mxu0
        %v4342 = vadd.f32 %v4276, %v4341
        %v4343 = vand.u32 %v4119, 4294901760
        %v4344 = vsub.f32 %v4119, %v4343
        %4345 = vmatmul.f32.gmra.mxu0 %v4344
        %v4346 = vpop.f32.mrf.mxu0
        %v4347 = vadd.f32 %v4280, %v4346
        %v4348 = vand.u32 %v4122, 4294901760
        %v4349 = vsub.f32 %v4122, %v4348
        %4350 = vmatmul.f32.gmra.mxu0 %v4349
        %v4351 = vpop.f32.mrf.mxu0
        %v4352 = vadd.f32 %v4284, %v4351
        %v4353 = vand.u32 %v4125, 4294901760
        %v4354 = vsub.f32 %v4125, %v4353
        %4355 = vmatmul.f32.gmra.mxu0 %v4354
        %v4356 = vpop.f32.mrf.mxu0
        %v4357 = vadd.f32 %v4288, %v4356
        %4358 = vdwg.mxu0
        %4359 = vmatpush.msra.mxu0 0.0
        %4360 = vmatpush.msra.mxu0 0.0
        %4361 = vmatpush.msra.mxu0 0.0
        %4362 = vmatpush.msra.mxu0 0.0
        %4363 = vmatpush.msra.mxu0 0.0
        %4364 = vmatpush.msra.mxu0 0.0
        %4365 = vmatpush.msra.mxu0 0.0
        %4366 = vmatpush.msra.mxu0 0.0
        %4367 = vmatpush.msra.mxu0 0.0
        %4368 = vmatpush.msra.mxu0 0.0
        %4369 = vmatpush.msra.mxu0 0.0
        %4370 = vmatpush.msra.mxu0 0.0
        %4371 = vmatpush.msra.mxu0 0.0
        %4372 = vmatpush.msra.mxu0 0.0
        %4373 = vmatpush.msra.mxu0 0.0
        %v4374 = vand.u32 %v4128, 4294901760
        %4375 = vmatpush.msra.mxu0 %v4374
        %v4376 = vand.u32 %v4098, 4294901760
        %v4377 = vsub.f32 %v4098, %v4376
        %v4378 = vand.u32 %v4377, 4294901760
        %4379 = vmatmul.f32.gmra.mxu0 %v4378
        %v4380 = vpop.f32.mrf.mxu0
        %v4381 = vadd.f32 %v4312, %v4380
        %v4382 = vand.u32 %v4101, 4294901760
        %v4383 = vsub.f32 %v4101, %v4382
        %v4384 = vand.u32 %v4383, 4294901760
        %4385 = vmatmul.f32.gmra.mxu0 %v4384
        %v4386 = vpop.f32.mrf.mxu0
        %v4387 = vadd.f32 %v4317, %v4386
        %v4388 = vand.u32 %v4104, 4294901760
        %v4389 = vsub.f32 %v4104, %v4388
        %v4390 = vand.u32 %v4389, 4294901760
        %4391 = vmatmul.f32.gmra.mxu0 %v4390
        %v4392 = vpop.f32.mrf.mxu0
        %v4393 = vadd.f32 %v4322, %v4392
        %v4394 = vand.u32 %v4107, 4294901760
        %v4395 = vsub.f32 %v4107, %v4394
        %v4396 = vand.u32 %v4395, 4294901760
        %4397 = vmatmul.f32.gmra.mxu0 %v4396
        %v4398 = vpop.f32.mrf.mxu0
        %v4399 = vadd.f32 %v4327, %v4398
        %v4400 = vand.u32 %v4110, 4294901760
        %v4401 = vsub.f32 %v4110, %v4400
        %v4402 = vand.u32 %v4401, 4294901760
        %4403 = vmatmul.f32.gmra.mxu0 %v4402
        %v4404 = vpop.f32.mrf.mxu0
        %v4405 = vadd.f32 %v4332, %v4404
        %v4406 = vand.u32 %v4113, 4294901760
        %v4407 = vsub.f32 %v4113, %v4406
        %v4408 = vand.u32 %v4407, 4294901760
        %4409 = vmatmul.f32.gmra.mxu0 %v4408
        %v4410 = vpop.f32.mrf.mxu0
        %v4411 = vadd.f32 %v4337, %v4410
        %v4412 = vand.u32 %v4116, 4294901760
        %v4413 = vsub.f32 %v4116, %v4412
        %v4414 = vand.u32 %v4413, 4294901760
        %4415 = vmatmul.f32.gmra.mxu0 %v4414
        %v4416 = vpop.f32.mrf.mxu0
        %v4417 = vadd.f32 %v4342, %v4416
        %v4418 = vand.u32 %v4119, 4294901760
        %v4419 = vsub.f32 %v4119, %v4418
        %v4420 = vand.u32 %v4419, 4294901760
        %4421 = vmatmul.f32.gmra.mxu0 %v4420
        %v4422 = vpop.f32.mrf.mxu0
        %v4423 = vadd.f32 %v4347, %v4422
        %v4424 = vand.u32 %v4122, 4294901760
        %v4425 = vsub.f32 %v4122, %v4424
        %v4426 = vand.u32 %v4425, 4294901760
        %4427 = vmatmul.f32.gmra.mxu0 %v4426
        %v4428 = vpop.f32.mrf.mxu0
        %v4429 = vadd.f32 %v4352, %v4428
        %v4430 = vand.u32 %v4125, 4294901760
        %v4431 = vsub.f32 %v4125, %v4430
        %v4432 = vand.u32 %v4431, 4294901760
        %4433 = vmatmul.f32.gmra.mxu0 %v4432
        %v4434 = vpop.f32.mrf.mxu0
        %v4435 = vadd.f32 %v4357, %v4434
        %4436 = vdwg.mxu0
        %4437 = vmatpush.msra.mxu0 0.0
        %4438 = vmatpush.msra.mxu0 0.0
        %4439 = vmatpush.msra.mxu0 0.0
        %4440 = vmatpush.msra.mxu0 0.0
        %4441 = vmatpush.msra.mxu0 0.0
        %4442 = vmatpush.msra.mxu0 0.0
        %4443 = vmatpush.msra.mxu0 0.0
        %4444 = vmatpush.msra.mxu0 0.0
        %4445 = vmatpush.msra.mxu0 0.0
        %4446 = vmatpush.msra.mxu0 0.0
        %4447 = vmatpush.msra.mxu0 0.0
        %4448 = vmatpush.msra.mxu0 0.0
        %4449 = vmatpush.msra.mxu0 0.0
        %4450 = vmatpush.msra.mxu0 0.0
        %4451 = vmatpush.msra.mxu0 0.0
        %v4452 = vand.u32 %v4128, 4294901760
        %v4453 = vsub.f32 %v4128, %v4452
        %v4454 = vand.u32 %v4453, 4294901760
        %4455 = vmatpush.msra.mxu0 %v4454
        %v4456 = vand.u32 %v4098, 4294901760
        %4457 = vmatmul.f32.gmra.mxu0 %v4456
        %v4458 = vpop.f32.mrf.mxu0
        %v4459 = vadd.f32 %v4381, %v4458
        %v4460 = vand.u32 %v4101, 4294901760
        %4461 = vmatmul.f32.gmra.mxu0 %v4460
        %v4462 = vpop.f32.mrf.mxu0
        %v4463 = vadd.f32 %v4387, %v4462
        %v4464 = vand.u32 %v4104, 4294901760
        %4465 = vmatmul.f32.gmra.mxu0 %v4464
        %v4466 = vpop.f32.mrf.mxu0
        %v4467 = vadd.f32 %v4393, %v4466
        %v4468 = vand.u32 %v4107, 4294901760
        %4469 = vmatmul.f32.gmra.mxu0 %v4468
        %v4470 = vpop.f32.mrf.mxu0
        %v4471 = vadd.f32 %v4399, %v4470
        %v4472 = vand.u32 %v4110, 4294901760
        %4473 = vmatmul.f32.gmra.mxu0 %v4472
        %v4474 = vpop.f32.mrf.mxu0
        %v4475 = vadd.f32 %v4405, %v4474
        %v4476 = vand.u32 %v4113, 4294901760
        %4477 = vmatmul.f32.gmra.mxu0 %v4476
        %v4478 = vpop.f32.mrf.mxu0
        %v4479 = vadd.f32 %v4411, %v4478
        %v4480 = vand.u32 %v4116, 4294901760
        %4481 = vmatmul.f32.gmra.mxu0 %v4480
        %v4482 = vpop.f32.mrf.mxu0
        %v4483 = vadd.f32 %v4417, %v4482
        %v4484 = vand.u32 %v4119, 4294901760
        %4485 = vmatmul.f32.gmra.mxu0 %v4484
        %v4486 = vpop.f32.mrf.mxu0
        %v4487 = vadd.f32 %v4423, %v4486
        %v4488 = vand.u32 %v4122, 4294901760
        %4489 = vmatmul.f32.gmra.mxu0 %v4488
        %v4490 = vpop.f32.mrf.mxu0
        %v4491 = vadd.f32 %v4429, %v4490
        %v4492 = vand.u32 %v4125, 4294901760
        %4493 = vmatmul.f32.gmra.mxu0 %v4492
        %v4494 = vpop.f32.mrf.mxu0
        %v4495 = vadd.f32 %v4435, %v4494
        %4496 = vdwg.mxu0
        %4497 = vmatpush.msra.mxu0 0.0
        %4498 = vmatpush.msra.mxu0 0.0
        %4499 = vmatpush.msra.mxu0 0.0
        %4500 = vmatpush.msra.mxu0 0.0
        %4501 = vmatpush.msra.mxu0 0.0
        %4502 = vmatpush.msra.mxu0 0.0
        %4503 = vmatpush.msra.mxu0 0.0
        %4504 = vmatpush.msra.mxu0 0.0
        %4505 = vmatpush.msra.mxu0 0.0
        %4506 = vmatpush.msra.mxu0 0.0
        %4507 = vmatpush.msra.mxu0 0.0
        %4508 = vmatpush.msra.mxu0 0.0
        %4509 = vmatpush.msra.mxu0 0.0
        %4510 = vmatpush.msra.mxu0 0.0
        %4511 = vmatpush.msra.mxu0 0.0
        %v4512 = vand.u32 %v4128, 4294901760
        %4513 = vmatpush.msra.mxu0 %v4512
        %v4514 = vand.u32 %v4098, 4294901760
        %4515 = vmatmul.f32.gmra.mxu0 %v4514
        %v4516 = vpop.f32.mrf.mxu0
        %v4517 = vadd.f32 %v4459, %v4516
        %v4518 = vand.u32 %v4101, 4294901760
        %4519 = vmatmul.f32.gmra.mxu0 %v4518
        %v4520 = vpop.f32.mrf.mxu0
        %v4521 = vadd.f32 %v4463, %v4520
        %v4522 = vand.u32 %v4104, 4294901760
        %4523 = vmatmul.f32.gmra.mxu0 %v4522
        %v4524 = vpop.f32.mrf.mxu0
        %v4525 = vadd.f32 %v4467, %v4524
        %v4526 = vand.u32 %v4107, 4294901760
        %4527 = vmatmul.f32.gmra.mxu0 %v4526
        %v4528 = vpop.f32.mrf.mxu0
        %v4529 = vadd.f32 %v4471, %v4528
        %v4530 = vand.u32 %v4110, 4294901760
        %4531 = vmatmul.f32.gmra.mxu0 %v4530
        %v4532 = vpop.f32.mrf.mxu0
        %v4533 = vadd.f32 %v4475, %v4532
        %v4534 = vand.u32 %v4113, 4294901760
        %4535 = vmatmul.f32.gmra.mxu0 %v4534
        %v4536 = vpop.f32.mrf.mxu0
        %v4537 = vadd.f32 %v4479, %v4536
        %v4538 = vand.u32 %v4116, 4294901760
        %4539 = vmatmul.f32.gmra.mxu0 %v4538
        %v4540 = vpop.f32.mrf.mxu0
        %v4541 = vadd.f32 %v4483, %v4540
        %v4542 = vand.u32 %v4119, 4294901760
        %4543 = vmatmul.f32.gmra.mxu0 %v4542
        %v4544 = vpop.f32.mrf.mxu0
        %v4545 = vadd.f32 %v4487, %v4544
        %v4546 = vand.u32 %v4122, 4294901760
        %4547 = vmatmul.f32.gmra.mxu0 %v4546
        %v4548 = vpop.f32.mrf.mxu0
        %v4549 = vadd.f32 %v4491, %v4548
        %v4550 = vand.u32 %v4125, 4294901760
        %4551 = vmatmul.f32.gmra.mxu0 %v4550
        %v4552 = vpop.f32.mrf.mxu0
        %v4553 = vadd.f32 %v4495, %v4552
        %4554 = vdwg.mxu0
        %v4555 = vmul.f32 %v4517, %v4054
        %v4556 = vmul.f32 %v4521, %v4055
        %v4557 = vmul.f32 %v4525, %v4056
        %v4558 = vmul.f32 %v4529, %v4057
        %v4559 = vmul.f32 %v4533, %v4058
        %v4560 = vmul.f32 %v4537, %v4059
        %v4561 = vmul.f32 %v4541, %v4060
        %v4562 = vmul.f32 %v4545, %v4061
        %v4563 = vmul.f32 %v4549, %v4062
        %v4564 = vmul.f32 %v4553, %v4063
        %v4566 = vsel %vm768, %v4555, 0
        %v4569 = vsel %vm768, %v4556, 0
        %v4572 = vsel %vm768, %v4557, 0
        %v4575 = vsel %vm768, %v4558, 0
        %v4578 = vsel %vm768, %v4559, 0
        %v4581 = vsel %vm768, %v4560, 0
        %v4584 = vsel %vm768, %v4561, 0
        %v4587 = vsel %vm768, %v4562, 0
        %v4590 = vsel %vm768, %v4563, 0
        %v4593 = vsel %vm768, %v4564, 0
        %4595 = vmatpush.msra.mxu0 0.0
        %4596 = vmatpush.msra.mxu0 0.0
        %4597 = vmatpush.msra.mxu0 0.0
        %4598 = vmatpush.msra.mxu0 0.0
        %4599 = vmatpush.msra.mxu0 0.0
        %4600 = vmatpush.msra.mxu0 0.0
        %v4601 = vand.u32 %v4053, 4294901760
        %4602 = vmatpush.msra.mxu0 %v4601
        %v4603 = vand.u32 %v4052, 4294901760
        %4604 = vmatpush.msra.mxu0 %v4603
        %v4605 = vand.u32 %v4051, 4294901760
        %4606 = vmatpush.msra.mxu0 %v4605
        %v4607 = vand.u32 %v4050, 4294901760
        %4608 = vmatpush.msra.mxu0 %v4607
        %v4609 = vand.u32 %v4049, 4294901760
        %4610 = vmatpush.msra.mxu0 %v4609
        %v4611 = vand.u32 %v4048, 4294901760
        %4612 = vmatpush.msra.mxu0 %v4611
        %v4613 = vand.u32 %v4047, 4294901760
        %4614 = vmatpush.msra.mxu0 %v4613
        %v4615 = vand.u32 %v4046, 4294901760
        %4616 = vmatpush.msra.mxu0 %v4615
        %v4617 = vand.u32 %v4045, 4294901760
        %4618 = vmatpush.msra.mxu0 %v4617
        %v4619 = vand.u32 %v4044, 4294901760
        %4620 = vmatpush.msra.mxu0 %v4619
        %v4621 = vand.u32 %v4566, 4294901760
        %v4622 = vsub.f32 %v4566, %v4621
        %v4623 = vand.u32 %v4622, 4294901760
        %v4624 = vsub.f32 %v4622, %v4623
        %v4625 = vand.u32 %v4624, 4294901760
        %4626 = vmatmul.f32.gmra.mxu0 %v4625
        %v4627 = vpop.f32.mrf.mxu0
        %v4628 = vadd.f32 0.0, %v4627
        %v4629 = vand.u32 %v4569, 4294901760
        %v4630 = vsub.f32 %v4569, %v4629
        %v4631 = vand.u32 %v4630, 4294901760
        %v4632 = vsub.f32 %v4630, %v4631
        %v4633 = vand.u32 %v4632, 4294901760
        %4634 = vmatmul.f32.gmra.mxu0 %v4633
        %v4635 = vpop.f32.mrf.mxu0
        %v4636 = vadd.f32 0.0, %v4635
        %v4637 = vand.u32 %v4572, 4294901760
        %v4638 = vsub.f32 %v4572, %v4637
        %v4639 = vand.u32 %v4638, 4294901760
        %v4640 = vsub.f32 %v4638, %v4639
        %v4641 = vand.u32 %v4640, 4294901760
        %4642 = vmatmul.f32.gmra.mxu0 %v4641
        %v4643 = vpop.f32.mrf.mxu0
        %v4644 = vadd.f32 0.0, %v4643
        %v4645 = vand.u32 %v4575, 4294901760
        %v4646 = vsub.f32 %v4575, %v4645
        %v4647 = vand.u32 %v4646, 4294901760
        %v4648 = vsub.f32 %v4646, %v4647
        %v4649 = vand.u32 %v4648, 4294901760
        %4650 = vmatmul.f32.gmra.mxu0 %v4649
        %v4651 = vpop.f32.mrf.mxu0
        %v4652 = vadd.f32 0.0, %v4651
        %v4653 = vand.u32 %v4578, 4294901760
        %v4654 = vsub.f32 %v4578, %v4653
        %v4655 = vand.u32 %v4654, 4294901760
        %v4656 = vsub.f32 %v4654, %v4655
        %v4657 = vand.u32 %v4656, 4294901760
        %4658 = vmatmul.f32.gmra.mxu0 %v4657
        %v4659 = vpop.f32.mrf.mxu0
        %v4660 = vadd.f32 0.0, %v4659
        %v4661 = vand.u32 %v4581, 4294901760
        %v4662 = vsub.f32 %v4581, %v4661
        %v4663 = vand.u32 %v4662, 4294901760
        %v4664 = vsub.f32 %v4662, %v4663
        %v4665 = vand.u32 %v4664, 4294901760
        %4666 = vmatmul.f32.gmra.mxu0 %v4665
        %v4667 = vpop.f32.mrf.mxu0
        %v4668 = vadd.f32 0.0, %v4667
        %v4669 = vand.u32 %v4584, 4294901760
        %v4670 = vsub.f32 %v4584, %v4669
        %v4671 = vand.u32 %v4670, 4294901760
        %v4672 = vsub.f32 %v4670, %v4671
        %v4673 = vand.u32 %v4672, 4294901760
        %4674 = vmatmul.f32.gmra.mxu0 %v4673
        %v4675 = vpop.f32.mrf.mxu0
        %v4676 = vadd.f32 0.0, %v4675
        %v4677 = vand.u32 %v4587, 4294901760
        %v4678 = vsub.f32 %v4587, %v4677
        %v4679 = vand.u32 %v4678, 4294901760
        %v4680 = vsub.f32 %v4678, %v4679
        %v4681 = vand.u32 %v4680, 4294901760
        %4682 = vmatmul.f32.gmra.mxu0 %v4681
        %v4683 = vpop.f32.mrf.mxu0
        %v4684 = vadd.f32 0.0, %v4683
        %v4685 = vand.u32 %v4590, 4294901760
        %v4686 = vsub.f32 %v4590, %v4685
        %v4687 = vand.u32 %v4686, 4294901760
        %v4688 = vsub.f32 %v4686, %v4687
        %v4689 = vand.u32 %v4688, 4294901760
        %4690 = vmatmul.f32.gmra.mxu0 %v4689
        %v4691 = vpop.f32.mrf.mxu0
        %v4692 = vadd.f32 0.0, %v4691
        %v4693 = vand.u32 %v4593, 4294901760
        %v4694 = vsub.f32 %v4593, %v4693
        %v4695 = vand.u32 %v4694, 4294901760
        %v4696 = vsub.f32 %v4694, %v4695
        %v4697 = vand.u32 %v4696, 4294901760
        %4698 = vmatmul.f32.gmra.mxu0 %v4697
        %v4699 = vpop.f32.mrf.mxu0
        %v4700 = vadd.f32 0.0, %v4699
        %4701 = vdwg.mxu0
        %4702 = vmatpush.msra.mxu0 0.0
        %4703 = vmatpush.msra.mxu0 0.0
        %4704 = vmatpush.msra.mxu0 0.0
        %4705 = vmatpush.msra.mxu0 0.0
        %4706 = vmatpush.msra.mxu0 0.0
        %4707 = vmatpush.msra.mxu0 0.0
        %v4708 = vand.u32 %v4053, 4294901760
        %v4709 = vsub.f32 %v4053, %v4708
        %v4710 = vand.u32 %v4709, 4294901760
        %v4711 = vsub.f32 %v4709, %v4710
        %v4712 = vand.u32 %v4711, 4294901760
        %4713 = vmatpush.msra.mxu0 %v4712
        %v4714 = vand.u32 %v4052, 4294901760
        %v4715 = vsub.f32 %v4052, %v4714
        %v4716 = vand.u32 %v4715, 4294901760
        %v4717 = vsub.f32 %v4715, %v4716
        %v4718 = vand.u32 %v4717, 4294901760
        %4719 = vmatpush.msra.mxu0 %v4718
        %v4720 = vand.u32 %v4051, 4294901760
        %v4721 = vsub.f32 %v4051, %v4720
        %v4722 = vand.u32 %v4721, 4294901760
        %v4723 = vsub.f32 %v4721, %v4722
        %v4724 = vand.u32 %v4723, 4294901760
        %4725 = vmatpush.msra.mxu0 %v4724
        %v4726 = vand.u32 %v4050, 4294901760
        %v4727 = vsub.f32 %v4050, %v4726
        %v4728 = vand.u32 %v4727, 4294901760
        %v4729 = vsub.f32 %v4727, %v4728
        %v4730 = vand.u32 %v4729, 4294901760
        %4731 = vmatpush.msra.mxu0 %v4730
        %v4732 = vand.u32 %v4049, 4294901760
        %v4733 = vsub.f32 %v4049, %v4732
        %v4734 = vand.u32 %v4733, 4294901760
        %v4735 = vsub.f32 %v4733, %v4734
        %v4736 = vand.u32 %v4735, 4294901760
        %4737 = vmatpush.msra.mxu0 %v4736
        %v4738 = vand.u32 %v4048, 4294901760
        %v4739 = vsub.f32 %v4048, %v4738
        %v4740 = vand.u32 %v4739, 4294901760
        %v4741 = vsub.f32 %v4739, %v4740
        %v4742 = vand.u32 %v4741, 4294901760
        %4743 = vmatpush.msra.mxu0 %v4742
        %v4744 = vand.u32 %v4047, 4294901760
        %v4745 = vsub.f32 %v4047, %v4744
        %v4746 = vand.u32 %v4745, 4294901760
        %v4747 = vsub.f32 %v4745, %v4746
        %v4748 = vand.u32 %v4747, 4294901760
        %4749 = vmatpush.msra.mxu0 %v4748
        %v4750 = vand.u32 %v4046, 4294901760
        %v4751 = vsub.f32 %v4046, %v4750
        %v4752 = vand.u32 %v4751, 4294901760
        %v4753 = vsub.f32 %v4751, %v4752
        %v4754 = vand.u32 %v4753, 4294901760
        %4755 = vmatpush.msra.mxu0 %v4754
        %v4756 = vand.u32 %v4045, 4294901760
        %v4757 = vsub.f32 %v4045, %v4756
        %v4758 = vand.u32 %v4757, 4294901760
        %v4759 = vsub.f32 %v4757, %v4758
        %v4760 = vand.u32 %v4759, 4294901760
        %4761 = vmatpush.msra.mxu0 %v4760
        %v4762 = vand.u32 %v4044, 4294901760
        %v4763 = vsub.f32 %v4044, %v4762
        %v4764 = vand.u32 %v4763, 4294901760
        %v4765 = vsub.f32 %v4763, %v4764
        %v4766 = vand.u32 %v4765, 4294901760
        %4767 = vmatpush.msra.mxu0 %v4766
        %v4768 = vand.u32 %v4566, 4294901760
        %4769 = vmatmul.f32.gmra.mxu0 %v4768
        %v4770 = vpop.f32.mrf.mxu0
        %v4771 = vadd.f32 %v4628, %v4770
        %v4772 = vand.u32 %v4569, 4294901760
        %4773 = vmatmul.f32.gmra.mxu0 %v4772
        %v4774 = vpop.f32.mrf.mxu0
        %v4775 = vadd.f32 %v4636, %v4774
        %v4776 = vand.u32 %v4572, 4294901760
        %4777 = vmatmul.f32.gmra.mxu0 %v4776
        %v4778 = vpop.f32.mrf.mxu0
        %v4779 = vadd.f32 %v4644, %v4778
        %v4780 = vand.u32 %v4575, 4294901760
        %4781 = vmatmul.f32.gmra.mxu0 %v4780
        %v4782 = vpop.f32.mrf.mxu0
        %v4783 = vadd.f32 %v4652, %v4782
        %v4784 = vand.u32 %v4578, 4294901760
        %4785 = vmatmul.f32.gmra.mxu0 %v4784
        %v4786 = vpop.f32.mrf.mxu0
        %v4787 = vadd.f32 %v4660, %v4786
        %v4788 = vand.u32 %v4581, 4294901760
        %4789 = vmatmul.f32.gmra.mxu0 %v4788
        %v4790 = vpop.f32.mrf.mxu0
        %v4791 = vadd.f32 %v4668, %v4790
        %v4792 = vand.u32 %v4584, 4294901760
        %4793 = vmatmul.f32.gmra.mxu0 %v4792
        %v4794 = vpop.f32.mrf.mxu0
        %v4795 = vadd.f32 %v4676, %v4794
        %v4796 = vand.u32 %v4587, 4294901760
        %4797 = vmatmul.f32.gmra.mxu0 %v4796
        %v4798 = vpop.f32.mrf.mxu0
        %v4799 = vadd.f32 %v4684, %v4798
        %v4800 = vand.u32 %v4590, 4294901760
        %4801 = vmatmul.f32.gmra.mxu0 %v4800
        %v4802 = vpop.f32.mrf.mxu0
        %v4803 = vadd.f32 %v4692, %v4802
        %v4804 = vand.u32 %v4593, 4294901760
        %4805 = vmatmul.f32.gmra.mxu0 %v4804
        %v4806 = vpop.f32.mrf.mxu0
        %v4807 = vadd.f32 %v4700, %v4806
        %4808 = vdwg.mxu0
        %4809 = vmatpush.msra.mxu0 0.0
        %4810 = vmatpush.msra.mxu0 0.0
        %4811 = vmatpush.msra.mxu0 0.0
        %4812 = vmatpush.msra.mxu0 0.0
        %4813 = vmatpush.msra.mxu0 0.0
        %4814 = vmatpush.msra.mxu0 0.0
        %v4815 = vand.u32 %v4053, 4294901760
        %v4816 = vsub.f32 %v4053, %v4815
        %4817 = vmatpush.msra.mxu0 %v4816
        %v4818 = vand.u32 %v4052, 4294901760
        %v4819 = vsub.f32 %v4052, %v4818
        %4820 = vmatpush.msra.mxu0 %v4819
        %v4821 = vand.u32 %v4051, 4294901760
        %v4822 = vsub.f32 %v4051, %v4821
        %4823 = vmatpush.msra.mxu0 %v4822
        %v4824 = vand.u32 %v4050, 4294901760
        %v4825 = vsub.f32 %v4050, %v4824
        %4826 = vmatpush.msra.mxu0 %v4825
        %v4827 = vand.u32 %v4049, 4294901760
        %v4828 = vsub.f32 %v4049, %v4827
        %4829 = vmatpush.msra.mxu0 %v4828
        %v4830 = vand.u32 %v4048, 4294901760
        %v4831 = vsub.f32 %v4048, %v4830
        %4832 = vmatpush.msra.mxu0 %v4831
        %v4833 = vand.u32 %v4047, 4294901760
        %v4834 = vsub.f32 %v4047, %v4833
        %4835 = vmatpush.msra.mxu0 %v4834
        %v4836 = vand.u32 %v4046, 4294901760
        %v4837 = vsub.f32 %v4046, %v4836
        %4838 = vmatpush.msra.mxu0 %v4837
        %v4839 = vand.u32 %v4045, 4294901760
        %v4840 = vsub.f32 %v4045, %v4839
        %4841 = vmatpush.msra.mxu0 %v4840
        %v4842 = vand.u32 %v4044, 4294901760
        %v4843 = vsub.f32 %v4044, %v4842
        %4844 = vmatpush.msra.mxu0 %v4843
        %v4845 = vand.u32 %v4566, 4294901760
        %v4846 = vsub.f32 %v4566, %v4845
        %4847 = vmatmul.f32.gmra.mxu0 %v4846
        %v4848 = vpop.f32.mrf.mxu0
        %v4849 = vadd.f32 %v4771, %v4848
        %v4850 = vand.u32 %v4569, 4294901760
        %v4851 = vsub.f32 %v4569, %v4850
        %4852 = vmatmul.f32.gmra.mxu0 %v4851
        %v4853 = vpop.f32.mrf.mxu0
        %v4854 = vadd.f32 %v4775, %v4853
        %v4855 = vand.u32 %v4572, 4294901760
        %v4856 = vsub.f32 %v4572, %v4855
        %4857 = vmatmul.f32.gmra.mxu0 %v4856
        %v4858 = vpop.f32.mrf.mxu0
        %v4859 = vadd.f32 %v4779, %v4858
        %v4860 = vand.u32 %v4575, 4294901760
        %v4861 = vsub.f32 %v4575, %v4860
        %4862 = vmatmul.f32.gmra.mxu0 %v4861
        %v4863 = vpop.f32.mrf.mxu0
        %v4864 = vadd.f32 %v4783, %v4863
        %v4865 = vand.u32 %v4578, 4294901760
        %v4866 = vsub.f32 %v4578, %v4865
        %4867 = vmatmul.f32.gmra.mxu0 %v4866
        %v4868 = vpop.f32.mrf.mxu0
        %v4869 = vadd.f32 %v4787, %v4868
        %v4870 = vand.u32 %v4581, 4294901760
        %v4871 = vsub.f32 %v4581, %v4870
        %4872 = vmatmul.f32.gmra.mxu0 %v4871
        %v4873 = vpop.f32.mrf.mxu0
        %v4874 = vadd.f32 %v4791, %v4873
        %v4875 = vand.u32 %v4584, 4294901760
        %v4876 = vsub.f32 %v4584, %v4875
        %4877 = vmatmul.f32.gmra.mxu0 %v4876
        %v4878 = vpop.f32.mrf.mxu0
        %v4879 = vadd.f32 %v4795, %v4878
        %v4880 = vand.u32 %v4587, 4294901760
        %v4881 = vsub.f32 %v4587, %v4880
        %4882 = vmatmul.f32.gmra.mxu0 %v4881
        %v4883 = vpop.f32.mrf.mxu0
        %v4884 = vadd.f32 %v4799, %v4883
        %v4885 = vand.u32 %v4590, 4294901760
        %v4886 = vsub.f32 %v4590, %v4885
        %4887 = vmatmul.f32.gmra.mxu0 %v4886
        %v4888 = vpop.f32.mrf.mxu0
        %v4889 = vadd.f32 %v4803, %v4888
        %v4890 = vand.u32 %v4593, 4294901760
        %v4891 = vsub.f32 %v4593, %v4890
        %4892 = vmatmul.f32.gmra.mxu0 %v4891
        %v4893 = vpop.f32.mrf.mxu0
        %v4894 = vadd.f32 %v4807, %v4893
        %4895 = vdwg.mxu0
        %4896 = vmatpush.msra.mxu0 0.0
        %4897 = vmatpush.msra.mxu0 0.0
        %4898 = vmatpush.msra.mxu0 0.0
        %4899 = vmatpush.msra.mxu0 0.0
        %4900 = vmatpush.msra.mxu0 0.0
        %4901 = vmatpush.msra.mxu0 0.0
        %v4902 = vand.u32 %v4053, 4294901760
        %4903 = vmatpush.msra.mxu0 %v4902
        %v4904 = vand.u32 %v4052, 4294901760
        %4905 = vmatpush.msra.mxu0 %v4904
        %v4906 = vand.u32 %v4051, 4294901760
        %4907 = vmatpush.msra.mxu0 %v4906
        %v4908 = vand.u32 %v4050, 4294901760
        %4909 = vmatpush.msra.mxu0 %v4908
        %v4910 = vand.u32 %v4049, 4294901760
        %4911 = vmatpush.msra.mxu0 %v4910
        %v4912 = vand.u32 %v4048, 4294901760
        %4913 = vmatpush.msra.mxu0 %v4912
        %v4914 = vand.u32 %v4047, 4294901760
        %4915 = vmatpush.msra.mxu0 %v4914
        %v4916 = vand.u32 %v4046, 4294901760
        %4917 = vmatpush.msra.mxu0 %v4916
        %v4918 = vand.u32 %v4045, 4294901760
        %4919 = vmatpush.msra.mxu0 %v4918
        %v4920 = vand.u32 %v4044, 4294901760
        %4921 = vmatpush.msra.mxu0 %v4920
        %v4922 = vand.u32 %v4566, 4294901760
        %v4923 = vsub.f32 %v4566, %v4922
        %v4924 = vand.u32 %v4923, 4294901760
        %4925 = vmatmul.f32.gmra.mxu0 %v4924
        %v4926 = vpop.f32.mrf.mxu0
        %v4927 = vadd.f32 %v4849, %v4926
        %v4928 = vand.u32 %v4569, 4294901760
        %v4929 = vsub.f32 %v4569, %v4928
        %v4930 = vand.u32 %v4929, 4294901760
        %4931 = vmatmul.f32.gmra.mxu0 %v4930
        %v4932 = vpop.f32.mrf.mxu0
        %v4933 = vadd.f32 %v4854, %v4932
        %v4934 = vand.u32 %v4572, 4294901760
        %v4935 = vsub.f32 %v4572, %v4934
        %v4936 = vand.u32 %v4935, 4294901760
        %4937 = vmatmul.f32.gmra.mxu0 %v4936
        %v4938 = vpop.f32.mrf.mxu0
        %v4939 = vadd.f32 %v4859, %v4938
        %v4940 = vand.u32 %v4575, 4294901760
        %v4941 = vsub.f32 %v4575, %v4940
        %v4942 = vand.u32 %v4941, 4294901760
        %4943 = vmatmul.f32.gmra.mxu0 %v4942
        %v4944 = vpop.f32.mrf.mxu0
        %v4945 = vadd.f32 %v4864, %v4944
        %v4946 = vand.u32 %v4578, 4294901760
        %v4947 = vsub.f32 %v4578, %v4946
        %v4948 = vand.u32 %v4947, 4294901760
        %4949 = vmatmul.f32.gmra.mxu0 %v4948
        %v4950 = vpop.f32.mrf.mxu0
        %v4951 = vadd.f32 %v4869, %v4950
        %v4952 = vand.u32 %v4581, 4294901760
        %v4953 = vsub.f32 %v4581, %v4952
        %v4954 = vand.u32 %v4953, 4294901760
        %4955 = vmatmul.f32.gmra.mxu0 %v4954
        %v4956 = vpop.f32.mrf.mxu0
        %v4957 = vadd.f32 %v4874, %v4956
        %v4958 = vand.u32 %v4584, 4294901760
        %v4959 = vsub.f32 %v4584, %v4958
        %v4960 = vand.u32 %v4959, 4294901760
        %4961 = vmatmul.f32.gmra.mxu0 %v4960
        %v4962 = vpop.f32.mrf.mxu0
        %v4963 = vadd.f32 %v4879, %v4962
        %v4964 = vand.u32 %v4587, 4294901760
        %v4965 = vsub.f32 %v4587, %v4964
        %v4966 = vand.u32 %v4965, 4294901760
        %4967 = vmatmul.f32.gmra.mxu0 %v4966
        %v4968 = vpop.f32.mrf.mxu0
        %v4969 = vadd.f32 %v4884, %v4968
        %v4970 = vand.u32 %v4590, 4294901760
        %v4971 = vsub.f32 %v4590, %v4970
        %v4972 = vand.u32 %v4971, 4294901760
        %4973 = vmatmul.f32.gmra.mxu0 %v4972
        %v4974 = vpop.f32.mrf.mxu0
        %v4975 = vadd.f32 %v4889, %v4974
        %v4976 = vand.u32 %v4593, 4294901760
        %v4977 = vsub.f32 %v4593, %v4976
        %v4978 = vand.u32 %v4977, 4294901760
        %4979 = vmatmul.f32.gmra.mxu0 %v4978
        %v4980 = vpop.f32.mrf.mxu0
        %v4981 = vadd.f32 %v4894, %v4980
        %4982 = vdwg.mxu0
        %4983 = vmatpush.msra.mxu0 0.0
        %4984 = vmatpush.msra.mxu0 0.0
        %4985 = vmatpush.msra.mxu0 0.0
        %4986 = vmatpush.msra.mxu0 0.0
        %4987 = vmatpush.msra.mxu0 0.0
        %4988 = vmatpush.msra.mxu0 0.0
        %v4989 = vand.u32 %v4053, 4294901760
        %v4990 = vsub.f32 %v4053, %v4989
        %v4991 = vand.u32 %v4990, 4294901760
        %4992 = vmatpush.msra.mxu0 %v4991
        %v4993 = vand.u32 %v4052, 4294901760
        %v4994 = vsub.f32 %v4052, %v4993
        %v4995 = vand.u32 %v4994, 4294901760
        %4996 = vmatpush.msra.mxu0 %v4995
        %v4997 = vand.u32 %v4051, 4294901760
        %v4998 = vsub.f32 %v4051, %v4997
        %v4999 = vand.u32 %v4998, 4294901760
        %5000 = vmatpush.msra.mxu0 %v4999
        %v5001 = vand.u32 %v4050, 4294901760
        %v5002 = vsub.f32 %v4050, %v5001
        %v5003 = vand.u32 %v5002, 4294901760
        %5004 = vmatpush.msra.mxu0 %v5003
        %v5005 = vand.u32 %v4049, 4294901760
        %v5006 = vsub.f32 %v4049, %v5005
        %v5007 = vand.u32 %v5006, 4294901760
        %5008 = vmatpush.msra.mxu0 %v5007
        %v5009 = vand.u32 %v4048, 4294901760
        %v5010 = vsub.f32 %v4048, %v5009
        %v5011 = vand.u32 %v5010, 4294901760
        %5012 = vmatpush.msra.mxu0 %v5011
        %v5013 = vand.u32 %v4047, 4294901760
        %v5014 = vsub.f32 %v4047, %v5013
        %v5015 = vand.u32 %v5014, 4294901760
        %5016 = vmatpush.msra.mxu0 %v5015
        %v5017 = vand.u32 %v4046, 4294901760
        %v5018 = vsub.f32 %v4046, %v5017
        %v5019 = vand.u32 %v5018, 4294901760
        %5020 = vmatpush.msra.mxu0 %v5019
        %v5021 = vand.u32 %v4045, 4294901760
        %v5022 = vsub.f32 %v4045, %v5021
        %v5023 = vand.u32 %v5022, 4294901760
        %5024 = vmatpush.msra.mxu0 %v5023
        %v5025 = vand.u32 %v4044, 4294901760
        %v5026 = vsub.f32 %v4044, %v5025
        %v5027 = vand.u32 %v5026, 4294901760
        %5028 = vmatpush.msra.mxu0 %v5027
        %v5029 = vand.u32 %v4566, 4294901760
        %5030 = vmatmul.f32.gmra.mxu0 %v5029
        %v5031 = vpop.f32.mrf.mxu0
        %v5032 = vadd.f32 %v4927, %v5031
        %v5033 = vand.u32 %v4569, 4294901760
        %5034 = vmatmul.f32.gmra.mxu0 %v5033
        %v5035 = vpop.f32.mrf.mxu0
        %v5036 = vadd.f32 %v4933, %v5035
        %v5037 = vand.u32 %v4572, 4294901760
        %5038 = vmatmul.f32.gmra.mxu0 %v5037
        %v5039 = vpop.f32.mrf.mxu0
        %v5040 = vadd.f32 %v4939, %v5039
        %v5041 = vand.u32 %v4575, 4294901760
        %5042 = vmatmul.f32.gmra.mxu0 %v5041
        %v5043 = vpop.f32.mrf.mxu0
        %v5044 = vadd.f32 %v4945, %v5043
        %v5045 = vand.u32 %v4578, 4294901760
        %5046 = vmatmul.f32.gmra.mxu0 %v5045
        %v5047 = vpop.f32.mrf.mxu0
        %v5048 = vadd.f32 %v4951, %v5047
        %v5049 = vand.u32 %v4581, 4294901760
        %5050 = vmatmul.f32.gmra.mxu0 %v5049
        %v5051 = vpop.f32.mrf.mxu0
        %v5052 = vadd.f32 %v4957, %v5051
        %v5053 = vand.u32 %v4584, 4294901760
        %5054 = vmatmul.f32.gmra.mxu0 %v5053
        %v5055 = vpop.f32.mrf.mxu0
        %v5056 = vadd.f32 %v4963, %v5055
        %v5057 = vand.u32 %v4587, 4294901760
        %5058 = vmatmul.f32.gmra.mxu0 %v5057
        %v5059 = vpop.f32.mrf.mxu0
        %v5060 = vadd.f32 %v4969, %v5059
        %v5061 = vand.u32 %v4590, 4294901760
        %5062 = vmatmul.f32.gmra.mxu0 %v5061
        %v5063 = vpop.f32.mrf.mxu0
        %v5064 = vadd.f32 %v4975, %v5063
        %v5065 = vand.u32 %v4593, 4294901760
        %5066 = vmatmul.f32.gmra.mxu0 %v5065
        %v5067 = vpop.f32.mrf.mxu0
        %v5068 = vadd.f32 %v4981, %v5067
        %5069 = vdwg.mxu0
        %5070 = vmatpush.msra.mxu0 0.0
        %5071 = vmatpush.msra.mxu0 0.0
        %5072 = vmatpush.msra.mxu0 0.0
        %5073 = vmatpush.msra.mxu0 0.0
        %5074 = vmatpush.msra.mxu0 0.0
        %5075 = vmatpush.msra.mxu0 0.0
        %v5076 = vand.u32 %v4053, 4294901760
        %5077 = vmatpush.msra.mxu0 %v5076
        %v5078 = vand.u32 %v4052, 4294901760
        %5079 = vmatpush.msra.mxu0 %v5078
        %v5080 = vand.u32 %v4051, 4294901760
        %5081 = vmatpush.msra.mxu0 %v5080
        %v5082 = vand.u32 %v4050, 4294901760
        %5083 = vmatpush.msra.mxu0 %v5082
        %v5084 = vand.u32 %v4049, 4294901760
        %5085 = vmatpush.msra.mxu0 %v5084
        %v5086 = vand.u32 %v4048, 4294901760
        %5087 = vmatpush.msra.mxu0 %v5086
        %v5088 = vand.u32 %v4047, 4294901760
        %5089 = vmatpush.msra.mxu0 %v5088
        %v5090 = vand.u32 %v4046, 4294901760
        %5091 = vmatpush.msra.mxu0 %v5090
        %v5092 = vand.u32 %v4045, 4294901760
        %5093 = vmatpush.msra.mxu0 %v5092
        %v5094 = vand.u32 %v4044, 4294901760
        %5095 = vmatpush.msra.mxu0 %v5094
        %v5096 = vand.u32 %v4566, 4294901760
        %5097 = vmatmul.f32.gmra.mxu0 %v5096
        %v5098 = vpop.f32.mrf.mxu0
        %v5099 = vadd.f32 %v5032, %v5098
        %v5100 = vand.u32 %v4569, 4294901760
        %5101 = vmatmul.f32.gmra.mxu0 %v5100
        %v5102 = vpop.f32.mrf.mxu0
        %v5103 = vadd.f32 %v5036, %v5102
        %v5104 = vand.u32 %v4572, 4294901760
        %5105 = vmatmul.f32.gmra.mxu0 %v5104
        %v5106 = vpop.f32.mrf.mxu0
        %v5107 = vadd.f32 %v5040, %v5106
        %v5108 = vand.u32 %v4575, 4294901760
        %5109 = vmatmul.f32.gmra.mxu0 %v5108
        %v5110 = vpop.f32.mrf.mxu0
        %v5111 = vadd.f32 %v5044, %v5110
        %v5112 = vand.u32 %v4578, 4294901760
        %5113 = vmatmul.f32.gmra.mxu0 %v5112
        %v5114 = vpop.f32.mrf.mxu0
        %v5115 = vadd.f32 %v5048, %v5114
        %v5116 = vand.u32 %v4581, 4294901760
        %5117 = vmatmul.f32.gmra.mxu0 %v5116
        %v5118 = vpop.f32.mrf.mxu0
        %v5119 = vadd.f32 %v5052, %v5118
        %v5120 = vand.u32 %v4584, 4294901760
        %5121 = vmatmul.f32.gmra.mxu0 %v5120
        %v5122 = vpop.f32.mrf.mxu0
        %v5123 = vadd.f32 %v5056, %v5122
        %v5124 = vand.u32 %v4587, 4294901760
        %5125 = vmatmul.f32.gmra.mxu0 %v5124
        %v5126 = vpop.f32.mrf.mxu0
        %v5127 = vadd.f32 %v5060, %v5126
        %v5128 = vand.u32 %v4590, 4294901760
        %5129 = vmatmul.f32.gmra.mxu0 %v5128
        %v5130 = vpop.f32.mrf.mxu0
        %v5131 = vadd.f32 %v5064, %v5130
        %v5132 = vand.u32 %v4593, 4294901760
        %5133 = vmatmul.f32.gmra.mxu0 %v5132
        %v5134 = vpop.f32.mrf.mxu0
        %v5135 = vadd.f32 %v5068, %v5134
        %5136 = vdwg.mxu0
        %5137 = vxpose.xlu0.b32.start [1/16] %v4044, 128
        %5138 = vxpose.xlu0.b32.cont [2/16] %v4045, 128
        %5139 = vxpose.xlu0.b32.cont [3/16] %v4046, 128
        %5140 = vxpose.xlu0.b32.cont [4/16] %v4047, 128
        %5141 = vxpose.xlu0.b32.cont [5/16] %v4048, 128
        %5142 = vxpose.xlu0.b32.cont [6/16] %v4049, 128
        %5143 = vxpose.xlu0.b32.cont [7/16] %v4050, 128
        %5144 = vxpose.xlu0.b32.cont [8/16] %v4051, 128
        %5145 = vxpose.xlu0.b32.cont [9/16] %v4052, 128
        %5146 = vxpose.xlu0.b32.cont [10/16] %v4053, 128
        %5147 = vxpose.xlu0.b32.cont [11/16] 0.0, 128
        %5148 = vxpose.xlu0.b32.cont [12/16] 0.0, 128
        %5149 = vxpose.xlu0.b32.cont [13/16] 0.0, 128
        %5150 = vxpose.xlu0.b32.cont [14/16] 0.0, 128
        %5151 = vxpose.xlu0.b32.cont [15/16] 0.0, 128
        %5152 = vxpose.xlu0.b32.end [16/16] 0.0, 128
        %v5153 = vpop.trf.xlu0
        %v5154 = vpop.trf.xlu0
        %v5155 = vpop.trf.xlu0
        %v5156 = vpop.trf.xlu0
        %v5157 = vpop.trf.xlu0
        %v5158 = vpop.trf.xlu0
        %v5159 = vpop.trf.xlu0
        %v5160 = vpop.trf.xlu0
        %v5161 = vpop.trf.xlu0
        %v5162 = vpop.trf.xlu0
        %v5163 = vpop.trf.xlu0
        %v5164 = vpop.trf.xlu0
        %v5165 = vpop.trf.xlu0
        %v5166 = vpop.trf.xlu0
        %v5167 = vpop.trf.xlu0
        %v5168 = vpop.trf.xlu0
        %v5170 = vsel %vm768, %v5153, 0
        %5172 = vmatpush.msra.mxu0 0.0
        %5173 = vmatpush.msra.mxu0 0.0
        %5174 = vmatpush.msra.mxu0 0.0
        %5175 = vmatpush.msra.mxu0 0.0
        %5176 = vmatpush.msra.mxu0 0.0
        %5177 = vmatpush.msra.mxu0 0.0
        %v5178 = vand.u32 %v5135, 4294901760
        %5179 = vmatpush.msra.mxu0 %v5178
        %v5180 = vand.u32 %v5131, 4294901760
        %5181 = vmatpush.msra.mxu0 %v5180
        %v5182 = vand.u32 %v5127, 4294901760
        %5183 = vmatpush.msra.mxu0 %v5182
        %v5184 = vand.u32 %v5123, 4294901760
        %5185 = vmatpush.msra.mxu0 %v5184
        %v5186 = vand.u32 %v5119, 4294901760
        %5187 = vmatpush.msra.mxu0 %v5186
        %v5188 = vand.u32 %v5115, 4294901760
        %5189 = vmatpush.msra.mxu0 %v5188
        %v5190 = vand.u32 %v5111, 4294901760
        %5191 = vmatpush.msra.mxu0 %v5190
        %v5192 = vand.u32 %v5107, 4294901760
        %5193 = vmatpush.msra.mxu0 %v5192
        %v5194 = vand.u32 %v5103, 4294901760
        %5195 = vmatpush.msra.mxu0 %v5194
        %v5196 = vand.u32 %v5099, 4294901760
        %5197 = vmatpush.msra.mxu0 %v5196
        %v5198 = vand.u32 %v5170, 4294901760
        %v5199 = vsub.f32 %v5170, %v5198
        %v5200 = vand.u32 %v5199, 4294901760
        %v5201 = vsub.f32 %v5199, %v5200
        %v5202 = vand.u32 %v5201, 4294901760
        %5203 = vmatmul.f32.gmra.mxu0 %v5202
        %v5204 = vpop.f32.mrf.mxu0
        %v5205 = vadd.f32 0.0, %v5204
        %5206 = vdwg.mxu0
        %5207 = vmatpush.msra.mxu0 0.0
        %5208 = vmatpush.msra.mxu0 0.0
        %5209 = vmatpush.msra.mxu0 0.0
        %5210 = vmatpush.msra.mxu0 0.0
        %5211 = vmatpush.msra.mxu0 0.0
        %5212 = vmatpush.msra.mxu0 0.0
        %v5213 = vand.u32 %v5135, 4294901760
        %v5214 = vsub.f32 %v5135, %v5213
        %v5215 = vand.u32 %v5214, 4294901760
        %v5216 = vsub.f32 %v5214, %v5215
        %v5217 = vand.u32 %v5216, 4294901760
        %5218 = vmatpush.msra.mxu0 %v5217
        %v5219 = vand.u32 %v5131, 4294901760
        %v5220 = vsub.f32 %v5131, %v5219
        %v5221 = vand.u32 %v5220, 4294901760
        %v5222 = vsub.f32 %v5220, %v5221
        %v5223 = vand.u32 %v5222, 4294901760
        %5224 = vmatpush.msra.mxu0 %v5223
        %v5225 = vand.u32 %v5127, 4294901760
        %v5226 = vsub.f32 %v5127, %v5225
        %v5227 = vand.u32 %v5226, 4294901760
        %v5228 = vsub.f32 %v5226, %v5227
        %v5229 = vand.u32 %v5228, 4294901760
        %5230 = vmatpush.msra.mxu0 %v5229
        %v5231 = vand.u32 %v5123, 4294901760
        %v5232 = vsub.f32 %v5123, %v5231
        %v5233 = vand.u32 %v5232, 4294901760
        %v5234 = vsub.f32 %v5232, %v5233
        %v5235 = vand.u32 %v5234, 4294901760
        %5236 = vmatpush.msra.mxu0 %v5235
        %v5237 = vand.u32 %v5119, 4294901760
        %v5238 = vsub.f32 %v5119, %v5237
        %v5239 = vand.u32 %v5238, 4294901760
        %v5240 = vsub.f32 %v5238, %v5239
        %v5241 = vand.u32 %v5240, 4294901760
        %5242 = vmatpush.msra.mxu0 %v5241
        %v5243 = vand.u32 %v5115, 4294901760
        %v5244 = vsub.f32 %v5115, %v5243
        %v5245 = vand.u32 %v5244, 4294901760
        %v5246 = vsub.f32 %v5244, %v5245
        %v5247 = vand.u32 %v5246, 4294901760
        %5248 = vmatpush.msra.mxu0 %v5247
        %v5249 = vand.u32 %v5111, 4294901760
        %v5250 = vsub.f32 %v5111, %v5249
        %v5251 = vand.u32 %v5250, 4294901760
        %v5252 = vsub.f32 %v5250, %v5251
        %v5253 = vand.u32 %v5252, 4294901760
        %5254 = vmatpush.msra.mxu0 %v5253
        %v5255 = vand.u32 %v5107, 4294901760
        %v5256 = vsub.f32 %v5107, %v5255
        %v5257 = vand.u32 %v5256, 4294901760
        %v5258 = vsub.f32 %v5256, %v5257
        %v5259 = vand.u32 %v5258, 4294901760
        %5260 = vmatpush.msra.mxu0 %v5259
        %v5261 = vand.u32 %v5103, 4294901760
        %v5262 = vsub.f32 %v5103, %v5261
        %v5263 = vand.u32 %v5262, 4294901760
        %v5264 = vsub.f32 %v5262, %v5263
        %v5265 = vand.u32 %v5264, 4294901760
        %5266 = vmatpush.msra.mxu0 %v5265
        %v5267 = vand.u32 %v5099, 4294901760
        %v5268 = vsub.f32 %v5099, %v5267
        %v5269 = vand.u32 %v5268, 4294901760
        %v5270 = vsub.f32 %v5268, %v5269
        %v5271 = vand.u32 %v5270, 4294901760
        %5272 = vmatpush.msra.mxu0 %v5271
        %v5273 = vand.u32 %v5170, 4294901760
        %5274 = vmatmul.f32.gmra.mxu0 %v5273
        %v5275 = vpop.f32.mrf.mxu0
        %v5276 = vadd.f32 %v5205, %v5275
        %5277 = vdwg.mxu0
        %5278 = vmatpush.msra.mxu0 0.0
        %5279 = vmatpush.msra.mxu0 0.0
        %5280 = vmatpush.msra.mxu0 0.0
        %5281 = vmatpush.msra.mxu0 0.0
        %5282 = vmatpush.msra.mxu0 0.0
        %5283 = vmatpush.msra.mxu0 0.0
        %v5284 = vand.u32 %v5135, 4294901760
        %v5285 = vsub.f32 %v5135, %v5284
        %5286 = vmatpush.msra.mxu0 %v5285
        %v5287 = vand.u32 %v5131, 4294901760
        %v5288 = vsub.f32 %v5131, %v5287
        %5289 = vmatpush.msra.mxu0 %v5288
        %v5290 = vand.u32 %v5127, 4294901760
        %v5291 = vsub.f32 %v5127, %v5290
        %5292 = vmatpush.msra.mxu0 %v5291
        %v5293 = vand.u32 %v5123, 4294901760
        %v5294 = vsub.f32 %v5123, %v5293
        %5295 = vmatpush.msra.mxu0 %v5294
        %v5296 = vand.u32 %v5119, 4294901760
        %v5297 = vsub.f32 %v5119, %v5296
        %5298 = vmatpush.msra.mxu0 %v5297
        %v5299 = vand.u32 %v5115, 4294901760
        %v5300 = vsub.f32 %v5115, %v5299
        %5301 = vmatpush.msra.mxu0 %v5300
        %v5302 = vand.u32 %v5111, 4294901760
        %v5303 = vsub.f32 %v5111, %v5302
        %5304 = vmatpush.msra.mxu0 %v5303
        %v5305 = vand.u32 %v5107, 4294901760
        %v5306 = vsub.f32 %v5107, %v5305
        %5307 = vmatpush.msra.mxu0 %v5306
        %v5308 = vand.u32 %v5103, 4294901760
        %v5309 = vsub.f32 %v5103, %v5308
        %5310 = vmatpush.msra.mxu0 %v5309
        %v5311 = vand.u32 %v5099, 4294901760
        %v5312 = vsub.f32 %v5099, %v5311
        %5313 = vmatpush.msra.mxu0 %v5312
        %v5314 = vand.u32 %v5170, 4294901760
        %v5315 = vsub.f32 %v5170, %v5314
        %5316 = vmatmul.f32.gmra.mxu0 %v5315
        %v5317 = vpop.f32.mrf.mxu0
        %v5318 = vadd.f32 %v5276, %v5317
        %5319 = vdwg.mxu0
        %5320 = vmatpush.msra.mxu0 0.0
        %5321 = vmatpush.msra.mxu0 0.0
        %5322 = vmatpush.msra.mxu0 0.0
        %5323 = vmatpush.msra.mxu0 0.0
        %5324 = vmatpush.msra.mxu0 0.0
        %5325 = vmatpush.msra.mxu0 0.0
        %v5326 = vand.u32 %v5135, 4294901760
        %5327 = vmatpush.msra.mxu0 %v5326
        %v5328 = vand.u32 %v5131, 4294901760
        %5329 = vmatpush.msra.mxu0 %v5328
        %v5330 = vand.u32 %v5127, 4294901760
        %5331 = vmatpush.msra.mxu0 %v5330
        %v5332 = vand.u32 %v5123, 4294901760
        %5333 = vmatpush.msra.mxu0 %v5332
        %v5334 = vand.u32 %v5119, 4294901760
        %5335 = vmatpush.msra.mxu0 %v5334
        %v5336 = vand.u32 %v5115, 4294901760
        %5337 = vmatpush.msra.mxu0 %v5336
        %v5338 = vand.u32 %v5111, 4294901760
        %5339 = vmatpush.msra.mxu0 %v5338
        %v5340 = vand.u32 %v5107, 4294901760
        %5341 = vmatpush.msra.mxu0 %v5340
        %v5342 = vand.u32 %v5103, 4294901760
        %5343 = vmatpush.msra.mxu0 %v5342
        %v5344 = vand.u32 %v5099, 4294901760
        %5345 = vmatpush.msra.mxu0 %v5344
        %v5346 = vand.u32 %v5170, 4294901760
        %v5347 = vsub.f32 %v5170, %v5346
        %v5348 = vand.u32 %v5347, 4294901760
        %5349 = vmatmul.f32.gmra.mxu0 %v5348
        %v5350 = vpop.f32.mrf.mxu0
        %v5351 = vadd.f32 %v5318, %v5350
        %5352 = vdwg.mxu0
        %5353 = vmatpush.msra.mxu0 0.0
        %5354 = vmatpush.msra.mxu0 0.0
        %5355 = vmatpush.msra.mxu0 0.0
        %5356 = vmatpush.msra.mxu0 0.0
        %5357 = vmatpush.msra.mxu0 0.0
        %5358 = vmatpush.msra.mxu0 0.0
        %v5359 = vand.u32 %v5135, 4294901760
        %v5360 = vsub.f32 %v5135, %v5359
        %v5361 = vand.u32 %v5360, 4294901760
        %5362 = vmatpush.msra.mxu0 %v5361
        %v5363 = vand.u32 %v5131, 4294901760
        %v5364 = vsub.f32 %v5131, %v5363
        %v5365 = vand.u32 %v5364, 4294901760
        %5366 = vmatpush.msra.mxu0 %v5365
        %v5367 = vand.u32 %v5127, 4294901760
        %v5368 = vsub.f32 %v5127, %v5367
        %v5369 = vand.u32 %v5368, 4294901760
        %5370 = vmatpush.msra.mxu0 %v5369
        %v5371 = vand.u32 %v5123, 4294901760
        %v5372 = vsub.f32 %v5123, %v5371
        %v5373 = vand.u32 %v5372, 4294901760
        %5374 = vmatpush.msra.mxu0 %v5373
        %v5375 = vand.u32 %v5119, 4294901760
        %v5376 = vsub.f32 %v5119, %v5375
        %v5377 = vand.u32 %v5376, 4294901760
        %5378 = vmatpush.msra.mxu0 %v5377
        %v5379 = vand.u32 %v5115, 4294901760
        %v5380 = vsub.f32 %v5115, %v5379
        %v5381 = vand.u32 %v5380, 4294901760
        %5382 = vmatpush.msra.mxu0 %v5381
        %v5383 = vand.u32 %v5111, 4294901760
        %v5384 = vsub.f32 %v5111, %v5383
        %v5385 = vand.u32 %v5384, 4294901760
        %5386 = vmatpush.msra.mxu0 %v5385
        %v5387 = vand.u32 %v5107, 4294901760
        %v5388 = vsub.f32 %v5107, %v5387
        %v5389 = vand.u32 %v5388, 4294901760
        %5390 = vmatpush.msra.mxu0 %v5389
        %v5391 = vand.u32 %v5103, 4294901760
        %v5392 = vsub.f32 %v5103, %v5391
        %v5393 = vand.u32 %v5392, 4294901760
        %5394 = vmatpush.msra.mxu0 %v5393
        %v5395 = vand.u32 %v5099, 4294901760
        %v5396 = vsub.f32 %v5099, %v5395
        %v5397 = vand.u32 %v5396, 4294901760
        %5398 = vmatpush.msra.mxu0 %v5397
        %v5399 = vand.u32 %v5170, 4294901760
        %5400 = vmatmul.f32.gmra.mxu0 %v5399
        %v5401 = vpop.f32.mrf.mxu0
        %v5402 = vadd.f32 %v5351, %v5401
        %5403 = vdwg.mxu0
        %5404 = vmatpush.msra.mxu0 0.0
        %5405 = vmatpush.msra.mxu0 0.0
        %5406 = vmatpush.msra.mxu0 0.0
        %5407 = vmatpush.msra.mxu0 0.0
        %5408 = vmatpush.msra.mxu0 0.0
        %5409 = vmatpush.msra.mxu0 0.0
        %v5410 = vand.u32 %v5135, 4294901760
        %5411 = vmatpush.msra.mxu0 %v5410
        %v5412 = vand.u32 %v5131, 4294901760
        %5413 = vmatpush.msra.mxu0 %v5412
        %v5414 = vand.u32 %v5127, 4294901760
        %5415 = vmatpush.msra.mxu0 %v5414
        %v5416 = vand.u32 %v5123, 4294901760
        %5417 = vmatpush.msra.mxu0 %v5416
        %v5418 = vand.u32 %v5119, 4294901760
        %5419 = vmatpush.msra.mxu0 %v5418
        %v5420 = vand.u32 %v5115, 4294901760
        %5421 = vmatpush.msra.mxu0 %v5420
        %v5422 = vand.u32 %v5111, 4294901760
        %5423 = vmatpush.msra.mxu0 %v5422
        %v5424 = vand.u32 %v5107, 4294901760
        %5425 = vmatpush.msra.mxu0 %v5424
        %v5426 = vand.u32 %v5103, 4294901760
        %5427 = vmatpush.msra.mxu0 %v5426
        %v5428 = vand.u32 %v5099, 4294901760
        %5429 = vmatpush.msra.mxu0 %v5428
        %v5430 = vand.u32 %v5170, 4294901760
        %5431 = vmatmul.f32.gmra.mxu0 %v5430
        %v5432 = vpop.f32.mrf.mxu0
        %v5433 = vadd.f32 %v5402, %v5432
        %5434 = vdwg.mxu0
        %v5435 = vmul.f32 %v5433, 0.15625
        %vm5436 = vcmask 36864
        %v5437 = vsel %vm5436, %v5435, -inf
        %5438 = vmax.xlane.f32.xlu0 %v5437
        %v5439 = vpop.xlane.xlu0 %5438
        %v5440 = vsub.f32 %v5435, %v5439
        %v5441 = vmul.f32 %v5440, 1.442695
        %v5442 = vpow.pop %v5441
        %v5443 = vsel %vm5436, %v5442, 0.0
        %5444 = vadd.xlane.f32.xlu0 %v5443
        %v5445 = vpop.xlane.xlu0 %5444
        %v5446 = vrcp.pop %v5445
        %v5447 = vmul.f32 %v5445, %v5446
        %v5448 = vsub.f32 1.0, %v5447
        %v5449 = vmul.f32 %v5446, %v5448
        %v5450 = vadd.f32 %v5446, %v5449
        %vm5451 = vweird.f32 %v5445
        %vm5452 = vweird.f32 %v5446
        %vm5453 = vmor %vm5451, %vm5452
        %v5454 = vsel %vm5453, %v5446, %v5450
        %v5455 = vand.u32 2147483647, %v5445
        %vm5456 = vcmp.eq.f32.partialorder %v5455, 8.507059e+37
        %v5457 = vand.u32 %v5445, 2147483648
        %v5458 = vor.u32 1.1754944e-38, %v5457
        %v5459 = vsel %vm5456, %v5458, %v5454
        %v5460 = vmul.f32 %v5442, %v5459
        %vm5461 = vcmask 39936
        %v5463 = vsel %vm5461, %v4044, 0
        %v5466 = vsel %vm5461, %v4045, 0
        %v5469 = vsel %vm5461, %v4046, 0
        %v5472 = vsel %vm5461, %v4047, 0
        %v5475 = vsel %vm5461, %v4048, 0
        %v5478 = vsel %vm5461, %v4049, 0
        %v5481 = vsel %vm5461, %v4050, 0
        %v5484 = vsel %vm5461, %v4051, 0
        %v5487 = vsel %vm5461, %v4052, 0
        %v5490 = vsel %vm5461, %v4053, 0
        %v5493 = vsel %vm5461, %v5460, 0
        %5495 = vmatpush.xpose.msra.mxu0 0.0
        %5496 = vmatpush.xpose.msra.mxu0 0.0
        %5497 = vmatpush.xpose.msra.mxu0 0.0
        %5498 = vmatpush.xpose.msra.mxu0 0.0
        %5499 = vmatpush.xpose.msra.mxu0 0.0
        %5500 = vmatpush.xpose.msra.mxu0 0.0
        %5501 = vmatpush.xpose.msra.mxu0 0.0
        %5502 = vmatpush.xpose.msra.mxu0 0.0
        %5503 = vmatpush.xpose.msra.mxu0 0.0
        %5504 = vmatpush.xpose.msra.mxu0 0.0
        %5505 = vmatpush.xpose.msra.mxu0 0.0
        %5506 = vmatpush.xpose.msra.mxu0 0.0
        %5507 = vmatpush.xpose.msra.mxu0 0.0
        %5508 = vmatpush.xpose.msra.mxu0 0.0
        %5509 = vmatpush.xpose.msra.mxu0 0.0
        %v5510 = vand.u32 %v5493, 4294901760
        %5511 = vmatpush.xpose.msra.mxu0 %v5510
        %v5512 = vand.u32 %v5463, 4294901760
        %v5513 = vsub.f32 %v5463, %v5512
        %v5514 = vand.u32 %v5513, 4294901760
        %v5515 = vsub.f32 %v5513, %v5514
        %v5516 = vand.u32 %v5515, 4294901760
        %5517 = vmatmul.f32.gmra.mxu0 %v5516
        %v5518 = vpop.f32.mrf.mxu0
        %v5519 = vadd.f32 0.0, %v5518
        %v5520 = vand.u32 %v5466, 4294901760
        %v5521 = vsub.f32 %v5466, %v5520
        %v5522 = vand.u32 %v5521, 4294901760
        %v5523 = vsub.f32 %v5521, %v5522
        %v5524 = vand.u32 %v5523, 4294901760
        %5525 = vmatmul.f32.gmra.mxu0 %v5524
        %v5526 = vpop.f32.mrf.mxu0
        %v5527 = vadd.f32 0.0, %v5526
        %v5528 = vand.u32 %v5469, 4294901760
        %v5529 = vsub.f32 %v5469, %v5528
        %v5530 = vand.u32 %v5529, 4294901760
        %v5531 = vsub.f32 %v5529, %v5530
        %v5532 = vand.u32 %v5531, 4294901760
        %5533 = vmatmul.f32.gmra.mxu0 %v5532
        %v5534 = vpop.f32.mrf.mxu0
        %v5535 = vadd.f32 0.0, %v5534
        %v5536 = vand.u32 %v5472, 4294901760
        %v5537 = vsub.f32 %v5472, %v5536
        %v5538 = vand.u32 %v5537, 4294901760
        %v5539 = vsub.f32 %v5537, %v5538
        %v5540 = vand.u32 %v5539, 4294901760
        %5541 = vmatmul.f32.gmra.mxu0 %v5540
        %v5542 = vpop.f32.mrf.mxu0
        %v5543 = vadd.f32 0.0, %v5542
        %v5544 = vand.u32 %v5475, 4294901760
        %v5545 = vsub.f32 %v5475, %v5544
        %v5546 = vand.u32 %v5545, 4294901760
        %v5547 = vsub.f32 %v5545, %v5546
        %v5548 = vand.u32 %v5547, 4294901760
        %5549 = vmatmul.f32.gmra.mxu0 %v5548
        %v5550 = vpop.f32.mrf.mxu0
        %v5551 = vadd.f32 0.0, %v5550
        %v5552 = vand.u32 %v5478, 4294901760
        %v5553 = vsub.f32 %v5478, %v5552
        %v5554 = vand.u32 %v5553, 4294901760
        %v5555 = vsub.f32 %v5553, %v5554
        %v5556 = vand.u32 %v5555, 4294901760
        %5557 = vmatmul.f32.gmra.mxu0 %v5556
        %v5558 = vpop.f32.mrf.mxu0
        %v5559 = vadd.f32 0.0, %v5558
        %v5560 = vand.u32 %v5481, 4294901760
        %v5561 = vsub.f32 %v5481, %v5560
        %v5562 = vand.u32 %v5561, 4294901760
        %v5563 = vsub.f32 %v5561, %v5562
        %v5564 = vand.u32 %v5563, 4294901760
        %5565 = vmatmul.f32.gmra.mxu0 %v5564
        %v5566 = vpop.f32.mrf.mxu0
        %v5567 = vadd.f32 0.0, %v5566
        %v5568 = vand.u32 %v5484, 4294901760
        %v5569 = vsub.f32 %v5484, %v5568
        %v5570 = vand.u32 %v5569, 4294901760
        %v5571 = vsub.f32 %v5569, %v5570
        %v5572 = vand.u32 %v5571, 4294901760
        %5573 = vmatmul.f32.gmra.mxu0 %v5572
        %v5574 = vpop.f32.mrf.mxu0
        %v5575 = vadd.f32 0.0, %v5574
        %v5576 = vand.u32 %v5487, 4294901760
        %v5577 = vsub.f32 %v5487, %v5576
        %v5578 = vand.u32 %v5577, 4294901760
        %v5579 = vsub.f32 %v5577, %v5578
        %v5580 = vand.u32 %v5579, 4294901760
        %5581 = vmatmul.f32.gmra.mxu0 %v5580
        %v5582 = vpop.f32.mrf.mxu0
        %v5583 = vadd.f32 0.0, %v5582
        %v5584 = vand.u32 %v5490, 4294901760
        %v5585 = vsub.f32 %v5490, %v5584
        %v5586 = vand.u32 %v5585, 4294901760
        %v5587 = vsub.f32 %v5585, %v5586
        %v5588 = vand.u32 %v5587, 4294901760
        %5589 = vmatmul.f32.gmra.mxu0 %v5588
        %v5590 = vpop.f32.mrf.mxu0
        %v5591 = vadd.f32 0.0, %v5590
        %5592 = vdwg.mxu0
        %5593 = vmatpush.xpose.msra.mxu0 0.0
        %5594 = vmatpush.xpose.msra.mxu0 0.0
        %5595 = vmatpush.xpose.msra.mxu0 0.0
        %5596 = vmatpush.xpose.msra.mxu0 0.0
        %5597 = vmatpush.xpose.msra.mxu0 0.0
        %5598 = vmatpush.xpose.msra.mxu0 0.0
        %5599 = vmatpush.xpose.msra.mxu0 0.0
        %5600 = vmatpush.xpose.msra.mxu0 0.0
        %5601 = vmatpush.xpose.msra.mxu0 0.0
        %5602 = vmatpush.xpose.msra.mxu0 0.0
        %5603 = vmatpush.xpose.msra.mxu0 0.0
        %5604 = vmatpush.xpose.msra.mxu0 0.0
        %5605 = vmatpush.xpose.msra.mxu0 0.0
        %5606 = vmatpush.xpose.msra.mxu0 0.0
        %5607 = vmatpush.xpose.msra.mxu0 0.0
        %v5608 = vand.u32 %v5493, 4294901760
        %v5609 = vsub.f32 %v5493, %v5608
        %v5610 = vand.u32 %v5609, 4294901760
        %v5611 = vsub.f32 %v5609, %v5610
        %v5612 = vand.u32 %v5611, 4294901760
        %5613 = vmatpush.xpose.msra.mxu0 %v5612
        %v5614 = vand.u32 %v5463, 4294901760
        %5615 = vmatmul.f32.gmra.mxu0 %v5614
        %v5616 = vpop.f32.mrf.mxu0
        %v5617 = vadd.f32 %v5519, %v5616
        %v5618 = vand.u32 %v5466, 4294901760
        %5619 = vmatmul.f32.gmra.mxu0 %v5618
        %v5620 = vpop.f32.mrf.mxu0
        %v5621 = vadd.f32 %v5527, %v5620
        %v5622 = vand.u32 %v5469, 4294901760
        %5623 = vmatmul.f32.gmra.mxu0 %v5622
        %v5624 = vpop.f32.mrf.mxu0
        %v5625 = vadd.f32 %v5535, %v5624
        %v5626 = vand.u32 %v5472, 4294901760
        %5627 = vmatmul.f32.gmra.mxu0 %v5626
        %v5628 = vpop.f32.mrf.mxu0
        %v5629 = vadd.f32 %v5543, %v5628
        %v5630 = vand.u32 %v5475, 4294901760
        %5631 = vmatmul.f32.gmra.mxu0 %v5630
        %v5632 = vpop.f32.mrf.mxu0
        %v5633 = vadd.f32 %v5551, %v5632
        %v5634 = vand.u32 %v5478, 4294901760
        %5635 = vmatmul.f32.gmra.mxu0 %v5634
        %v5636 = vpop.f32.mrf.mxu0
        %v5637 = vadd.f32 %v5559, %v5636
        %v5638 = vand.u32 %v5481, 4294901760
        %5639 = vmatmul.f32.gmra.mxu0 %v5638
        %v5640 = vpop.f32.mrf.mxu0
        %v5641 = vadd.f32 %v5567, %v5640
        %v5642 = vand.u32 %v5484, 4294901760
        %5643 = vmatmul.f32.gmra.mxu0 %v5642
        %v5644 = vpop.f32.mrf.mxu0
        %v5645 = vadd.f32 %v5575, %v5644
        %v5646 = vand.u32 %v5487, 4294901760
        %5647 = vmatmul.f32.gmra.mxu0 %v5646
        %v5648 = vpop.f32.mrf.mxu0
        %v5649 = vadd.f32 %v5583, %v5648
        %v5650 = vand.u32 %v5490, 4294901760
        %5651 = vmatmul.f32.gmra.mxu0 %v5650
        %v5652 = vpop.f32.mrf.mxu0
        %v5653 = vadd.f32 %v5591, %v5652
        %5654 = vdwg.mxu0
        %5655 = vmatpush.xpose.msra.mxu0 0.0
        %5656 = vmatpush.xpose.msra.mxu0 0.0
        %5657 = vmatpush.xpose.msra.mxu0 0.0
        %5658 = vmatpush.xpose.msra.mxu0 0.0
        %5659 = vmatpush.xpose.msra.mxu0 0.0
        %5660 = vmatpush.xpose.msra.mxu0 0.0
        %5661 = vmatpush.xpose.msra.mxu0 0.0
        %5662 = vmatpush.xpose.msra.mxu0 0.0
        %5663 = vmatpush.xpose.msra.mxu0 0.0
        %5664 = vmatpush.xpose.msra.mxu0 0.0
        %5665 = vmatpush.xpose.msra.mxu0 0.0
        %5666 = vmatpush.xpose.msra.mxu0 0.0
        %5667 = vmatpush.xpose.msra.mxu0 0.0
        %5668 = vmatpush.xpose.msra.mxu0 0.0
        %5669 = vmatpush.xpose.msra.mxu0 0.0
        %v5670 = vand.u32 %v5493, 4294901760
        %v5671 = vsub.f32 %v5493, %v5670
        %5672 = vmatpush.xpose.msra.mxu0 %v5671
        %v5673 = vand.u32 %v5463, 4294901760
        %v5674 = vsub.f32 %v5463, %v5673
        %5675 = vmatmul.f32.gmra.mxu0 %v5674
        %v5676 = vpop.f32.mrf.mxu0
        %v5677 = vadd.f32 %v5617, %v5676
        %v5678 = vand.u32 %v5466, 4294901760
        %v5679 = vsub.f32 %v5466, %v5678
        %5680 = vmatmul.f32.gmra.mxu0 %v5679
        %v5681 = vpop.f32.mrf.mxu0
        %v5682 = vadd.f32 %v5621, %v5681
        %v5683 = vand.u32 %v5469, 4294901760
        %v5684 = vsub.f32 %v5469, %v5683
        %5685 = vmatmul.f32.gmra.mxu0 %v5684
        %v5686 = vpop.f32.mrf.mxu0
        %v5687 = vadd.f32 %v5625, %v5686
        %v5688 = vand.u32 %v5472, 4294901760
        %v5689 = vsub.f32 %v5472, %v5688
        %5690 = vmatmul.f32.gmra.mxu0 %v5689
        %v5691 = vpop.f32.mrf.mxu0
        %v5692 = vadd.f32 %v5629, %v5691
        %v5693 = vand.u32 %v5475, 4294901760
        %v5694 = vsub.f32 %v5475, %v5693
        %5695 = vmatmul.f32.gmra.mxu0 %v5694
        %v5696 = vpop.f32.mrf.mxu0
        %v5697 = vadd.f32 %v5633, %v5696
        %v5698 = vand.u32 %v5478, 4294901760
        %v5699 = vsub.f32 %v5478, %v5698
        %5700 = vmatmul.f32.gmra.mxu0 %v5699
        %v5701 = vpop.f32.mrf.mxu0
        %v5702 = vadd.f32 %v5637, %v5701
        %v5703 = vand.u32 %v5481, 4294901760
        %v5704 = vsub.f32 %v5481, %v5703
        %5705 = vmatmul.f32.gmra.mxu0 %v5704
        %v5706 = vpop.f32.mrf.mxu0
        %v5707 = vadd.f32 %v5641, %v5706
        %v5708 = vand.u32 %v5484, 4294901760
        %v5709 = vsub.f32 %v5484, %v5708
        %5710 = vmatmul.f32.gmra.mxu0 %v5709
        %v5711 = vpop.f32.mrf.mxu0
        %v5712 = vadd.f32 %v5645, %v5711
        %v5713 = vand.u32 %v5487, 4294901760
        %v5714 = vsub.f32 %v5487, %v5713
        %5715 = vmatmul.f32.gmra.mxu0 %v5714
        %v5716 = vpop.f32.mrf.mxu0
        %v5717 = vadd.f32 %v5649, %v5716
        %v5718 = vand.u32 %v5490, 4294901760
        %v5719 = vsub.f32 %v5490, %v5718
        %5720 = vmatmul.f32.gmra.mxu0 %v5719
        %v5721 = vpop.f32.mrf.mxu0
        %v5722 = vadd.f32 %v5653, %v5721
        %5723 = vdwg.mxu0
        %5724 = vmatpush.xpose.msra.mxu0 0.0
        %5725 = vmatpush.xpose.msra.mxu0 0.0
        %5726 = vmatpush.xpose.msra.mxu0 0.0
        %5727 = vmatpush.xpose.msra.mxu0 0.0
        %5728 = vmatpush.xpose.msra.mxu0 0.0
        %5729 = vmatpush.xpose.msra.mxu0 0.0
        %5730 = vmatpush.xpose.msra.mxu0 0.0
        %5731 = vmatpush.xpose.msra.mxu0 0.0
        %5732 = vmatpush.xpose.msra.mxu0 0.0
        %5733 = vmatpush.xpose.msra.mxu0 0.0
        %5734 = vmatpush.xpose.msra.mxu0 0.0
        %5735 = vmatpush.xpose.msra.mxu0 0.0
        %5736 = vmatpush.xpose.msra.mxu0 0.0
        %5737 = vmatpush.xpose.msra.mxu0 0.0
        %5738 = vmatpush.xpose.msra.mxu0 0.0
        %v5739 = vand.u32 %v5493, 4294901760
        %5740 = vmatpush.xpose.msra.mxu0 %v5739
        %v5741 = vand.u32 %v5463, 4294901760
        %v5742 = vsub.f32 %v5463, %v5741
        %v5743 = vand.u32 %v5742, 4294901760
        %5744 = vmatmul.f32.gmra.mxu0 %v5743
        %v5745 = vpop.f32.mrf.mxu0
        %v5746 = vadd.f32 %v5677, %v5745
        %v5747 = vand.u32 %v5466, 4294901760
        %v5748 = vsub.f32 %v5466, %v5747
        %v5749 = vand.u32 %v5748, 4294901760
        %5750 = vmatmul.f32.gmra.mxu0 %v5749
        %v5751 = vpop.f32.mrf.mxu0
        %v5752 = vadd.f32 %v5682, %v5751
        %v5753 = vand.u32 %v5469, 4294901760
        %v5754 = vsub.f32 %v5469, %v5753
        %v5755 = vand.u32 %v5754, 4294901760
        %5756 = vmatmul.f32.gmra.mxu0 %v5755
        %v5757 = vpop.f32.mrf.mxu0
        %v5758 = vadd.f32 %v5687, %v5757
        %v5759 = vand.u32 %v5472, 4294901760
        %v5760 = vsub.f32 %v5472, %v5759
        %v5761 = vand.u32 %v5760, 4294901760
        %5762 = vmatmul.f32.gmra.mxu0 %v5761
        %v5763 = vpop.f32.mrf.mxu0
        %v5764 = vadd.f32 %v5692, %v5763
        %v5765 = vand.u32 %v5475, 4294901760
        %v5766 = vsub.f32 %v5475, %v5765
        %v5767 = vand.u32 %v5766, 4294901760
        %5768 = vmatmul.f32.gmra.mxu0 %v5767
        %v5769 = vpop.f32.mrf.mxu0
        %v5770 = vadd.f32 %v5697, %v5769
        %v5771 = vand.u32 %v5478, 4294901760
        %v5772 = vsub.f32 %v5478, %v5771
        %v5773 = vand.u32 %v5772, 4294901760
        %5774 = vmatmul.f32.gmra.mxu0 %v5773
        %v5775 = vpop.f32.mrf.mxu0
        %v5776 = vadd.f32 %v5702, %v5775
        %v5777 = vand.u32 %v5481, 4294901760
        %v5778 = vsub.f32 %v5481, %v5777
        %v5779 = vand.u32 %v5778, 4294901760
        %5780 = vmatmul.f32.gmra.mxu0 %v5779
        %v5781 = vpop.f32.mrf.mxu0
        %v5782 = vadd.f32 %v5707, %v5781
        %v5783 = vand.u32 %v5484, 4294901760
        %v5784 = vsub.f32 %v5484, %v5783
        %v5785 = vand.u32 %v5784, 4294901760
        %5786 = vmatmul.f32.gmra.mxu0 %v5785
        %v5787 = vpop.f32.mrf.mxu0
        %v5788 = vadd.f32 %v5712, %v5787
        %v5789 = vand.u32 %v5487, 4294901760
        %v5790 = vsub.f32 %v5487, %v5789
        %v5791 = vand.u32 %v5790, 4294901760
        %5792 = vmatmul.f32.gmra.mxu0 %v5791
        %v5793 = vpop.f32.mrf.mxu0
        %v5794 = vadd.f32 %v5717, %v5793
        %v5795 = vand.u32 %v5490, 4294901760
        %v5796 = vsub.f32 %v5490, %v5795
        %v5797 = vand.u32 %v5796, 4294901760
        %5798 = vmatmul.f32.gmra.mxu0 %v5797
        %v5799 = vpop.f32.mrf.mxu0
        %v5800 = vadd.f32 %v5722, %v5799
        %5801 = vdwg.mxu0
        %5802 = vmatpush.xpose.msra.mxu0 0.0
        %5803 = vmatpush.xpose.msra.mxu0 0.0
        %5804 = vmatpush.xpose.msra.mxu0 0.0
        %5805 = vmatpush.xpose.msra.mxu0 0.0
        %5806 = vmatpush.xpose.msra.mxu0 0.0
        %5807 = vmatpush.xpose.msra.mxu0 0.0
        %5808 = vmatpush.xpose.msra.mxu0 0.0
        %5809 = vmatpush.xpose.msra.mxu0 0.0
        %5810 = vmatpush.xpose.msra.mxu0 0.0
        %5811 = vmatpush.xpose.msra.mxu0 0.0
        %5812 = vmatpush.xpose.msra.mxu0 0.0
        %5813 = vmatpush.xpose.msra.mxu0 0.0
        %5814 = vmatpush.xpose.msra.mxu0 0.0
        %5815 = vmatpush.xpose.msra.mxu0 0.0
        %5816 = vmatpush.xpose.msra.mxu0 0.0
        %v5817 = vand.u32 %v5493, 4294901760
        %v5818 = vsub.f32 %v5493, %v5817
        %v5819 = vand.u32 %v5818, 4294901760
        %5820 = vmatpush.xpose.msra.mxu0 %v5819
        %v5821 = vand.u32 %v5463, 4294901760
        %5822 = vmatmul.f32.gmra.mxu0 %v5821
        %v5823 = vpop.f32.mrf.mxu0
        %v5824 = vadd.f32 %v5746, %v5823
        %v5825 = vand.u32 %v5466, 4294901760
        %5826 = vmatmul.f32.gmra.mxu0 %v5825
        %v5827 = vpop.f32.mrf.mxu0
        %v5828 = vadd.f32 %v5752, %v5827
        %v5829 = vand.u32 %v5469, 4294901760
        %5830 = vmatmul.f32.gmra.mxu0 %v5829
        %v5831 = vpop.f32.mrf.mxu0
        %v5832 = vadd.f32 %v5758, %v5831
        %v5833 = vand.u32 %v5472, 4294901760
        %5834 = vmatmul.f32.gmra.mxu0 %v5833
        %v5835 = vpop.f32.mrf.mxu0
        %v5836 = vadd.f32 %v5764, %v5835
        %v5837 = vand.u32 %v5475, 4294901760
        %5838 = vmatmul.f32.gmra.mxu0 %v5837
        %v5839 = vpop.f32.mrf.mxu0
        %v5840 = vadd.f32 %v5770, %v5839
        %v5841 = vand.u32 %v5478, 4294901760
        %5842 = vmatmul.f32.gmra.mxu0 %v5841
        %v5843 = vpop.f32.mrf.mxu0
        %v5844 = vadd.f32 %v5776, %v5843
        %v5845 = vand.u32 %v5481, 4294901760
        %5846 = vmatmul.f32.gmra.mxu0 %v5845
        %v5847 = vpop.f32.mrf.mxu0
        %v5848 = vadd.f32 %v5782, %v5847
        %v5849 = vand.u32 %v5484, 4294901760
        %5850 = vmatmul.f32.gmra.mxu0 %v5849
        %v5851 = vpop.f32.mrf.mxu0
        %v5852 = vadd.f32 %v5788, %v5851
        %v5853 = vand.u32 %v5487, 4294901760
        %5854 = vmatmul.f32.gmra.mxu0 %v5853
        %v5855 = vpop.f32.mrf.mxu0
        %v5856 = vadd.f32 %v5794, %v5855
        %v5857 = vand.u32 %v5490, 4294901760
        %5858 = vmatmul.f32.gmra.mxu0 %v5857
        %v5859 = vpop.f32.mrf.mxu0
        %v5860 = vadd.f32 %v5800, %v5859
        %5861 = vdwg.mxu0
        %5862 = vmatpush.xpose.msra.mxu0 0.0
        %5863 = vmatpush.xpose.msra.mxu0 0.0
        %5864 = vmatpush.xpose.msra.mxu0 0.0
        %5865 = vmatpush.xpose.msra.mxu0 0.0
        %5866 = vmatpush.xpose.msra.mxu0 0.0
        %5867 = vmatpush.xpose.msra.mxu0 0.0
        %5868 = vmatpush.xpose.msra.mxu0 0.0
        %5869 = vmatpush.xpose.msra.mxu0 0.0
        %5870 = vmatpush.xpose.msra.mxu0 0.0
        %5871 = vmatpush.xpose.msra.mxu0 0.0
        %5872 = vmatpush.xpose.msra.mxu0 0.0
        %5873 = vmatpush.xpose.msra.mxu0 0.0
        %5874 = vmatpush.xpose.msra.mxu0 0.0
        %5875 = vmatpush.xpose.msra.mxu0 0.0
        %5876 = vmatpush.xpose.msra.mxu0 0.0
        %v5877 = vand.u32 %v5493, 4294901760
        %5878 = vmatpush.xpose.msra.mxu0 %v5877
        %v5879 = vand.u32 %v5463, 4294901760
        %5880 = vmatmul.f32.gmra.mxu0 %v5879
        %v5881 = vpop.f32.mrf.mxu0
        %v5882 = vadd.f32 %v5824, %v5881
        %v5883 = vand.u32 %v5466, 4294901760
        %5884 = vmatmul.f32.gmra.mxu0 %v5883
        %v5885 = vpop.f32.mrf.mxu0
        %v5886 = vadd.f32 %v5828, %v5885
        %v5887 = vand.u32 %v5469, 4294901760
        %5888 = vmatmul.f32.gmra.mxu0 %v5887
        %v5889 = vpop.f32.mrf.mxu0
        %v5890 = vadd.f32 %v5832, %v5889
        %v5891 = vand.u32 %v5472, 4294901760
        %5892 = vmatmul.f32.gmra.mxu0 %v5891
        %v5893 = vpop.f32.mrf.mxu0
        %v5894 = vadd.f32 %v5836, %v5893
        %v5895 = vand.u32 %v5475, 4294901760
        %5896 = vmatmul.f32.gmra.mxu0 %v5895
        %v5897 = vpop.f32.mrf.mxu0
        %v5898 = vadd.f32 %v5840, %v5897
        %v5899 = vand.u32 %v5478, 4294901760
        %5900 = vmatmul.f32.gmra.mxu0 %v5899
        %v5901 = vpop.f32.mrf.mxu0
        %v5902 = vadd.f32 %v5844, %v5901
        %v5903 = vand.u32 %v5481, 4294901760
        %5904 = vmatmul.f32.gmra.mxu0 %v5903
        %v5905 = vpop.f32.mrf.mxu0
        %v5906 = vadd.f32 %v5848, %v5905
        %v5907 = vand.u32 %v5484, 4294901760
        %5908 = vmatmul.f32.gmra.mxu0 %v5907
        %v5909 = vpop.f32.mrf.mxu0
        %v5910 = vadd.f32 %v5852, %v5909
        %v5911 = vand.u32 %v5487, 4294901760
        %5912 = vmatmul.f32.gmra.mxu0 %v5911
        %v5913 = vpop.f32.mrf.mxu0
        %v5914 = vadd.f32 %v5856, %v5913
        %v5915 = vand.u32 %v5490, 4294901760
        %5916 = vmatmul.f32.gmra.mxu0 %v5915
        %v5917 = vpop.f32.mrf.mxu0
        %v5918 = vadd.f32 %v5860, %v5917
        %5919 = vdwg.mxu0
        %v5921 = vsel %vm5461, %v5882, 0
        %v5924 = vsel %vm5461, %v5886, 0
        %v5927 = vsel %vm5461, %v5890, 0
        %v5930 = vsel %vm5461, %v5894, 0
        %v5933 = vsel %vm5461, %v5898, 0
        %v5936 = vsel %vm5461, %v5902, 0
        %v5939 = vsel %vm5461, %v5906, 0
        %v5942 = vsel %vm5461, %v5910, 0
        %v5945 = vsel %vm5461, %v5914, 0
        %v5948 = vsel %vm5461, %v5918, 0
        %5950 = vmatpush.xpose.msra.mxu0 0.0
        %5951 = vmatpush.xpose.msra.mxu0 0.0
        %5952 = vmatpush.xpose.msra.mxu0 0.0
        %5953 = vmatpush.xpose.msra.mxu0 0.0
        %5954 = vmatpush.xpose.msra.mxu0 0.0
        %5955 = vmatpush.xpose.msra.mxu0 0.0
        %v5956 = vand.u32 %v5490, 4294901760
        %5957 = vmatpush.xpose.msra.mxu0 %v5956
        %v5958 = vand.u32 %v5487, 4294901760
        %5959 = vmatpush.xpose.msra.mxu0 %v5958
        %v5960 = vand.u32 %v5484, 4294901760
        %5961 = vmatpush.xpose.msra.mxu0 %v5960
        %v5962 = vand.u32 %v5481, 4294901760
        %5963 = vmatpush.xpose.msra.mxu0 %v5962
        %v5964 = vand.u32 %v5478, 4294901760
        %5965 = vmatpush.xpose.msra.mxu0 %v5964
        %v5966 = vand.u32 %v5475, 4294901760
        %5967 = vmatpush.xpose.msra.mxu0 %v5966
        %v5968 = vand.u32 %v5472, 4294901760
        %5969 = vmatpush.xpose.msra.mxu0 %v5968
        %v5970 = vand.u32 %v5469, 4294901760
        %5971 = vmatpush.xpose.msra.mxu0 %v5970
        %v5972 = vand.u32 %v5466, 4294901760
        %5973 = vmatpush.xpose.msra.mxu0 %v5972
        %v5974 = vand.u32 %v5463, 4294901760
        %5975 = vmatpush.xpose.msra.mxu0 %v5974
        %v5976 = vand.u32 %v5921, 4294901760
        %v5977 = vsub.f32 %v5921, %v5976
        %v5978 = vand.u32 %v5977, 4294901760
        %v5979 = vsub.f32 %v5977, %v5978
        %v5980 = vand.u32 %v5979, 4294901760
        %5981 = vmatmul.f32.gmra.mxu0 %v5980
        %v5982 = vpop.f32.mrf.mxu0
        %v5983 = vadd.f32 0.0, %v5982
        %v5984 = vand.u32 %v5924, 4294901760
        %v5985 = vsub.f32 %v5924, %v5984
        %v5986 = vand.u32 %v5985, 4294901760
        %v5987 = vsub.f32 %v5985, %v5986
        %v5988 = vand.u32 %v5987, 4294901760
        %5989 = vmatmul.f32.gmra.mxu0 %v5988
        %v5990 = vpop.f32.mrf.mxu0
        %v5991 = vadd.f32 0.0, %v5990
        %v5992 = vand.u32 %v5927, 4294901760
        %v5993 = vsub.f32 %v5927, %v5992
        %v5994 = vand.u32 %v5993, 4294901760
        %v5995 = vsub.f32 %v5993, %v5994
        %v5996 = vand.u32 %v5995, 4294901760
        %5997 = vmatmul.f32.gmra.mxu0 %v5996
        %v5998 = vpop.f32.mrf.mxu0
        %v5999 = vadd.f32 0.0, %v5998
        %v6000 = vand.u32 %v5930, 4294901760
        %v6001 = vsub.f32 %v5930, %v6000
        %v6002 = vand.u32 %v6001, 4294901760
        %v6003 = vsub.f32 %v6001, %v6002
        %v6004 = vand.u32 %v6003, 4294901760
        %6005 = vmatmul.f32.gmra.mxu0 %v6004
        %v6006 = vpop.f32.mrf.mxu0
        %v6007 = vadd.f32 0.0, %v6006
        %v6008 = vand.u32 %v5933, 4294901760
        %v6009 = vsub.f32 %v5933, %v6008
        %v6010 = vand.u32 %v6009, 4294901760
        %v6011 = vsub.f32 %v6009, %v6010
        %v6012 = vand.u32 %v6011, 4294901760
        %6013 = vmatmul.f32.gmra.mxu0 %v6012
        %v6014 = vpop.f32.mrf.mxu0
        %v6015 = vadd.f32 0.0, %v6014
        %v6016 = vand.u32 %v5936, 4294901760
        %v6017 = vsub.f32 %v5936, %v6016
        %v6018 = vand.u32 %v6017, 4294901760
        %v6019 = vsub.f32 %v6017, %v6018
        %v6020 = vand.u32 %v6019, 4294901760
        %6021 = vmatmul.f32.gmra.mxu0 %v6020
        %v6022 = vpop.f32.mrf.mxu0
        %v6023 = vadd.f32 0.0, %v6022
        %v6024 = vand.u32 %v5939, 4294901760
        %v6025 = vsub.f32 %v5939, %v6024
        %v6026 = vand.u32 %v6025, 4294901760
        %v6027 = vsub.f32 %v6025, %v6026
        %v6028 = vand.u32 %v6027, 4294901760
        %6029 = vmatmul.f32.gmra.mxu0 %v6028
        %v6030 = vpop.f32.mrf.mxu0
        %v6031 = vadd.f32 0.0, %v6030
        %v6032 = vand.u32 %v5942, 4294901760
        %v6033 = vsub.f32 %v5942, %v6032
        %v6034 = vand.u32 %v6033, 4294901760
        %v6035 = vsub.f32 %v6033, %v6034
        %v6036 = vand.u32 %v6035, 4294901760
        %6037 = vmatmul.f32.gmra.mxu0 %v6036
        %v6038 = vpop.f32.mrf.mxu0
        %v6039 = vadd.f32 0.0, %v6038
        %v6040 = vand.u32 %v5945, 4294901760
        %v6041 = vsub.f32 %v5945, %v6040
        %v6042 = vand.u32 %v6041, 4294901760
        %v6043 = vsub.f32 %v6041, %v6042
        %v6044 = vand.u32 %v6043, 4294901760
        %6045 = vmatmul.f32.gmra.mxu0 %v6044
        %v6046 = vpop.f32.mrf.mxu0
        %v6047 = vadd.f32 0.0, %v6046
        %v6048 = vand.u32 %v5948, 4294901760
        %v6049 = vsub.f32 %v5948, %v6048
        %v6050 = vand.u32 %v6049, 4294901760
        %v6051 = vsub.f32 %v6049, %v6050
        %v6052 = vand.u32 %v6051, 4294901760
        %6053 = vmatmul.f32.gmra.mxu0 %v6052
        %v6054 = vpop.f32.mrf.mxu0
        %v6055 = vadd.f32 0.0, %v6054
        %6056 = vdwg.mxu0
        %6057 = vmatpush.xpose.msra.mxu0 0.0
        %6058 = vmatpush.xpose.msra.mxu0 0.0
        %6059 = vmatpush.xpose.msra.mxu0 0.0
        %6060 = vmatpush.xpose.msra.mxu0 0.0
        %6061 = vmatpush.xpose.msra.mxu0 0.0
        %6062 = vmatpush.xpose.msra.mxu0 0.0
        %v6063 = vand.u32 %v5490, 4294901760
        %v6064 = vsub.f32 %v5490, %v6063
        %v6065 = vand.u32 %v6064, 4294901760
        %v6066 = vsub.f32 %v6064, %v6065
        %v6067 = vand.u32 %v6066, 4294901760
        %6068 = vmatpush.xpose.msra.mxu0 %v6067
        %v6069 = vand.u32 %v5487, 4294901760
        %v6070 = vsub.f32 %v5487, %v6069
        %v6071 = vand.u32 %v6070, 4294901760
        %v6072 = vsub.f32 %v6070, %v6071
        %v6073 = vand.u32 %v6072, 4294901760
        %6074 = vmatpush.xpose.msra.mxu0 %v6073
        %v6075 = vand.u32 %v5484, 4294901760
        %v6076 = vsub.f32 %v5484, %v6075
        %v6077 = vand.u32 %v6076, 4294901760
        %v6078 = vsub.f32 %v6076, %v6077
        %v6079 = vand.u32 %v6078, 4294901760
        %6080 = vmatpush.xpose.msra.mxu0 %v6079
        %v6081 = vand.u32 %v5481, 4294901760
        %v6082 = vsub.f32 %v5481, %v6081
        %v6083 = vand.u32 %v6082, 4294901760
        %v6084 = vsub.f32 %v6082, %v6083
        %v6085 = vand.u32 %v6084, 4294901760
        %6086 = vmatpush.xpose.msra.mxu0 %v6085
        %v6087 = vand.u32 %v5478, 4294901760
        %v6088 = vsub.f32 %v5478, %v6087
        %v6089 = vand.u32 %v6088, 4294901760
        %v6090 = vsub.f32 %v6088, %v6089
        %v6091 = vand.u32 %v6090, 4294901760
        %6092 = vmatpush.xpose.msra.mxu0 %v6091
        %v6093 = vand.u32 %v5475, 4294901760
        %v6094 = vsub.f32 %v5475, %v6093
        %v6095 = vand.u32 %v6094, 4294901760
        %v6096 = vsub.f32 %v6094, %v6095
        %v6097 = vand.u32 %v6096, 4294901760
        %6098 = vmatpush.xpose.msra.mxu0 %v6097
        %v6099 = vand.u32 %v5472, 4294901760
        %v6100 = vsub.f32 %v5472, %v6099
        %v6101 = vand.u32 %v6100, 4294901760
        %v6102 = vsub.f32 %v6100, %v6101
        %v6103 = vand.u32 %v6102, 4294901760
        %6104 = vmatpush.xpose.msra.mxu0 %v6103
        %v6105 = vand.u32 %v5469, 4294901760
        %v6106 = vsub.f32 %v5469, %v6105
        %v6107 = vand.u32 %v6106, 4294901760
        %v6108 = vsub.f32 %v6106, %v6107
        %v6109 = vand.u32 %v6108, 4294901760
        %6110 = vmatpush.xpose.msra.mxu0 %v6109
        %v6111 = vand.u32 %v5466, 4294901760
        %v6112 = vsub.f32 %v5466, %v6111
        %v6113 = vand.u32 %v6112, 4294901760
        %v6114 = vsub.f32 %v6112, %v6113
        %v6115 = vand.u32 %v6114, 4294901760
        %6116 = vmatpush.xpose.msra.mxu0 %v6115
        %v6117 = vand.u32 %v5463, 4294901760
        %v6118 = vsub.f32 %v5463, %v6117
        %v6119 = vand.u32 %v6118, 4294901760
        %v6120 = vsub.f32 %v6118, %v6119
        %v6121 = vand.u32 %v6120, 4294901760
        %6122 = vmatpush.xpose.msra.mxu0 %v6121
        %v6123 = vand.u32 %v5921, 4294901760
        %6124 = vmatmul.f32.gmra.mxu0 %v6123
        %v6125 = vpop.f32.mrf.mxu0
        %v6126 = vadd.f32 %v5983, %v6125
        %v6127 = vand.u32 %v5924, 4294901760
        %6128 = vmatmul.f32.gmra.mxu0 %v6127
        %v6129 = vpop.f32.mrf.mxu0
        %v6130 = vadd.f32 %v5991, %v6129
        %v6131 = vand.u32 %v5927, 4294901760
        %6132 = vmatmul.f32.gmra.mxu0 %v6131
        %v6133 = vpop.f32.mrf.mxu0
        %v6134 = vadd.f32 %v5999, %v6133
        %v6135 = vand.u32 %v5930, 4294901760
        %6136 = vmatmul.f32.gmra.mxu0 %v6135
        %v6137 = vpop.f32.mrf.mxu0
        %v6138 = vadd.f32 %v6007, %v6137
        %v6139 = vand.u32 %v5933, 4294901760
        %6140 = vmatmul.f32.gmra.mxu0 %v6139
        %v6141 = vpop.f32.mrf.mxu0
        %v6142 = vadd.f32 %v6015, %v6141
        %v6143 = vand.u32 %v5936, 4294901760
        %6144 = vmatmul.f32.gmra.mxu0 %v6143
        %v6145 = vpop.f32.mrf.mxu0
        %v6146 = vadd.f32 %v6023, %v6145
        %v6147 = vand.u32 %v5939, 4294901760
        %6148 = vmatmul.f32.gmra.mxu0 %v6147
        %v6149 = vpop.f32.mrf.mxu0
        %v6150 = vadd.f32 %v6031, %v6149
        %v6151 = vand.u32 %v5942, 4294901760
        %6152 = vmatmul.f32.gmra.mxu0 %v6151
        %v6153 = vpop.f32.mrf.mxu0
        %v6154 = vadd.f32 %v6039, %v6153
        %v6155 = vand.u32 %v5945, 4294901760
        %6156 = vmatmul.f32.gmra.mxu0 %v6155
        %v6157 = vpop.f32.mrf.mxu0
        %v6158 = vadd.f32 %v6047, %v6157
        %v6159 = vand.u32 %v5948, 4294901760
        %6160 = vmatmul.f32.gmra.mxu0 %v6159
        %v6161 = vpop.f32.mrf.mxu0
        %v6162 = vadd.f32 %v6055, %v6161
        %6163 = vdwg.mxu0
        %6164 = vmatpush.xpose.msra.mxu0 0.0
        %6165 = vmatpush.xpose.msra.mxu0 0.0
        %6166 = vmatpush.xpose.msra.mxu0 0.0
        %6167 = vmatpush.xpose.msra.mxu0 0.0
        %6168 = vmatpush.xpose.msra.mxu0 0.0
        %6169 = vmatpush.xpose.msra.mxu0 0.0
        %v6170 = vand.u32 %v5490, 4294901760
        %v6171 = vsub.f32 %v5490, %v6170
        %6172 = vmatpush.xpose.msra.mxu0 %v6171
        %v6173 = vand.u32 %v5487, 4294901760
        %v6174 = vsub.f32 %v5487, %v6173
        %6175 = vmatpush.xpose.msra.mxu0 %v6174
        %v6176 = vand.u32 %v5484, 4294901760
        %v6177 = vsub.f32 %v5484, %v6176
        %6178 = vmatpush.xpose.msra.mxu0 %v6177
        %v6179 = vand.u32 %v5481, 4294901760
        %v6180 = vsub.f32 %v5481, %v6179
        %6181 = vmatpush.xpose.msra.mxu0 %v6180
        %v6182 = vand.u32 %v5478, 4294901760
        %v6183 = vsub.f32 %v5478, %v6182
        %6184 = vmatpush.xpose.msra.mxu0 %v6183
        %v6185 = vand.u32 %v5475, 4294901760
        %v6186 = vsub.f32 %v5475, %v6185
        %6187 = vmatpush.xpose.msra.mxu0 %v6186
        %v6188 = vand.u32 %v5472, 4294901760
        %v6189 = vsub.f32 %v5472, %v6188
        %6190 = vmatpush.xpose.msra.mxu0 %v6189
        %v6191 = vand.u32 %v5469, 4294901760
        %v6192 = vsub.f32 %v5469, %v6191
        %6193 = vmatpush.xpose.msra.mxu0 %v6192
        %v6194 = vand.u32 %v5466, 4294901760
        %v6195 = vsub.f32 %v5466, %v6194
        %6196 = vmatpush.xpose.msra.mxu0 %v6195
        %v6197 = vand.u32 %v5463, 4294901760
        %v6198 = vsub.f32 %v5463, %v6197
        %6199 = vmatpush.xpose.msra.mxu0 %v6198
        %v6200 = vand.u32 %v5921, 4294901760
        %v6201 = vsub.f32 %v5921, %v6200
        %6202 = vmatmul.f32.gmra.mxu0 %v6201
        %v6203 = vpop.f32.mrf.mxu0
        %v6204 = vadd.f32 %v6126, %v6203
        %v6205 = vand.u32 %v5924, 4294901760
        %v6206 = vsub.f32 %v5924, %v6205
        %6207 = vmatmul.f32.gmra.mxu0 %v6206
        %v6208 = vpop.f32.mrf.mxu0
        %v6209 = vadd.f32 %v6130, %v6208
        %v6210 = vand.u32 %v5927, 4294901760
        %v6211 = vsub.f32 %v5927, %v6210
        %6212 = vmatmul.f32.gmra.mxu0 %v6211
        %v6213 = vpop.f32.mrf.mxu0
        %v6214 = vadd.f32 %v6134, %v6213
        %v6215 = vand.u32 %v5930, 4294901760
        %v6216 = vsub.f32 %v5930, %v6215
        %6217 = vmatmul.f32.gmra.mxu0 %v6216
        %v6218 = vpop.f32.mrf.mxu0
        %v6219 = vadd.f32 %v6138, %v6218
        %v6220 = vand.u32 %v5933, 4294901760
        %v6221 = vsub.f32 %v5933, %v6220
        %6222 = vmatmul.f32.gmra.mxu0 %v6221
        %v6223 = vpop.f32.mrf.mxu0
        %v6224 = vadd.f32 %v6142, %v6223
        %v6225 = vand.u32 %v5936, 4294901760
        %v6226 = vsub.f32 %v5936, %v6225
        %6227 = vmatmul.f32.gmra.mxu0 %v6226
        %v6228 = vpop.f32.mrf.mxu0
        %v6229 = vadd.f32 %v6146, %v6228
        %v6230 = vand.u32 %v5939, 4294901760
        %v6231 = vsub.f32 %v5939, %v6230
        %6232 = vmatmul.f32.gmra.mxu0 %v6231
        %v6233 = vpop.f32.mrf.mxu0
        %v6234 = vadd.f32 %v6150, %v6233
        %v6235 = vand.u32 %v5942, 4294901760
        %v6236 = vsub.f32 %v5942, %v6235
        %6237 = vmatmul.f32.gmra.mxu0 %v6236
        %v6238 = vpop.f32.mrf.mxu0
        %v6239 = vadd.f32 %v6154, %v6238
        %v6240 = vand.u32 %v5945, 4294901760
        %v6241 = vsub.f32 %v5945, %v6240
        %6242 = vmatmul.f32.gmra.mxu0 %v6241
        %v6243 = vpop.f32.mrf.mxu0
        %v6244 = vadd.f32 %v6158, %v6243
        %v6245 = vand.u32 %v5948, 4294901760
        %v6246 = vsub.f32 %v5948, %v6245
        %6247 = vmatmul.f32.gmra.mxu0 %v6246
        %v6248 = vpop.f32.mrf.mxu0
        %v6249 = vadd.f32 %v6162, %v6248
        %6250 = vdwg.mxu0
        %6251 = vmatpush.xpose.msra.mxu0 0.0
        %6252 = vmatpush.xpose.msra.mxu0 0.0
        %6253 = vmatpush.xpose.msra.mxu0 0.0
        %6254 = vmatpush.xpose.msra.mxu0 0.0
        %6255 = vmatpush.xpose.msra.mxu0 0.0
        %6256 = vmatpush.xpose.msra.mxu0 0.0
        %v6257 = vand.u32 %v5490, 4294901760
        %6258 = vmatpush.xpose.msra.mxu0 %v6257
        %v6259 = vand.u32 %v5487, 4294901760
        %6260 = vmatpush.xpose.msra.mxu0 %v6259
        %v6261 = vand.u32 %v5484, 4294901760
        %6262 = vmatpush.xpose.msra.mxu0 %v6261
        %v6263 = vand.u32 %v5481, 4294901760
        %6264 = vmatpush.xpose.msra.mxu0 %v6263
        %v6265 = vand.u32 %v5478, 4294901760
        %6266 = vmatpush.xpose.msra.mxu0 %v6265
        %v6267 = vand.u32 %v5475, 4294901760
        %6268 = vmatpush.xpose.msra.mxu0 %v6267
        %v6269 = vand.u32 %v5472, 4294901760
        %6270 = vmatpush.xpose.msra.mxu0 %v6269
        %v6271 = vand.u32 %v5469, 4294901760
        %6272 = vmatpush.xpose.msra.mxu0 %v6271
        %v6273 = vand.u32 %v5466, 4294901760
        %6274 = vmatpush.xpose.msra.mxu0 %v6273
        %v6275 = vand.u32 %v5463, 4294901760
        %6276 = vmatpush.xpose.msra.mxu0 %v6275
        %v6277 = vand.u32 %v5921, 4294901760
        %v6278 = vsub.f32 %v5921, %v6277
        %v6279 = vand.u32 %v6278, 4294901760
        %6280 = vmatmul.f32.gmra.mxu0 %v6279
        %v6281 = vpop.f32.mrf.mxu0
        %v6282 = vadd.f32 %v6204, %v6281
        %v6283 = vand.u32 %v5924, 4294901760
        %v6284 = vsub.f32 %v5924, %v6283
        %v6285 = vand.u32 %v6284, 4294901760
        %6286 = vmatmul.f32.gmra.mxu0 %v6285
        %v6287 = vpop.f32.mrf.mxu0
        %v6288 = vadd.f32 %v6209, %v6287
        %v6289 = vand.u32 %v5927, 4294901760
        %v6290 = vsub.f32 %v5927, %v6289
        %v6291 = vand.u32 %v6290, 4294901760
        %6292 = vmatmul.f32.gmra.mxu0 %v6291
        %v6293 = vpop.f32.mrf.mxu0
        %v6294 = vadd.f32 %v6214, %v6293
        %v6295 = vand.u32 %v5930, 4294901760
        %v6296 = vsub.f32 %v5930, %v6295
        %v6297 = vand.u32 %v6296, 4294901760
        %6298 = vmatmul.f32.gmra.mxu0 %v6297
        %v6299 = vpop.f32.mrf.mxu0
        %v6300 = vadd.f32 %v6219, %v6299
        %v6301 = vand.u32 %v5933, 4294901760
        %v6302 = vsub.f32 %v5933, %v6301
        %v6303 = vand.u32 %v6302, 4294901760
        %6304 = vmatmul.f32.gmra.mxu0 %v6303
        %v6305 = vpop.f32.mrf.mxu0
        %v6306 = vadd.f32 %v6224, %v6305
        %v6307 = vand.u32 %v5936, 4294901760
        %v6308 = vsub.f32 %v5936, %v6307
        %v6309 = vand.u32 %v6308, 4294901760
        %6310 = vmatmul.f32.gmra.mxu0 %v6309
        %v6311 = vpop.f32.mrf.mxu0
        %v6312 = vadd.f32 %v6229, %v6311
        %v6313 = vand.u32 %v5939, 4294901760
        %v6314 = vsub.f32 %v5939, %v6313
        %v6315 = vand.u32 %v6314, 4294901760
        %6316 = vmatmul.f32.gmra.mxu0 %v6315
        %v6317 = vpop.f32.mrf.mxu0
        %v6318 = vadd.f32 %v6234, %v6317
        %v6319 = vand.u32 %v5942, 4294901760
        %v6320 = vsub.f32 %v5942, %v6319
        %v6321 = vand.u32 %v6320, 4294901760
        %6322 = vmatmul.f32.gmra.mxu0 %v6321
        %v6323 = vpop.f32.mrf.mxu0
        %v6324 = vadd.f32 %v6239, %v6323
        %v6325 = vand.u32 %v5945, 4294901760
        %v6326 = vsub.f32 %v5945, %v6325
        %v6327 = vand.u32 %v6326, 4294901760
        %6328 = vmatmul.f32.gmra.mxu0 %v6327
        %v6329 = vpop.f32.mrf.mxu0
        %v6330 = vadd.f32 %v6244, %v6329
        %v6331 = vand.u32 %v5948, 4294901760
        %v6332 = vsub.f32 %v5948, %v6331
        %v6333 = vand.u32 %v6332, 4294901760
        %6334 = vmatmul.f32.gmra.mxu0 %v6333
        %v6335 = vpop.f32.mrf.mxu0
        %v6336 = vadd.f32 %v6249, %v6335
        %6337 = vdwg.mxu0
        %6338 = vmatpush.xpose.msra.mxu0 0.0
        %6339 = vmatpush.xpose.msra.mxu0 0.0
        %6340 = vmatpush.xpose.msra.mxu0 0.0
        %6341 = vmatpush.xpose.msra.mxu0 0.0
        %6342 = vmatpush.xpose.msra.mxu0 0.0
        %6343 = vmatpush.xpose.msra.mxu0 0.0
        %v6344 = vand.u32 %v5490, 4294901760
        %v6345 = vsub.f32 %v5490, %v6344
        %v6346 = vand.u32 %v6345, 4294901760
        %6347 = vmatpush.xpose.msra.mxu0 %v6346
        %v6348 = vand.u32 %v5487, 4294901760
        %v6349 = vsub.f32 %v5487, %v6348
        %v6350 = vand.u32 %v6349, 4294901760
        %6351 = vmatpush.xpose.msra.mxu0 %v6350
        %v6352 = vand.u32 %v5484, 4294901760
        %v6353 = vsub.f32 %v5484, %v6352
        %v6354 = vand.u32 %v6353, 4294901760
        %6355 = vmatpush.xpose.msra.mxu0 %v6354
        %v6356 = vand.u32 %v5481, 4294901760
        %v6357 = vsub.f32 %v5481, %v6356
        %v6358 = vand.u32 %v6357, 4294901760
        %6359 = vmatpush.xpose.msra.mxu0 %v6358
        %v6360 = vand.u32 %v5478, 4294901760
        %v6361 = vsub.f32 %v5478, %v6360
        %v6362 = vand.u32 %v6361, 4294901760
        %6363 = vmatpush.xpose.msra.mxu0 %v6362
        %v6364 = vand.u32 %v5475, 4294901760
        %v6365 = vsub.f32 %v5475, %v6364
        %v6366 = vand.u32 %v6365, 4294901760
        %6367 = vmatpush.xpose.msra.mxu0 %v6366
        %v6368 = vand.u32 %v5472, 4294901760
        %v6369 = vsub.f32 %v5472, %v6368
        %v6370 = vand.u32 %v6369, 4294901760
        %6371 = vmatpush.xpose.msra.mxu0 %v6370
        %v6372 = vand.u32 %v5469, 4294901760
        %v6373 = vsub.f32 %v5469, %v6372
        %v6374 = vand.u32 %v6373, 4294901760
        %6375 = vmatpush.xpose.msra.mxu0 %v6374
        %v6376 = vand.u32 %v5466, 4294901760
        %v6377 = vsub.f32 %v5466, %v6376
        %v6378 = vand.u32 %v6377, 4294901760
        %6379 = vmatpush.xpose.msra.mxu0 %v6378
        %v6380 = vand.u32 %v5463, 4294901760
        %v6381 = vsub.f32 %v5463, %v6380
        %v6382 = vand.u32 %v6381, 4294901760
        %6383 = vmatpush.xpose.msra.mxu0 %v6382
        %v6384 = vand.u32 %v5921, 4294901760
        %6385 = vmatmul.f32.gmra.mxu0 %v6384
        %v6386 = vpop.f32.mrf.mxu0
        %v6387 = vadd.f32 %v6282, %v6386
        %v6388 = vand.u32 %v5924, 4294901760
        %6389 = vmatmul.f32.gmra.mxu0 %v6388
        %v6390 = vpop.f32.mrf.mxu0
        %v6391 = vadd.f32 %v6288, %v6390
        %v6392 = vand.u32 %v5927, 4294901760
        %6393 = vmatmul.f32.gmra.mxu0 %v6392
        %v6394 = vpop.f32.mrf.mxu0
        %v6395 = vadd.f32 %v6294, %v6394
        %v6396 = vand.u32 %v5930, 4294901760
        %6397 = vmatmul.f32.gmra.mxu0 %v6396
        %v6398 = vpop.f32.mrf.mxu0
        %v6399 = vadd.f32 %v6300, %v6398
        %v6400 = vand.u32 %v5933, 4294901760
        %6401 = vmatmul.f32.gmra.mxu0 %v6400
        %v6402 = vpop.f32.mrf.mxu0
        %v6403 = vadd.f32 %v6306, %v6402
        %v6404 = vand.u32 %v5936, 4294901760
        %6405 = vmatmul.f32.gmra.mxu0 %v6404
        %v6406 = vpop.f32.mrf.mxu0
        %v6407 = vadd.f32 %v6312, %v6406
        %v6408 = vand.u32 %v5939, 4294901760
        %6409 = vmatmul.f32.gmra.mxu0 %v6408
        %v6410 = vpop.f32.mrf.mxu0
        %v6411 = vadd.f32 %v6318, %v6410
        %v6412 = vand.u32 %v5942, 4294901760
        %6413 = vmatmul.f32.gmra.mxu0 %v6412
        %v6414 = vpop.f32.mrf.mxu0
        %v6415 = vadd.f32 %v6324, %v6414
        %v6416 = vand.u32 %v5945, 4294901760
        %6417 = vmatmul.f32.gmra.mxu0 %v6416
        %v6418 = vpop.f32.mrf.mxu0
        %v6419 = vadd.f32 %v6330, %v6418
        %v6420 = vand.u32 %v5948, 4294901760
        %6421 = vmatmul.f32.gmra.mxu0 %v6420
        %v6422 = vpop.f32.mrf.mxu0
        %v6423 = vadd.f32 %v6336, %v6422
        %6424 = vdwg.mxu0
        %6425 = vmatpush.xpose.msra.mxu0 0.0
        %6426 = vmatpush.xpose.msra.mxu0 0.0
        %6427 = vmatpush.xpose.msra.mxu0 0.0
        %6428 = vmatpush.xpose.msra.mxu0 0.0
        %6429 = vmatpush.xpose.msra.mxu0 0.0
        %6430 = vmatpush.xpose.msra.mxu0 0.0
        %v6431 = vand.u32 %v5490, 4294901760
        %6432 = vmatpush.xpose.msra.mxu0 %v6431
        %v6433 = vand.u32 %v5487, 4294901760
        %6434 = vmatpush.xpose.msra.mxu0 %v6433
        %v6435 = vand.u32 %v5484, 4294901760
        %6436 = vmatpush.xpose.msra.mxu0 %v6435
        %v6437 = vand.u32 %v5481, 4294901760
        %6438 = vmatpush.xpose.msra.mxu0 %v6437
        %v6439 = vand.u32 %v5478, 4294901760
        %6440 = vmatpush.xpose.msra.mxu0 %v6439
        %v6441 = vand.u32 %v5475, 4294901760
        %6442 = vmatpush.xpose.msra.mxu0 %v6441
        %v6443 = vand.u32 %v5472, 4294901760
        %6444 = vmatpush.xpose.msra.mxu0 %v6443
        %v6445 = vand.u32 %v5469, 4294901760
        %6446 = vmatpush.xpose.msra.mxu0 %v6445
        %v6447 = vand.u32 %v5466, 4294901760
        %6448 = vmatpush.xpose.msra.mxu0 %v6447
        %v6449 = vand.u32 %v5463, 4294901760
        %6450 = vmatpush.xpose.msra.mxu0 %v6449
        %v6451 = vand.u32 %v5921, 4294901760
        %6452 = vmatmul.f32.gmra.mxu0 %v6451
        %v6453 = vpop.f32.mrf.mxu0
        %v6454 = vadd.f32 %v6387, %v6453
        %v6455 = vand.u32 %v5924, 4294901760
        %6456 = vmatmul.f32.gmra.mxu0 %v6455
        %v6457 = vpop.f32.mrf.mxu0
        %v6458 = vadd.f32 %v6391, %v6457
        %v6459 = vand.u32 %v5927, 4294901760
        %6460 = vmatmul.f32.gmra.mxu0 %v6459
        %v6461 = vpop.f32.mrf.mxu0
        %v6462 = vadd.f32 %v6395, %v6461
        %v6463 = vand.u32 %v5930, 4294901760
        %6464 = vmatmul.f32.gmra.mxu0 %v6463
        %v6465 = vpop.f32.mrf.mxu0
        %v6466 = vadd.f32 %v6399, %v6465
        %v6467 = vand.u32 %v5933, 4294901760
        %6468 = vmatmul.f32.gmra.mxu0 %v6467
        %v6469 = vpop.f32.mrf.mxu0
        %v6470 = vadd.f32 %v6403, %v6469
        %v6471 = vand.u32 %v5936, 4294901760
        %6472 = vmatmul.f32.gmra.mxu0 %v6471
        %v6473 = vpop.f32.mrf.mxu0
        %v6474 = vadd.f32 %v6407, %v6473
        %v6475 = vand.u32 %v5939, 4294901760
        %6476 = vmatmul.f32.gmra.mxu0 %v6475
        %v6477 = vpop.f32.mrf.mxu0
        %v6478 = vadd.f32 %v6411, %v6477
        %v6479 = vand.u32 %v5942, 4294901760
        %6480 = vmatmul.f32.gmra.mxu0 %v6479
        %v6481 = vpop.f32.mrf.mxu0
        %v6482 = vadd.f32 %v6415, %v6481
        %v6483 = vand.u32 %v5945, 4294901760
        %6484 = vmatmul.f32.gmra.mxu0 %v6483
        %v6485 = vpop.f32.mrf.mxu0
        %v6486 = vadd.f32 %v6419, %v6485
        %v6487 = vand.u32 %v5948, 4294901760
        %6488 = vmatmul.f32.gmra.mxu0 %v6487
        %v6489 = vpop.f32.mrf.mxu0
        %v6490 = vadd.f32 %v6423, %v6489
        %6491 = vdwg.mxu0
        %v6492 = vmul.f32 %v6454, %v4054
        %v6493 = vmul.f32 %v6458, %v4055
        %v6494 = vmul.f32 %v6462, %v4056
        %v6495 = vmul.f32 %v6466, %v4057
        %v6496 = vmul.f32 %v6470, %v4058
        %v6497 = vmul.f32 %v6474, %v4059
        %v6498 = vmul.f32 %v6478, %v4060
        %v6499 = vmul.f32 %v6482, %v4061
        %v6500 = vmul.f32 %v6486, %v4062
        %v6501 = vmul.f32 %v6490, %v4063
        %6502 = vmatpush.msra.mxu0 0.0
        %6503 = vmatpush.msra.mxu0 0.0
        %6504 = vmatpush.msra.mxu0 0.0
        %6505 = vmatpush.msra.mxu0 0.0
        %6506 = vmatpush.msra.mxu0 0.0
        %6507 = vmatpush.msra.mxu0 0.0
        %v6508 = vand.u32 %v6501, 4294901760
        %6509 = vmatpush.msra.mxu0 %v6508
        %v6510 = vand.u32 %v6500, 4294901760
        %6511 = vmatpush.msra.mxu0 %v6510
        %v6512 = vand.u32 %v6499, 4294901760
        %6513 = vmatpush.msra.mxu0 %v6512
        %v6514 = vand.u32 %v6498, 4294901760
        %6515 = vmatpush.msra.mxu0 %v6514
        %v6516 = vand.u32 %v6497, 4294901760
        %6517 = vmatpush.msra.mxu0 %v6516
        %v6518 = vand.u32 %v6496, 4294901760
        %6519 = vmatpush.msra.mxu0 %v6518
        %v6520 = vand.u32 %v6495, 4294901760
        %6521 = vmatpush.msra.mxu0 %v6520
        %v6522 = vand.u32 %v6494, 4294901760
        %6523 = vmatpush.msra.mxu0 %v6522
        %v6524 = vand.u32 %v6493, 4294901760
        %6525 = vmatpush.msra.mxu0 %v6524
        %v6526 = vand.u32 %v6492, 4294901760
        %6527 = vmatpush.msra.mxu0 %v6526
        %v6528 = vand.u32 %v3513, 4294901760
        %v6529 = vsub.f32 %v3513, %v6528
        %v6530 = vand.u32 %v6529, 4294901760
        %v6531 = vsub.f32 %v6529, %v6530
        %v6532 = vand.u32 %v6531, 4294901760
        %6533 = vmatmul.f32.gmra.mxu0 %v6532
        %v6534 = vpop.f32.mrf.mxu0
        %v6535 = vadd.f32 0.0, %v6534
        %6536 = vdwg.mxu0
        %6537 = vmatpush.msra.mxu0 0.0
        %6538 = vmatpush.msra.mxu0 0.0
        %6539 = vmatpush.msra.mxu0 0.0
        %6540 = vmatpush.msra.mxu0 0.0
        %6541 = vmatpush.msra.mxu0 0.0
        %6542 = vmatpush.msra.mxu0 0.0
        %v6543 = vand.u32 %v6501, 4294901760
        %v6544 = vsub.f32 %v6501, %v6543
        %v6545 = vand.u32 %v6544, 4294901760
        %v6546 = vsub.f32 %v6544, %v6545
        %v6547 = vand.u32 %v6546, 4294901760
        %6548 = vmatpush.msra.mxu0 %v6547
        %v6549 = vand.u32 %v6500, 4294901760
        %v6550 = vsub.f32 %v6500, %v6549
        %v6551 = vand.u32 %v6550, 4294901760
        %v6552 = vsub.f32 %v6550, %v6551
        %v6553 = vand.u32 %v6552, 4294901760
        %6554 = vmatpush.msra.mxu0 %v6553
        %v6555 = vand.u32 %v6499, 4294901760
        %v6556 = vsub.f32 %v6499, %v6555
        %v6557 = vand.u32 %v6556, 4294901760
        %v6558 = vsub.f32 %v6556, %v6557
        %v6559 = vand.u32 %v6558, 4294901760
        %6560 = vmatpush.msra.mxu0 %v6559
        %v6561 = vand.u32 %v6498, 4294901760
        %v6562 = vsub.f32 %v6498, %v6561
        %v6563 = vand.u32 %v6562, 4294901760
        %v6564 = vsub.f32 %v6562, %v6563
        %v6565 = vand.u32 %v6564, 4294901760
        %6566 = vmatpush.msra.mxu0 %v6565
        %v6567 = vand.u32 %v6497, 4294901760
        %v6568 = vsub.f32 %v6497, %v6567
        %v6569 = vand.u32 %v6568, 4294901760
        %v6570 = vsub.f32 %v6568, %v6569
        %v6571 = vand.u32 %v6570, 4294901760
        %6572 = vmatpush.msra.mxu0 %v6571
        %v6573 = vand.u32 %v6496, 4294901760
        %v6574 = vsub.f32 %v6496, %v6573
        %v6575 = vand.u32 %v6574, 4294901760
        %v6576 = vsub.f32 %v6574, %v6575
        %v6577 = vand.u32 %v6576, 4294901760
        %6578 = vmatpush.msra.mxu0 %v6577
        %v6579 = vand.u32 %v6495, 4294901760
        %v6580 = vsub.f32 %v6495, %v6579
        %v6581 = vand.u32 %v6580, 4294901760
        %v6582 = vsub.f32 %v6580, %v6581
        %v6583 = vand.u32 %v6582, 4294901760
        %6584 = vmatpush.msra.mxu0 %v6583
        %v6585 = vand.u32 %v6494, 4294901760
        %v6586 = vsub.f32 %v6494, %v6585
        %v6587 = vand.u32 %v6586, 4294901760
        %v6588 = vsub.f32 %v6586, %v6587
        %v6589 = vand.u32 %v6588, 4294901760
        %6590 = vmatpush.msra.mxu0 %v6589
        %v6591 = vand.u32 %v6493, 4294901760
        %v6592 = vsub.f32 %v6493, %v6591
        %v6593 = vand.u32 %v6592, 4294901760
        %v6594 = vsub.f32 %v6592, %v6593
        %v6595 = vand.u32 %v6594, 4294901760
        %6596 = vmatpush.msra.mxu0 %v6595
        %v6597 = vand.u32 %v6492, 4294901760
        %v6598 = vsub.f32 %v6492, %v6597
        %v6599 = vand.u32 %v6598, 4294901760
        %v6600 = vsub.f32 %v6598, %v6599
        %v6601 = vand.u32 %v6600, 4294901760
        %6602 = vmatpush.msra.mxu0 %v6601
        %v6603 = vand.u32 %v3513, 4294901760
        %6604 = vmatmul.f32.gmra.mxu0 %v6603
        %v6605 = vpop.f32.mrf.mxu0
        %v6606 = vadd.f32 %v6535, %v6605
        %6607 = vdwg.mxu0
        %6608 = vmatpush.msra.mxu0 0.0
        %6609 = vmatpush.msra.mxu0 0.0
        %6610 = vmatpush.msra.mxu0 0.0
        %6611 = vmatpush.msra.mxu0 0.0
        %6612 = vmatpush.msra.mxu0 0.0
        %6613 = vmatpush.msra.mxu0 0.0
        %v6614 = vand.u32 %v6501, 4294901760
        %v6615 = vsub.f32 %v6501, %v6614
        %6616 = vmatpush.msra.mxu0 %v6615
        %v6617 = vand.u32 %v6500, 4294901760
        %v6618 = vsub.f32 %v6500, %v6617
        %6619 = vmatpush.msra.mxu0 %v6618
        %v6620 = vand.u32 %v6499, 4294901760
        %v6621 = vsub.f32 %v6499, %v6620
        %6622 = vmatpush.msra.mxu0 %v6621
        %v6623 = vand.u32 %v6498, 4294901760
        %v6624 = vsub.f32 %v6498, %v6623
        %6625 = vmatpush.msra.mxu0 %v6624
        %v6626 = vand.u32 %v6497, 4294901760
        %v6627 = vsub.f32 %v6497, %v6626
        %6628 = vmatpush.msra.mxu0 %v6627
        %v6629 = vand.u32 %v6496, 4294901760
        %v6630 = vsub.f32 %v6496, %v6629
        %6631 = vmatpush.msra.mxu0 %v6630
        %v6632 = vand.u32 %v6495, 4294901760
        %v6633 = vsub.f32 %v6495, %v6632
        %6634 = vmatpush.msra.mxu0 %v6633
        %v6635 = vand.u32 %v6494, 4294901760
        %v6636 = vsub.f32 %v6494, %v6635
        %6637 = vmatpush.msra.mxu0 %v6636
        %v6638 = vand.u32 %v6493, 4294901760
        %v6639 = vsub.f32 %v6493, %v6638
        %6640 = vmatpush.msra.mxu0 %v6639
        %v6641 = vand.u32 %v6492, 4294901760
        %v6642 = vsub.f32 %v6492, %v6641
        %6643 = vmatpush.msra.mxu0 %v6642
        %v6644 = vand.u32 %v3513, 4294901760
        %v6645 = vsub.f32 %v3513, %v6644
        %6646 = vmatmul.f32.gmra.mxu0 %v6645
        %v6647 = vpop.f32.mrf.mxu0
        %v6648 = vadd.f32 %v6606, %v6647
        %6649 = vdwg.mxu0
        %6650 = vmatpush.msra.mxu0 0.0
        %6651 = vmatpush.msra.mxu0 0.0
        %6652 = vmatpush.msra.mxu0 0.0
        %6653 = vmatpush.msra.mxu0 0.0
        %6654 = vmatpush.msra.mxu0 0.0
        %6655 = vmatpush.msra.mxu0 0.0
        %v6656 = vand.u32 %v6501, 4294901760
        %6657 = vmatpush.msra.mxu0 %v6656
        %v6658 = vand.u32 %v6500, 4294901760
        %6659 = vmatpush.msra.mxu0 %v6658
        %v6660 = vand.u32 %v6499, 4294901760
        %6661 = vmatpush.msra.mxu0 %v6660
        %v6662 = vand.u32 %v6498, 4294901760
        %6663 = vmatpush.msra.mxu0 %v6662
        %v6664 = vand.u32 %v6497, 4294901760
        %6665 = vmatpush.msra.mxu0 %v6664
        %v6666 = vand.u32 %v6496, 4294901760
        %6667 = vmatpush.msra.mxu0 %v6666
        %v6668 = vand.u32 %v6495, 4294901760
        %6669 = vmatpush.msra.mxu0 %v6668
        %v6670 = vand.u32 %v6494, 4294901760
        %6671 = vmatpush.msra.mxu0 %v6670
        %v6672 = vand.u32 %v6493, 4294901760
        %6673 = vmatpush.msra.mxu0 %v6672
        %v6674 = vand.u32 %v6492, 4294901760
        %6675 = vmatpush.msra.mxu0 %v6674
        %v6676 = vand.u32 %v3513, 4294901760
        %v6677 = vsub.f32 %v3513, %v6676
        %v6678 = vand.u32 %v6677, 4294901760
        %6679 = vmatmul.f32.gmra.mxu0 %v6678
        %v6680 = vpop.f32.mrf.mxu0
        %v6681 = vadd.f32 %v6648, %v6680
        %6682 = vdwg.mxu0
        %6683 = vmatpush.msra.mxu0 0.0
        %6684 = vmatpush.msra.mxu0 0.0
        %6685 = vmatpush.msra.mxu0 0.0
        %6686 = vmatpush.msra.mxu0 0.0
        %6687 = vmatpush.msra.mxu0 0.0
        %6688 = vmatpush.msra.mxu0 0.0
        %v6689 = vand.u32 %v6501, 4294901760
        %v6690 = vsub.f32 %v6501, %v6689
        %v6691 = vand.u32 %v6690, 4294901760
        %6692 = vmatpush.msra.mxu0 %v6691
        %v6693 = vand.u32 %v6500, 4294901760
        %v6694 = vsub.f32 %v6500, %v6693
        %v6695 = vand.u32 %v6694, 4294901760
        %6696 = vmatpush.msra.mxu0 %v6695
        %v6697 = vand.u32 %v6499, 4294901760
        %v6698 = vsub.f32 %v6499, %v6697
        %v6699 = vand.u32 %v6698, 4294901760
        %6700 = vmatpush.msra.mxu0 %v6699
        %v6701 = vand.u32 %v6498, 4294901760
        %v6702 = vsub.f32 %v6498, %v6701
        %v6703 = vand.u32 %v6702, 4294901760
        %6704 = vmatpush.msra.mxu0 %v6703
        %v6705 = vand.u32 %v6497, 4294901760
        %v6706 = vsub.f32 %v6497, %v6705
        %v6707 = vand.u32 %v6706, 4294901760
        %6708 = vmatpush.msra.mxu0 %v6707
        %v6709 = vand.u32 %v6496, 4294901760
        %v6710 = vsub.f32 %v6496, %v6709
        %v6711 = vand.u32 %v6710, 4294901760
        %6712 = vmatpush.msra.mxu0 %v6711
        %v6713 = vand.u32 %v6495, 4294901760
        %v6714 = vsub.f32 %v6495, %v6713
        %v6715 = vand.u32 %v6714, 4294901760
        %6716 = vmatpush.msra.mxu0 %v6715
        %v6717 = vand.u32 %v6494, 4294901760
        %v6718 = vsub.f32 %v6494, %v6717
        %v6719 = vand.u32 %v6718, 4294901760
        %6720 = vmatpush.msra.mxu0 %v6719
        %v6721 = vand.u32 %v6493, 4294901760
        %v6722 = vsub.f32 %v6493, %v6721
        %v6723 = vand.u32 %v6722, 4294901760
        %6724 = vmatpush.msra.mxu0 %v6723
        %v6725 = vand.u32 %v6492, 4294901760
        %v6726 = vsub.f32 %v6492, %v6725
        %v6727 = vand.u32 %v6726, 4294901760
        %6728 = vmatpush.msra.mxu0 %v6727
        %v6729 = vand.u32 %v3513, 4294901760
        %6730 = vmatmul.f32.gmra.mxu0 %v6729
        %v6731 = vpop.f32.mrf.mxu0
        %v6732 = vadd.f32 %v6681, %v6731
        %6733 = vdwg.mxu0
        %6734 = vmatpush.msra.mxu0 0.0
        %6735 = vmatpush.msra.mxu0 0.0
        %6736 = vmatpush.msra.mxu0 0.0
        %6737 = vmatpush.msra.mxu0 0.0
        %6738 = vmatpush.msra.mxu0 0.0
        %6739 = vmatpush.msra.mxu0 0.0
        %v6740 = vand.u32 %v6501, 4294901760
        %6741 = vmatpush.msra.mxu0 %v6740
        %v6742 = vand.u32 %v6500, 4294901760
        %6743 = vmatpush.msra.mxu0 %v6742
        %v6744 = vand.u32 %v6499, 4294901760
        %6745 = vmatpush.msra.mxu0 %v6744
        %v6746 = vand.u32 %v6498, 4294901760
        %6747 = vmatpush.msra.mxu0 %v6746
        %v6748 = vand.u32 %v6497, 4294901760
        %6749 = vmatpush.msra.mxu0 %v6748
        %v6750 = vand.u32 %v6496, 4294901760
        %6751 = vmatpush.msra.mxu0 %v6750
        %v6752 = vand.u32 %v6495, 4294901760
        %6753 = vmatpush.msra.mxu0 %v6752
        %v6754 = vand.u32 %v6494, 4294901760
        %6755 = vmatpush.msra.mxu0 %v6754
        %v6756 = vand.u32 %v6493, 4294901760
        %6757 = vmatpush.msra.mxu0 %v6756
        %v6758 = vand.u32 %v6492, 4294901760
        %6759 = vmatpush.msra.mxu0 %v6758
        %v6760 = vand.u32 %v3513, 4294901760
        %6761 = vmatmul.f32.gmra.mxu0 %v6760
        %v6762 = vpop.f32.mrf.mxu0
        %v6763 = vadd.f32 %v6732, %v6762
        %6764 = vdwg.mxu0
        %v6765 = vmul.f32 %v3501, %v3501
        %v6767 = vsel %vm768, %v6765, 0
        %6769 = vmatpush.msra.mxu0 0.0
        %6770 = vmatpush.msra.mxu0 0.0
        %6771 = vmatpush.msra.mxu0 0.0
        %6772 = vmatpush.msra.mxu0 0.0
        %6773 = vmatpush.msra.mxu0 0.0
        %6774 = vmatpush.msra.mxu0 0.0
        %v6775 = vand.u32 %v6501, 4294901760
        %6776 = vmatpush.msra.mxu0 %v6775
        %v6777 = vand.u32 %v6500, 4294901760
        %6778 = vmatpush.msra.mxu0 %v6777
        %v6779 = vand.u32 %v6499, 4294901760
        %6780 = vmatpush.msra.mxu0 %v6779
        %v6781 = vand.u32 %v6498, 4294901760
        %6782 = vmatpush.msra.mxu0 %v6781
        %v6783 = vand.u32 %v6497, 4294901760
        %6784 = vmatpush.msra.mxu0 %v6783
        %v6785 = vand.u32 %v6496, 4294901760
        %6786 = vmatpush.msra.mxu0 %v6785
        %v6787 = vand.u32 %v6495, 4294901760
        %6788 = vmatpush.msra.mxu0 %v6787
        %v6789 = vand.u32 %v6494, 4294901760
        %6790 = vmatpush.msra.mxu0 %v6789
        %v6791 = vand.u32 %v6493, 4294901760
        %6792 = vmatpush.msra.mxu0 %v6791
        %v6793 = vand.u32 %v6492, 4294901760
        %6794 = vmatpush.msra.mxu0 %v6793
        %v6795 = vand.u32 %v6767, 4294901760
        %v6796 = vsub.f32 %v6767, %v6795
        %v6797 = vand.u32 %v6796, 4294901760
        %v6798 = vsub.f32 %v6796, %v6797
        %v6799 = vand.u32 %v6798, 4294901760
        %6800 = vmatmul.f32.gmra.mxu0 %v6799
        %v6801 = vpop.f32.mrf.mxu0
        %v6802 = vadd.f32 0.0, %v6801
        %6803 = vdwg.mxu0
        %6804 = vmatpush.msra.mxu0 0.0
        %6805 = vmatpush.msra.mxu0 0.0
        %6806 = vmatpush.msra.mxu0 0.0
        %6807 = vmatpush.msra.mxu0 0.0
        %6808 = vmatpush.msra.mxu0 0.0
        %6809 = vmatpush.msra.mxu0 0.0
        %v6810 = vand.u32 %v6501, 4294901760
        %v6811 = vsub.f32 %v6501, %v6810
        %v6812 = vand.u32 %v6811, 4294901760
        %v6813 = vsub.f32 %v6811, %v6812
        %v6814 = vand.u32 %v6813, 4294901760
        %6815 = vmatpush.msra.mxu0 %v6814
        %v6816 = vand.u32 %v6500, 4294901760
        %v6817 = vsub.f32 %v6500, %v6816
        %v6818 = vand.u32 %v6817, 4294901760
        %v6819 = vsub.f32 %v6817, %v6818
        %v6820 = vand.u32 %v6819, 4294901760
        %6821 = vmatpush.msra.mxu0 %v6820
        %v6822 = vand.u32 %v6499, 4294901760
        %v6823 = vsub.f32 %v6499, %v6822
        %v6824 = vand.u32 %v6823, 4294901760
        %v6825 = vsub.f32 %v6823, %v6824
        %v6826 = vand.u32 %v6825, 4294901760
        %6827 = vmatpush.msra.mxu0 %v6826
        %v6828 = vand.u32 %v6498, 4294901760
        %v6829 = vsub.f32 %v6498, %v6828
        %v6830 = vand.u32 %v6829, 4294901760
        %v6831 = vsub.f32 %v6829, %v6830
        %v6832 = vand.u32 %v6831, 4294901760
        %6833 = vmatpush.msra.mxu0 %v6832
        %v6834 = vand.u32 %v6497, 4294901760
        %v6835 = vsub.f32 %v6497, %v6834
        %v6836 = vand.u32 %v6835, 4294901760
        %v6837 = vsub.f32 %v6835, %v6836
        %v6838 = vand.u32 %v6837, 4294901760
        %6839 = vmatpush.msra.mxu0 %v6838
        %v6840 = vand.u32 %v6496, 4294901760
        %v6841 = vsub.f32 %v6496, %v6840
        %v6842 = vand.u32 %v6841, 4294901760
        %v6843 = vsub.f32 %v6841, %v6842
        %v6844 = vand.u32 %v6843, 4294901760
        %6845 = vmatpush.msra.mxu0 %v6844
        %v6846 = vand.u32 %v6495, 4294901760
        %v6847 = vsub.f32 %v6495, %v6846
        %v6848 = vand.u32 %v6847, 4294901760
        %v6849 = vsub.f32 %v6847, %v6848
        %v6850 = vand.u32 %v6849, 4294901760
        %6851 = vmatpush.msra.mxu0 %v6850
        %v6852 = vand.u32 %v6494, 4294901760
        %v6853 = vsub.f32 %v6494, %v6852
        %v6854 = vand.u32 %v6853, 4294901760
        %v6855 = vsub.f32 %v6853, %v6854
        %v6856 = vand.u32 %v6855, 4294901760
        %6857 = vmatpush.msra.mxu0 %v6856
        %v6858 = vand.u32 %v6493, 4294901760
        %v6859 = vsub.f32 %v6493, %v6858
        %v6860 = vand.u32 %v6859, 4294901760
        %v6861 = vsub.f32 %v6859, %v6860
        %v6862 = vand.u32 %v6861, 4294901760
        %6863 = vmatpush.msra.mxu0 %v6862
        %v6864 = vand.u32 %v6492, 4294901760
        %v6865 = vsub.f32 %v6492, %v6864
        %v6866 = vand.u32 %v6865, 4294901760
        %v6867 = vsub.f32 %v6865, %v6866
        %v6868 = vand.u32 %v6867, 4294901760
        %6869 = vmatpush.msra.mxu0 %v6868
        %v6870 = vand.u32 %v6767, 4294901760
        %6871 = vmatmul.f32.gmra.mxu0 %v6870
        %v6872 = vpop.f32.mrf.mxu0
        %v6873 = vadd.f32 %v6802, %v6872
        %6874 = vdwg.mxu0
        %6875 = vmatpush.msra.mxu0 0.0
        %6876 = vmatpush.msra.mxu0 0.0
        %6877 = vmatpush.msra.mxu0 0.0
        %6878 = vmatpush.msra.mxu0 0.0
        %6879 = vmatpush.msra.mxu0 0.0
        %6880 = vmatpush.msra.mxu0 0.0
        %v6881 = vand.u32 %v6501, 4294901760
        %v6882 = vsub.f32 %v6501, %v6881
        %6883 = vmatpush.msra.mxu0 %v6882
        %v6884 = vand.u32 %v6500, 4294901760
        %v6885 = vsub.f32 %v6500, %v6884
        %6886 = vmatpush.msra.mxu0 %v6885
        %v6887 = vand.u32 %v6499, 4294901760
        %v6888 = vsub.f32 %v6499, %v6887
        %6889 = vmatpush.msra.mxu0 %v6888
        %v6890 = vand.u32 %v6498, 4294901760
        %v6891 = vsub.f32 %v6498, %v6890
        %6892 = vmatpush.msra.mxu0 %v6891
        %v6893 = vand.u32 %v6497, 4294901760
        %v6894 = vsub.f32 %v6497, %v6893
        %6895 = vmatpush.msra.mxu0 %v6894
        %v6896 = vand.u32 %v6496, 4294901760
        %v6897 = vsub.f32 %v6496, %v6896
        %6898 = vmatpush.msra.mxu0 %v6897
        %v6899 = vand.u32 %v6495, 4294901760
        %v6900 = vsub.f32 %v6495, %v6899
        %6901 = vmatpush.msra.mxu0 %v6900
        %v6902 = vand.u32 %v6494, 4294901760
        %v6903 = vsub.f32 %v6494, %v6902
        %6904 = vmatpush.msra.mxu0 %v6903
        %v6905 = vand.u32 %v6493, 4294901760
        %v6906 = vsub.f32 %v6493, %v6905
        %6907 = vmatpush.msra.mxu0 %v6906
        %v6908 = vand.u32 %v6492, 4294901760
        %v6909 = vsub.f32 %v6492, %v6908
        %6910 = vmatpush.msra.mxu0 %v6909
        %v6911 = vand.u32 %v6767, 4294901760
        %v6912 = vsub.f32 %v6767, %v6911
        %6913 = vmatmul.f32.gmra.mxu0 %v6912
        %v6914 = vpop.f32.mrf.mxu0
        %v6915 = vadd.f32 %v6873, %v6914
        %6916 = vdwg.mxu0
        %6917 = vmatpush.msra.mxu0 0.0
        %6918 = vmatpush.msra.mxu0 0.0
        %6919 = vmatpush.msra.mxu0 0.0
        %6920 = vmatpush.msra.mxu0 0.0
        %6921 = vmatpush.msra.mxu0 0.0
        %6922 = vmatpush.msra.mxu0 0.0
        %v6923 = vand.u32 %v6501, 4294901760
        %6924 = vmatpush.msra.mxu0 %v6923
        %v6925 = vand.u32 %v6500, 4294901760
        %6926 = vmatpush.msra.mxu0 %v6925
        %v6927 = vand.u32 %v6499, 4294901760
        %6928 = vmatpush.msra.mxu0 %v6927
        %v6929 = vand.u32 %v6498, 4294901760
        %6930 = vmatpush.msra.mxu0 %v6929
        %v6931 = vand.u32 %v6497, 4294901760
        %6932 = vmatpush.msra.mxu0 %v6931
        %v6933 = vand.u32 %v6496, 4294901760
        %6934 = vmatpush.msra.mxu0 %v6933
        %v6935 = vand.u32 %v6495, 4294901760
        %6936 = vmatpush.msra.mxu0 %v6935
        %v6937 = vand.u32 %v6494, 4294901760
        %6938 = vmatpush.msra.mxu0 %v6937
        %v6939 = vand.u32 %v6493, 4294901760
        %6940 = vmatpush.msra.mxu0 %v6939
        %v6941 = vand.u32 %v6492, 4294901760
        %6942 = vmatpush.msra.mxu0 %v6941
        %v6943 = vand.u32 %v6767, 4294901760
        %v6944 = vsub.f32 %v6767, %v6943
        %v6945 = vand.u32 %v6944, 4294901760
        %6946 = vmatmul.f32.gmra.mxu0 %v6945
        %v6947 = vpop.f32.mrf.mxu0
        %v6948 = vadd.f32 %v6915, %v6947
        %6949 = vdwg.mxu0
        %6950 = vmatpush.msra.mxu0 0.0
        %6951 = vmatpush.msra.mxu0 0.0
        %6952 = vmatpush.msra.mxu0 0.0
        %6953 = vmatpush.msra.mxu0 0.0
        %6954 = vmatpush.msra.mxu0 0.0
        %6955 = vmatpush.msra.mxu0 0.0
        %v6956 = vand.u32 %v6501, 4294901760
        %v6957 = vsub.f32 %v6501, %v6956
        %v6958 = vand.u32 %v6957, 4294901760
        %6959 = vmatpush.msra.mxu0 %v6958
        %v6960 = vand.u32 %v6500, 4294901760
        %v6961 = vsub.f32 %v6500, %v6960
        %v6962 = vand.u32 %v6961, 4294901760
        %6963 = vmatpush.msra.mxu0 %v6962
        %v6964 = vand.u32 %v6499, 4294901760
        %v6965 = vsub.f32 %v6499, %v6964
        %v6966 = vand.u32 %v6965, 4294901760
        %6967 = vmatpush.msra.mxu0 %v6966
        %v6968 = vand.u32 %v6498, 4294901760
        %v6969 = vsub.f32 %v6498, %v6968
        %v6970 = vand.u32 %v6969, 4294901760
        %6971 = vmatpush.msra.mxu0 %v6970
        %v6972 = vand.u32 %v6497, 4294901760
        %v6973 = vsub.f32 %v6497, %v6972
        %v6974 = vand.u32 %v6973, 4294901760
        %6975 = vmatpush.msra.mxu0 %v6974
        %v6976 = vand.u32 %v6496, 4294901760
        %v6977 = vsub.f32 %v6496, %v6976
        %v6978 = vand.u32 %v6977, 4294901760
        %6979 = vmatpush.msra.mxu0 %v6978
        %v6980 = vand.u32 %v6495, 4294901760
        %v6981 = vsub.f32 %v6495, %v6980
        %v6982 = vand.u32 %v6981, 4294901760
        %6983 = vmatpush.msra.mxu0 %v6982
        %v6984 = vand.u32 %v6494, 4294901760
        %v6985 = vsub.f32 %v6494, %v6984
        %v6986 = vand.u32 %v6985, 4294901760
        %6987 = vmatpush.msra.mxu0 %v6986
        %v6988 = vand.u32 %v6493, 4294901760
        %v6989 = vsub.f32 %v6493, %v6988
        %v6990 = vand.u32 %v6989, 4294901760
        %6991 = vmatpush.msra.mxu0 %v6990
        %v6992 = vand.u32 %v6492, 4294901760
        %v6993 = vsub.f32 %v6492, %v6992
        %v6994 = vand.u32 %v6993, 4294901760
        %6995 = vmatpush.msra.mxu0 %v6994
        %v6996 = vand.u32 %v6767, 4294901760
        %6997 = vmatmul.f32.gmra.mxu0 %v6996
        %v6998 = vpop.f32.mrf.mxu0
        %v6999 = vadd.f32 %v6948, %v6998
        %7000 = vdwg.mxu0
        %7001 = vmatpush.msra.mxu0 0.0
        %7002 = vmatpush.msra.mxu0 0.0
        %7003 = vmatpush.msra.mxu0 0.0
        %7004 = vmatpush.msra.mxu0 0.0
        %7005 = vmatpush.msra.mxu0 0.0
        %7006 = vmatpush.msra.mxu0 0.0
        %v7007 = vand.u32 %v6501, 4294901760
        %7008 = vmatpush.msra.mxu0 %v7007
        %v7009 = vand.u32 %v6500, 4294901760
        %7010 = vmatpush.msra.mxu0 %v7009
        %v7011 = vand.u32 %v6499, 4294901760
        %7012 = vmatpush.msra.mxu0 %v7011
        %v7013 = vand.u32 %v6498, 4294901760
        %7014 = vmatpush.msra.mxu0 %v7013
        %v7015 = vand.u32 %v6497, 4294901760
        %7016 = vmatpush.msra.mxu0 %v7015
        %v7017 = vand.u32 %v6496, 4294901760
        %7018 = vmatpush.msra.mxu0 %v7017
        %v7019 = vand.u32 %v6495, 4294901760
        %7020 = vmatpush.msra.mxu0 %v7019
        %v7021 = vand.u32 %v6494, 4294901760
        %7022 = vmatpush.msra.mxu0 %v7021
        %v7023 = vand.u32 %v6493, 4294901760
        %7024 = vmatpush.msra.mxu0 %v7023
        %v7025 = vand.u32 %v6492, 4294901760
        %7026 = vmatpush.msra.mxu0 %v7025
        %v7027 = vand.u32 %v6767, 4294901760
        %7028 = vmatmul.f32.gmra.mxu0 %v7027
        %v7029 = vpop.f32.mrf.mxu0
        %v7030 = vadd.f32 %v6999, %v7029
        %7031 = vdwg.mxu0
        %v7032 = vmul.f32 %v6763, %v6763
        %v7033 = vsub.f32 %v7030, %v7032
        %v7034 = vadd.f32 %v7033, 0.0001
        %v7035 = vsub.f32 %v3501, %v6763
        %v7036 = vrsqrt.pop %v7034
        %v7037 = vmul.f32 %v7036, %v7034
        %v7038 = vmul.f32 %v7037, %v7036
        %v7039 = vmul.f32 0.5, %v7038
        %v7040 = vsub.f32 1.5, %v7039
        %v7041 = vmul.f32 %v7036, %v7040
        %vm7042 = vweird.f32 %v7034
        %vm7043 = vweird.f32 %v7036
        %vm7044 = vmor %vm7042, %vm7043
        %v7045 = vsel %vm7044, %v7036, %v7041
        %v7046 = vmul.f32 %v7035, %v7045
        %v7047 = vld [vmem:[%s7] sm:$0xff]
        %v7048 = vld [vmem:[%s7 + $0x8] sm:$0xff]
        %v7049 = vld [vmem:[%s7 + $0x10] sm:$0xff]
        %v7050 = vld [vmem:[%s7 + $0x18] sm:$0xff]
        %v7051 = vld [vmem:[%s7 + $0x20] sm:$0xff]
        %v7052 = vld [vmem:[%s7 + $0x28] sm:$0xff]
        %v7053 = vld [vmem:[%s7 + $0x30] sm:$0xff]
        %v7054 = vld [vmem:[%s7 + $0x38] sm:$0xff]
        %v7055 = vld [vmem:[%s7 + $0x40] sm:$0xff]
        %v7056 = vld [vmem:[%s7 + $0x48] sm:$0xff]
        %v7058 = vsel %vm768, %v7046, 0
        %7060 = vmatpush.msra.mxu0 0.0
        %7061 = vmatpush.msra.mxu0 0.0
        %7062 = vmatpush.msra.mxu0 0.0
        %7063 = vmatpush.msra.mxu0 0.0
        %7064 = vmatpush.msra.mxu0 0.0
        %7065 = vmatpush.msra.mxu0 0.0
        %v7066 = vand.u32 %v7056, 4294901760
        %7067 = vmatpush.msra.mxu0 %v7066
        %v7068 = vand.u32 %v7055, 4294901760
        %7069 = vmatpush.msra.mxu0 %v7068
        %v7070 = vand.u32 %v7054, 4294901760
        %7071 = vmatpush.msra.mxu0 %v7070
        %v7072 = vand.u32 %v7053, 4294901760
        %7073 = vmatpush.msra.mxu0 %v7072
        %v7074 = vand.u32 %v7052, 4294901760
        %7075 = vmatpush.msra.mxu0 %v7074
        %v7076 = vand.u32 %v7051, 4294901760
        %7077 = vmatpush.msra.mxu0 %v7076
        %v7078 = vand.u32 %v7050, 4294901760
        %7079 = vmatpush.msra.mxu0 %v7078
        %v7080 = vand.u32 %v7049, 4294901760
        %7081 = vmatpush.msra.mxu0 %v7080
        %v7082 = vand.u32 %v7048, 4294901760
        %7083 = vmatpush.msra.mxu0 %v7082
        %v7084 = vand.u32 %v7047, 4294901760
        %7085 = vmatpush.msra.mxu0 %v7084
        %v7086 = vand.u32 %v7058, 4294901760
        %v7087 = vsub.f32 %v7058, %v7086
        %v7088 = vand.u32 %v7087, 4294901760
        %v7089 = vsub.f32 %v7087, %v7088
        %v7090 = vand.u32 %v7089, 4294901760
        %7091 = vmatmul.f32.gmra.mxu0 %v7090
        %v7092 = vpop.f32.mrf.mxu0
        %v7093 = vadd.f32 0.0, %v7092
        %7094 = vdwg.mxu0
        %7095 = vmatpush.msra.mxu0 0.0
        %7096 = vmatpush.msra.mxu0 0.0
        %7097 = vmatpush.msra.mxu0 0.0
        %7098 = vmatpush.msra.mxu0 0.0
        %7099 = vmatpush.msra.mxu0 0.0
        %7100 = vmatpush.msra.mxu0 0.0
        %v7101 = vand.u32 %v7056, 4294901760
        %v7102 = vsub.f32 %v7056, %v7101
        %v7103 = vand.u32 %v7102, 4294901760
        %v7104 = vsub.f32 %v7102, %v7103
        %v7105 = vand.u32 %v7104, 4294901760
        %7106 = vmatpush.msra.mxu0 %v7105
        %v7107 = vand.u32 %v7055, 4294901760
        %v7108 = vsub.f32 %v7055, %v7107
        %v7109 = vand.u32 %v7108, 4294901760
        %v7110 = vsub.f32 %v7108, %v7109
        %v7111 = vand.u32 %v7110, 4294901760
        %7112 = vmatpush.msra.mxu0 %v7111
        %v7113 = vand.u32 %v7054, 4294901760
        %v7114 = vsub.f32 %v7054, %v7113
        %v7115 = vand.u32 %v7114, 4294901760
        %v7116 = vsub.f32 %v7114, %v7115
        %v7117 = vand.u32 %v7116, 4294901760
        %7118 = vmatpush.msra.mxu0 %v7117
        %v7119 = vand.u32 %v7053, 4294901760
        %v7120 = vsub.f32 %v7053, %v7119
        %v7121 = vand.u32 %v7120, 4294901760
        %v7122 = vsub.f32 %v7120, %v7121
        %v7123 = vand.u32 %v7122, 4294901760
        %7124 = vmatpush.msra.mxu0 %v7123
        %v7125 = vand.u32 %v7052, 4294901760
        %v7126 = vsub.f32 %v7052, %v7125
        %v7127 = vand.u32 %v7126, 4294901760
        %v7128 = vsub.f32 %v7126, %v7127
        %v7129 = vand.u32 %v7128, 4294901760
        %7130 = vmatpush.msra.mxu0 %v7129
        %v7131 = vand.u32 %v7051, 4294901760
        %v7132 = vsub.f32 %v7051, %v7131
        %v7133 = vand.u32 %v7132, 4294901760
        %v7134 = vsub.f32 %v7132, %v7133
        %v7135 = vand.u32 %v7134, 4294901760
        %7136 = vmatpush.msra.mxu0 %v7135
        %v7137 = vand.u32 %v7050, 4294901760
        %v7138 = vsub.f32 %v7050, %v7137
        %v7139 = vand.u32 %v7138, 4294901760
        %v7140 = vsub.f32 %v7138, %v7139
        %v7141 = vand.u32 %v7140, 4294901760
        %7142 = vmatpush.msra.mxu0 %v7141
        %v7143 = vand.u32 %v7049, 4294901760
        %v7144 = vsub.f32 %v7049, %v7143
        %v7145 = vand.u32 %v7144, 4294901760
        %v7146 = vsub.f32 %v7144, %v7145
        %v7147 = vand.u32 %v7146, 4294901760
        %7148 = vmatpush.msra.mxu0 %v7147
        %v7149 = vand.u32 %v7048, 4294901760
        %v7150 = vsub.f32 %v7048, %v7149
        %v7151 = vand.u32 %v7150, 4294901760
        %v7152 = vsub.f32 %v7150, %v7151
        %v7153 = vand.u32 %v7152, 4294901760
        %7154 = vmatpush.msra.mxu0 %v7153
        %v7155 = vand.u32 %v7047, 4294901760
        %v7156 = vsub.f32 %v7047, %v7155
        %v7157 = vand.u32 %v7156, 4294901760
        %v7158 = vsub.f32 %v7156, %v7157
        %v7159 = vand.u32 %v7158, 4294901760
        %7160 = vmatpush.msra.mxu0 %v7159
        %v7161 = vand.u32 %v7058, 4294901760
        %7162 = vmatmul.f32.gmra.mxu0 %v7161
        %v7163 = vpop.f32.mrf.mxu0
        %v7164 = vadd.f32 %v7093, %v7163
        %7165 = vdwg.mxu0
        %7166 = vmatpush.msra.mxu0 0.0
        %7167 = vmatpush.msra.mxu0 0.0
        %7168 = vmatpush.msra.mxu0 0.0
        %7169 = vmatpush.msra.mxu0 0.0
        %7170 = vmatpush.msra.mxu0 0.0
        %7171 = vmatpush.msra.mxu0 0.0
        %v7172 = vand.u32 %v7056, 4294901760
        %v7173 = vsub.f32 %v7056, %v7172
        %7174 = vmatpush.msra.mxu0 %v7173
        %v7175 = vand.u32 %v7055, 4294901760
        %v7176 = vsub.f32 %v7055, %v7175
        %7177 = vmatpush.msra.mxu0 %v7176
        %v7178 = vand.u32 %v7054, 4294901760
        %v7179 = vsub.f32 %v7054, %v7178
        %7180 = vmatpush.msra.mxu0 %v7179
        %v7181 = vand.u32 %v7053, 4294901760
        %v7182 = vsub.f32 %v7053, %v7181
        %7183 = vmatpush.msra.mxu0 %v7182
        %v7184 = vand.u32 %v7052, 4294901760
        %v7185 = vsub.f32 %v7052, %v7184
        %7186 = vmatpush.msra.mxu0 %v7185
        %v7187 = vand.u32 %v7051, 4294901760
        %v7188 = vsub.f32 %v7051, %v7187
        %7189 = vmatpush.msra.mxu0 %v7188
        %v7190 = vand.u32 %v7050, 4294901760
        %v7191 = vsub.f32 %v7050, %v7190
        %7192 = vmatpush.msra.mxu0 %v7191
        %v7193 = vand.u32 %v7049, 4294901760
        %v7194 = vsub.f32 %v7049, %v7193
        %7195 = vmatpush.msra.mxu0 %v7194
        %v7196 = vand.u32 %v7048, 4294901760
        %v7197 = vsub.f32 %v7048, %v7196
        %7198 = vmatpush.msra.mxu0 %v7197
        %v7199 = vand.u32 %v7047, 4294901760
        %v7200 = vsub.f32 %v7047, %v7199
        %7201 = vmatpush.msra.mxu0 %v7200
        %v7202 = vand.u32 %v7058, 4294901760
        %v7203 = vsub.f32 %v7058, %v7202
        %7204 = vmatmul.f32.gmra.mxu0 %v7203
        %v7205 = vpop.f32.mrf.mxu0
        %v7206 = vadd.f32 %v7164, %v7205
        %7207 = vdwg.mxu0
        %7208 = vmatpush.msra.mxu0 0.0
        %7209 = vmatpush.msra.mxu0 0.0
        %7210 = vmatpush.msra.mxu0 0.0
        %7211 = vmatpush.msra.mxu0 0.0
        %7212 = vmatpush.msra.mxu0 0.0
        %7213 = vmatpush.msra.mxu0 0.0
        %v7214 = vand.u32 %v7056, 4294901760
        %7215 = vmatpush.msra.mxu0 %v7214
        %v7216 = vand.u32 %v7055, 4294901760
        %7217 = vmatpush.msra.mxu0 %v7216
        %v7218 = vand.u32 %v7054, 4294901760
        %7219 = vmatpush.msra.mxu0 %v7218
        %v7220 = vand.u32 %v7053, 4294901760
        %7221 = vmatpush.msra.mxu0 %v7220
        %v7222 = vand.u32 %v7052, 4294901760
        %7223 = vmatpush.msra.mxu0 %v7222
        %v7224 = vand.u32 %v7051, 4294901760
        %7225 = vmatpush.msra.mxu0 %v7224
        %v7226 = vand.u32 %v7050, 4294901760
        %7227 = vmatpush.msra.mxu0 %v7226
        %v7228 = vand.u32 %v7049, 4294901760
        %7229 = vmatpush.msra.mxu0 %v7228
        %v7230 = vand.u32 %v7048, 4294901760
        %7231 = vmatpush.msra.mxu0 %v7230
        %v7232 = vand.u32 %v7047, 4294901760
        %7233 = vmatpush.msra.mxu0 %v7232
        %v7234 = vand.u32 %v7058, 4294901760
        %v7235 = vsub.f32 %v7058, %v7234
        %v7236 = vand.u32 %v7235, 4294901760
        %7237 = vmatmul.f32.gmra.mxu0 %v7236
        %v7238 = vpop.f32.mrf.mxu0
        %v7239 = vadd.f32 %v7206, %v7238
        %7240 = vdwg.mxu0
        %7241 = vmatpush.msra.mxu0 0.0
        %7242 = vmatpush.msra.mxu0 0.0
        %7243 = vmatpush.msra.mxu0 0.0
        %7244 = vmatpush.msra.mxu0 0.0
        %7245 = vmatpush.msra.mxu0 0.0
        %7246 = vmatpush.msra.mxu0 0.0
        %v7247 = vand.u32 %v7056, 4294901760
        %v7248 = vsub.f32 %v7056, %v7247
        %v7249 = vand.u32 %v7248, 4294901760
        %7250 = vmatpush.msra.mxu0 %v7249
        %v7251 = vand.u32 %v7055, 4294901760
        %v7252 = vsub.f32 %v7055, %v7251
        %v7253 = vand.u32 %v7252, 4294901760
        %7254 = vmatpush.msra.mxu0 %v7253
        %v7255 = vand.u32 %v7054, 4294901760
        %v7256 = vsub.f32 %v7054, %v7255
        %v7257 = vand.u32 %v7256, 4294901760
        %7258 = vmatpush.msra.mxu0 %v7257
        %v7259 = vand.u32 %v7053, 4294901760
        %v7260 = vsub.f32 %v7053, %v7259
        %v7261 = vand.u32 %v7260, 4294901760
        %7262 = vmatpush.msra.mxu0 %v7261
        %v7263 = vand.u32 %v7052, 4294901760
        %v7264 = vsub.f32 %v7052, %v7263
        %v7265 = vand.u32 %v7264, 4294901760
        %7266 = vmatpush.msra.mxu0 %v7265
        %v7267 = vand.u32 %v7051, 4294901760
        %v7268 = vsub.f32 %v7051, %v7267
        %v7269 = vand.u32 %v7268, 4294901760
        %7270 = vmatpush.msra.mxu0 %v7269
        %v7271 = vand.u32 %v7050, 4294901760
        %v7272 = vsub.f32 %v7050, %v7271
        %v7273 = vand.u32 %v7272, 4294901760
        %7274 = vmatpush.msra.mxu0 %v7273
        %v7275 = vand.u32 %v7049, 4294901760
        %v7276 = vsub.f32 %v7049, %v7275
        %v7277 = vand.u32 %v7276, 4294901760
        %7278 = vmatpush.msra.mxu0 %v7277
        %v7279 = vand.u32 %v7048, 4294901760
        %v7280 = vsub.f32 %v7048, %v7279
        %v7281 = vand.u32 %v7280, 4294901760
        %7282 = vmatpush.msra.mxu0 %v7281
        %v7283 = vand.u32 %v7047, 4294901760
        %v7284 = vsub.f32 %v7047, %v7283
        %v7285 = vand.u32 %v7284, 4294901760
        %7286 = vmatpush.msra.mxu0 %v7285
        %v7287 = vand.u32 %v7058, 4294901760
        %7288 = vmatmul.f32.gmra.mxu0 %v7287
        %v7289 = vpop.f32.mrf.mxu0
        %v7290 = vadd.f32 %v7239, %v7289
        %7291 = vdwg.mxu0
        %7292 = vmatpush.msra.mxu0 0.0
        %7293 = vmatpush.msra.mxu0 0.0
        %7294 = vmatpush.msra.mxu0 0.0
        %7295 = vmatpush.msra.mxu0 0.0
        %7296 = vmatpush.msra.mxu0 0.0
        %7297 = vmatpush.msra.mxu0 0.0
        %v7298 = vand.u32 %v7056, 4294901760
        %7299 = vmatpush.msra.mxu0 %v7298
        %v7300 = vand.u32 %v7055, 4294901760
        %7301 = vmatpush.msra.mxu0 %v7300
        %v7302 = vand.u32 %v7054, 4294901760
        %7303 = vmatpush.msra.mxu0 %v7302
        %v7304 = vand.u32 %v7053, 4294901760
        %7305 = vmatpush.msra.mxu0 %v7304
        %v7306 = vand.u32 %v7052, 4294901760
        %7307 = vmatpush.msra.mxu0 %v7306
        %v7308 = vand.u32 %v7051, 4294901760
        %7309 = vmatpush.msra.mxu0 %v7308
        %v7310 = vand.u32 %v7050, 4294901760
        %7311 = vmatpush.msra.mxu0 %v7310
        %v7312 = vand.u32 %v7049, 4294901760
        %7313 = vmatpush.msra.mxu0 %v7312
        %v7314 = vand.u32 %v7048, 4294901760
        %7315 = vmatpush.msra.mxu0 %v7314
        %v7316 = vand.u32 %v7047, 4294901760
        %7317 = vmatpush.msra.mxu0 %v7316
        %v7318 = vand.u32 %v7058, 4294901760
        %7319 = vmatmul.f32.gmra.mxu0 %v7318
        %v7320 = vpop.f32.mrf.mxu0
        %v7321 = vadd.f32 %v7290, %v7320
        %7322 = vdwg.mxu0
        %v7324 = vsel %vm768, %v6763, 0
        %7326 = vmatpush.msra.mxu0 0.0
        %7327 = vmatpush.msra.mxu0 0.0
        %7328 = vmatpush.msra.mxu0 0.0
        %7329 = vmatpush.msra.mxu0 0.0
        %7330 = vmatpush.msra.mxu0 0.0
        %7331 = vmatpush.msra.mxu0 0.0
        %v7332 = vand.u32 %v7056, 4294901760
        %7333 = vmatpush.msra.mxu0 %v7332
        %v7334 = vand.u32 %v7055, 4294901760
        %7335 = vmatpush.msra.mxu0 %v7334
        %v7336 = vand.u32 %v7054, 4294901760
        %7337 = vmatpush.msra.mxu0 %v7336
        %v7338 = vand.u32 %v7053, 4294901760
        %7339 = vmatpush.msra.mxu0 %v7338
        %v7340 = vand.u32 %v7052, 4294901760
        %7341 = vmatpush.msra.mxu0 %v7340
        %v7342 = vand.u32 %v7051, 4294901760
        %7343 = vmatpush.msra.mxu0 %v7342
        %v7344 = vand.u32 %v7050, 4294901760
        %7345 = vmatpush.msra.mxu0 %v7344
        %v7346 = vand.u32 %v7049, 4294901760
        %7347 = vmatpush.msra.mxu0 %v7346
        %v7348 = vand.u32 %v7048, 4294901760
        %7349 = vmatpush.msra.mxu0 %v7348
        %v7350 = vand.u32 %v7047, 4294901760
        %7351 = vmatpush.msra.mxu0 %v7350
        %v7352 = vand.u32 %v7324, 4294901760
        %v7353 = vsub.f32 %v7324, %v7352
        %v7354 = vand.u32 %v7353, 4294901760
        %v7355 = vsub.f32 %v7353, %v7354
        %v7356 = vand.u32 %v7355, 4294901760
        %7357 = vmatmul.f32.gmra.mxu0 %v7356
        %v7358 = vpop.f32.mrf.mxu0
        %v7359 = vadd.f32 0.0, %v7358
        %7360 = vdwg.mxu0
        %7361 = vmatpush.msra.mxu0 0.0
        %7362 = vmatpush.msra.mxu0 0.0
        %7363 = vmatpush.msra.mxu0 0.0
        %7364 = vmatpush.msra.mxu0 0.0
        %7365 = vmatpush.msra.mxu0 0.0
        %7366 = vmatpush.msra.mxu0 0.0
        %v7367 = vand.u32 %v7056, 4294901760
        %v7368 = vsub.f32 %v7056, %v7367
        %v7369 = vand.u32 %v7368, 4294901760
        %v7370 = vsub.f32 %v7368, %v7369
        %v7371 = vand.u32 %v7370, 4294901760
        %7372 = vmatpush.msra.mxu0 %v7371
        %v7373 = vand.u32 %v7055, 4294901760
        %v7374 = vsub.f32 %v7055, %v7373
        %v7375 = vand.u32 %v7374, 4294901760
        %v7376 = vsub.f32 %v7374, %v7375
        %v7377 = vand.u32 %v7376, 4294901760
        %7378 = vmatpush.msra.mxu0 %v7377
        %v7379 = vand.u32 %v7054, 4294901760
        %v7380 = vsub.f32 %v7054, %v7379
        %v7381 = vand.u32 %v7380, 4294901760
        %v7382 = vsub.f32 %v7380, %v7381
        %v7383 = vand.u32 %v7382, 4294901760
        %7384 = vmatpush.msra.mxu0 %v7383
        %v7385 = vand.u32 %v7053, 4294901760
        %v7386 = vsub.f32 %v7053, %v7385
        %v7387 = vand.u32 %v7386, 4294901760
        %v7388 = vsub.f32 %v7386, %v7387
        %v7389 = vand.u32 %v7388, 4294901760
        %7390 = vmatpush.msra.mxu0 %v7389
        %v7391 = vand.u32 %v7052, 4294901760
        %v7392 = vsub.f32 %v7052, %v7391
        %v7393 = vand.u32 %v7392, 4294901760
        %v7394 = vsub.f32 %v7392, %v7393
        %v7395 = vand.u32 %v7394, 4294901760
        %7396 = vmatpush.msra.mxu0 %v7395
        %v7397 = vand.u32 %v7051, 4294901760
        %v7398 = vsub.f32 %v7051, %v7397
        %v7399 = vand.u32 %v7398, 4294901760
        %v7400 = vsub.f32 %v7398, %v7399
        %v7401 = vand.u32 %v7400, 4294901760
        %7402 = vmatpush.msra.mxu0 %v7401
        %v7403 = vand.u32 %v7050, 4294901760
        %v7404 = vsub.f32 %v7050, %v7403
        %v7405 = vand.u32 %v7404, 4294901760
        %v7406 = vsub.f32 %v7404, %v7405
        %v7407 = vand.u32 %v7406, 4294901760
        %7408 = vmatpush.msra.mxu0 %v7407
        %v7409 = vand.u32 %v7049, 4294901760
        %v7410 = vsub.f32 %v7049, %v7409
        %v7411 = vand.u32 %v7410, 4294901760
        %v7412 = vsub.f32 %v7410, %v7411
        %v7413 = vand.u32 %v7412, 4294901760
        %7414 = vmatpush.msra.mxu0 %v7413
        %v7415 = vand.u32 %v7048, 4294901760
        %v7416 = vsub.f32 %v7048, %v7415
        %v7417 = vand.u32 %v7416, 4294901760
        %v7418 = vsub.f32 %v7416, %v7417
        %v7419 = vand.u32 %v7418, 4294901760
        %7420 = vmatpush.msra.mxu0 %v7419
        %v7421 = vand.u32 %v7047, 4294901760
        %v7422 = vsub.f32 %v7047, %v7421
        %v7423 = vand.u32 %v7422, 4294901760
        %v7424 = vsub.f32 %v7422, %v7423
        %v7425 = vand.u32 %v7424, 4294901760
        %7426 = vmatpush.msra.mxu0 %v7425
        %v7427 = vand.u32 %v7324, 4294901760
        %7428 = vmatmul.f32.gmra.mxu0 %v7427
        %v7429 = vpop.f32.mrf.mxu0
        %v7430 = vadd.f32 %v7359, %v7429
        %7431 = vdwg.mxu0
        %7432 = vmatpush.msra.mxu0 0.0
        %7433 = vmatpush.msra.mxu0 0.0
        %7434 = vmatpush.msra.mxu0 0.0
        %7435 = vmatpush.msra.mxu0 0.0
        %7436 = vmatpush.msra.mxu0 0.0
        %7437 = vmatpush.msra.mxu0 0.0
        %v7438 = vand.u32 %v7056, 4294901760
        %v7439 = vsub.f32 %v7056, %v7438
        %7440 = vmatpush.msra.mxu0 %v7439
        %v7441 = vand.u32 %v7055, 4294901760
        %v7442 = vsub.f32 %v7055, %v7441
        %7443 = vmatpush.msra.mxu0 %v7442
        %v7444 = vand.u32 %v7054, 4294901760
        %v7445 = vsub.f32 %v7054, %v7444
        %7446 = vmatpush.msra.mxu0 %v7445
        %v7447 = vand.u32 %v7053, 4294901760
        %v7448 = vsub.f32 %v7053, %v7447
        %7449 = vmatpush.msra.mxu0 %v7448
        %v7450 = vand.u32 %v7052, 4294901760
        %v7451 = vsub.f32 %v7052, %v7450
        %7452 = vmatpush.msra.mxu0 %v7451
        %v7453 = vand.u32 %v7051, 4294901760
        %v7454 = vsub.f32 %v7051, %v7453
        %7455 = vmatpush.msra.mxu0 %v7454
        %v7456 = vand.u32 %v7050, 4294901760
        %v7457 = vsub.f32 %v7050, %v7456
        %7458 = vmatpush.msra.mxu0 %v7457
        %v7459 = vand.u32 %v7049, 4294901760
        %v7460 = vsub.f32 %v7049, %v7459
        %7461 = vmatpush.msra.mxu0 %v7460
        %v7462 = vand.u32 %v7048, 4294901760
        %v7463 = vsub.f32 %v7048, %v7462
        %7464 = vmatpush.msra.mxu0 %v7463
        %v7465 = vand.u32 %v7047, 4294901760
        %v7466 = vsub.f32 %v7047, %v7465
        %7467 = vmatpush.msra.mxu0 %v7466
        %v7468 = vand.u32 %v7324, 4294901760
        %v7469 = vsub.f32 %v7324, %v7468
        %7470 = vmatmul.f32.gmra.mxu0 %v7469
        %v7471 = vpop.f32.mrf.mxu0
        %v7472 = vadd.f32 %v7430, %v7471
        %7473 = vdwg.mxu0
        %7474 = vmatpush.msra.mxu0 0.0
        %7475 = vmatpush.msra.mxu0 0.0
        %7476 = vmatpush.msra.mxu0 0.0
        %7477 = vmatpush.msra.mxu0 0.0
        %7478 = vmatpush.msra.mxu0 0.0
        %7479 = vmatpush.msra.mxu0 0.0
        %v7480 = vand.u32 %v7056, 4294901760
        %7481 = vmatpush.msra.mxu0 %v7480
        %v7482 = vand.u32 %v7055, 4294901760
        %7483 = vmatpush.msra.mxu0 %v7482
        %v7484 = vand.u32 %v7054, 4294901760
        %7485 = vmatpush.msra.mxu0 %v7484
        %v7486 = vand.u32 %v7053, 4294901760
        %7487 = vmatpush.msra.mxu0 %v7486
        %v7488 = vand.u32 %v7052, 4294901760
        %7489 = vmatpush.msra.mxu0 %v7488
        %v7490 = vand.u32 %v7051, 4294901760
        %7491 = vmatpush.msra.mxu0 %v7490
        %v7492 = vand.u32 %v7050, 4294901760
        %7493 = vmatpush.msra.mxu0 %v7492
        %v7494 = vand.u32 %v7049, 4294901760
        %7495 = vmatpush.msra.mxu0 %v7494
        %v7496 = vand.u32 %v7048, 4294901760
        %7497 = vmatpush.msra.mxu0 %v7496
        %v7498 = vand.u32 %v7047, 4294901760
        %7499 = vmatpush.msra.mxu0 %v7498
        %v7500 = vand.u32 %v7324, 4294901760
        %v7501 = vsub.f32 %v7324, %v7500
        %v7502 = vand.u32 %v7501, 4294901760
        %7503 = vmatmul.f32.gmra.mxu0 %v7502
        %v7504 = vpop.f32.mrf.mxu0
        %v7505 = vadd.f32 %v7472, %v7504
        %7506 = vdwg.mxu0
        %7507 = vmatpush.msra.mxu0 0.0
        %7508 = vmatpush.msra.mxu0 0.0
        %7509 = vmatpush.msra.mxu0 0.0
        %7510 = vmatpush.msra.mxu0 0.0
        %7511 = vmatpush.msra.mxu0 0.0
        %7512 = vmatpush.msra.mxu0 0.0
        %v7513 = vand.u32 %v7056, 4294901760
        %v7514 = vsub.f32 %v7056, %v7513
        %v7515 = vand.u32 %v7514, 4294901760
        %7516 = vmatpush.msra.mxu0 %v7515
        %v7517 = vand.u32 %v7055, 4294901760
        %v7518 = vsub.f32 %v7055, %v7517
        %v7519 = vand.u32 %v7518, 4294901760
        %7520 = vmatpush.msra.mxu0 %v7519
        %v7521 = vand.u32 %v7054, 4294901760
        %v7522 = vsub.f32 %v7054, %v7521
        %v7523 = vand.u32 %v7522, 4294901760
        %7524 = vmatpush.msra.mxu0 %v7523
        %v7525 = vand.u32 %v7053, 4294901760
        %v7526 = vsub.f32 %v7053, %v7525
        %v7527 = vand.u32 %v7526, 4294901760
        %7528 = vmatpush.msra.mxu0 %v7527
        %v7529 = vand.u32 %v7052, 4294901760
        %v7530 = vsub.f32 %v7052, %v7529
        %v7531 = vand.u32 %v7530, 4294901760
        %7532 = vmatpush.msra.mxu0 %v7531
        %v7533 = vand.u32 %v7051, 4294901760
        %v7534 = vsub.f32 %v7051, %v7533
        %v7535 = vand.u32 %v7534, 4294901760
        %7536 = vmatpush.msra.mxu0 %v7535
        %v7537 = vand.u32 %v7050, 4294901760
        %v7538 = vsub.f32 %v7050, %v7537
        %v7539 = vand.u32 %v7538, 4294901760
        %7540 = vmatpush.msra.mxu0 %v7539
        %v7541 = vand.u32 %v7049, 4294901760
        %v7542 = vsub.f32 %v7049, %v7541
        %v7543 = vand.u32 %v7542, 4294901760
        %7544 = vmatpush.msra.mxu0 %v7543
        %v7545 = vand.u32 %v7048, 4294901760
        %v7546 = vsub.f32 %v7048, %v7545
        %v7547 = vand.u32 %v7546, 4294901760
        %7548 = vmatpush.msra.mxu0 %v7547
        %v7549 = vand.u32 %v7047, 4294901760
        %v7550 = vsub.f32 %v7047, %v7549
        %v7551 = vand.u32 %v7550, 4294901760
        %7552 = vmatpush.msra.mxu0 %v7551
        %v7553 = vand.u32 %v7324, 4294901760
        %7554 = vmatmul.f32.gmra.mxu0 %v7553
        %v7555 = vpop.f32.mrf.mxu0
        %v7556 = vadd.f32 %v7505, %v7555
        %7557 = vdwg.mxu0
        %7558 = vmatpush.msra.mxu0 0.0
        %7559 = vmatpush.msra.mxu0 0.0
        %7560 = vmatpush.msra.mxu0 0.0
        %7561 = vmatpush.msra.mxu0 0.0
        %7562 = vmatpush.msra.mxu0 0.0
        %7563 = vmatpush.msra.mxu0 0.0
        %v7564 = vand.u32 %v7056, 4294901760
        %7565 = vmatpush.msra.mxu0 %v7564
        %v7566 = vand.u32 %v7055, 4294901760
        %7567 = vmatpush.msra.mxu0 %v7566
        %v7568 = vand.u32 %v7054, 4294901760
        %7569 = vmatpush.msra.mxu0 %v7568
        %v7570 = vand.u32 %v7053, 4294901760
        %7571 = vmatpush.msra.mxu0 %v7570
        %v7572 = vand.u32 %v7052, 4294901760
        %7573 = vmatpush.msra.mxu0 %v7572
        %v7574 = vand.u32 %v7051, 4294901760
        %7575 = vmatpush.msra.mxu0 %v7574
        %v7576 = vand.u32 %v7050, 4294901760
        %7577 = vmatpush.msra.mxu0 %v7576
        %v7578 = vand.u32 %v7049, 4294901760
        %7579 = vmatpush.msra.mxu0 %v7578
        %v7580 = vand.u32 %v7048, 4294901760
        %7581 = vmatpush.msra.mxu0 %v7580
        %v7582 = vand.u32 %v7047, 4294901760
        %7583 = vmatpush.msra.mxu0 %v7582
        %v7584 = vand.u32 %v7324, 4294901760
        %7585 = vmatmul.f32.gmra.mxu0 %v7584
        %v7586 = vpop.f32.mrf.mxu0
        %v7587 = vadd.f32 %v7556, %v7586
        %7588 = vdwg.mxu0
        %vm7589 = vcmask 650240
        %7590 = vst.msk [vmem:[#allocation2] sm:$0xf] %vm7589, %v1315
        %vm7591 = vcmask 158720
        %7592 = vst.msk [vmem:[#allocation3] sm:$0xf] %vm7591, %v1590
        %7593 = vst.msk [vmem:[#allocation2 + $0x4] sm:$0xf] %vm7589, %v1033
        %7594 = vst.msk [vmem:[#allocation3 + $0x4] sm:$0xf] %vm7591, %v1856
        %7595 = vst.msk [vmem:[#allocation2 + $0x8] sm:$0xf] %vm7589, %v2408
        %7596 = vst.msk [vmem:[#allocation3 + $0x8] sm:$0xf] %vm7591, %v2683
        %7597 = vst.msk [vmem:[#allocation2 + $0xc] sm:$0xf] %vm7589, %v2129
        %7598 = vst.msk [vmem:[#allocation3 + $0xc] sm:$0xf] %vm7591, %v2949
        %7599 = vst.msk [vmem:[#allocation2 + $0x10] sm:$0xf] %vm7589, %v3501
        %7600 = vst.msk [vmem:[#allocation3 + $0x10] sm:$0xf] %vm7591, %v3776
        %7601 = vst.msk [vmem:[#allocation2 + $0x14] sm:$0xf] %vm7589, %v3222
        %7602 = vst.msk [vmem:[#allocation3 + $0x14] sm:$0xf] %vm7591, %v4042
        %7603 = vst.msk [vmem:[#allocation2 + $0x18] sm:$0xf] %vm7589, %v7046
        %7604 = vst.msk [vmem:[#allocation3 + $0x18] sm:$0xf] %vm7591, %v7321
        %7605 = vst.msk [vmem:[#allocation2 + $0x1c] sm:$0xf] %vm7589, %v6763
        %7606 = vst.msk [vmem:[#allocation3 + $0x1c] sm:$0xf] %vm7591, %v7587
        %v7607 = vld [vmem:[#allocation2] sm:$0xff]
        %v7608 = vld [vmem:[#allocation2 + $0x8] sm:$0xff]
        %v7609 = vld [vmem:[#allocation2 + $0x10] sm:$0xff]
        %v7610 = vld [vmem:[#allocation2 + $0x18] sm:$0xff]
        %v7611 = vld [vmem:[#allocation3] sm:$0xff]
        %v7612 = vld [vmem:[#allocation3 + $0x8] sm:$0xff]
        %v7613 = vld [vmem:[#allocation3 + $0x10] sm:$0xff]
        %v7614 = vld [vmem:[#allocation3 + $0x18] sm:$0xff]
        %v7615 = vld [vmem:[%s15] sm:$0xff]
        %v7616 = vld [vmem:[%s15 + $0x8] sm:$0xf]
        %v7617 = vld [vmem:[#allocation7] sm:$0xff]
        %v7618 = vld [vmem:[#allocation7 + $0x8] sm:$0xf]
        %vm7619 = vcmask 261120
        %v7621 = vsel %vm7619, %v7617, 0
        %v7624 = vsel %vm7619, %v7618, 0
        %7626 = vmatpush.msra.mxu0 0.0
        %7627 = vmatpush.msra.mxu0 0.0
        %7628 = vmatpush.msra.mxu0 0.0
        %7629 = vmatpush.msra.mxu0 0.0
        %7630 = vmatpush.msra.mxu0 0.0
        %7631 = vmatpush.msra.mxu0 0.0
        %7632 = vmatpush.msra.mxu0 0.0
        %7633 = vmatpush.msra.mxu0 0.0
        %7634 = vmatpush.msra.mxu0 0.0
        %7635 = vmatpush.msra.mxu0 0.0
        %7636 = vmatpush.msra.mxu0 0.0
        %7637 = vmatpush.msra.mxu0 0.0
        %7638 = vmatpush.msra.mxu0 %v7610
        %7639 = vmatpush.msra.mxu0 %v7609
        %7640 = vmatpush.msra.mxu0 %v7608
        %7641 = vmatpush.msra.mxu0 %v7607
        %7642 = vmatmul.f32.gmra.mxu0 %v7621
        %v7643 = vpop.f32.mrf.mxu0
        %v7644 = vadd.f32 0.0, %v7643
        %7645 = vmatmul.f32.gmra.mxu0 %v7624
        %v7646 = vpop.f32.mrf.mxu0
        %v7647 = vadd.f32 0.0, %v7646
        %7648 = vdwg.mxu0
        %v7649 = vld [vmem:[%s10] sm:$0xff]
        %v7650 = vld [vmem:[%s10 + $0x8] sm:$0xff]
        %v7651 = vld [vmem:[%s10 + $0x10] sm:$0xff]
        %v7652 = vld [vmem:[%s10 + $0x18] sm:$0xff]
        %v7653 = vld [vmem:[%s10 + $0x20] sm:$0xff]
        %v7654 = vld [vmem:[%s10 + $0x28] sm:$0xff]
        %v7655 = vld [vmem:[%s10 + $0x30] sm:$0xff]
        %v7656 = vld [vmem:[%s10 + $0x38] sm:$0xff]
        %v7657 = vld [vmem:[%s10 + $0x40] sm:$0xff]
        %v7658 = vld [vmem:[%s10 + $0x48] sm:$0xff]
        %v7660 = vsel %vm768, %v7644, 0
        %v7663 = vsel %vm768, %v7647, 0
        %7665 = vmatpush.msra.mxu0 0.0
        %7666 = vmatpush.msra.mxu0 0.0
        %7667 = vmatpush.msra.mxu0 0.0
        %7668 = vmatpush.msra.mxu0 0.0
        %7669 = vmatpush.msra.mxu0 0.0
        %7670 = vmatpush.msra.mxu0 0.0
        %7671 = vmatpush.msra.mxu0 %v7658
        %7672 = vmatpush.msra.mxu0 %v7657
        %7673 = vmatpush.msra.mxu0 %v7656
        %7674 = vmatpush.msra.mxu0 %v7655
        %7675 = vmatpush.msra.mxu0 %v7654
        %7676 = vmatpush.msra.mxu0 %v7653
        %7677 = vmatpush.msra.mxu0 %v7652
        %7678 = vmatpush.msra.mxu0 %v7651
        %7679 = vmatpush.msra.mxu0 %v7650
        %7680 = vmatpush.msra.mxu0 %v7649
        %7681 = vmatmul.f32.gmra.mxu0 %v7660
        %v7682 = vpop.f32.mrf.mxu0
        %v7683 = vadd.f32 0.0, %v7682
        %7684 = vmatmul.f32.gmra.mxu0 %v7663
        %v7685 = vpop.f32.mrf.mxu0
        %v7686 = vadd.f32 0.0, %v7685
        %7687 = vdwg.mxu0
        %7689 = vset.pattern.permute.xlu0 0
        %7690 = vperm.xlu0 %7689, %v7615
        %v7691 = vpop.permute.xlu0 %7690
        %7694 = vset.pattern.permute.xlu0 0
        %7695 = vperm.xlu0 %7694, %v7616
        %v7696 = vpop.permute.xlu0 %7695
        %v7698 = vadd.f32 %v7691, %v7683
        %v7699 = vadd.f32 %v7696, %v7686
        %7700 = vmatpush.msra.mxu0 0.0
        %7701 = vmatpush.msra.mxu0 0.0
        %7702 = vmatpush.msra.mxu0 0.0
        %7703 = vmatpush.msra.mxu0 0.0
        %7704 = vmatpush.msra.mxu0 0.0
        %7705 = vmatpush.msra.mxu0 0.0
        %7706 = vmatpush.msra.mxu0 0.0
        %7707 = vmatpush.msra.mxu0 0.0
        %7708 = vmatpush.msra.mxu0 0.0
        %7709 = vmatpush.msra.mxu0 0.0
        %7710 = vmatpush.msra.mxu0 0.0
        %7711 = vmatpush.msra.mxu0 0.0
        %7712 = vmatpush.msra.mxu0 %v7614
        %7713 = vmatpush.msra.mxu0 %v7613
        %7714 = vmatpush.msra.mxu0 %v7612
        %7715 = vmatpush.msra.mxu0 %v7611
        %7716 = vmatmul.f32.gmra.mxu0 %v7621
        %v7717 = vpop.f32.mrf.mxu0
        %v7718 = vadd.f32 0.0, %v7717
        %7719 = vmatmul.f32.gmra.mxu0 %v7624
        %v7720 = vpop.f32.mrf.mxu0
        %v7721 = vadd.f32 0.0, %v7720
        %7722 = vdwg.mxu0
        %v7723 = vld [vmem:[%s11] sm:$0xff]
        %v7724 = vld [vmem:[%s11 + $0x8] sm:$0xff]
        %v7725 = vld [vmem:[%s11 + $0x10] sm:$0xf]
        %vm7726 = vcmask 162816
        %v7728 = vsel %vm7726, %v7718, 0
        %v7731 = vsel %vm7726, %v7721, 0
        %v7734 = vsel %vm4127, %v7725, 0
        %7736 = vmatpush.msra.mxu0 0.0
        %7737 = vmatpush.msra.mxu0 0.0
        %7738 = vmatpush.msra.mxu0 0.0
        %7739 = vmatpush.msra.mxu0 0.0
        %7740 = vmatpush.msra.mxu0 0.0
        %7741 = vmatpush.msra.mxu0 0.0
        %7742 = vmatpush.msra.mxu0 0.0
        %7743 = vmatpush.msra.mxu0 0.0
        %7744 = vmatpush.msra.mxu0 0.0
        %7745 = vmatpush.msra.mxu0 0.0
        %7746 = vmatpush.msra.mxu0 0.0
        %7747 = vmatpush.msra.mxu0 0.0
        %7748 = vmatpush.msra.mxu0 0.0
        %7749 = vmatpush.msra.mxu0 %v7734
        %7750 = vmatpush.msra.mxu0 %v7724
        %7751 = vmatpush.msra.mxu0 %v7723
        %7752 = vmatmul.f32.gmra.mxu0 %v7728
        %v7753 = vpop.f32.mrf.mxu0
        %v7754 = vadd.f32 0.0, %v7753
        %7755 = vmatmul.f32.gmra.mxu0 %v7731
        %v7756 = vpop.f32.mrf.mxu0
        %v7757 = vadd.f32 0.0, %v7756
        %7758 = vdwg.mxu0
        %v7759 = vadd.f32 %v7698, %v7754
        %v7760 = vadd.f32 %v7699, %v7757
        %s7761 = scalar_lea.vmem [#allocation7], 16
        %v7762 = vld [vmem:[%s7761] sm:$0xff]
        %v7763 = vld [vmem:[%s7761 + $0x8] sm:$0xf]
        %v7765 = vsel %vm7619, %v7762, 0
        %v7768 = vsel %vm7619, %v7763, 0
        %7770 = vmatpush.msra.mxu0 0.0
        %7771 = vmatpush.msra.mxu0 0.0
        %7772 = vmatpush.msra.mxu0 0.0
        %7773 = vmatpush.msra.mxu0 0.0
        %7774 = vmatpush.msra.mxu0 0.0
        %7775 = vmatpush.msra.mxu0 0.0
        %7776 = vmatpush.msra.mxu0 0.0
        %7777 = vmatpush.msra.mxu0 0.0
        %7778 = vmatpush.msra.mxu0 0.0
        %7779 = vmatpush.msra.mxu0 0.0
        %7780 = vmatpush.msra.mxu0 0.0
        %7781 = vmatpush.msra.mxu0 0.0
        %7782 = vmatpush.msra.mxu0 %v7610
        %7783 = vmatpush.msra.mxu0 %v7609
        %7784 = vmatpush.msra.mxu0 %v7608
        %7785 = vmatpush.msra.mxu0 %v7607
        %7786 = vmatmul.f32.gmra.mxu0 %v7765
        %v7787 = vpop.f32.mrf.mxu0
        %v7788 = vadd.f32 0.0, %v7787
        %7789 = vmatmul.f32.gmra.mxu0 %v7768
        %v7790 = vpop.f32.mrf.mxu0
        %v7791 = vadd.f32 0.0, %v7790
        %7792 = vdwg.mxu0
        %s7793 = scalar_lea.vmem %s10, 80
        %v7794 = vld [vmem:[%s7793] sm:$0xff]
        %v7795 = vld [vmem:[%s7793 + $0x8] sm:$0xff]
        %v7796 = vld [vmem:[%s7793 + $0x10] sm:$0xff]
        %v7797 = vld [vmem:[%s7793 + $0x18] sm:$0xff]
        %v7798 = vld [vmem:[%s7793 + $0x20] sm:$0xff]
        %v7799 = vld [vmem:[%s7793 + $0x28] sm:$0xff]
        %v7800 = vld [vmem:[%s7793 + $0x30] sm:$0xff]
        %v7801 = vld [vmem:[%s7793 + $0x38] sm:$0xff]
        %v7802 = vld [vmem:[%s7793 + $0x40] sm:$0xff]
        %v7803 = vld [vmem:[%s7793 + $0x48] sm:$0xff]
        %v7805 = vsel %vm768, %v7788, 0
        %v7808 = vsel %vm768, %v7791, 0
        %7810 = vmatpush.msra.mxu0 0.0
        %7811 = vmatpush.msra.mxu0 0.0
        %7812 = vmatpush.msra.mxu0 0.0
        %7813 = vmatpush.msra.mxu0 0.0
        %7814 = vmatpush.msra.mxu0 0.0
        %7815 = vmatpush.msra.mxu0 0.0
        %7816 = vmatpush.msra.mxu0 %v7803
        %7817 = vmatpush.msra.mxu0 %v7802
        %7818 = vmatpush.msra.mxu0 %v7801
        %7819 = vmatpush.msra.mxu0 %v7800
        %7820 = vmatpush.msra.mxu0 %v7799
        %7821 = vmatpush.msra.mxu0 %v7798
        %7822 = vmatpush.msra.mxu0 %v7797
        %7823 = vmatpush.msra.mxu0 %v7796
        %7824 = vmatpush.msra.mxu0 %v7795
        %7825 = vmatpush.msra.mxu0 %v7794
        %7826 = vmatmul.f32.gmra.mxu0 %v7805
        %v7827 = vpop.f32.mrf.mxu0
        %v7828 = vadd.f32 0.0, %v7827
        %7829 = vmatmul.f32.gmra.mxu0 %v7808
        %v7830 = vpop.f32.mrf.mxu0
        %v7831 = vadd.f32 0.0, %v7830
        %7832 = vdwg.mxu0
        %v7833 = vadd.f32 %v7759, %v7828
        %v7834 = vadd.f32 %v7760, %v7831
        %7835 = vmatpush.msra.mxu0 0.0
        %7836 = vmatpush.msra.mxu0 0.0
        %7837 = vmatpush.msra.mxu0 0.0
        %7838 = vmatpush.msra.mxu0 0.0
        %7839 = vmatpush.msra.mxu0 0.0
        %7840 = vmatpush.msra.mxu0 0.0
        %7841 = vmatpush.msra.mxu0 0.0
        %7842 = vmatpush.msra.mxu0 0.0
        %7843 = vmatpush.msra.mxu0 0.0
        %7844 = vmatpush.msra.mxu0 0.0
        %7845 = vmatpush.msra.mxu0 0.0
        %7846 = vmatpush.msra.mxu0 0.0
        %7847 = vmatpush.msra.mxu0 %v7614
        %7848 = vmatpush.msra.mxu0 %v7613
        %7849 = vmatpush.msra.mxu0 %v7612
        %7850 = vmatpush.msra.mxu0 %v7611
        %7851 = vmatmul.f32.gmra.mxu0 %v7765
        %v7852 = vpop.f32.mrf.mxu0
        %v7853 = vadd.f32 0.0, %v7852
        %7854 = vmatmul.f32.gmra.mxu0 %v7768
        %v7855 = vpop.f32.mrf.mxu0
        %v7856 = vadd.f32 0.0, %v7855
        %7857 = vdwg.mxu0
        %s7858 = scalar_lea.vmem %s11, 24
        %v7859 = vld [vmem:[%s7858] sm:$0xff]
        %v7860 = vld [vmem:[%s7858 + $0x8] sm:$0xff]
        %v7861 = vld [vmem:[%s7858 + $0x10] sm:$0xf]
        %v7863 = vsel %vm7726, %v7853, 0
        %v7866 = vsel %vm7726, %v7856, 0
        %v7869 = vsel %vm4127, %v7861, 0
        %7871 = vmatpush.msra.mxu0 0.0
        %7872 = vmatpush.msra.mxu0 0.0
        %7873 = vmatpush.msra.mxu0 0.0
        %7874 = vmatpush.msra.mxu0 0.0
        %7875 = vmatpush.msra.mxu0 0.0
        %7876 = vmatpush.msra.mxu0 0.0
        %7877 = vmatpush.msra.mxu0 0.0
        %7878 = vmatpush.msra.mxu0 0.0
        %7879 = vmatpush.msra.mxu0 0.0
        %7880 = vmatpush.msra.mxu0 0.0
        %7881 = vmatpush.msra.mxu0 0.0
        %7882 = vmatpush.msra.mxu0 0.0
        %7883 = vmatpush.msra.mxu0 0.0
        %7884 = vmatpush.msra.mxu0 %v7869
        %7885 = vmatpush.msra.mxu0 %v7860
        %7886 = vmatpush.msra.mxu0 %v7859
        %7887 = vmatmul.f32.gmra.mxu0 %v7863
        %v7888 = vpop.f32.mrf.mxu0
        %v7889 = vadd.f32 0.0, %v7888
        %7890 = vmatmul.f32.gmra.mxu0 %v7866
        %v7891 = vpop.f32.mrf.mxu0
        %v7892 = vadd.f32 0.0, %v7891
        %7893 = vdwg.mxu0
        %v7894 = vadd.f32 %v7833, %v7889
        %v7895 = vadd.f32 %v7834, %v7892
        %s7896 = scalar_lea.vmem [#allocation7], 32
        %v7897 = vld [vmem:[%s7896] sm:$0xff]
        %v7898 = vld [vmem:[%s7896 + $0x8] sm:$0xf]
        %v7900 = vsel %vm7619, %v7897, 0
        %v7903 = vsel %vm7619, %v7898, 0
        %7905 = vmatpush.msra.mxu0 0.0
        %7906 = vmatpush.msra.mxu0 0.0
        %7907 = vmatpush.msra.mxu0 0.0
        %7908 = vmatpush.msra.mxu0 0.0
        %7909 = vmatpush.msra.mxu0 0.0
        %7910 = vmatpush.msra.mxu0 0.0
        %7911 = vmatpush.msra.mxu0 0.0
        %7912 = vmatpush.msra.mxu0 0.0
        %7913 = vmatpush.msra.mxu0 0.0
        %7914 = vmatpush.msra.mxu0 0.0
        %7915 = vmatpush.msra.mxu0 0.0
        %7916 = vmatpush.msra.mxu0 0.0
        %7917 = vmatpush.msra.mxu0 %v7610
        %7918 = vmatpush.msra.mxu0 %v7609
        %7919 = vmatpush.msra.mxu0 %v7608
        %7920 = vmatpush.msra.mxu0 %v7607
        %7921 = vmatmul.f32.gmra.mxu0 %v7900
        %v7922 = vpop.f32.mrf.mxu0
        %v7923 = vadd.f32 0.0, %v7922
        %7924 = vmatmul.f32.gmra.mxu0 %v7903
        %v7925 = vpop.f32.mrf.mxu0
        %v7926 = vadd.f32 0.0, %v7925
        %7927 = vdwg.mxu0
        %s7928 = scalar_lea.vmem %s10, 160
        %v7929 = vld [vmem:[%s7928] sm:$0xff]
        %v7930 = vld [vmem:[%s7928 + $0x8] sm:$0xff]
        %v7931 = vld [vmem:[%s7928 + $0x10] sm:$0xff]
        %v7932 = vld [vmem:[%s7928 + $0x18] sm:$0xff]
        %v7933 = vld [vmem:[%s7928 + $0x20] sm:$0xff]
        %v7934 = vld [vmem:[%s7928 + $0x28] sm:$0xff]
        %v7935 = vld [vmem:[%s7928 + $0x30] sm:$0xff]
        %v7936 = vld [vmem:[%s7928 + $0x38] sm:$0xff]
        %v7937 = vld [vmem:[%s7928 + $0x40] sm:$0xff]
        %v7938 = vld [vmem:[%s7928 + $0x48] sm:$0xff]
        %v7940 = vsel %vm768, %v7923, 0
        %v7943 = vsel %vm768, %v7926, 0
        %7945 = vmatpush.msra.mxu0 0.0
        %7946 = vmatpush.msra.mxu0 0.0
        %7947 = vmatpush.msra.mxu0 0.0
        %7948 = vmatpush.msra.mxu0 0.0
        %7949 = vmatpush.msra.mxu0 0.0
        %7950 = vmatpush.msra.mxu0 0.0
        %7951 = vmatpush.msra.mxu0 %v7938
        %7952 = vmatpush.msra.mxu0 %v7937
        %7953 = vmatpush.msra.mxu0 %v7936
        %7954 = vmatpush.msra.mxu0 %v7935
        %7955 = vmatpush.msra.mxu0 %v7934
        %7956 = vmatpush.msra.mxu0 %v7933
        %7957 = vmatpush.msra.mxu0 %v7932
        %7958 = vmatpush.msra.mxu0 %v7931
        %7959 = vmatpush.msra.mxu0 %v7930
        %7960 = vmatpush.msra.mxu0 %v7929
        %7961 = vmatmul.f32.gmra.mxu0 %v7940
        %v7962 = vpop.f32.mrf.mxu0
        %v7963 = vadd.f32 0.0, %v7962
        %7964 = vmatmul.f32.gmra.mxu0 %v7943
        %v7965 = vpop.f32.mrf.mxu0
        %v7966 = vadd.f32 0.0, %v7965
        %7967 = vdwg.mxu0
        %v7968 = vadd.f32 %v7894, %v7963
        %v7969 = vadd.f32 %v7895, %v7966
        %7970 = vmatpush.msra.mxu0 0.0
        %7971 = vmatpush.msra.mxu0 0.0
        %7972 = vmatpush.msra.mxu0 0.0
        %7973 = vmatpush.msra.mxu0 0.0
        %7974 = vmatpush.msra.mxu0 0.0
        %7975 = vmatpush.msra.mxu0 0.0
        %7976 = vmatpush.msra.mxu0 0.0
        %7977 = vmatpush.msra.mxu0 0.0
        %7978 = vmatpush.msra.mxu0 0.0
        %7979 = vmatpush.msra.mxu0 0.0
        %7980 = vmatpush.msra.mxu0 0.0
        %7981 = vmatpush.msra.mxu0 0.0
        %7982 = vmatpush.msra.mxu0 %v7614
        %7983 = vmatpush.msra.mxu0 %v7613
        %7984 = vmatpush.msra.mxu0 %v7612
        %7985 = vmatpush.msra.mxu0 %v7611
        %7986 = vmatmul.f32.gmra.mxu0 %v7900
        %v7987 = vpop.f32.mrf.mxu0
        %v7988 = vadd.f32 0.0, %v7987
        %7989 = vmatmul.f32.gmra.mxu0 %v7903
        %v7990 = vpop.f32.mrf.mxu0
        %v7991 = vadd.f32 0.0, %v7990
        %7992 = vdwg.mxu0
        %s7993 = scalar_lea.vmem %s11, 48
        %v7994 = vld [vmem:[%s7993] sm:$0xff]
        %v7995 = vld [vmem:[%s7993 + $0x8] sm:$0xff]
        %v7996 = vld [vmem:[%s7993 + $0x10] sm:$0xf]
        %v7998 = vsel %vm7726, %v7988, 0
        %v8001 = vsel %vm7726, %v7991, 0
        %v8004 = vsel %vm4127, %v7996, 0
        %8006 = vmatpush.msra.mxu0 0.0
        %8007 = vmatpush.msra.mxu0 0.0
        %8008 = vmatpush.msra.mxu0 0.0
        %8009 = vmatpush.msra.mxu0 0.0
        %8010 = vmatpush.msra.mxu0 0.0
        %8011 = vmatpush.msra.mxu0 0.0
        %8012 = vmatpush.msra.mxu0 0.0
        %8013 = vmatpush.msra.mxu0 0.0
        %8014 = vmatpush.msra.mxu0 0.0
        %8015 = vmatpush.msra.mxu0 0.0
        %8016 = vmatpush.msra.mxu0 0.0
        %8017 = vmatpush.msra.mxu0 0.0
        %8018 = vmatpush.msra.mxu0 0.0
        %8019 = vmatpush.msra.mxu0 %v8004
        %8020 = vmatpush.msra.mxu0 %v7995
        %8021 = vmatpush.msra.mxu0 %v7994
        %8022 = vmatmul.f32.gmra.mxu0 %v7998
        %v8023 = vpop.f32.mrf.mxu0
        %v8024 = vadd.f32 0.0, %v8023
        %8025 = vmatmul.f32.gmra.mxu0 %v8001
        %v8026 = vpop.f32.mrf.mxu0
        %v8027 = vadd.f32 0.0, %v8026
        %8028 = vdwg.mxu0
        %v8029 = vadd.f32 %v7968, %v8024
        %v8030 = vadd.f32 %v7969, %v8027
        %v8031 = vld [vmem:[%s16] sm:$0xf]
        %v8033 = vrot.slane %v8029, 4
        %v8035 = vmul.f32 %v8029, %v8033
        %v8036 = vld [vmem:[%s17] sm:$0xf]
        %8038 = vset.pattern.permute.xlu0 0
        %8039 = vperm.xlu0 %8038, %v8036
        %v8040 = vpop.permute.xlu0 %8039
        %v8043 = vsel %vm4096, %v8031, 0
        %v8046 = vsel %vm4127, %v8035, 0
        %8048 = vmatpush.msra.mxu0 0.0
        %8049 = vmatpush.msra.mxu0 0.0
        %8050 = vmatpush.msra.mxu0 0.0
        %8051 = vmatpush.msra.mxu0 0.0
        %8052 = vmatpush.msra.mxu0 0.0
        %8053 = vmatpush.msra.mxu0 0.0
        %8054 = vmatpush.msra.mxu0 0.0
        %8055 = vmatpush.msra.mxu0 0.0
        %8056 = vmatpush.msra.mxu0 0.0
        %8057 = vmatpush.msra.mxu0 0.0
        %8058 = vmatpush.msra.mxu0 0.0
        %8059 = vmatpush.msra.mxu0 0.0
        %8060 = vmatpush.msra.mxu0 0.0
        %8061 = vmatpush.msra.mxu0 0.0
        %8062 = vmatpush.msra.mxu0 0.0
        %8063 = vmatpush.msra.mxu0 %v8046
        %8064 = vmatmul.f32.gmra.mxu0 %v8043
        %v8065 = vpop.f32.mrf.mxu0
        %v8066 = vadd.f32 %v8040, %v8065
        %8067 = vdwg.mxu0
        %v8068 = vadd.f32 %v8066, %v8030
        %v8069 = vld [vmem:[%s12] sm:$0xff]
        %v8070 = vld [vmem:[%s12 + $0x8] sm:$0xff]
        %v8071 = vld [vmem:[%s12 + $0x10] sm:$0xff]
        %v8072 = vld [vmem:[%s12 + $0x18] sm:$0xff]
        %v8073 = vld [vmem:[%s12 + $0x20] sm:$0xff]
        %v8074 = vld [vmem:[%s12 + $0x28] sm:$0xff]
        %v8075 = vld [vmem:[%s12 + $0x30] sm:$0xff]
        %v8076 = vld [vmem:[%s12 + $0x38] sm:$0xff]
        %v8077 = vld [vmem:[%s12 + $0x40] sm:$0xff]
        %v8078 = vld [vmem:[%s12 + $0x48] sm:$0xff]
        %v8079 = vld [vmem:[%s12 + $0x50] sm:$0xff]
        %v8080 = vld [vmem:[%s12 + $0x58] sm:$0xff]
        %v8081 = vld [vmem:[%s12 + $0x60] sm:$0xf]
        %vm8082 = vcmask 818176
        %v8084 = vsel %vm8082, %v8068, 0
        %v8087 = vsel %vm4127, %v8081, 0
        %8089 = vmatpush.msra.mxu0 0.0
        %8090 = vmatpush.msra.mxu0 0.0
        %8091 = vmatpush.msra.mxu0 0.0
        %8092 = vmatpush.msra.mxu0 %v8087
        %8093 = vmatpush.msra.mxu0 %v8080
        %8094 = vmatpush.msra.mxu0 %v8079
        %8095 = vmatpush.msra.mxu0 %v8078
        %8096 = vmatpush.msra.mxu0 %v8077
        %8097 = vmatpush.msra.mxu0 %v8076
        %8098 = vmatpush.msra.mxu0 %v8075
        %8099 = vmatpush.msra.mxu0 %v8074
        %8100 = vmatpush.msra.mxu0 %v8073
        %8101 = vmatpush.msra.mxu0 %v8072
        %8102 = vmatpush.msra.mxu0 %v8071
        %8103 = vmatpush.msra.mxu0 %v8070
        %8104 = vmatpush.msra.mxu0 %v8069
        %8105 = vmatmul.f32.gmra.mxu0 %v8084
        %v8106 = vpop.f32.mrf.mxu0
        %v8107 = vadd.f32 0.0, %v8106
        %8108 = vdwg.mxu0
        %v8109 = vld [vmem:[%s13] sm:$0xff]
        %v8110 = vld [vmem:[%s13 + $0x8] sm:$0xff]
        %v8111 = vld [vmem:[%s13 + $0x10] sm:$0xff]
        %v8112 = vld [vmem:[%s13 + $0x18] sm:$0xff]
        %v8113 = vld [vmem:[%s13 + $0x20] sm:$0xff]
        %v8114 = vld [vmem:[%s13 + $0x28] sm:$0xff]
        %v8115 = vld [vmem:[%s13 + $0x30] sm:$0xff]
        %v8116 = vld [vmem:[%s13 + $0x38] sm:$0xff]
        %v8117 = vld [vmem:[%s13 + $0x40] sm:$0xff]
        %v8118 = vld [vmem:[%s13 + $0x48] sm:$0xff]
        %v8119 = vld [vmem:[%s13 + $0x50] sm:$0xff]
        %v8120 = vld [vmem:[%s13 + $0x58] sm:$0xff]
        %v8121 = vld [vmem:[%s13 + $0x60] sm:$0xf]
        %v8123 = vsel %vm4127, %v8121, 0
        %8125 = vmatpush.msra.mxu0 0.0
        %8126 = vmatpush.msra.mxu0 0.0
        %8127 = vmatpush.msra.mxu0 0.0
        %8128 = vmatpush.msra.mxu0 %v8123
        %8129 = vmatpush.msra.mxu0 %v8120
        %8130 = vmatpush.msra.mxu0 %v8119
        %8131 = vmatpush.msra.mxu0 %v8118
        %8132 = vmatpush.msra.mxu0 %v8117
        %8133 = vmatpush.msra.mxu0 %v8116
        %8134 = vmatpush.msra.mxu0 %v8115
        %8135 = vmatpush.msra.mxu0 %v8114
        %8136 = vmatpush.msra.mxu0 %v8113
        %8137 = vmatpush.msra.mxu0 %v8112
        %8138 = vmatpush.msra.mxu0 %v8111
        %8139 = vmatpush.msra.mxu0 %v8110
        %8140 = vmatpush.msra.mxu0 %v8109
        %8141 = vmatmul.f32.gmra.mxu0 %v8084
        %v8142 = vpop.f32.mrf.mxu0
        %v8143 = vadd.f32 0.0, %v8142
        %8144 = vdwg.mxu0
        %v8145 = vld [vmem:[%s18] sm:$0xf]
        %v8146 = vld [vmem:[%s19] sm:$0xf]
        %8148 = vset.pattern.permute.xlu0 0
        %8149 = vperm.xlu0 %8148, %v8146
        %v8150 = vpop.permute.xlu0 %8149
        %v8153 = vsel %vm4096, %v8145, 0
        %v8156 = vsel %vm4127, %v8107, 0
        %8158 = vmatpush.msra.mxu0 0.0
        %8159 = vmatpush.msra.mxu0 0.0
        %8160 = vmatpush.msra.mxu0 0.0
        %8161 = vmatpush.msra.mxu0 0.0
        %8162 = vmatpush.msra.mxu0 0.0
        %8163 = vmatpush.msra.mxu0 0.0
        %8164 = vmatpush.msra.mxu0 0.0
        %8165 = vmatpush.msra.mxu0 0.0
        %8166 = vmatpush.msra.mxu0 0.0
        %8167 = vmatpush.msra.mxu0 0.0
        %8168 = vmatpush.msra.mxu0 0.0
        %8169 = vmatpush.msra.mxu0 0.0
        %8170 = vmatpush.msra.mxu0 0.0
        %8171 = vmatpush.msra.mxu0 0.0
        %8172 = vmatpush.msra.mxu0 0.0
        %8173 = vmatpush.msra.mxu0 %v8156
        %8174 = vmatmul.f32.gmra.mxu0 %v8153
        %v8175 = vpop.f32.mrf.mxu0
        %v8176 = vadd.f32 %v8150, %v8175
        %8177 = vdwg.mxu0
        %8178 = vst.msk [vmem:[%s748] sm:$0xf] %vm7589, %v8176
        %v8179 = vld [vmem:[%s20] sm:$0xf]
        %v8180 = vld [vmem:[%s21] sm:$0xf]
        %8182 = vset.pattern.permute.xlu0 0
        %8183 = vperm.xlu0 %8182, %v8180
        %v8184 = vpop.permute.xlu0 %8183
        %v8187 = vsel %vm4096, %v8179, 0
        %v8190 = vsel %vm4127, %v8143, 0
        %8192 = vmatpush.msra.mxu0 0.0
        %8193 = vmatpush.msra.mxu0 0.0
        %8194 = vmatpush.msra.mxu0 0.0
        %8195 = vmatpush.msra.mxu0 0.0
        %8196 = vmatpush.msra.mxu0 0.0
        %8197 = vmatpush.msra.mxu0 0.0
        %8198 = vmatpush.msra.mxu0 0.0
        %8199 = vmatpush.msra.mxu0 0.0
        %8200 = vmatpush.msra.mxu0 0.0
        %8201 = vmatpush.msra.mxu0 0.0
        %8202 = vmatpush.msra.mxu0 0.0
        %8203 = vmatpush.msra.mxu0 0.0
        %8204 = vmatpush.msra.mxu0 0.0
        %8205 = vmatpush.msra.mxu0 0.0
        %8206 = vmatpush.msra.mxu0 0.0
        %8207 = vmatpush.msra.mxu0 %v8190
        %8208 = vmatmul.f32.gmra.mxu0 %v8187
        %v8209 = vpop.f32.mrf.mxu0
        %v8210 = vadd.f32 %v8184, %v8209
        %8211 = vdwg.mxu0
        %8212 = vst.msk [vmem:[%s755] sm:$0xf] %vm7591, %v8210
        %s8213 = sand.u32 %s520, 1
        %s8214 = scalar_lea.sflag [#allocation6], %s8213
        %s8215 = sand.u32 %s520, 1
        %s8216 = smul.addr %s8215, 4
        %s8217 = scalar_lea.vmem [#allocation9], %s8216
        %s8218 = sand.u32 %s546, 1
        %s8219 = scalar_lea.sflag [#allocation11], %s8218
        %s8220 = sand.u32 %s546, 1
        %s8221 = smul.addr %s8220, 4
        %s8222 = scalar_lea.vmem [#allocation10], %s8221
        // Predicated region
        $region117: #{tpu_custom_call.1} parent=107 // pred_check
          %p8223 = pneg %p530
        $region118: #{tpu_custom_call.1} parent=107 // pred_check_branch
          %8225 = sbr.rel (%p8223) target = $region120
        $region119: #{tpu_custom_call.1} parent=107 // pred_region
          %8227 = vsyncadd %s8214, 0
          %s8228 = smul.addr %s45, 4
          %s8229 = scalar_lea.hbm %s22, %s8228
          %s8231 = sshll.u32 %s8217, 4
          %s8232 = int_to_ptr.vmem [resolvable:$true] %s8231
          %s8233 = sshll.u32 %s8229, 4
          %s8234 = int_to_ptr.hbm [resolvable:$true] %s8233
          %8236 = dma.vmem_to_hbm [thread:$0]  %s8232, 64, %s8234, %s8214
        $region120: #{tpu_custom_call.1} parent=107 // pred_fallthru
          _
        // Predicated region
        $region121: #{tpu_custom_call.1} parent=107 // pred_check
          %p8237 = pneg %p556
        $region122: #{tpu_custom_call.1} parent=107 // pred_check_branch
          %8239 = sbr.rel (%p8237) target = $region124
        $region123: #{tpu_custom_call.1} parent=107 // pred_region
          %8241 = vsyncadd %s8219, 0
          %s8242 = smul.addr %s45, 4
          %s8243 = scalar_lea.hbm %s23, %s8242
          %s8245 = sshll.u32 %s8222, 4
          %s8246 = int_to_ptr.vmem [resolvable:$true] %s8245
          %s8247 = sshll.u32 %s8243, 4
          %s8248 = int_to_ptr.hbm [resolvable:$true] %s8247
          %8250 = dma.vmem_to_hbm [thread:$0]  %s8246, 64, %s8248, %s8219
        $region124: #{tpu_custom_call.1} parent=107 // pred_fallthru
          _
      $region108: #{tpu_custom_call.1} parent=5 // pred_fallthru
        _
      %p8251 = scmp.le.s32.totalorder 2, %s40
      // Predicated region
      $region125: #{tpu_custom_call.1} parent=5 // pred_check
        %p8252 = pneg %p8251
      $region126: #{tpu_custom_call.1} parent=5 // pred_check_branch
        %8254 = sbr.rel (%p8252) target = $region128
      $region127: #{tpu_custom_call.1} parent=5 // pred_region
        %s8255 = ssub.s32 %s40, 2
        // Predicated region
        $region129: #{tpu_custom_call.1} parent=127 // pred_check
          %p8256 = pneg %p536
        $region130: #{tpu_custom_call.1} parent=127 // pred_check_branch
          %8258 = sbr.rel (%p8256) target = $region132
        $region131: #{tpu_custom_call.1} parent=127 // pred_region
          %s8259 = sand.u32 %s521, 1
          %s8260 = scalar_lea.sflag [#allocation6], %s8259
          %s8261 = sand.u32 %s521, 1
          %s8262 = smul.addr %s8261, 4
          %s8263 = scalar_lea.vmem [#allocation9], %s8262
          %8265 = dma.done %s8260, 64
        $region132: #{tpu_custom_call.1} parent=127 // pred_fallthru
          _
        // Predicated region
        $region133: #{tpu_custom_call.1} parent=127 // pred_check
          %p8266 = pneg %p562
        $region134: #{tpu_custom_call.1} parent=127 // pred_check_branch
          %8268 = sbr.rel (%p8266) target = $region136
        $region135: #{tpu_custom_call.1} parent=127 // pred_region
          %s8269 = sand.u32 %s547, 1
          %s8270 = scalar_lea.sflag [#allocation11], %s8269
          %s8271 = sand.u32 %s547, 1
          %s8272 = smul.addr %s8271, 4
          %s8273 = scalar_lea.vmem [#allocation10], %s8272
          %8275 = dma.done %s8270, 64
        $region136: #{tpu_custom_call.1} parent=127 // pred_fallthru
          _
      $region128: #{tpu_custom_call.1} parent=5 // pred_fallthru
        _
    $region6: #{tpu_custom_call.1} parent=1 // loop_footer
      %s44 = sadd.s32 1, %s40
    $region7: #{tpu_custom_call.1} parent=1 // loop_footer_branch
      %39 = sbr.rel target = $region3
    $region8: #{tpu_custom_call.1} parent=1 // loop_exit
      _
    %8276 = vsyncpa [#allocation5], 1
    %s8277 = scalar_lea.sflag [#allocation5], 1
    %8278 = vsyncpa %s8277, 1
    %8279 = vsyncpa [#allocation8], 1
    %8280 = vsyncpa [#allocation6], 1
    %s8281 = scalar_lea.sflag [#allocation6], 1
    %8282 = vsyncpa %s8281, 1
    %8283 = vsyncpa [#allocation11], 1
    %s8284 = scalar_lea.sflag [#allocation11], 1
    %8285 = vsyncpa %s8284, 1

</llo_original>
